<compile_context>
chip_gen: v5e
topology: v5e:2x2
jax: 0.10.0
libtpu: 0.0.40
codegen_flags: <defaults>
</compile_context>

<pallas_src>
import functools

import jax
import jax.numpy as jnp
from jax import lax
from jax.experimental import pallas as pl
from jax.experimental.pallas import tpu as pltpu

TM_MAX = 512       # M tile; sized so bf16 A tiles double-buffer well inside
                   # v7x's 64 MiB VMEM while still giving >=2 tiles on big M.


def _rup(v, m):
    return (v + m - 1) // m * m


def _m_tiling(m):
    mp = _rup(max(m, 8), 8)
    if mp <= TM_MAX:
        return mp, mp
    mp = _rup(m, TM_MAX)
    return mp, TM_MAX


# ---------------------------------------------------------------------------
# Pallas kernels: one MXU matmul (full K, full N; weights resident in VMEM)
# with a fused bias / residual-add / ReLU / clamp epilogue.
# ---------------------------------------------------------------------------
def _mm_kernel(a_ref, b_ref, bias_ref, o_ref, *, relu, clamp):
    out = jnp.dot(a_ref[...], b_ref[...], preferred_element_type=jnp.float32)
    out = out + bias_ref[...]
    if relu:
        out = jnp.maximum(out, 0.0)
    if clamp:
        out = jnp.minimum(out, 1.0)
    o_ref[...] = out


def _mm_add_kernel(a_ref, b_ref, bias_ref, add_ref, o_ref, *, relu, clamp):
    out = jnp.dot(a_ref[...], b_ref[...], preferred_element_type=jnp.float32)
    out = out + bias_ref[...] + add_ref[...]
    if relu:
        out = jnp.maximum(out, 0.0)
    if clamp:
        out = jnp.minimum(out, 1.0)
    o_ref[...] = out


def _attn_kernel(a_ref, b_ref, bias_ref, mod_ref, o_ref):
    # attention conv (Cout=1) fused with the modulation x + x*exp(sigmoid(.)).
    att = jnp.dot(a_ref[...], b_ref[...], preferred_element_type=jnp.float32)
    att = att + bias_ref[...]
    att = 1.0 / (1.0 + jnp.exp(-att))          # sigmoid, shape (tm, 1)
    m = mod_ref[...]
    o_ref[...] = m + m * jnp.exp(att)          # lane-broadcast of (tm, 1)


# ---------------------------------------------------------------------------
# Pallas wrappers.
# ---------------------------------------------------------------------------
def pallas_matmul(a, b, bias, add=None, *, relu=False, clamp=False):
    """epilogue(a @ b + bias [+ add]) — bf16 MXU inputs, f32 accumulation."""
    M, K = a.shape
    N = b.shape[1]
    Mp, tm = _m_tiling(M)

    a_bf = a.astype(jnp.bfloat16)
    if Mp != M:
        a_bf = jnp.zeros((Mp, K), jnp.bfloat16).at[:M].set(a_bf)
    b_bf = b.astype(jnp.bfloat16)
    bias2 = bias.reshape(1, N).astype(jnp.float32)

    in_specs = [
        pl.BlockSpec((tm, K), lambda i: (i, 0)),   # A streams over M tiles
        pl.BlockSpec((K, N), lambda i: (0, 0)),    # weights stay resident
        pl.BlockSpec((1, N), lambda i: (0, 0)),    # bias stays resident
    ]
    args = [a_bf, b_bf, bias2]
    if add is not None:
        add_f = add.astype(jnp.float32)
        if Mp != M:
            add_f = jnp.zeros((Mp, N), jnp.float32).at[:M].set(add_f)
        in_specs.append(pl.BlockSpec((tm, N), lambda i: (i, 0)))
        args.append(add_f)
        kern = functools.partial(_mm_add_kernel, relu=relu, clamp=clamp)
    else:
        kern = functools.partial(_mm_kernel, relu=relu, clamp=clamp)

    out = pl.pallas_call(
        kern,
        out_shape=jax.ShapeDtypeStruct((Mp, N), jnp.float32),
        grid_spec=pltpu.PrefetchScalarGridSpec(
            num_scalar_prefetch=0,
            grid=(Mp // tm,),
            in_specs=in_specs,
            out_specs=pl.BlockSpec((tm, N), lambda i: (i, 0)),
        ),
        compiler_params=pltpu.CompilerParams(
            dimension_semantics=("parallel",)),
    )(*args)
    return out[:M]


def _im2col(x, kh, kw, stride, pad):
    # x: NHWC (materialize patches in bf16 to halve HBM traffic).
    x = x.astype(jnp.bfloat16)
    n, h, w, c = x.shape
    xp = jnp.pad(x, ((0, 0), (pad, pad), (pad, pad), (0, 0)))
    ho = (h + 2 * pad - kh) // stride + 1
    wo = (w + 2 * pad - kw) // stride + 1
    cols = []
    for i in range(kh):
        for j in range(kw):
            cols.append(xp[:, i:i + stride * (ho - 1) + 1:stride,
                           j:j + stride * (wo - 1) + 1:stride, :])
    patches = jnp.concatenate(cols, axis=-1)          # (N,Ho,Wo,KH*KW*Cin)
    return patches.reshape(n * ho * wo, kh * kw * c), (n, ho, wo)


def conv2d(x, w_oihw, b, stride, pad, *, relu=False, clamp=False):
    cout, cin, kh, kw = w_oihw.shape
    cols, (n, ho, wo) = _im2col(x, kh, kw, stride, pad)
    wmat = jnp.transpose(w_oihw, (2, 3, 1, 0)).reshape(kh * kw * cin, cout)
    out = pallas_matmul(cols, wmat, b, relu=relu, clamp=clamp)
    return out.reshape(n, ho, wo, cout)


def attention_block(x, w_oihw, b):
    # AttentionModel: out = x + x * exp(sigmoid(conv3x3(x)))   (Cout = 1)
    n, h, w, c = x.shape
    cols, _ = _im2col(x, 3, 3, 1, 1)
    K = cols.shape[1]
    wmat = jnp.transpose(w_oihw, (2, 3, 1, 0)).reshape(K, 1).astype(jnp.bfloat16)
    M = n * h * w
    xflat = x.reshape(M, c).astype(jnp.float32)
    Mp, tm = _m_tiling(M)
    if Mp != M:
        cols = jnp.zeros((Mp, K), cols.dtype).at[:M].set(cols)
        xflat = jnp.zeros((Mp, c), jnp.float32).at[:M].set(xflat)

    out = pl.pallas_call(
        _attn_kernel,
        out_shape=jax.ShapeDtypeStruct((Mp, c), jnp.float32),
        grid_spec=pltpu.PrefetchScalarGridSpec(
            num_scalar_prefetch=0,
            grid=(Mp // tm,),
            in_specs=[
                pl.BlockSpec((tm, K), lambda i: (i, 0)),
                pl.BlockSpec((K, 1), lambda i: (0, 0)),
                pl.BlockSpec((1, 1), lambda i: (0, 0)),
                pl.BlockSpec((tm, c), lambda i: (i, 0)),
            ],
            out_specs=pl.BlockSpec((tm, c), lambda i: (i, 0)),
        ),
        compiler_params=pltpu.CompilerParams(
            dimension_semantics=("parallel",)),
    )(cols, wmat, b.reshape(1, 1).astype(jnp.float32), xflat)
    return out[:M].reshape(n, h, w, c)


# ---------------------------------------------------------------------------
# Sub-pixel (phase) helpers for stride-2 transposed convs.
# Phase layout: columns grouped as (rh, rw) in {(0,0),(0,1),(1,0),(1,1)},
# Cout contiguous inside each group.
# ---------------------------------------------------------------------------
def _space_to_phase(t):
    n, hh, ww, c = t.shape
    h, w = hh // 2, ww // 2
    t = t.reshape(n, h, 2, w, 2, c)
    t = jnp.transpose(t, (0, 1, 3, 2, 4, 5))
    return t.reshape(n * h * w, 4 * c)


def _phase_to_space(flat, n, h, w, c):
    t = flat.reshape(n, h, w, 2, 2, c)
    t = jnp.transpose(t, (0, 1, 3, 2, 4, 5))
    return t.reshape(n, 2 * h, 2 * w, c)


def conv_transpose_2x2(x, w_iohw, b, *, add=None, relu=False, clamp=False):
    # ConvTranspose2d(cin, cout, 2, stride=2, padding=0):
    #   out[2m+rh, 2p+rw] = x[m, p] @ w[:, :, rh, rw] + b   (no wasted FLOPs)
    n, h, w, cin = x.shape
    cout = w_iohw.shape[1]
    a = x.astype(jnp.bfloat16).reshape(n * h * w, cin)
    bmat = jnp.transpose(w_iohw, (0, 2, 3, 1)).reshape(cin, 4 * cout)
    bias4 = jnp.tile(b, 4)
    add_flat = None if add is None else _space_to_phase(add)
    out = pallas_matmul(a, bmat, bias4, add_flat, relu=relu, clamp=clamp)
    return _phase_to_space(out, n, h, w, cout)


def conv_transpose_3x3_s2(x, w_iohw, b, *, add=None, relu=False):
    # ConvTranspose2d(cin, cout, 3, stride=2, padding=1, output_padding=1):
    # sub-pixel decomposition over a 2x2 tap window (x padded bottom/right):
    #   out[2m  ,2p  ] = x[m,p]@w11
    #   out[2m  ,2p+1] = x[m,p]@w12 + x[m,p+1]@w10
    #   out[2m+1,2p  ] = x[m,p]@w21 + x[m+1,p]@w01
    #   out[2m+1,2p+1] = x[m,p]@w22 + x[m,p+1]@w20 + x[m+1,p]@w02 + x[m+1,p+1]@w00
    n, h, w, cin = x.shape
    cout = w_iohw.shape[1]
    xb = x.astype(jnp.bfloat16)
    xp = jnp.pad(xb, ((0, 0), (0, 1), (0, 1), (0, 0)))
    taps = [xp[:, 0:h, 0:w, :], xp[:, 0:h, 1:w + 1, :],
            xp[:, 1:h + 1, 0:w, :], xp[:, 1:h + 1, 1:w + 1, :]]
    a = jnp.concatenate(taps, axis=-1).reshape(n * h * w, 4 * cin)

    z = jnp.zeros((cin, cout), w_iohw.dtype)
    wk = lambda i, j: w_iohw[:, :, i, j]                       # (cin, cout)
    col00 = jnp.concatenate([wk(1, 1), z, z, z], axis=0)
    col01 = jnp.concatenate([wk(1, 2), wk(1, 0), z, z], axis=0)
    col10 = jnp.concatenate([wk(2, 1), z, wk(0, 1), z], axis=0)
    col11 = jnp.concatenate([wk(2, 2), wk(2, 0), wk(0, 2), wk(0, 0)], axis=0)
    bmat = jnp.concatenate([col00, col01, col10, col11], axis=1)  # (4cin,4cout)
    bias4 = jnp.tile(b, 4)
    add_flat = None if add is None else _space_to_phase(add)
    out = pallas_matmul(a, bmat, bias4, add_flat, relu=relu)
    return _phase_to_space(out, n, h, w, cout)


# ---------------------------------------------------------------------------
# CompenTrans512 forward (non-simplified path), inputs/outputs in NCHW.
# ---------------------------------------------------------------------------
def compentrans512_forward(x_nchw, s_nchw, P):
    x = jnp.transpose(x_nchw, (0, 2, 3, 1))
    s = jnp.transpose(s_nchw, (0, 2, 3, 1))
    n = x.shape[0]
    t = jnp.concatenate([x, s], axis=0)   # shared-weight encoder: run once

    r1 = conv2d(t, P['skip11_w'], P['skip11_b'], 1, 1, relu=True)
    r1 = conv2d(r1, P['skip12_w'], P['skip12_b'], 1, 1)
    res1 = r1[:n] - r1[n:]

    t1 = conv2d(t, P['conv1_w'], P['conv1_b'], 2, 1, relu=True)
    r2 = conv2d(t1, P['skip21_w'], P['skip21_b'], 1, 0, relu=True)
    r2 = conv2d(r2, P['skip22_w'], P['skip22_b'], 1, 1)
    res2 = r2[:n] - r2[n:]

    t2 = conv2d(t1, P['conv2_w'], P['conv2_b'], 2, 1, relu=True)
    r3 = conv2d(t2, P['skip31_w'], P['skip31_b'], 1, 1)
    res3 = r3[:n] - r3[n:]

    t3 = conv2d(t2, P['conv3_w'], P['conv3_b'], 2, 1, relu=True)
    t4 = conv2d(t3, P['conv4_w'], P['conv4_b'], 1, 1, relu=True)
    x4 = t4[:n] - t4[n:]                  # relu(conv4(x)) - relu(conv4(s))

    x5 = conv2d(x4, P['conv5_w'], P['conv5_b'], 1, 1, relu=True)
    x5 = attention_block(x5, P['att_w'], P['att_b'])

    x6 = conv_transpose_3x3_s2(x5, P['tconv1_w'], P['tconv1_b'],
                               add=res3, relu=True)
    x7 = conv_transpose_2x2(x6, P['trans1_w'], P['trans1_b'],
                            add=res2, relu=True)
    x8 = conv_transpose_2x2(x7, P['tconv2_w'], P['tconv2_b'],
                            add=res1, relu=True)
    # relu then clamp(max=1); the trailing clamp(min=0) is a no-op after relu.
    x9 = conv_transpose_2x2(x8, P['trans2_w'], P['trans2_b'],
                            relu=True, clamp=True)
    return jnp.transpose(x9, (0, 3, 1, 2))


# ---------------------------------------------------------------------------
# Pure-lax reference (same bf16 operand quantization, f32 accumulation) for a
# correctness check of the Pallas path.
# ---------------------------------------------------------------------------
def _ref_forward(x_nchw, s_nchw, P):
    relu = lambda v: jnp.maximum(v, 0.0)
    bf = lambda v: v.astype(jnp.bfloat16)

    def conv(t, w, b, stride, pad):
        y = lax.conv_general_dilated(
            bf(t), bf(jnp.transpose(w, (2, 3, 1, 0))), (stride, stride),
            [(pad, pad), (pad, pad)],
            dimension_numbers=('NHWC', 'HWIO', 'NHWC'),
            preferred_element_type=jnp.float32)
        return y + b

    def tconv(t, w, b, stride, pad, out_pad):
        k = w.shape[2]
        wf = jnp.transpose(jnp.flip(w, (2, 3)), (2, 3, 0, 1))
        y = lax.conv_general_dilated(
            bf(t), bf(wf), (1, 1),
            [(k - 1 - pad, k - 1 - pad + out_pad)] * 2,
            lhs_dilation=(stride, stride),
            dimension_numbers=('NHWC', 'HWIO', 'NHWC'),
            preferred_element_type=jnp.float32)
        return y + b

    x = jnp.transpose(x_nchw, (0, 2, 3, 1))
    s = jnp.transpose(s_nchw, (0, 2, 3, 1))

    # surface branch
    res1_s = conv(relu(conv(s, P['skip11_w'], P['skip11_b'], 1, 1)),
                  P['skip12_w'], P['skip12_b'], 1, 1)
    s1 = relu(conv(s, P['conv1_w'], P['conv1_b'], 2, 1))
    res2_s = conv(relu(conv(s1, P['skip21_w'], P['skip21_b'], 1, 0)),
                  P['skip22_w'], P['skip22_b'], 1, 1)
    s2 = relu(conv(s1, P['conv2_w'], P['conv2_b'], 2, 1))
    res3_s = conv(s2, P['skip31_w'], P['skip31_b'], 1, 1)
    s3 = relu(conv(s2, P['conv3_w'], P['conv3_b'], 2, 1))
    res4_s = relu(conv(s3, P['conv4_w'], P['conv4_b'], 1, 1))

    # input branch
    res1 = conv(relu(conv(x, P['skip11_w'], P['skip11_b'], 1, 1)),
                P['skip12_w'], P['skip12_b'], 1, 1) - res1_s
    x1 = relu(conv(x, P['conv1_w'], P['conv1_b'], 2, 1))
    res2 = conv(relu(conv(x1, P['skip21_w'], P['skip21_b'], 1, 0)),
                P['skip22_w'], P['skip22_b'], 1, 1) - res2_s
    x2 = relu(conv(x1, P['conv2_w'], P['conv2_b'], 2, 1))
    res3 = conv(x2, P['skip31_w'], P['skip31_b'], 1, 1) - res3_s
    x3 = relu(conv(x2, P['conv3_w'], P['conv3_b'], 2, 1))
    x4 = relu(conv(x3, P['conv4_w'], P['conv4_b'], 1, 1)) - res4_s
    x5 = relu(conv(x4, P['conv5_w'], P['conv5_b'], 1, 1))
    att = conv(x5, P['att_w'], P['att_b'], 1, 1)
    att = 1.0 / (1.0 + jnp.exp(-att))
    x5 = x5 + x5 * jnp.exp(att)
    x6 = relu(tconv(x5, P['tconv1_w'], P['tconv1_b'], 2, 1, 1) + res3)
    x7 = relu(tconv(x6, P['trans1_w'], P['trans1_b'], 2, 0, 0) + res2)
    x8 = relu(tconv(x7, P['tconv2_w'], P['tconv2_b'], 2, 0, 0) + res1)
    x9 = relu(tconv(x8, P['trans2_w'], P['trans2_b'], 2, 0, 0))
    x9 = jnp.minimum(x9, 1.0)
    x9 = jnp.maximum(x9, 0.0)
    return jnp.transpose(x9, (0, 3, 1, 2))


# ---------------------------------------------------------------------------
# Deterministic parameter init (Kaiming-normal conv weights, small biases).
# ---------------------------------------------------------------------------
def init_params(key):
    conv_defs = {        # name: (Cout, Cin, KH, KW)  [PyTorch Conv2d OIHW]
        'conv1': (32, 3, 3, 3), 'conv2': (64, 32, 3, 3), 'conv3': (128, 64, 3, 3),
        'conv4': (256, 128, 3, 3), 'conv5': (128, 256, 3, 3),
        'skip11': (32, 3, 3, 3), 'skip12': (32, 32, 3, 3),
        'skip21': (64, 32, 1, 1), 'skip22': (64, 64, 3, 3), 'skip31': (64, 64, 3, 3),
        'att': (1, 128, 3, 3),
    }
    tconv_defs = {       # name: (Cin, Cout, KH, KW)  [PyTorch ConvTranspose2d]
        'tconv1': (128, 64, 3, 3), 'tconv2': (64, 32, 2, 2),
        'trans1': (64, 64, 2, 2), 'trans2': (32, 3, 2, 2),
    }
    P = {}
    keys = iter(jax.random.split(key, 2 * (len(conv_defs) + len(tconv_defs))))
    for name, (co, ci, kh, kw) in conv_defs.items():
        fan_in = ci * kh * kw
        P[name + '_w'] = jax.random.normal(next(keys), (co, ci, kh, kw),
                                           jnp.float32) * jnp.sqrt(2.0 / fan_in)
        P[name + '_b'] = jax.random.normal(next(keys), (co,), jnp.float32) * 0.01
    for name, (ci, co, kh, kw) in tconv_defs.items():
        fan = co * kh * kw
        P[name + '_w'] = jax.random.normal(next(keys), (ci, co, kh, kw),
                                           jnp.float32) * jnp.sqrt(1.0 / fan)
        P[name + '_b'] = jax.random.normal(next(keys), (co,), jnp.float32) * 0.01
    return P


if __name__ == "__main__":
    key = jax.random.PRNGKey(0)
    kx, ks, kp = jax.random.split(key, 3)

    # NCHW inputs, like the PyTorch module: (batch=2, C=3, H=16, W=16)
    x = jax.random.uniform(kx, (2, 3, 16, 16), jnp.float32)
    s = jax.random.uniform(ks, (2, 3, 16, 16), jnp.float32)
    params = init_params(kp)

    fwd = jax.jit(compentrans512_forward)
    out = jax.block_until_ready(fwd(x, s, params))
    # CompenTrans512 upsamples 2x at the end: 16x16 -> 32x32.
    assert out.shape == (2, 3, 32, 32), out.shape

    ref = jax.block_until_ready(_ref_forward(x, s, params))
    max_err = float(jnp.max(jnp.abs(out - ref)))
    assert max_err < 1e-2, f"mismatch vs reference: {max_err}"

    print("KERNEL_OK")
</pallas_src>

<mosaic_0001>
module attributes {stable_mosaic.version = 11 : i64} {
  func.func @_mm_kernel(%arg0: i32, %arg1: memref<512x27xbf16, #tpu.memory_space<vmem>>, %arg2: memref<27x32xbf16, #tpu.memory_space<vmem>>, %arg3: memref<1x32xf32, #tpu.memory_space<vmem>>, %arg4: memref<512x32xf32, #tpu.memory_space<vmem>>) attributes {dimension_semantics = [#tpu.dimension_semantics<parallel>], iteration_bounds = array<i64: 2>, scalar_prefetch = 0 : i64, scratch_operands = 0 : i64, tpu.core_type = #tpu.core_type<tc>, window_params = [{transform_indices = @transform_0, window_bounds = array<i64: 512, 27>}, {pipeline_mode = #tpu.pipeline_mode<synchronous>, transform_indices = @transform_1, window_bounds = array<i64: 27, 32>}, {pipeline_mode = #tpu.pipeline_mode<synchronous>, transform_indices = @transform_2, window_bounds = array<i64: 1, 32>}, {transform_indices = @transform_3, window_bounds = array<i64: 512, 32>}]} {
    %c0 = arith.constant 0 : index
    %c0_0 = arith.constant 0 : index
    %0 = vector.load %arg1[%c0, %c0_0] : memref<512x27xbf16, #tpu.memory_space<vmem>>, vector<512x27xbf16>
    %c0_1 = arith.constant 0 : index
    %c0_2 = arith.constant 0 : index
    %1 = vector.load %arg2[%c0_1, %c0_2] : memref<27x32xbf16, #tpu.memory_space<vmem>>, vector<27x32xbf16>
    %cst = arith.constant dense<0.000000e+00> : vector<512x32xf32>
    %2 = tpu.matmul %0, %1, %cst {dimension_numbers = #tpu.dot_dimension_numbers<[1], [0], [0], [1], [0, 0, 1, 1], [], []>} : vector<512x27xbf16>, vector<27x32xbf16>, vector<512x32xf32> -> vector<512x32xf32>
    %c0_3 = arith.constant 0 : index
    %c0_4 = arith.constant 0 : index
    %3 = vector.load %arg3[%c0_3, %c0_4] : memref<1x32xf32, #tpu.memory_space<vmem>>, vector<1x32xf32>
    %4 = vector.broadcast %3 : vector<1x32xf32> to vector<512x32xf32>
    %5 = arith.addf %2, %4 : vector<512x32xf32>
    %cst_5 = arith.constant 0.000000e+00 : f32
    %6 = vector.broadcast %cst_5 : f32 to vector<512x32xf32>
    %7 = arith.maximumf %5, %6 : vector<512x32xf32>
    %c0_6 = arith.constant 0 : index
    %c0_7 = arith.constant 0 : index
    %8 = vector.load %arg4[%c0_6, %c0_7] : memref<512x32xf32, #tpu.memory_space<vmem>>, vector<512x32xf32>
    tpu.vector_store %arg4[%c0_6, %c0_7], %7 {strides = array<i32>} : memref<512x32xf32, #tpu.memory_space<vmem>>, vector<512x32xf32>,
    return
  }
  func.func @transform_0(%arg0: i32) -> (i32, i32) {
    %c0_i32 = arith.constant 0 : i32
    %c0_i32_0 = arith.constant 0 : i32
    return %arg0, %c0_i32 : i32, i32
  }
  func.func @transform_1(%arg0: i32) -> (i32, i32) {
    %c0_i32 = arith.constant 0 : i32
    %c0_i32_0 = arith.constant 0 : i32
    %c0_i32_1 = arith.constant 0 : i32
    return %c0_i32, %c0_i32_0 : i32, i32
  }
  func.func @transform_2(%arg0: i32) -> (i32, i32) {
    %c0_i32 = arith.constant 0 : i32
    %c0_i32_0 = arith.constant 0 : i32
    %c0_i32_1 = arith.constant 0 : i32
    return %c0_i32, %c0_i32_0 : i32, i32
  }
  func.func @transform_3(%arg0: i32) -> (i32, i32) {
    %c0_i32 = arith.constant 0 : i32
    %c0_i32_0 = arith.constant 0 : i32
    return %arg0, %c0_i32 : i32, i32
  }
}

module attributes {stable_mosaic.version = 11 : i64} {
  func.func @_mm_kernel(%arg0: i32, %arg1: memref<512x288xbf16, #tpu.memory_space<vmem>>, %arg2: memref<288x32xbf16, #tpu.memory_space<vmem>>, %arg3: memref<1x32xf32, #tpu.memory_space<vmem>>, %arg4: memref<512x32xf32, #tpu.memory_space<vmem>>) attributes {dimension_semantics = [#tpu.dimension_semantics<parallel>], iteration_bounds = array<i64: 2>, scalar_prefetch = 0 : i64, scratch_operands = 0 : i64, tpu.core_type = #tpu.core_type<tc>, window_params = [{transform_indices = @transform_0, window_bounds = array<i64: 512, 288>}, {pipeline_mode = #tpu.pipeline_mode<synchronous>, transform_indices = @transform_1, window_bounds = array<i64: 288, 32>}, {pipeline_mode = #tpu.pipeline_mode<synchronous>, transform_indices = @transform_2, window_bounds = array<i64: 1, 32>}, {transform_indices = @transform_3, window_bounds = array<i64: 512, 32>}]} {
    %c0 = arith.constant 0 : index
    %c0_0 = arith.constant 0 : index
    %0 = vector.load %arg1[%c0, %c0_0] : memref<512x288xbf16, #tpu.memory_space<vmem>>, vector<512x288xbf16>
    %c0_1 = arith.constant 0 : index
    %c0_2 = arith.constant 0 : index
    %1 = vector.load %arg2[%c0_1, %c0_2] : memref<288x32xbf16, #tpu.memory_space<vmem>>, vector<288x32xbf16>
    %cst = arith.constant dense<0.000000e+00> : vector<512x32xf32>
    %2 = tpu.matmul %0, %1, %cst {dimension_numbers = #tpu.dot_dimension_numbers<[1], [0], [0], [1], [0, 0, 1, 1], [], []>} : vector<512x288xbf16>, vector<288x32xbf16>, vector<512x32xf32> -> vector<512x32xf32>
    %c0_3 = arith.constant 0 : index
    %c0_4 = arith.constant 0 : index
    %3 = vector.load %arg3[%c0_3, %c0_4] : memref<1x32xf32, #tpu.memory_space<vmem>>, vector<1x32xf32>
    %4 = vector.broadcast %3 : vector<1x32xf32> to vector<512x32xf32>
    %5 = arith.addf %2, %4 : vector<512x32xf32>
    %c0_5 = arith.constant 0 : index
    %c0_6 = arith.constant 0 : index
    %6 = vector.load %arg4[%c0_5, %c0_6] : memref<512x32xf32, #tpu.memory_space<vmem>>, vector<512x32xf32>
    tpu.vector_store %arg4[%c0_5, %c0_6], %5 {strides = array<i32>} : memref<512x32xf32, #tpu.memory_space<vmem>>, vector<512x32xf32>,
    return
  }
  func.func @transform_0(%arg0: i32) -> (i32, i32) {
    %c0_i32 = arith.constant 0 : i32
    %c0_i32_0 = arith.constant 0 : i32
    return %arg0, %c0_i32 : i32, i32
  }
  func.func @transform_1(%arg0: i32) -> (i32, i32) {
    %c0_i32 = arith.constant 0 : i32
    %c0_i32_0 = arith.constant 0 : i32
    %c0_i32_1 = arith.constant 0 : i32
    return %c0_i32, %c0_i32_0 : i32, i32
  }
  func.func @transform_2(%arg0: i32) -> (i32, i32) {
    %c0_i32 = arith.constant 0 : i32
    %c0_i32_0 = arith.constant 0 : i32
    %c0_i32_1 = arith.constant 0 : i32
    return %c0_i32, %c0_i32_0 : i32, i32
  }
  func.func @transform_3(%arg0: i32) -> (i32, i32) {
    %c0_i32 = arith.constant 0 : i32
    %c0_i32_0 = arith.constant 0 : i32
    return %arg0, %c0_i32 : i32, i32
  }
}

module attributes {stable_mosaic.version = 11 : i64} {
  func.func @_mm_kernel(%arg0: i32, %arg1: memref<256x27xbf16, #tpu.memory_space<vmem>>, %arg2: memref<27x32xbf16, #tpu.memory_space<vmem>>, %arg3: memref<1x32xf32, #tpu.memory_space<vmem>>, %arg4: memref<256x32xf32, #tpu.memory_space<vmem>>) attributes {dimension_semantics = [#tpu.dimension_semantics<parallel>], iteration_bounds = array<i64: 1>, scalar_prefetch = 0 : i64, scratch_operands = 0 : i64, tpu.core_type = #tpu.core_type<tc>, window_params = [{transform_indices = @transform_0, window_bounds = array<i64: 256, 27>}, {pipeline_mode = #tpu.pipeline_mode<synchronous>, transform_indices = @transform_1, window_bounds = array<i64: 27, 32>}, {pipeline_mode = #tpu.pipeline_mode<synchronous>, transform_indices = @transform_2, window_bounds = array<i64: 1, 32>}, {transform_indices = @transform_3, window_bounds = array<i64: 256, 32>}]} {
    %c0 = arith.constant 0 : index
    %c0_0 = arith.constant 0 : index
    %0 = vector.load %arg1[%c0, %c0_0] : memref<256x27xbf16, #tpu.memory_space<vmem>>, vector<256x27xbf16>
    %c0_1 = arith.constant 0 : index
    %c0_2 = arith.constant 0 : index
    %1 = vector.load %arg2[%c0_1, %c0_2] : memref<27x32xbf16, #tpu.memory_space<vmem>>, vector<27x32xbf16>
    %cst = arith.constant dense<0.000000e+00> : vector<256x32xf32>
    %2 = tpu.matmul %0, %1, %cst {dimension_numbers = #tpu.dot_dimension_numbers<[1], [0], [0], [1], [0, 0, 1, 1], [], []>} : vector<256x27xbf16>, vector<27x32xbf16>, vector<256x32xf32> -> vector<256x32xf32>
    %c0_3 = arith.constant 0 : index
    %c0_4 = arith.constant 0 : index
    %3 = vector.load %arg3[%c0_3, %c0_4] : memref<1x32xf32, #tpu.memory_space<vmem>>, vector<1x32xf32>
    %4 = vector.broadcast %3 : vector<1x32xf32> to vector<256x32xf32>
    %5 = arith.addf %2, %4 : vector<256x32xf32>
    %cst_5 = arith.constant 0.000000e+00 : f32
    %6 = vector.broadcast %cst_5 : f32 to vector<256x32xf32>
    %7 = arith.maximumf %5, %6 : vector<256x32xf32>
    %c0_6 = arith.constant 0 : index
    %c0_7 = arith.constant 0 : index
    %8 = vector.load %arg4[%c0_6, %c0_7] : memref<256x32xf32, #tpu.memory_space<vmem>>, vector<256x32xf32>
    tpu.vector_store %arg4[%c0_6, %c0_7], %7 {strides = array<i32>} : memref<256x32xf32, #tpu.memory_space<vmem>>, vector<256x32xf32>,
    return
  }
  func.func @transform_0(%arg0: i32) -> (i32, i32) {
    %c0_i32 = arith.constant 0 : i32
    %c0_i32_0 = arith.constant 0 : i32
    return %arg0, %c0_i32 : i32, i32
  }
  func.func @transform_1(%arg0: i32) -> (i32, i32) {
    %c0_i32 = arith.constant 0 : i32
    %c0_i32_0 = arith.constant 0 : i32
    %c0_i32_1 = arith.constant 0 : i32
    return %c0_i32, %c0_i32_0 : i32, i32
  }
  func.func @transform_2(%arg0: i32) -> (i32, i32) {
    %c0_i32 = arith.constant 0 : i32
    %c0_i32_0 = arith.constant 0 : i32
    %c0_i32_1 = arith.constant 0 : i32
    return %c0_i32, %c0_i32_0 : i32, i32
  }
  func.func @transform_3(%arg0: i32) -> (i32, i32) {
    %c0_i32 = arith.constant 0 : i32
    %c0_i32_0 = arith.constant 0 : i32
    return %arg0, %c0_i32 : i32, i32
  }
}

module attributes {stable_mosaic.version = 11 : i64} {
  func.func @_mm_kernel(%arg0: i32, %arg1: memref<256x32xbf16, #tpu.memory_space<vmem>>, %arg2: memref<32x64xbf16, #tpu.memory_space<vmem>>, %arg3: memref<1x64xf32, #tpu.memory_space<vmem>>, %arg4: memref<256x64xf32, #tpu.memory_space<vmem>>) attributes {dimension_semantics = [#tpu.dimension_semantics<parallel>], iteration_bounds = array<i64: 1>, scalar_prefetch = 0 : i64, scratch_operands = 0 : i64, tpu.core_type = #tpu.core_type<tc>, window_params = [{transform_indices = @transform_0, window_bounds = array<i64: 256, 32>}, {pipeline_mode = #tpu.pipeline_mode<synchronous>, transform_indices = @transform_1, window_bounds = array<i64: 32, 64>}, {pipeline_mode = #tpu.pipeline_mode<synchronous>, transform_indices = @transform_2, window_bounds = array<i64: 1, 64>}, {transform_indices = @transform_3, window_bounds = array<i64: 256, 64>}]} {
    %c0 = arith.constant 0 : index
    %c0_0 = arith.constant 0 : index
    %0 = vector.load %arg1[%c0, %c0_0] : memref<256x32xbf16, #tpu.memory_space<vmem>>, vector<256x32xbf16>
    %c0_1 = arith.constant 0 : index
    %c0_2 = arith.constant 0 : index
    %1 = vector.load %arg2[%c0_1, %c0_2] : memref<32x64xbf16, #tpu.memory_space<vmem>>, vector<32x64xbf16>
    %cst = arith.constant dense<0.000000e+00> : vector<256x64xf32>
    %2 = tpu.matmul %0, %1, %cst {dimension_numbers = #tpu.dot_dimension_numbers<[1], [0], [0], [1], [0, 0, 1, 1], [], []>} : vector<256x32xbf16>, vector<32x64xbf16>, vector<256x64xf32> -> vector<256x64xf32>
    %c0_3 = arith.constant 0 : index
    %c0_4 = arith.constant 0 : index
    %3 = vector.load %arg3[%c0_3, %c0_4] : memref<1x64xf32, #tpu.memory_space<vmem>>, vector<1x64xf32>
    %4 = vector.broadcast %3 : vector<1x64xf32> to vector<256x64xf32>
    %5 = arith.addf %2, %4 : vector<256x64xf32>
    %cst_5 = arith.constant 0.000000e+00 : f32
    %6 = vector.broadcast %cst_5 : f32 to vector<256x64xf32>
    %7 = arith.maximumf %5, %6 : vector<256x64xf32>
    %c0_6 = arith.constant 0 : index
    %c0_7 = arith.constant 0 : index
    %8 = vector.load %arg4[%c0_6, %c0_7] : memref<256x64xf32, #tpu.memory_space<vmem>>, vector<256x64xf32>
    tpu.vector_store %arg4[%c0_6, %c0_7], %7 {strides = array<i32>} : memref<256x64xf32, #tpu.memory_space<vmem>>, vector<256x64xf32>,
    return
  }
  func.func @transform_0(%arg0: i32) -> (i32, i32) {
    %c0_i32 = arith.constant 0 : i32
    %c0_i32_0 = arith.constant 0 : i32
    return %arg0, %c0_i32 : i32, i32
  }
  func.func @transform_1(%arg0: i32) -> (i32, i32) {
    %c0_i32 = arith.constant 0 : i32
    %c0_i32_0 = arith.constant 0 : i32
    %c0_i32_1 = arith.constant 0 : i32
    return %c0_i32, %c0_i32_0 : i32, i32
  }
  func.func @transform_2(%arg0: i32) -> (i32, i32) {
    %c0_i32 = arith.constant 0 : i32
    %c0_i32_0 = arith.constant 0 : i32
    %c0_i32_1 = arith.constant 0 : i32
    return %c0_i32, %c0_i32_0 : i32, i32
  }
  func.func @transform_3(%arg0: i32) -> (i32, i32) {
    %c0_i32 = arith.constant 0 : i32
    %c0_i32_0 = arith.constant 0 : i32
    return %arg0, %c0_i32 : i32, i32
  }
}

module attributes {stable_mosaic.version = 11 : i64} {
  func.func @_mm_kernel(%arg0: i32, %arg1: memref<256x576xbf16, #tpu.memory_space<vmem>>, %arg2: memref<576x64xbf16, #tpu.memory_space<vmem>>, %arg3: memref<1x64xf32, #tpu.memory_space<vmem>>, %arg4: memref<256x64xf32, #tpu.memory_space<vmem>>) attributes {dimension_semantics = [#tpu.dimension_semantics<parallel>], iteration_bounds = array<i64: 1>, scalar_prefetch = 0 : i64, scratch_operands = 0 : i64, tpu.core_type = #tpu.core_type<tc>, window_params = [{transform_indices = @transform_0, window_bounds = array<i64: 256, 576>}, {pipeline_mode = #tpu.pipeline_mode<synchronous>, transform_indices = @transform_1, window_bounds = array<i64: 576, 64>}, {pipeline_mode = #tpu.pipeline_mode<synchronous>, transform_indices = @transform_2, window_bounds = array<i64: 1, 64>}, {transform_indices = @transform_3, window_bounds = array<i64: 256, 64>}]} {
    %c0 = arith.constant 0 : index
    %c0_0 = arith.constant 0 : index
    %0 = vector.load %arg1[%c0, %c0_0] : memref<256x576xbf16, #tpu.memory_space<vmem>>, vector<256x576xbf16>
    %c0_1 = arith.constant 0 : index
    %c0_2 = arith.constant 0 : index
    %1 = vector.load %arg2[%c0_1, %c0_2] : memref<576x64xbf16, #tpu.memory_space<vmem>>, vector<576x64xbf16>
    %cst = arith.constant dense<0.000000e+00> : vector<256x64xf32>
    %2 = tpu.matmul %0, %1, %cst {dimension_numbers = #tpu.dot_dimension_numbers<[1], [0], [0], [1], [0, 0, 1, 1], [], []>} : vector<256x576xbf16>, vector<576x64xbf16>, vector<256x64xf32> -> vector<256x64xf32>
    %c0_3 = arith.constant 0 : index
    %c0_4 = arith.constant 0 : index
    %3 = vector.load %arg3[%c0_3, %c0_4] : memref<1x64xf32, #tpu.memory_space<vmem>>, vector<1x64xf32>
    %4 = vector.broadcast %3 : vector<1x64xf32> to vector<256x64xf32>
    %5 = arith.addf %2, %4 : vector<256x64xf32>
    %c0_5 = arith.constant 0 : index
    %c0_6 = arith.constant 0 : index
    %6 = vector.load %arg4[%c0_5, %c0_6] : memref<256x64xf32, #tpu.memory_space<vmem>>, vector<256x64xf32>
    tpu.vector_store %arg4[%c0_5, %c0_6], %5 {strides = array<i32>} : memref<256x64xf32, #tpu.memory_space<vmem>>, vector<256x64xf32>,
    return
  }
  func.func @transform_0(%arg0: i32) -> (i32, i32) {
    %c0_i32 = arith.constant 0 : i32
    %c0_i32_0 = arith.constant 0 : i32
    return %arg0, %c0_i32 : i32, i32
  }
  func.func @transform_1(%arg0: i32) -> (i32, i32) {
    %c0_i32 = arith.constant 0 : i32
    %c0_i32_0 = arith.constant 0 : i32
    %c0_i32_1 = arith.constant 0 : i32
    return %c0_i32, %c0_i32_0 : i32, i32
  }
  func.func @transform_2(%arg0: i32) -> (i32, i32) {
    %c0_i32 = arith.constant 0 : i32
    %c0_i32_0 = arith.constant 0 : i32
    %c0_i32_1 = arith.constant 0 : i32
    return %c0_i32, %c0_i32_0 : i32, i32
  }
  func.func @transform_3(%arg0: i32) -> (i32, i32) {
    %c0_i32 = arith.constant 0 : i32
    %c0_i32_0 = arith.constant 0 : i32
    return %arg0, %c0_i32 : i32, i32
  }
}

module attributes {stable_mosaic.version = 11 : i64} {
  func.func @_mm_kernel(%arg0: i32, %arg1: memref<64x288xbf16, #tpu.memory_space<vmem>>, %arg2: memref<288x64xbf16, #tpu.memory_space<vmem>>, %arg3: memref<1x64xf32, #tpu.memory_space<vmem>>, %arg4: memref<64x64xf32, #tpu.memory_space<vmem>>) attributes {dimension_semantics = [#tpu.dimension_semantics<parallel>], iteration_bounds = array<i64: 1>, scalar_prefetch = 0 : i64, scratch_operands = 0 : i64, tpu.core_type = #tpu.core_type<tc>, window_params = [{transform_indices = @transform_0, window_bounds = array<i64: 64, 288>}, {pipeline_mode = #tpu.pipeline_mode<synchronous>, transform_indices = @transform_1, window_bounds = array<i64: 288, 64>}, {pipeline_mode = #tpu.pipeline_mode<synchronous>, transform_indices = @transform_2, window_bounds = array<i64: 1, 64>}, {transform_indices = @transform_3, window_bounds = array<i64: 64, 64>}]} {
    %c0 = arith.constant 0 : index
    %c0_0 = arith.constant 0 : index
    %0 = vector.load %arg1[%c0, %c0_0] : memref<64x288xbf16, #tpu.memory_space<vmem>>, vector<64x288xbf16>
    %c0_1 = arith.constant 0 : index
    %c0_2 = arith.constant 0 : index
    %1 = vector.load %arg2[%c0_1, %c0_2] : memref<288x64xbf16, #tpu.memory_space<vmem>>, vector<288x64xbf16>
    %cst = arith.constant dense<0.000000e+00> : vector<64x64xf32>
    %2 = tpu.matmul %0, %1, %cst {dimension_numbers = #tpu.dot_dimension_numbers<[1], [0], [0], [1], [0, 0, 1, 1], [], []>} : vector<64x288xbf16>, vector<288x64xbf16>, vector<64x64xf32> -> vector<64x64xf32>
    %c0_3 = arith.constant 0 : index
    %c0_4 = arith.constant 0 : index
    %3 = vector.load %arg3[%c0_3, %c0_4] : memref<1x64xf32, #tpu.memory_space<vmem>>, vector<1x64xf32>
    %4 = vector.broadcast %3 : vector<1x64xf32> to vector<64x64xf32>
    %5 = arith.addf %2, %4 : vector<64x64xf32>
    %cst_5 = arith.constant 0.000000e+00 : f32
    %6 = vector.broadcast %cst_5 : f32 to vector<64x64xf32>
    %7 = arith.maximumf %5, %6 : vector<64x64xf32>
    %c0_6 = arith.constant 0 : index
    %c0_7 = arith.constant 0 : index
    %8 = vector.load %arg4[%c0_6, %c0_7] : memref<64x64xf32, #tpu.memory_space<vmem>>, vector<64x64xf32>
    tpu.vector_store %arg4[%c0_6, %c0_7], %7 {strides = array<i32>} : memref<64x64xf32, #tpu.memory_space<vmem>>, vector<64x64xf32>,
    return
  }
  func.func @transform_0(%arg0: i32) -> (i32, i32) {
    %c0_i32 = arith.constant 0 : i32
    %c0_i32_0 = arith.constant 0 : i32
    return %arg0, %c0_i32 : i32, i32
  }
  func.func @transform_1(%arg0: i32) -> (i32, i32) {
    %c0_i32 = arith.constant 0 : i32
    %c0_i32_0 = arith.constant 0 : i32
    %c0_i32_1 = arith.constant 0 : i32
    return %c0_i32, %c0_i32_0 : i32, i32
  }
  func.func @transform_2(%arg0: i32) -> (i32, i32) {
    %c0_i32 = arith.constant 0 : i32
    %c0_i32_0 = arith.constant 0 : i32
    %c0_i32_1 = arith.constant 0 : i32
    return %c0_i32, %c0_i32_0 : i32, i32
  }
  func.func @transform_3(%arg0: i32) -> (i32, i32) {
    %c0_i32 = arith.constant 0 : i32
    %c0_i32_0 = arith.constant 0 : i32
    return %arg0, %c0_i32 : i32, i32
  }
}

module attributes {stable_mosaic.version = 11 : i64} {
  func.func @_mm_kernel(%arg0: i32, %arg1: memref<64x576xbf16, #tpu.memory_space<vmem>>, %arg2: memref<576x64xbf16, #tpu.memory_space<vmem>>, %arg3: memref<1x64xf32, #tpu.memory_space<vmem>>, %arg4: memref<64x64xf32, #tpu.memory_space<vmem>>) attributes {dimension_semantics = [#tpu.dimension_semantics<parallel>], iteration_bounds = array<i64: 1>, scalar_prefetch = 0 : i64, scratch_operands = 0 : i64, tpu.core_type = #tpu.core_type<tc>, window_params = [{transform_indices = @transform_0, window_bounds = array<i64: 64, 576>}, {pipeline_mode = #tpu.pipeline_mode<synchronous>, transform_indices = @transform_1, window_bounds = array<i64: 576, 64>}, {pipeline_mode = #tpu.pipeline_mode<synchronous>, transform_indices = @transform_2, window_bounds = array<i64: 1, 64>}, {transform_indices = @transform_3, window_bounds = array<i64: 64, 64>}]} {
    %c0 = arith.constant 0 : index
    %c0_0 = arith.constant 0 : index
    %0 = vector.load %arg1[%c0, %c0_0] : memref<64x576xbf16, #tpu.memory_space<vmem>>, vector<64x576xbf16>
    %c0_1 = arith.constant 0 : index
    %c0_2 = arith.constant 0 : index
    %1 = vector.load %arg2[%c0_1, %c0_2] : memref<576x64xbf16, #tpu.memory_space<vmem>>, vector<576x64xbf16>
    %cst = arith.constant dense<0.000000e+00> : vector<64x64xf32>
    %2 = tpu.matmul %0, %1, %cst {dimension_numbers = #tpu.dot_dimension_numbers<[1], [0], [0], [1], [0, 0, 1, 1], [], []>} : vector<64x576xbf16>, vector<576x64xbf16>, vector<64x64xf32> -> vector<64x64xf32>
    %c0_3 = arith.constant 0 : index
    %c0_4 = arith.constant 0 : index
    %3 = vector.load %arg3[%c0_3, %c0_4] : memref<1x64xf32, #tpu.memory_space<vmem>>, vector<1x64xf32>
    %4 = vector.broadcast %3 : vector<1x64xf32> to vector<64x64xf32>
    %5 = arith.addf %2, %4 : vector<64x64xf32>
    %c0_5 = arith.constant 0 : index
    %c0_6 = arith.constant 0 : index
    %6 = vector.load %arg4[%c0_5, %c0_6] : memref<64x64xf32, #tpu.memory_space<vmem>>, vector<64x64xf32>
    tpu.vector_store %arg4[%c0_5, %c0_6], %5 {strides = array<i32>} : memref<64x64xf32, #tpu.memory_space<vmem>>, vector<64x64xf32>,
    return
  }
  func.func @transform_0(%arg0: i32) -> (i32, i32) {
    %c0_i32 = arith.constant 0 : i32
    %c0_i32_0 = arith.constant 0 : i32
    return %arg0, %c0_i32 : i32, i32
  }
  func.func @transform_1(%arg0: i32) -> (i32, i32) {
    %c0_i32 = arith.constant 0 : i32
    %c0_i32_0 = arith.constant 0 : i32
    %c0_i32_1 = arith.constant 0 : i32
    return %c0_i32, %c0_i32_0 : i32, i32
  }
  func.func @transform_2(%arg0: i32) -> (i32, i32) {
    %c0_i32 = arith.constant 0 : i32
    %c0_i32_0 = arith.constant 0 : i32
    %c0_i32_1 = arith.constant 0 : i32
    return %c0_i32, %c0_i32_0 : i32, i32
  }
  func.func @transform_3(%arg0: i32) -> (i32, i32) {
    %c0_i32 = arith.constant 0 : i32
    %c0_i32_0 = arith.constant 0 : i32
    return %arg0, %c0_i32 : i32, i32
  }
}

module attributes {stable_mosaic.version = 11 : i64} {
  func.func @_mm_kernel(%arg0: i32, %arg1: memref<16x576xbf16, #tpu.memory_space<vmem>>, %arg2: memref<576x128xbf16, #tpu.memory_space<vmem>>, %arg3: memref<1x128xf32, #tpu.memory_space<vmem>>, %arg4: memref<16x128xf32, #tpu.memory_space<vmem>>) attributes {dimension_semantics = [#tpu.dimension_semantics<parallel>], iteration_bounds = array<i64: 1>, scalar_prefetch = 0 : i64, scratch_operands = 0 : i64, tpu.core_type = #tpu.core_type<tc>, window_params = [{transform_indices = @transform_0, window_bounds = array<i64: 16, 576>}, {pipeline_mode = #tpu.pipeline_mode<synchronous>, transform_indices = @transform_1, window_bounds = array<i64: 576, 128>}, {pipeline_mode = #tpu.pipeline_mode<synchronous>, transform_indices = @transform_2, window_bounds = array<i64: 1, 128>}, {transform_indices = @transform_3, window_bounds = array<i64: 16, 128>}]} {
    %c0 = arith.constant 0 : index
    %c0_0 = arith.constant 0 : index
    %0 = vector.load %arg1[%c0, %c0_0] : memref<16x576xbf16, #tpu.memory_space<vmem>>, vector<16x576xbf16>
    %c0_1 = arith.constant 0 : index
    %c0_2 = arith.constant 0 : index
    %1 = vector.load %arg2[%c0_1, %c0_2] : memref<576x128xbf16, #tpu.memory_space<vmem>>, vector<576x128xbf16>
    %cst = arith.constant dense<0.000000e+00> : vector<16x128xf32>
    %2 = tpu.matmul %0, %1, %cst {dimension_numbers = #tpu.dot_dimension_numbers<[1], [0], [0], [1], [0, 0, 1, 1], [], []>} : vector<16x576xbf16>, vector<576x128xbf16>, vector<16x128xf32> -> vector<16x128xf32>
    %c0_3 = arith.constant 0 : index
    %c0_4 = arith.constant 0 : index
    %3 = vector.load %arg3[%c0_3, %c0_4] : memref<1x128xf32, #tpu.memory_space<vmem>>, vector<1x128xf32>
    %4 = vector.broadcast %3 : vector<1x128xf32> to vector<16x128xf32>
    %5 = arith.addf %2, %4 : vector<16x128xf32>
    %cst_5 = arith.constant 0.000000e+00 : f32
    %6 = vector.broadcast %cst_5 : f32 to vector<16x128xf32>
    %7 = arith.maximumf %5, %6 : vector<16x128xf32>
    %c0_6 = arith.constant 0 : index
    %c0_7 = arith.constant 0 : index
    %8 = vector.load %arg4[%c0_6, %c0_7] : memref<16x128xf32, #tpu.memory_space<vmem>>, vector<16x128xf32>
    tpu.vector_store %arg4[%c0_6, %c0_7], %7 {strides = array<i32>} : memref<16x128xf32, #tpu.memory_space<vmem>>, vector<16x128xf32>,
    return
  }
  func.func @transform_0(%arg0: i32) -> (i32, i32) {
    %c0_i32 = arith.constant 0 : i32
    %c0_i32_0 = arith.constant 0 : i32
    return %arg0, %c0_i32 : i32, i32
  }
  func.func @transform_1(%arg0: i32) -> (i32, i32) {
    %c0_i32 = arith.constant 0 : i32
    %c0_i32_0 = arith.constant 0 : i32
    %c0_i32_1 = arith.constant 0 : i32
    return %c0_i32, %c0_i32_0 : i32, i32
  }
  func.func @transform_2(%arg0: i32) -> (i32, i32) {
    %c0_i32 = arith.constant 0 : i32
    %c0_i32_0 = arith.constant 0 : i32
    %c0_i32_1 = arith.constant 0 : i32
    return %c0_i32, %c0_i32_0 : i32, i32
  }
  func.func @transform_3(%arg0: i32) -> (i32, i32) {
    %c0_i32 = arith.constant 0 : i32
    %c0_i32_0 = arith.constant 0 : i32
    return %arg0, %c0_i32 : i32, i32
  }
}

module attributes {stable_mosaic.version = 11 : i64} {
  func.func @_mm_kernel(%arg0: i32, %arg1: memref<16x1152xbf16, #tpu.memory_space<vmem>>, %arg2: memref<1152x256xbf16, #tpu.memory_space<vmem>>, %arg3: memref<1x256xf32, #tpu.memory_space<vmem>>, %arg4: memref<16x256xf32, #tpu.memory_space<vmem>>) attributes {dimension_semantics = [#tpu.dimension_semantics<parallel>], iteration_bounds = array<i64: 1>, scalar_prefetch = 0 : i64, scratch_operands = 0 : i64, tpu.core_type = #tpu.core_type<tc>, window_params = [{transform_indices = @transform_0, window_bounds = array<i64: 16, 1152>}, {pipeline_mode = #tpu.pipeline_mode<synchronous>, transform_indices = @transform_1, window_bounds = array<i64: 1152, 256>}, {pipeline_mode = #tpu.pipeline_mode<synchronous>, transform_indices = @transform_2, window_bounds = array<i64: 1, 256>}, {transform_indices = @transform_3, window_bounds = array<i64: 16, 256>}]} {
    %c0 = arith.constant 0 : index
    %c0_0 = arith.constant 0 : index
    %0 = vector.load %arg1[%c0, %c0_0] : memref<16x1152xbf16, #tpu.memory_space<vmem>>, vector<16x1152xbf16>
    %c0_1 = arith.constant 0 : index
    %c0_2 = arith.constant 0 : index
    %1 = vector.load %arg2[%c0_1, %c0_2] : memref<1152x256xbf16, #tpu.memory_space<vmem>>, vector<1152x256xbf16>
    %cst = arith.constant dense<0.000000e+00> : vector<16x256xf32>
    %2 = tpu.matmul %0, %1, %cst {dimension_numbers = #tpu.dot_dimension_numbers<[1], [0], [0], [1], [0, 0, 1, 1], [], []>} : vector<16x1152xbf16>, vector<1152x256xbf16>, vector<16x256xf32> -> vector<16x256xf32>
    %c0_3 = arith.constant 0 : index
    %c0_4 = arith.constant 0 : index
    %3 = vector.load %arg3[%c0_3, %c0_4] : memref<1x256xf32, #tpu.memory_space<vmem>>, vector<1x256xf32>
    %4 = vector.broadcast %3 : vector<1x256xf32> to vector<16x256xf32>
    %5 = arith.addf %2, %4 : vector<16x256xf32>
    %cst_5 = arith.constant 0.000000e+00 : f32
    %6 = vector.broadcast %cst_5 : f32 to vector<16x256xf32>
    %7 = arith.maximumf %5, %6 : vector<16x256xf32>
    %c0_6 = arith.constant 0 : index
    %c0_7 = arith.constant 0 : index
    %8 = vector.load %arg4[%c0_6, %c0_7] : memref<16x256xf32, #tpu.memory_space<vmem>>, vector<16x256xf32>
    tpu.vector_store %arg4[%c0_6, %c0_7], %7 {strides = array<i32>} : memref<16x256xf32, #tpu.memory_space<vmem>>, vector<16x256xf32>,
    return
  }
  func.func @transform_0(%arg0: i32) -> (i32, i32) {
    %c0_i32 = arith.constant 0 : i32
    %c0_i32_0 = arith.constant 0 : i32
    return %arg0, %c0_i32 : i32, i32
  }
  func.func @transform_1(%arg0: i32) -> (i32, i32) {
    %c0_i32 = arith.constant 0 : i32
    %c0_i32_0 = arith.constant 0 : i32
    %c0_i32_1 = arith.constant 0 : i32
    return %c0_i32, %c0_i32_0 : i32, i32
  }
  func.func @transform_2(%arg0: i32) -> (i32, i32) {
    %c0_i32 = arith.constant 0 : i32
    %c0_i32_0 = arith.constant 0 : i32
    %c0_i32_1 = arith.constant 0 : i32
    return %c0_i32, %c0_i32_0 : i32, i32
  }
  func.func @transform_3(%arg0: i32) -> (i32, i32) {
    %c0_i32 = arith.constant 0 : i32
    %c0_i32_0 = arith.constant 0 : i32
    return %arg0, %c0_i32 : i32, i32
  }
}

module attributes {stable_mosaic.version = 11 : i64} {
  func.func @_mm_kernel(%arg0: i32, %arg1: memref<8x2304xbf16, #tpu.memory_space<vmem>>, %arg2: memref<2304x128xbf16, #tpu.memory_space<vmem>>, %arg3: memref<1x128xf32, #tpu.memory_space<vmem>>, %arg4: memref<8x128xf32, #tpu.memory_space<vmem>>) attributes {dimension_semantics = [#tpu.dimension_semantics<parallel>], iteration_bounds = array<i64: 1>, scalar_prefetch = 0 : i64, scratch_operands = 0 : i64, tpu.core_type = #tpu.core_type<tc>, window_params = [{transform_indices = @transform_0, window_bounds = array<i64: 8, 2304>}, {pipeline_mode = #tpu.pipeline_mode<synchronous>, transform_indices = @transform_1, window_bounds = array<i64: 2304, 128>}, {pipeline_mode = #tpu.pipeline_mode<synchronous>, transform_indices = @transform_2, window_bounds = array<i64: 1, 128>}, {transform_indices = @transform_3, window_bounds = array<i64: 8, 128>}]} {
    %c0 = arith.constant 0 : index
    %c0_0 = arith.constant 0 : index
    %0 = vector.load %arg1[%c0, %c0_0] : memref<8x2304xbf16, #tpu.memory_space<vmem>>, vector<8x2304xbf16>
    %c0_1 = arith.constant 0 : index
    %c0_2 = arith.constant 0 : index
    %1 = vector.load %arg2[%c0_1, %c0_2] : memref<2304x128xbf16, #tpu.memory_space<vmem>>, vector<2304x128xbf16>
    %cst = arith.constant dense<0.000000e+00> : vector<8x128xf32>
    %2 = tpu.matmul %0, %1, %cst {dimension_numbers = #tpu.dot_dimension_numbers<[1], [0], [0], [1], [0, 0, 1, 1], [], []>} : vector<8x2304xbf16>, vector<2304x128xbf16>, vector<8x128xf32> -> vector<8x128xf32>
    %c0_3 = arith.constant 0 : index
    %c0_4 = arith.constant 0 : index
    %3 = vector.load %arg3[%c0_3, %c0_4] : memref<1x128xf32, #tpu.memory_space<vmem>>, vector<1x128xf32>
    %4 = vector.broadcast %3 : vector<1x128xf32> to vector<8x128xf32>
    %5 = arith.addf %2, %4 : vector<8x128xf32>
    %cst_5 = arith.constant 0.000000e+00 : f32
    %6 = vector.broadcast %cst_5 : f32 to vector<8x128xf32>
    %7 = arith.maximumf %5, %6 : vector<8x128xf32>
    %c0_6 = arith.constant 0 : index
    %c0_7 = arith.constant 0 : index
    %8 = vector.load %arg4[%c0_6, %c0_7] : memref<8x128xf32, #tpu.memory_space<vmem>>, vector<8x128xf32>
    tpu.vector_store %arg4[%c0_6, %c0_7], %7 {strides = array<i32>} : memref<8x128xf32, #tpu.memory_space<vmem>>, vector<8x128xf32>,
    return
  }
  func.func @transform_0(%arg0: i32) -> (i32, i32) {
    %c0_i32 = arith.constant 0 : i32
    %c0_i32_0 = arith.constant 0 : i32
    return %arg0, %c0_i32 : i32, i32
  }
  func.func @transform_1(%arg0: i32) -> (i32, i32) {
    %c0_i32 = arith.constant 0 : i32
    %c0_i32_0 = arith.constant 0 : i32
    %c0_i32_1 = arith.constant 0 : i32
    return %c0_i32, %c0_i32_0 : i32, i32
  }
  func.func @transform_2(%arg0: i32) -> (i32, i32) {
    %c0_i32 = arith.constant 0 : i32
    %c0_i32_0 = arith.constant 0 : i32
    %c0_i32_1 = arith.constant 0 : i32
    return %c0_i32, %c0_i32_0 : i32, i32
  }
  func.func @transform_3(%arg0: i32) -> (i32, i32) {
    %c0_i32 = arith.constant 0 : i32
    %c0_i32_0 = arith.constant 0 : i32
    return %arg0, %c0_i32 : i32, i32
  }
}

module attributes {stable_mosaic.version = 11 : i64} {
  func.func @_attn_kernel(%arg0: i32, %arg1: memref<8x1152xbf16, #tpu.memory_space<vmem>>, %arg2: memref<1152x1xbf16, #tpu.memory_space<vmem>>, %arg3: memref<1x1xf32, #tpu.memory_space<vmem>>, %arg4: memref<8x128xf32, #tpu.memory_space<vmem>>, %arg5: memref<8x128xf32, #tpu.memory_space<vmem>>) attributes {dimension_semantics = [#tpu.dimension_semantics<parallel>], iteration_bounds = array<i64: 1>, scalar_prefetch = 0 : i64, scratch_operands = 0 : i64, tpu.core_type = #tpu.core_type<tc>, window_params = [{transform_indices = @transform_0, window_bounds = array<i64: 8, 1152>}, {pipeline_mode = #tpu.pipeline_mode<synchronous>, transform_indices = @transform_1, window_bounds = array<i64: 1152, 1>}, {pipeline_mode = #tpu.pipeline_mode<synchronous>, transform_indices = @transform_2, window_bounds = array<i64: 1, 1>}, {transform_indices = @transform_3, window_bounds = array<i64: 8, 128>}, {transform_indices = @transform_4, window_bounds = array<i64: 8, 128>}]} {
    %c0 = arith.constant 0 : index
    %c0_0 = arith.constant 0 : index
    %0 = vector.load %arg1[%c0, %c0_0] : memref<8x1152xbf16, #tpu.memory_space<vmem>>, vector<8x1152xbf16>
    %c0_1 = arith.constant 0 : index
    %c0_2 = arith.constant 0 : index
    %1 = vector.load %arg2[%c0_1, %c0_2] : memref<1152x1xbf16, #tpu.memory_space<vmem>>, vector<1152x1xbf16>
    %cst = arith.constant dense<0.000000e+00> : vector<8x1xf32>
    %2 = tpu.matmul %0, %1, %cst {dimension_numbers = #tpu.dot_dimension_numbers<[1], [0], [0], [1], [0, 0, 1, 1], [], []>} : vector<8x1152xbf16>, vector<1152x1xbf16>, vector<8x1xf32> -> vector<8x1xf32>
    %c0_3 = arith.constant 0 : index
    %c0_4 = arith.constant 0 : index
    %3 = vector.load %arg3[%c0_3, %c0_4] : memref<1x1xf32, #tpu.memory_space<vmem>>, vector<1x1xf32>
    %4 = vector.broadcast %3 : vector<1x1xf32> to vector<8x1xf32>
    %5 = arith.addf %2, %4 : vector<8x1xf32>
    %cst_5 = arith.constant 0.000000e+00 : f32
    %6 = vector.broadcast %cst_5 : f32 to vector<8x1xf32>
    %7 = arith.subf %6, %5 : vector<8x1xf32>
    %8 = math.exp %7 : vector<8x1xf32>
    %cst_6 = arith.constant 1.000000e+00 : f32
    %9 = vector.broadcast %cst_6 : f32 to vector<8x1xf32>
    %10 = arith.addf %9, %8 : vector<8x1xf32>
    %cst_7 = arith.constant 1.000000e+00 : f32
    %11 = vector.broadcast %cst_7 : f32 to vector<8x1xf32>
    %12 = arith.divf %11, %10 : vector<8x1xf32>
    %c0_8 = arith.constant 0 : index
    %c0_9 = arith.constant 0 : index
    %13 = vector.load %arg4[%c0_8, %c0_9] : memref<8x128xf32, #tpu.memory_space<vmem>>, vector<8x128xf32>
    %14 = math.exp %12 : vector<8x1xf32>
    %15 = vector.broadcast %14 : vector<8x1xf32> to vector<8x128xf32>
    %16 = arith.mulf %13, %15 : vector<8x128xf32>
    %17 = arith.addf %13, %16 : vector<8x128xf32>
    %c0_10 = arith.constant 0 : index
    %c0_11 = arith.constant 0 : index
    %18 = vector.load %arg5[%c0_10, %c0_11] : memref<8x128xf32, #tpu.memory_space<vmem>>, vector<8x128xf32>
    tpu.vector_store %arg5[%c0_10, %c0_11], %17 {strides = array<i32>} : memref<8x128xf32, #tpu.memory_space<vmem>>, vector<8x128xf32>,
    return
  }
  func.func @transform_0(%arg0: i32) -> (i32, i32) {
    %c0_i32 = arith.constant 0 : i32
    %c0_i32_0 = arith.constant 0 : i32
    return %arg0, %c0_i32 : i32, i32
  }
  func.func @transform_1(%arg0: i32) -> (i32, i32) {
    %c0_i32 = arith.constant 0 : i32
    %c0_i32_0 = arith.constant 0 : i32
    %c0_i32_1 = arith.constant 0 : i32
    return %c0_i32, %c0_i32_0 : i32, i32
  }
  func.func @transform_2(%arg0: i32) -> (i32, i32) {
    %c0_i32 = arith.constant 0 : i32
    %c0_i32_0 = arith.constant 0 : i32
    %c0_i32_1 = arith.constant 0 : i32
    return %c0_i32, %c0_i32_0 : i32, i32
  }
  func.func @transform_3(%arg0: i32) -> (i32, i32) {
    %c0_i32 = arith.constant 0 : i32
    %c0_i32_0 = arith.constant 0 : i32
    return %arg0, %c0_i32 : i32, i32
  }
  func.func @transform_4(%arg0: i32) -> (i32, i32) {
    %c0_i32 = arith.constant 0 : i32
    %c0_i32_0 = arith.constant 0 : i32
    return %arg0, %c0_i32 : i32, i32
  }
}

module attributes {stable_mosaic.version = 11 : i64} {
  func.func @_mm_add_kernel(%arg0: i32, %arg1: memref<8x512xbf16, #tpu.memory_space<vmem>>, %arg2: memref<512x256xbf16, #tpu.memory_space<vmem>>, %arg3: memref<1x256xf32, #tpu.memory_space<vmem>>, %arg4: memref<8x256xf32, #tpu.memory_space<vmem>>, %arg5: memref<8x256xf32, #tpu.memory_space<vmem>>) attributes {dimension_semantics = [#tpu.dimension_semantics<parallel>], iteration_bounds = array<i64: 1>, scalar_prefetch = 0 : i64, scratch_operands = 0 : i64, tpu.core_type = #tpu.core_type<tc>, window_params = [{transform_indices = @transform_0, window_bounds = array<i64: 8, 512>}, {pipeline_mode = #tpu.pipeline_mode<synchronous>, transform_indices = @transform_1, window_bounds = array<i64: 512, 256>}, {pipeline_mode = #tpu.pipeline_mode<synchronous>, transform_indices = @transform_2, window_bounds = array<i64: 1, 256>}, {transform_indices = @transform_3, window_bounds = array<i64: 8, 256>}, {transform_indices = @transform_4, window_bounds = array<i64: 8, 256>}]} {
    %c0 = arith.constant 0 : index
    %c0_0 = arith.constant 0 : index
    %0 = vector.load %arg1[%c0, %c0_0] : memref<8x512xbf16, #tpu.memory_space<vmem>>, vector<8x512xbf16>
    %c0_1 = arith.constant 0 : index
    %c0_2 = arith.constant 0 : index
    %1 = vector.load %arg2[%c0_1, %c0_2] : memref<512x256xbf16, #tpu.memory_space<vmem>>, vector<512x256xbf16>
    %cst = arith.constant dense<0.000000e+00> : vector<8x256xf32>
    %2 = tpu.matmul %0, %1, %cst {dimension_numbers = #tpu.dot_dimension_numbers<[1], [0], [0], [1], [0, 0, 1, 1], [], []>} : vector<8x512xbf16>, vector<512x256xbf16>, vector<8x256xf32> -> vector<8x256xf32>
    %c0_3 = arith.constant 0 : index
    %c0_4 = arith.constant 0 : index
    %3 = vector.load %arg3[%c0_3, %c0_4] : memref<1x256xf32, #tpu.memory_space<vmem>>, vector<1x256xf32>
    %4 = vector.broadcast %3 : vector<1x256xf32> to vector<8x256xf32>
    %5 = arith.addf %2, %4 : vector<8x256xf32>
    %c0_5 = arith.constant 0 : index
    %c0_6 = arith.constant 0 : index
    %6 = vector.load %arg4[%c0_5, %c0_6] : memref<8x256xf32, #tpu.memory_space<vmem>>, vector<8x256xf32>
    %7 = arith.addf %5, %6 : vector<8x256xf32>
    %cst_7 = arith.constant 0.000000e+00 : f32
    %8 = vector.broadcast %cst_7 : f32 to vector<8x256xf32>
    %9 = arith.maximumf %7, %8 : vector<8x256xf32>
    %c0_8 = arith.constant 0 : index
    %c0_9 = arith.constant 0 : index
    %10 = vector.load %arg5[%c0_8, %c0_9] : memref<8x256xf32, #tpu.memory_space<vmem>>, vector<8x256xf32>
    tpu.vector_store %arg5[%c0_8, %c0_9], %9 {strides = array<i32>} : memref<8x256xf32, #tpu.memory_space<vmem>>, vector<8x256xf32>,
    return
  }
  func.func @transform_0(%arg0: i32) -> (i32, i32) {
    %c0_i32 = arith.constant 0 : i32
    %c0_i32_0 = arith.constant 0 : i32
    return %arg0, %c0_i32 : i32, i32
  }
  func.func @transform_1(%arg0: i32) -> (i32, i32) {
    %c0_i32 = arith.constant 0 : i32
    %c0_i32_0 = arith.constant 0 : i32
    %c0_i32_1 = arith.constant 0 : i32
    return %c0_i32, %c0_i32_0 : i32, i32
  }
  func.func @transform_2(%arg0: i32) -> (i32, i32) {
    %c0_i32 = arith.constant 0 : i32
    %c0_i32_0 = arith.constant 0 : i32
    %c0_i32_1 = arith.constant 0 : i32
    return %c0_i32, %c0_i32_0 : i32, i32
  }
  func.func @transform_3(%arg0: i32) -> (i32, i32) {
    %c0_i32 = arith.constant 0 : i32
    %c0_i32_0 = arith.constant 0 : i32
    return %arg0, %c0_i32 : i32, i32
  }
  func.func @transform_4(%arg0: i32) -> (i32, i32) {
    %c0_i32 = arith.constant 0 : i32
    %c0_i32_0 = arith.constant 0 : i32
    return %arg0, %c0_i32 : i32, i32
  }
}

module attributes {stable_mosaic.version = 11 : i64} {
  func.func @_mm_add_kernel(%arg0: i32, %arg1: memref<32x64xbf16, #tpu.memory_space<vmem>>, %arg2: memref<64x256xbf16, #tpu.memory_space<vmem>>, %arg3: memref<1x256xf32, #tpu.memory_space<vmem>>, %arg4: memref<32x256xf32, #tpu.memory_space<vmem>>, %arg5: memref<32x256xf32, #tpu.memory_space<vmem>>) attributes {dimension_semantics = [#tpu.dimension_semantics<parallel>], iteration_bounds = array<i64: 1>, scalar_prefetch = 0 : i64, scratch_operands = 0 : i64, tpu.core_type = #tpu.core_type<tc>, window_params = [{transform_indices = @transform_0, window_bounds = array<i64: 32, 64>}, {pipeline_mode = #tpu.pipeline_mode<synchronous>, transform_indices = @transform_1, window_bounds = array<i64: 64, 256>}, {pipeline_mode = #tpu.pipeline_mode<synchronous>, transform_indices = @transform_2, window_bounds = array<i64: 1, 256>}, {transform_indices = @transform_3, window_bounds = array<i64: 32, 256>}, {transform_indices = @transform_4, window_bounds = array<i64: 32, 256>}]} {
    %c0 = arith.constant 0 : index
    %c0_0 = arith.constant 0 : index
    %0 = vector.load %arg1[%c0, %c0_0] : memref<32x64xbf16, #tpu.memory_space<vmem>>, vector<32x64xbf16>
    %c0_1 = arith.constant 0 : index
    %c0_2 = arith.constant 0 : index
    %1 = vector.load %arg2[%c0_1, %c0_2] : memref<64x256xbf16, #tpu.memory_space<vmem>>, vector<64x256xbf16>
    %cst = arith.constant dense<0.000000e+00> : vector<32x256xf32>
    %2 = tpu.matmul %0, %1, %cst {dimension_numbers = #tpu.dot_dimension_numbers<[1], [0], [0], [1], [0, 0, 1, 1], [], []>} : vector<32x64xbf16>, vector<64x256xbf16>, vector<32x256xf32> -> vector<32x256xf32>
    %c0_3 = arith.constant 0 : index
    %c0_4 = arith.constant 0 : index
    %3 = vector.load %arg3[%c0_3, %c0_4] : memref<1x256xf32, #tpu.memory_space<vmem>>, vector<1x256xf32>
    %4 = vector.broadcast %3 : vector<1x256xf32> to vector<32x256xf32>
    %5 = arith.addf %2, %4 : vector<32x256xf32>
    %c0_5 = arith.constant 0 : index
    %c0_6 = arith.constant 0 : index
    %6 = vector.load %arg4[%c0_5, %c0_6] : memref<32x256xf32, #tpu.memory_space<vmem>>, vector<32x256xf32>
    %7 = arith.addf %5, %6 : vector<32x256xf32>
    %cst_7 = arith.constant 0.000000e+00 : f32
    %8 = vector.broadcast %cst_7 : f32 to vector<32x256xf32>
    %9 = arith.maximumf %7, %8 : vector<32x256xf32>
    %c0_8 = arith.constant 0 : index
    %c0_9 = arith.constant 0 : index
    %10 = vector.load %arg5[%c0_8, %c0_9] : memref<32x256xf32, #tpu.memory_space<vmem>>, vector<32x256xf32>
    tpu.vector_store %arg5[%c0_8, %c0_9], %9 {strides = array<i32>} : memref<32x256xf32, #tpu.memory_space<vmem>>, vector<32x256xf32>,
    return
  }
  func.func @transform_0(%arg0: i32) -> (i32, i32) {
    %c0_i32 = arith.constant 0 : i32
    %c0_i32_0 = arith.constant 0 : i32
    return %arg0, %c0_i32 : i32, i32
  }
  func.func @transform_1(%arg0: i32) -> (i32, i32) {
    %c0_i32 = arith.constant 0 : i32
    %c0_i32_0 = arith.constant 0 : i32
    %c0_i32_1 = arith.constant 0 : i32
    return %c0_i32, %c0_i32_0 : i32, i32
  }
  func.func @transform_2(%arg0: i32) -> (i32, i32) {
    %c0_i32 = arith.constant 0 : i32
    %c0_i32_0 = arith.constant 0 : i32
    %c0_i32_1 = arith.constant 0 : i32
    return %c0_i32, %c0_i32_0 : i32, i32
  }
  func.func @transform_3(%arg0: i32) -> (i32, i32) {
    %c0_i32 = arith.constant 0 : i32
    %c0_i32_0 = arith.constant 0 : i32
    return %arg0, %c0_i32 : i32, i32
  }
  func.func @transform_4(%arg0: i32) -> (i32, i32) {
    %c0_i32 = arith.constant 0 : i32
    %c0_i32_0 = arith.constant 0 : i32
    return %arg0, %c0_i32 : i32, i32
  }
}

module attributes {stable_mosaic.version = 11 : i64} {
  func.func @_mm_add_kernel(%arg0: i32, %arg1: memref<128x64xbf16, #tpu.memory_space<vmem>>, %arg2: memref<64x128xbf16, #tpu.memory_space<vmem>>, %arg3: memref<1x128xf32, #tpu.memory_space<vmem>>, %arg4: memref<128x128xf32, #tpu.memory_space<vmem>>, %arg5: memref<128x128xf32, #tpu.memory_space<vmem>>) attributes {dimension_semantics = [#tpu.dimension_semantics<parallel>], iteration_bounds = array<i64: 1>, scalar_prefetch = 0 : i64, scratch_operands = 0 : i64, tpu.core_type = #tpu.core_type<tc>, window_params = [{transform_indices = @transform_0, window_bounds = array<i64: 128, 64>}, {pipeline_mode = #tpu.pipeline_mode<synchronous>, transform_indices = @transform_1, window_bounds = array<i64: 64, 128>}, {pipeline_mode = #tpu.pipeline_mode<synchronous>, transform_indices = @transform_2, window_bounds = array<i64: 1, 128>}, {transform_indices = @transform_3, window_bounds = array<i64: 128, 128>}, {transform_indices = @transform_4, window_bounds = array<i64: 128, 128>}]} {
    %c0 = arith.constant 0 : index
    %c0_0 = arith.constant 0 : index
    %0 = vector.load %arg1[%c0, %c0_0] : memref<128x64xbf16, #tpu.memory_space<vmem>>, vector<128x64xbf16>
    %c0_1 = arith.constant 0 : index
    %c0_2 = arith.constant 0 : index
    %1 = vector.load %arg2[%c0_1, %c0_2] : memref<64x128xbf16, #tpu.memory_space<vmem>>, vector<64x128xbf16>
    %cst = arith.constant dense<0.000000e+00> : vector<128x128xf32>
    %2 = tpu.matmul %0, %1, %cst {dimension_numbers = #tpu.dot_dimension_numbers<[1], [0], [0], [1], [0, 0, 1, 1], [], []>} : vector<128x64xbf16>, vector<64x128xbf16>, vector<128x128xf32> -> vector<128x128xf32>
    %c0_3 = arith.constant 0 : index
    %c0_4 = arith.constant 0 : index
    %3 = vector.load %arg3[%c0_3, %c0_4] : memref<1x128xf32, #tpu.memory_space<vmem>>, vector<1x128xf32>
    %4 = vector.broadcast %3 : vector<1x128xf32> to vector<128x128xf32>
    %5 = arith.addf %2, %4 : vector<128x128xf32>
    %c0_5 = arith.constant 0 : index
    %c0_6 = arith.constant 0 : index
    %6 = vector.load %arg4[%c0_5, %c0_6] : memref<128x128xf32, #tpu.memory_space<vmem>>, vector<128x128xf32>
    %7 = arith.addf %5, %6 : vector<128x128xf32>
    %cst_7 = arith.constant 0.000000e+00 : f32
    %8 = vector.broadcast %cst_7 : f32 to vector<128x128xf32>
    %9 = arith.maximumf %7, %8 : vector<128x128xf32>
    %c0_8 = arith.constant 0 : index
    %c0_9 = arith.constant 0 : index
    %10 = vector.load %arg5[%c0_8, %c0_9] : memref<128x128xf32, #tpu.memory_space<vmem>>, vector<128x128xf32>
    tpu.vector_store %arg5[%c0_8, %c0_9], %9 {strides = array<i32>} : memref<128x128xf32, #tpu.memory_space<vmem>>, vector<128x128xf32>,
    return
  }
  func.func @transform_0(%arg0: i32) -> (i32, i32) {
    %c0_i32 = arith.constant 0 : i32
    %c0_i32_0 = arith.constant 0 : i32
    return %arg0, %c0_i32 : i32, i32
  }
  func.func @transform_1(%arg0: i32) -> (i32, i32) {
    %c0_i32 = arith.constant 0 : i32
    %c0_i32_0 = arith.constant 0 : i32
    %c0_i32_1 = arith.constant 0 : i32
    return %c0_i32, %c0_i32_0 : i32, i32
  }
  func.func @transform_2(%arg0: i32) -> (i32, i32) {
    %c0_i32 = arith.constant 0 : i32
    %c0_i32_0 = arith.constant 0 : i32
    %c0_i32_1 = arith.constant 0 : i32
    return %c0_i32, %c0_i32_0 : i32, i32
  }
  func.func @transform_3(%arg0: i32) -> (i32, i32) {
    %c0_i32 = arith.constant 0 : i32
    %c0_i32_0 = arith.constant 0 : i32
    return %arg0, %c0_i32 : i32, i32
  }
  func.func @transform_4(%arg0: i32) -> (i32, i32) {
    %c0_i32 = arith.constant 0 : i32
    %c0_i32_0 = arith.constant 0 : i32
    return %arg0, %c0_i32 : i32, i32
  }
}

module attributes {stable_mosaic.version = 11 : i64} {
  func.func @_mm_kernel(%arg0: i32, %arg1: memref<512x32xbf16, #tpu.memory_space<vmem>>, %arg2: memref<32x12xbf16, #tpu.memory_space<vmem>>, %arg3: memref<1x12xf32, #tpu.memory_space<vmem>>, %arg4: memref<512x12xf32, #tpu.memory_space<vmem>>) attributes {dimension_semantics = [#tpu.dimension_semantics<parallel>], iteration_bounds = array<i64: 1>, scalar_prefetch = 0 : i64, scratch_operands = 0 : i64, tpu.core_type = #tpu.core_type<tc>, window_params = [{transform_indices = @transform_0, window_bounds = array<i64: 512, 32>}, {pipeline_mode = #tpu.pipeline_mode<synchronous>, transform_indices = @transform_1, window_bounds = array<i64: 32, 12>}, {pipeline_mode = #tpu.pipeline_mode<synchronous>, transform_indices = @transform_2, window_bounds = array<i64: 1, 12>}, {transform_indices = @transform_3, window_bounds = array<i64: 512, 12>}]} {
    %c0 = arith.constant 0 : index
    %c0_0 = arith.constant 0 : index
    %0 = vector.load %arg1[%c0, %c0_0] : memref<512x32xbf16, #tpu.memory_space<vmem>>, vector<512x32xbf16>
    %c0_1 = arith.constant 0 : index
    %c0_2 = arith.constant 0 : index
    %1 = vector.load %arg2[%c0_1, %c0_2] : memref<32x12xbf16, #tpu.memory_space<vmem>>, vector<32x12xbf16>
    %cst = arith.constant dense<0.000000e+00> : vector<512x12xf32>
    %2 = tpu.matmul %0, %1, %cst {dimension_numbers = #tpu.dot_dimension_numbers<[1], [0], [0], [1], [0, 0, 1, 1], [], []>} : vector<512x32xbf16>, vector<32x12xbf16>, vector<512x12xf32> -> vector<512x12xf32>
    %c0_3 = arith.constant 0 : index
    %c0_4 = arith.constant 0 : index
    %3 = vector.load %arg3[%c0_3, %c0_4] : memref<1x12xf32, #tpu.memory_space<vmem>>, vector<1x12xf32>
    %4 = vector.broadcast %3 : vector<1x12xf32> to vector<512x12xf32>
    %5 = arith.addf %2, %4 : vector<512x12xf32>
    %cst_5 = arith.constant 0.000000e+00 : f32
    %6 = vector.broadcast %cst_5 : f32 to vector<512x12xf32>
    %7 = arith.maximumf %5, %6 : vector<512x12xf32>
    %cst_6 = arith.constant 1.000000e+00 : f32
    %8 = vector.broadcast %cst_6 : f32 to vector<512x12xf32>
    %9 = arith.minimumf %7, %8 : vector<512x12xf32>
    %c0_7 = arith.constant 0 : index
    %c0_8 = arith.constant 0 : index
    %10 = vector.load %arg4[%c0_7, %c0_8] : memref<512x12xf32, #tpu.memory_space<vmem>>, vector<512x12xf32>
    tpu.vector_store %arg4[%c0_7, %c0_8], %9 {strides = array<i32>} : memref<512x12xf32, #tpu.memory_space<vmem>>, vector<512x12xf32>,
    return
  }
  func.func @transform_0(%arg0: i32) -> (i32, i32) {
    %c0_i32 = arith.constant 0 : i32
    %c0_i32_0 = arith.constant 0 : i32
    return %arg0, %c0_i32 : i32, i32
  }
  func.func @transform_1(%arg0: i32) -> (i32, i32) {
    %c0_i32 = arith.constant 0 : i32
    %c0_i32_0 = arith.constant 0 : i32
    %c0_i32_1 = arith.constant 0 : i32
    return %c0_i32, %c0_i32_0 : i32, i32
  }
  func.func @transform_2(%arg0: i32) -> (i32, i32) {
    %c0_i32 = arith.constant 0 : i32
    %c0_i32_0 = arith.constant 0 : i32
    %c0_i32_1 = arith.constant 0 : i32
    return %c0_i32, %c0_i32_0 : i32, i32
  }
  func.func @transform_3(%arg0: i32) -> (i32, i32) {
    %c0_i32 = arith.constant 0 : i32
    %c0_i32_0 = arith.constant 0 : i32
    return %arg0, %c0_i32 : i32, i32
  }
}

</mosaic_0001>

<llo_original>
// kernel: compentrans512_forward.15
$region0: #{compentrans512_forward.15}
  #allocation0 [shape = 'u32[]', space=smem, size = 0x4, offset = 0x4, fixed_abs, tag = 'smem constant byte address 0x4 - core index']
  #allocation1 [shape = 'u32[72,128]{1,0:T(1,128)}', space=vmem, size = 0x9000, scoped, tag = 'internal scratch']
  %s0 = inlined_call_operand.vmem [shape: bf16[1024,27], index: 0, kind: input, shape index: {}]
  %s1 = inlined_call_operand.vmem [shape: bf16[27,32], index: 1, kind: input, shape index: {}]
  %s2 = inlined_call_operand.vmem [shape: f32[1,32], index: 2, kind: input, shape index: {}]
  %s3 = inlined_call_operand.vmem [shape: f32[1024,32], index: 3, kind: output, shape index: {}]
  %s4 = sld [smem:[#allocation0]]
  $region45: #{compentrans512_forward.15} parent=0
    _
  %s6 = ssub.s32 1, %s4
  %s7 = scalar_select 0, %s6, %s4
  loop: start=0, step=1, limit=4
  $region2: #{compentrans512_forward.15} parent=0 // loop_pre_header
    _
  $region3: #{compentrans512_forward.15} parent=0 // loop_header
    %s9 = sphi 0, %s13
    %p10 = scmp.ge.s32.totalorder %s9, 4
    %s19 = sphi 0, %s21
    %s22 = sphi 0, %s19
    %s23 = sphi 0, %s22
    %s39 = sphi 0, %s23
    %s43 = sphi 0, %s43
    %s45 = sphi 0, %s43
    %s46 = sphi 0, %s45
    %s60 = sphi 0, %s46
    %s64 = sphi 0, %s64
    %s66 = sphi 0, %s64
    %s67 = sphi 0, %s66
    %s81 = sphi 0, %s67
    %s87 = sphi 0, %s89
    %s90 = sphi 0, %s87
    %s91 = sphi 0, %s90
    %s107 = sphi 0, %s91
  $region4: #{compentrans512_forward.15} parent=0 // loop_header_branch
    %12 = sbr.rel (%p10) target = $region8
  $region5: #{compentrans512_forward.15} parent=0 // loop_body
    %s14 = ssub.s32 %s9, 1
    %s15 = ssub.s32 %s9, 2
    %s16 = sadd.s32 %s9, 1
    %s17 = ssub.s32 %s9, %s16
    %p18 = scmp.eq.s32.totalorder %s17, 0
    %s20 = sadd.s32 %s19, 1
    %s21 = scalar_select %p18, %s19, %s20
    %p24 = pneg %p18
    %p25 = scmp.eq.s32.totalorder %s9, 1
    %p26 = por %p24, %p25
    %p27 = scmp.ne.s32.totalorder %s19, %s22
    %p28 = scmp.eq.s32.totalorder %s9, 0
    %p29 = por %p27, %p28
    %p30 = scmp.ne.s32.totalorder %s19, %s22
    %p31 = scmp.eq.s32.totalorder %s14, 1
    %p32 = por %p30, %p31
    %p33 = scmp.ne.s32.totalorder %s22, %s23
    %p34 = scmp.eq.s32.totalorder %s14, 0
    %p35 = por %p33, %p34
    %p36 = scmp.ne.s32.totalorder %s22, %s23
    %p37 = scmp.eq.s32.totalorder %s15, 1
    %p38 = por %p36, %p37
    %p40 = scmp.ne.s32.totalorder %s23, %s39
    %p41 = scmp.eq.s32.totalorder %s15, 0
    %p42 = por %p40, %p41
    %s44 = sadd.s32 %s43, 1
    %p47 = scmp.eq.s32.totalorder %s9, 1
    %p48 = scmp.ne.s32.totalorder %s43, %s45
    %p49 = scmp.eq.s32.totalorder %s9, 0
    %p50 = por %p48, %p49
    %p51 = scmp.ne.s32.totalorder %s43, %s45
    %p52 = scmp.eq.s32.totalorder %s14, 1
    %p53 = por %p51, %p52
    %p54 = scmp.ne.s32.totalorder %s45, %s46
    %p55 = scmp.eq.s32.totalorder %s14, 0
    %p56 = por %p54, %p55
    %p57 = scmp.ne.s32.totalorder %s45, %s46
    %p58 = scmp.eq.s32.totalorder %s15, 1
    %p59 = por %p57, %p58
    %p61 = scmp.ne.s32.totalorder %s46, %s60
    %p62 = scmp.eq.s32.totalorder %s15, 0
    %p63 = por %p61, %p62
    %s65 = sadd.s32 %s64, 1
    %p68 = scmp.eq.s32.totalorder %s9, 1
    %p69 = scmp.ne.s32.totalorder %s64, %s66
    %p70 = scmp.eq.s32.totalorder %s9, 0
    %p71 = por %p69, %p70
    %p72 = scmp.ne.s32.totalorder %s64, %s66
    %p73 = scmp.eq.s32.totalorder %s14, 1
    %p74 = por %p72, %p73
    %p75 = scmp.ne.s32.totalorder %s66, %s67
    %p76 = scmp.eq.s32.totalorder %s14, 0
    %p77 = por %p75, %p76
    %p78 = scmp.ne.s32.totalorder %s66, %s67
    %p79 = scmp.eq.s32.totalorder %s15, 1
    %p80 = por %p78, %p79
    %p82 = scmp.ne.s32.totalorder %s67, %s81
    %p83 = scmp.eq.s32.totalorder %s15, 0
    %p84 = por %p82, %p83
    %s85 = ssub.s32 %s9, %s16
    %p86 = scmp.eq.s32.totalorder %s85, 0
    %s88 = sadd.s32 %s87, 1
    %s89 = scalar_select %p86, %s87, %s88
    %p92 = pneg %p86
    %p93 = scmp.eq.s32.totalorder %s9, 1
    %p94 = por %p92, %p93
    %p95 = scmp.ne.s32.totalorder %s87, %s90
    %p96 = scmp.eq.s32.totalorder %s9, 0
    %p97 = por %p95, %p96
    %p98 = scmp.ne.s32.totalorder %s87, %s90
    %p99 = scmp.eq.s32.totalorder %s14, 1
    %p100 = por %p98, %p99
    %p101 = scmp.ne.s32.totalorder %s90, %s91
    %p102 = scmp.eq.s32.totalorder %s14, 0
    %p103 = por %p101, %p102
    %p104 = scmp.ne.s32.totalorder %s90, %s91
    %p105 = scmp.eq.s32.totalorder %s15, 1
    %p106 = por %p104, %p105
    %p108 = scmp.ne.s32.totalorder %s91, %s107
    %p109 = scmp.eq.s32.totalorder %s15, 0
    %p110 = por %p108, %p109
    %p111 = scmp.le.s32.totalorder 1, %s9
    %p112 = scmp.lt.s32.totalorder %s9, 3
    %p113 = pnand %p111, %p112
    %p114 = pneg %p113
    // Predicated region
    $region9: #{compentrans512_forward.15} parent=5 // pred_check
      _
    $region10: #{compentrans512_forward.15} parent=5 // pred_check_branch
      %116 = sbr.rel (%p113) target = $region12
    $region11: #{compentrans512_forward.15} parent=5 // pred_region
      %s117 = ssub.s32 %s9, 1
      // Predicated region
      $region13: #{compentrans512_forward.15} parent=11 // pred_check
        %p118 = pneg %p56
      $region14: #{compentrans512_forward.15} parent=11 // pred_check_branch
        %120 = sbr.rel (%p118) target = $region16
      $region15: #{compentrans512_forward.15} parent=11 // pred_region
        _
      $region16: #{compentrans512_forward.15} parent=11 // pred_fallthru
        _
      // Predicated region
      $region17: #{compentrans512_forward.15} parent=11 // pred_check
        %p121 = pneg %p77
      $region18: #{compentrans512_forward.15} parent=11 // pred_check_branch
        %123 = sbr.rel (%p121) target = $region20
      $region19: #{compentrans512_forward.15} parent=11 // pred_region
        _
      $region20: #{compentrans512_forward.15} parent=11 // pred_fallthru
        _
    $region12: #{compentrans512_forward.15} parent=5 // pred_fallthru
      _
    %p124 = scmp.lt.s32.totalorder %s9, 2
    // Predicated region
    $region21: #{compentrans512_forward.15} parent=5 // pred_check
      %p125 = pneg %p124
    $region22: #{compentrans512_forward.15} parent=5 // pred_check_branch
      %127 = sbr.rel (%p125) target = $region24
    $region23: #{compentrans512_forward.15} parent=5 // pred_region
      // Predicated region
      $region25: #{compentrans512_forward.15} parent=23 // pred_check
        %p128 = pneg %p29
      $region26: #{compentrans512_forward.15} parent=23 // pred_check_branch
        %130 = sbr.rel (%p128) target = $region28
      $region27: #{compentrans512_forward.15} parent=23 // pred_region
        %s131 = smul.u32 64, %s9
        %p132 = scmp.lt.s32.totalorder %s131, 127
        %s133 = scalar_select %p132, %s131, 127
        %s134 = smul.addr %s133, 4
        %s135 = scalar_lea.vmem %s0, %s134
        %s136 = smul.u32 64, %s9
      $region28: #{compentrans512_forward.15} parent=23 // pred_fallthru
        _
    $region24: #{compentrans512_forward.15} parent=5 // pred_fallthru
      _
    %p137 = scmp.le.s32.totalorder 1, %s9
    %p138 = scmp.lt.s32.totalorder %s9, 3
    %p139 = pnand %p137, %p138
    %p140 = pneg %p139
    // Predicated region
    $region29: #{compentrans512_forward.15} parent=5 // pred_check
      _
    $region30: #{compentrans512_forward.15} parent=5 // pred_check_branch
      %142 = sbr.rel (%p139) target = $region32
    $region31: #{compentrans512_forward.15} parent=5 // pred_region
      %s143 = ssub.s32 %s9, 1
      %s144 = smul.u32 64, %s14
      %p145 = scmp.lt.s32.totalorder %s144, 127
      %s146 = scalar_select %p145, %s144, 127
      %s147 = smul.addr %s146, 4
      %s148 = scalar_lea.vmem %s0, %s147
      %p149 = pneg %p35
      %p150 = pneg %p32
      %p151 = pneg %p56
      %p152 = pneg %p53
      %p153 = pneg %p77
      %p154 = pneg %p74
      %p155 = pneg %p103
      %p156 = pneg %p100
      %s157 = smul.u32 64, %s14
      %p158 = scmp.lt.s32.totalorder %s157, 127
      %s159 = scalar_select %p158, %s157, 127
      %s160 = smul.addr %s159, 8
      %s161 = scalar_lea.vmem %s3, %s160
      %s162 = smul.u32 64, %s14
      %p163 = scmp.lt.s32.totalorder %s162, 127
      %s164 = scalar_select %p163, %s162, 127
      %s165 = smul.addr %s164, 4
      %s166 = scalar_lea.vmem %s0, %s165
      %s167 = smul.u32 64, %s14
      %s168 = smul.u32 64, %s14
      %p169 = scmp.lt.s32.totalorder %s168, 127
      %s170 = scalar_select %p169, %s168, 127
      %s171 = smul.addr %s170, 8
      %s172 = scalar_lea.vmem %s3, %s171
      %s173 = smul.u32 64, %s14
      %v175 = vld [vmem:[%s166] sm:$0xf]
      %v176 = vld [vmem:[%s166 + $0x4] sm:$0xf]
      %v177 = vld [vmem:[%s166 + $0x8] sm:$0xf]
      %v178 = vld [vmem:[%s166 + $0xc] sm:$0xf]
      %v179 = vld [vmem:[%s166 + $0x10] sm:$0xf]
      %v180 = vld [vmem:[%s166 + $0x14] sm:$0xf]
      %v181 = vld [vmem:[%s166 + $0x18] sm:$0xf]
      %v182 = vld [vmem:[%s166 + $0x1c] sm:$0xf]
      %v183 = vld [vmem:[%s166 + $0x20] sm:$0xf]
      %v184 = vld [vmem:[%s166 + $0x24] sm:$0xf]
      %v185 = vld [vmem:[%s166 + $0x28] sm:$0xf]
      %v186 = vld [vmem:[%s166 + $0x2c] sm:$0xf]
      %v187 = vld [vmem:[%s166 + $0x30] sm:$0xf]
      %v188 = vld [vmem:[%s166 + $0x34] sm:$0xf]
      %v189 = vld [vmem:[%s166 + $0x38] sm:$0xf]
      %v190 = vld [vmem:[%s166 + $0x3c] sm:$0xf]
      %v191 = vld [vmem:[%s166 + $0x40] sm:$0xf]
      %v192 = vld [vmem:[%s166 + $0x44] sm:$0xf]
      %v193 = vld [vmem:[%s166 + $0x48] sm:$0xf]
      %v194 = vld [vmem:[%s166 + $0x4c] sm:$0xf]
      %v195 = vld [vmem:[%s166 + $0x50] sm:$0xf]
      %v196 = vld [vmem:[%s166 + $0x54] sm:$0xf]
      %v197 = vld [vmem:[%s166 + $0x58] sm:$0xf]
      %v198 = vld [vmem:[%s166 + $0x5c] sm:$0xf]
      %v199 = vld [vmem:[%s166 + $0x60] sm:$0xf]
      %v200 = vld [vmem:[%s166 + $0x64] sm:$0xf]
      %v201 = vld [vmem:[%s166 + $0x68] sm:$0xf]
      %v202 = vld [vmem:[%s166 + $0x6c] sm:$0xf]
      %v203 = vld [vmem:[%s166 + $0x70] sm:$0xf]
      %v204 = vld [vmem:[%s166 + $0x74] sm:$0xf]
      %v205 = vld [vmem:[%s166 + $0x78] sm:$0xf]
      %v206 = vld [vmem:[%s166 + $0x7c] sm:$0xf]
      %v207 = vld [vmem:[%s166 + $0x80] sm:$0xf]
      %v208 = vld [vmem:[%s166 + $0x84] sm:$0xf]
      %v209 = vld [vmem:[%s166 + $0x88] sm:$0xf]
      %v210 = vld [vmem:[%s166 + $0x8c] sm:$0xf]
      %v211 = vld [vmem:[%s166 + $0x90] sm:$0xf]
      %v212 = vld [vmem:[%s166 + $0x94] sm:$0xf]
      %v213 = vld [vmem:[%s166 + $0x98] sm:$0xf]
      %v214 = vld [vmem:[%s166 + $0x9c] sm:$0xf]
      %v215 = vld [vmem:[%s166 + $0xa0] sm:$0xf]
      %v216 = vld [vmem:[%s166 + $0xa4] sm:$0xf]
      %v217 = vld [vmem:[%s166 + $0xa8] sm:$0xf]
      %v218 = vld [vmem:[%s166 + $0xac] sm:$0xf]
      %v219 = vld [vmem:[%s166 + $0xb0] sm:$0xf]
      %v220 = vld [vmem:[%s166 + $0xb4] sm:$0xf]
      %v221 = vld [vmem:[%s166 + $0xb8] sm:$0xf]
      %v222 = vld [vmem:[%s166 + $0xbc] sm:$0xf]
      %v223 = vld [vmem:[%s166 + $0xc0] sm:$0xf]
      %v224 = vld [vmem:[%s166 + $0xc4] sm:$0xf]
      %v225 = vld [vmem:[%s166 + $0xc8] sm:$0xf]
      %v226 = vld [vmem:[%s166 + $0xcc] sm:$0xf]
      %v227 = vld [vmem:[%s166 + $0xd0] sm:$0xf]
      %v228 = vld [vmem:[%s166 + $0xd4] sm:$0xf]
      %v229 = vld [vmem:[%s166 + $0xd8] sm:$0xf]
      %v230 = vld [vmem:[%s166 + $0xdc] sm:$0xf]
      %v231 = vld [vmem:[%s166 + $0xe0] sm:$0xf]
      %v232 = vld [vmem:[%s166 + $0xe4] sm:$0xf]
      %v233 = vld [vmem:[%s166 + $0xe8] sm:$0xf]
      %v234 = vld [vmem:[%s166 + $0xec] sm:$0xf]
      %v235 = vld [vmem:[%s166 + $0xf0] sm:$0xf]
      %v236 = vld [vmem:[%s166 + $0xf4] sm:$0xf]
      %v237 = vld [vmem:[%s166 + $0xf8] sm:$0xf]
      %v238 = vld [vmem:[%s166 + $0xfc] sm:$0xf]
      %v239 = vld [vmem:[%s1] sm:$0xf]
      %v240 = vld [vmem:[%s1 + $0x4] sm:$0xf]
      %v241 = vld [vmem:[%s1 + $0x8] sm:$0xf]
      %v242 = vld [vmem:[%s1 + $0xc] sm:$0x3]
      %v243 = vld [vmem:[%s2] sm:$0x1]
      %v245 = vperm.slane %v243, 0
      %v311 = vunpack.c.l.b16 %v175
      %v312 = vunpack.c.l.b16 %v176
      %v313 = vunpack.c.l.b16 %v177
      %v314 = vunpack.c.l.b16 %v178
      %v315 = vunpack.c.l.b16 %v179
      %v316 = vunpack.c.l.b16 %v180
      %v317 = vunpack.c.l.b16 %v181
      %v318 = vunpack.c.l.b16 %v182
      %v319 = vunpack.c.l.b16 %v183
      %v320 = vunpack.c.l.b16 %v184
      %v321 = vunpack.c.l.b16 %v185
      %v322 = vunpack.c.l.b16 %v186
      %v323 = vunpack.c.l.b16 %v187
      %v324 = vunpack.c.l.b16 %v188
      %v325 = vunpack.c.l.b16 %v189
      %v326 = vunpack.c.l.b16 %v190
      %v327 = vunpack.c.l.b16 %v191
      %v328 = vunpack.c.l.b16 %v192
      %v329 = vunpack.c.l.b16 %v193
      %v330 = vunpack.c.l.b16 %v194
      %v331 = vunpack.c.l.b16 %v195
      %v332 = vunpack.c.l.b16 %v196
      %v333 = vunpack.c.l.b16 %v197
      %v334 = vunpack.c.l.b16 %v198
      %v335 = vunpack.c.l.b16 %v199
      %v336 = vunpack.c.l.b16 %v200
      %v337 = vunpack.c.l.b16 %v201
      %v338 = vunpack.c.l.b16 %v202
      %v339 = vunpack.c.l.b16 %v203
      %v340 = vunpack.c.l.b16 %v204
      %v341 = vunpack.c.l.b16 %v205
      %v342 = vunpack.c.l.b16 %v206
      %v343 = vunpack.c.l.b16 %v207
      %v344 = vunpack.c.l.b16 %v208
      %v345 = vunpack.c.l.b16 %v209
      %v346 = vunpack.c.l.b16 %v210
      %v347 = vunpack.c.l.b16 %v211
      %v348 = vunpack.c.l.b16 %v212
      %v349 = vunpack.c.l.b16 %v213
      %v350 = vunpack.c.l.b16 %v214
      %v351 = vunpack.c.l.b16 %v215
      %v352 = vunpack.c.l.b16 %v216
      %v353 = vunpack.c.l.b16 %v217
      %v354 = vunpack.c.l.b16 %v218
      %v355 = vunpack.c.l.b16 %v219
      %v356 = vunpack.c.l.b16 %v220
      %v357 = vunpack.c.l.b16 %v221
      %v358 = vunpack.c.l.b16 %v222
      %v359 = vunpack.c.l.b16 %v223
      %v360 = vunpack.c.l.b16 %v224
      %v361 = vunpack.c.l.b16 %v225
      %v362 = vunpack.c.l.b16 %v226
      %v363 = vunpack.c.l.b16 %v227
      %v364 = vunpack.c.l.b16 %v228
      %v365 = vunpack.c.l.b16 %v229
      %v366 = vunpack.c.l.b16 %v230
      %v367 = vunpack.c.l.b16 %v231
      %v368 = vunpack.c.l.b16 %v232
      %v369 = vunpack.c.l.b16 %v233
      %v370 = vunpack.c.l.b16 %v234
      %v371 = vunpack.c.l.b16 %v235
      %v372 = vunpack.c.l.b16 %v236
      %v373 = vunpack.c.l.b16 %v237
      %v374 = vunpack.c.l.b16 %v238
      %v375 = vpack.c.b16 %v312, %v311
      %v376 = vpack.c.b16 %v314, %v313
      %v377 = vpack.c.b16 %v316, %v315
      %v378 = vpack.c.b16 %v318, %v317
      %v379 = vpack.c.b16 %v320, %v319
      %v380 = vpack.c.b16 %v322, %v321
      %v381 = vpack.c.b16 %v324, %v323
      %v382 = vpack.c.b16 %v326, %v325
      %v383 = vpack.c.b16 %v328, %v327
      %v384 = vpack.c.b16 %v330, %v329
      %v385 = vpack.c.b16 %v332, %v331
      %v386 = vpack.c.b16 %v334, %v333
      %v387 = vpack.c.b16 %v336, %v335
      %v388 = vpack.c.b16 %v338, %v337
      %v389 = vpack.c.b16 %v340, %v339
      %v390 = vpack.c.b16 %v342, %v341
      %v391 = vpack.c.b16 %v344, %v343
      %v392 = vpack.c.b16 %v346, %v345
      %v393 = vpack.c.b16 %v348, %v347
      %v394 = vpack.c.b16 %v350, %v349
      %v395 = vpack.c.b16 %v352, %v351
      %v396 = vpack.c.b16 %v354, %v353
      %v397 = vpack.c.b16 %v356, %v355
      %v398 = vpack.c.b16 %v358, %v357
      %v399 = vpack.c.b16 %v360, %v359
      %v400 = vpack.c.b16 %v362, %v361
      %v401 = vpack.c.b16 %v364, %v363
      %v402 = vpack.c.b16 %v366, %v365
      %v403 = vpack.c.b16 %v368, %v367
      %v404 = vpack.c.b16 %v370, %v369
      %v405 = vpack.c.b16 %v372, %v371
      %v406 = vpack.c.b16 %v374, %v373
      %v411 = vunpack.c.l.b16 %v239
      %v412 = vunpack.c.l.b16 %v240
      %v413 = vunpack.c.l.b16 %v241
      %v414 = vunpack.c.l.b16 %v242
      %v415 = vpack.c.b16 %v412, %v411
      %v416 = vpack.c.b16 %v414, %v413
      %vm418 = vcmask 220160
      %v420 = vsel %vm418, %v375, 0
      %v423 = vsel %vm418, %v376, 0
      %v426 = vsel %vm418, %v377, 0
      %v429 = vsel %vm418, %v378, 0
      %v432 = vsel %vm418, %v379, 0
      %v435 = vsel %vm418, %v380, 0
      %v438 = vsel %vm418, %v381, 0
      %v441 = vsel %vm418, %v382, 0
      %v444 = vsel %vm418, %v383, 0
      %v447 = vsel %vm418, %v384, 0
      %v450 = vsel %vm418, %v385, 0
      %v453 = vsel %vm418, %v386, 0
      %v456 = vsel %vm418, %v387, 0
      %v459 = vsel %vm418, %v388, 0
      %v462 = vsel %vm418, %v389, 0
      %v465 = vsel %vm418, %v390, 0
      %v468 = vsel %vm418, %v391, 0
      %v471 = vsel %vm418, %v392, 0
      %v474 = vsel %vm418, %v393, 0
      %v477 = vsel %vm418, %v394, 0
      %v480 = vsel %vm418, %v395, 0
      %v483 = vsel %vm418, %v396, 0
      %v486 = vsel %vm418, %v397, 0
      %v489 = vsel %vm418, %v398, 0
      %v492 = vsel %vm418, %v399, 0
      %v495 = vsel %vm418, %v400, 0
      %v498 = vsel %vm418, %v401, 0
      %v501 = vsel %vm418, %v402, 0
      %v504 = vsel %vm418, %v403, 0
      %v507 = vsel %vm418, %v404, 0
      %v510 = vsel %vm418, %v405, 0
      %v513 = vsel %vm418, %v406, 0
      %vm515 = vcmask 1044480
      %vm516 = vcmask 1045504
      %v517 = vsel %vm515, 4294967295, 65535
      %v518 = vsel %vm516, %v517, 0
      %v520 = vand.u32 %v416, %v518
      %522 = vmatpush.bf16.msra.mxu0 0
      %523 = vmatpush.bf16.msra.mxu0 0
      %524 = vmatpush.bf16.msra.mxu0 0
      %525 = vmatpush.bf16.msra.mxu0 0
      %526 = vmatpush.bf16.msra.mxu0 0
      %527 = vmatpush.bf16.msra.mxu0 0
      %528 = vmatpush.bf16.msra.mxu0 %v520
      %529 = vmatpush.bf16.msra.mxu0 %v415
      %530 = vmatmul.bf16.gmra.mxu0 %v420
      %v531 = vpop.f32.mrf.mxu0
      %v532 = vadd.f32 %v245, %v531
      %v533 = vpop.f32.mrf.mxu0
      %v534 = vadd.f32 %v245, %v533
      %535 = vmatmul.bf16.gmra.mxu0 %v423
      %v536 = vpop.f32.mrf.mxu0
      %v537 = vadd.f32 %v245, %v536
      %v538 = vpop.f32.mrf.mxu0
      %v539 = vadd.f32 %v245, %v538
      %540 = vmatmul.bf16.gmra.mxu0 %v426
      %v541 = vpop.f32.mrf.mxu0
      %v542 = vadd.f32 %v245, %v541
      %v543 = vpop.f32.mrf.mxu0
      %v544 = vadd.f32 %v245, %v543
      %545 = vmatmul.bf16.gmra.mxu0 %v429
      %v546 = vpop.f32.mrf.mxu0
      %v547 = vadd.f32 %v245, %v546
      %v548 = vpop.f32.mrf.mxu0
      %v549 = vadd.f32 %v245, %v548
      %550 = vmatmul.bf16.gmra.mxu0 %v432
      %v551 = vpop.f32.mrf.mxu0
      %v552 = vadd.f32 %v245, %v551
      %v553 = vpop.f32.mrf.mxu0
      %v554 = vadd.f32 %v245, %v553
      %555 = vmatmul.bf16.gmra.mxu0 %v435
      %v556 = vpop.f32.mrf.mxu0
      %v557 = vadd.f32 %v245, %v556
      %v558 = vpop.f32.mrf.mxu0
      %v559 = vadd.f32 %v245, %v558
      %560 = vmatmul.bf16.gmra.mxu0 %v438
      %v561 = vpop.f32.mrf.mxu0
      %v562 = vadd.f32 %v245, %v561
      %v563 = vpop.f32.mrf.mxu0
      %v564 = vadd.f32 %v245, %v563
      %565 = vmatmul.bf16.gmra.mxu0 %v441
      %v566 = vpop.f32.mrf.mxu0
      %v567 = vadd.f32 %v245, %v566
      %v568 = vpop.f32.mrf.mxu0
      %v569 = vadd.f32 %v245, %v568
      %570 = vmatmul.bf16.gmra.mxu0 %v444
      %v571 = vpop.f32.mrf.mxu0
      %v572 = vadd.f32 %v245, %v571
      %v573 = vpop.f32.mrf.mxu0
      %v574 = vadd.f32 %v245, %v573
      %575 = vmatmul.bf16.gmra.mxu0 %v447
      %v576 = vpop.f32.mrf.mxu0
      %v577 = vadd.f32 %v245, %v576
      %v578 = vpop.f32.mrf.mxu0
      %v579 = vadd.f32 %v245, %v578
      %580 = vmatmul.bf16.gmra.mxu0 %v450
      %v581 = vpop.f32.mrf.mxu0
      %v582 = vadd.f32 %v245, %v581
      %v583 = vpop.f32.mrf.mxu0
      %v584 = vadd.f32 %v245, %v583
      %585 = vmatmul.bf16.gmra.mxu0 %v453
      %v586 = vpop.f32.mrf.mxu0
      %v587 = vadd.f32 %v245, %v586
      %v588 = vpop.f32.mrf.mxu0
      %v589 = vadd.f32 %v245, %v588
      %590 = vmatmul.bf16.gmra.mxu0 %v456
      %v591 = vpop.f32.mrf.mxu0
      %v592 = vadd.f32 %v245, %v591
      %v593 = vpop.f32.mrf.mxu0
      %v594 = vadd.f32 %v245, %v593
      %595 = vmatmul.bf16.gmra.mxu0 %v459
      %v596 = vpop.f32.mrf.mxu0
      %v597 = vadd.f32 %v245, %v596
      %v598 = vpop.f32.mrf.mxu0
      %v599 = vadd.f32 %v245, %v598
      %600 = vmatmul.bf16.gmra.mxu0 %v462
      %v601 = vpop.f32.mrf.mxu0
      %v602 = vadd.f32 %v245, %v601
      %v603 = vpop.f32.mrf.mxu0
      %v604 = vadd.f32 %v245, %v603
      %605 = vmatmul.bf16.gmra.mxu0 %v465
      %v606 = vpop.f32.mrf.mxu0
      %v607 = vadd.f32 %v245, %v606
      %v608 = vpop.f32.mrf.mxu0
      %v609 = vadd.f32 %v245, %v608
      %610 = vmatmul.bf16.gmra.mxu0 %v468
      %v611 = vpop.f32.mrf.mxu0
      %v612 = vadd.f32 %v245, %v611
      %v613 = vpop.f32.mrf.mxu0
      %v614 = vadd.f32 %v245, %v613
      %615 = vmatmul.bf16.gmra.mxu0 %v471
      %v616 = vpop.f32.mrf.mxu0
      %v617 = vadd.f32 %v245, %v616
      %v618 = vpop.f32.mrf.mxu0
      %v619 = vadd.f32 %v245, %v618
      %620 = vmatmul.bf16.gmra.mxu0 %v474
      %v621 = vpop.f32.mrf.mxu0
      %v622 = vadd.f32 %v245, %v621
      %v623 = vpop.f32.mrf.mxu0
      %v624 = vadd.f32 %v245, %v623
      %625 = vmatmul.bf16.gmra.mxu0 %v477
      %v626 = vpop.f32.mrf.mxu0
      %v627 = vadd.f32 %v245, %v626
      %v628 = vpop.f32.mrf.mxu0
      %v629 = vadd.f32 %v245, %v628
      %630 = vmatmul.bf16.gmra.mxu0 %v480
      %v631 = vpop.f32.mrf.mxu0
      %v632 = vadd.f32 %v245, %v631
      %v633 = vpop.f32.mrf.mxu0
      %v634 = vadd.f32 %v245, %v633
      %635 = vmatmul.bf16.gmra.mxu0 %v483
      %v636 = vpop.f32.mrf.mxu0
      %v637 = vadd.f32 %v245, %v636
      %v638 = vpop.f32.mrf.mxu0
      %v639 = vadd.f32 %v245, %v638
      %640 = vmatmul.bf16.gmra.mxu0 %v486
      %v641 = vpop.f32.mrf.mxu0
      %v642 = vadd.f32 %v245, %v641
      %v643 = vpop.f32.mrf.mxu0
      %v644 = vadd.f32 %v245, %v643
      %645 = vmatmul.bf16.gmra.mxu0 %v489
      %v646 = vpop.f32.mrf.mxu0
      %v647 = vadd.f32 %v245, %v646
      %v648 = vpop.f32.mrf.mxu0
      %v649 = vadd.f32 %v245, %v648
      %650 = vmatmul.bf16.gmra.mxu0 %v492
      %v651 = vpop.f32.mrf.mxu0
      %v652 = vadd.f32 %v245, %v651
      %v653 = vpop.f32.mrf.mxu0
      %v654 = vadd.f32 %v245, %v653
      %655 = vmatmul.bf16.gmra.mxu0 %v495
      %v656 = vpop.f32.mrf.mxu0
      %v657 = vadd.f32 %v245, %v656
      %v658 = vpop.f32.mrf.mxu0
      %v659 = vadd.f32 %v245, %v658
      %660 = vmatmul.bf16.gmra.mxu0 %v498
      %v661 = vpop.f32.mrf.mxu0
      %v662 = vadd.f32 %v245, %v661
      %v663 = vpop.f32.mrf.mxu0
      %v664 = vadd.f32 %v245, %v663
      %665 = vmatmul.bf16.gmra.mxu0 %v501
      %v666 = vpop.f32.mrf.mxu0
      %v667 = vadd.f32 %v245, %v666
      %v668 = vpop.f32.mrf.mxu0
      %v669 = vadd.f32 %v245, %v668
      %670 = vmatmul.bf16.gmra.mxu0 %v504
      %v671 = vpop.f32.mrf.mxu0
      %v672 = vadd.f32 %v245, %v671
      %v673 = vpop.f32.mrf.mxu0
      %v674 = vadd.f32 %v245, %v673
      %675 = vmatmul.bf16.gmra.mxu0 %v507
      %v676 = vpop.f32.mrf.mxu0
      %v677 = vadd.f32 %v245, %v676
      %v678 = vpop.f32.mrf.mxu0
      %v679 = vadd.f32 %v245, %v678
      %680 = vmatmul.bf16.gmra.mxu0 %v510
      %v681 = vpop.f32.mrf.mxu0
      %v682 = vadd.f32 %v245, %v681
      %v683 = vpop.f32.mrf.mxu0
      %v684 = vadd.f32 %v245, %v683
      %685 = vmatmul.bf16.gmra.mxu0 %v513
      %v686 = vpop.f32.mrf.mxu0
      %v687 = vadd.f32 %v245, %v686
      %v688 = vpop.f32.mrf.mxu0
      %v689 = vadd.f32 %v245, %v688
      %690 = vdwg.mxu0
      %v691 = vmax.f32 %v532, 0.0
      %v692 = vmax.f32 %v534, 0.0
      %v693 = vmax.f32 %v537, 0.0
      %v694 = vmax.f32 %v539, 0.0
      %v695 = vmax.f32 %v542, 0.0
      %v696 = vmax.f32 %v544, 0.0
      %v697 = vmax.f32 %v547, 0.0
      %v698 = vmax.f32 %v549, 0.0
      %v699 = vmax.f32 %v552, 0.0
      %v700 = vmax.f32 %v554, 0.0
      %v701 = vmax.f32 %v557, 0.0
      %v702 = vmax.f32 %v559, 0.0
      %v703 = vmax.f32 %v562, 0.0
      %v704 = vmax.f32 %v564, 0.0
      %v705 = vmax.f32 %v567, 0.0
      %v706 = vmax.f32 %v569, 0.0
      %v707 = vmax.f32 %v572, 0.0
      %v708 = vmax.f32 %v574, 0.0
      %v709 = vmax.f32 %v577, 0.0
      %v710 = vmax.f32 %v579, 0.0
      %v711 = vmax.f32 %v582, 0.0
      %v712 = vmax.f32 %v584, 0.0
      %v713 = vmax.f32 %v587, 0.0
      %v714 = vmax.f32 %v589, 0.0
      %v715 = vmax.f32 %v592, 0.0
      %v716 = vmax.f32 %v594, 0.0
      %v717 = vmax.f32 %v597, 0.0
      %v718 = vmax.f32 %v599, 0.0
      %v719 = vmax.f32 %v602, 0.0
      %v720 = vmax.f32 %v604, 0.0
      %v721 = vmax.f32 %v607, 0.0
      %v722 = vmax.f32 %v609, 0.0
      %v723 = vmax.f32 %v612, 0.0
      %v724 = vmax.f32 %v614, 0.0
      %v725 = vmax.f32 %v617, 0.0
      %v726 = vmax.f32 %v619, 0.0
      %v727 = vmax.f32 %v622, 0.0
      %v728 = vmax.f32 %v624, 0.0
      %v729 = vmax.f32 %v627, 0.0
      %v730 = vmax.f32 %v629, 0.0
      %v731 = vmax.f32 %v632, 0.0
      %v732 = vmax.f32 %v634, 0.0
      %v733 = vmax.f32 %v637, 0.0
      %v734 = vmax.f32 %v639, 0.0
      %v735 = vmax.f32 %v642, 0.0
      %v736 = vmax.f32 %v644, 0.0
      %v737 = vmax.f32 %v647, 0.0
      %v738 = vmax.f32 %v649, 0.0
      %v739 = vmax.f32 %v652, 0.0
      %v740 = vmax.f32 %v654, 0.0
      %v741 = vmax.f32 %v657, 0.0
      %v742 = vmax.f32 %v659, 0.0
      %v743 = vmax.f32 %v662, 0.0
      %v744 = vmax.f32 %v664, 0.0
      %v745 = vmax.f32 %v667, 0.0
      %v746 = vmax.f32 %v669, 0.0
      %v747 = vmax.f32 %v672, 0.0
      %v748 = vmax.f32 %v674, 0.0
      %v749 = vmax.f32 %v677, 0.0
      %v750 = vmax.f32 %v679, 0.0
      %v751 = vmax.f32 %v682, 0.0
      %v752 = vmax.f32 %v684, 0.0
      %v753 = vmax.f32 %v687, 0.0
      %v754 = vmax.f32 %v689, 0.0
      %vm755 = vcmask 261120
      %756 = vst.msk [vmem:[%s172] sm:$0xff] %vm755, %v691
      %757 = vst.msk [vmem:[%s172 + $0x8] sm:$0xff] %vm755, %v692
      %758 = vst.msk [vmem:[%s172 + $0x10] sm:$0xff] %vm755, %v693
      %759 = vst.msk [vmem:[%s172 + $0x18] sm:$0xff] %vm755, %v694
      %760 = vst.msk [vmem:[%s172 + $0x20] sm:$0xff] %vm755, %v695
      %761 = vst.msk [vmem:[%s172 + $0x28] sm:$0xff] %vm755, %v696
      %762 = vst.msk [vmem:[%s172 + $0x30] sm:$0xff] %vm755, %v697
      %763 = vst.msk [vmem:[%s172 + $0x38] sm:$0xff] %vm755, %v698
      %764 = vst.msk [vmem:[%s172 + $0x40] sm:$0xff] %vm755, %v699
      %765 = vst.msk [vmem:[%s172 + $0x48] sm:$0xff] %vm755, %v700
      %766 = vst.msk [vmem:[%s172 + $0x50] sm:$0xff] %vm755, %v701
      %767 = vst.msk [vmem:[%s172 + $0x58] sm:$0xff] %vm755, %v702
      %768 = vst.msk [vmem:[%s172 + $0x60] sm:$0xff] %vm755, %v703
      %769 = vst.msk [vmem:[%s172 + $0x68] sm:$0xff] %vm755, %v704
      %770 = vst.msk [vmem:[%s172 + $0x70] sm:$0xff] %vm755, %v705
      %771 = vst.msk [vmem:[%s172 + $0x78] sm:$0xff] %vm755, %v706
      %772 = vst.msk [vmem:[%s172 + $0x80] sm:$0xff] %vm755, %v707
      %773 = vst.msk [vmem:[%s172 + $0x88] sm:$0xff] %vm755, %v708
      %774 = vst.msk [vmem:[%s172 + $0x90] sm:$0xff] %vm755, %v709
      %775 = vst.msk [vmem:[%s172 + $0x98] sm:$0xff] %vm755, %v710
      %776 = vst.msk [vmem:[%s172 + $0xa0] sm:$0xff] %vm755, %v711
      %777 = vst.msk [vmem:[%s172 + $0xa8] sm:$0xff] %vm755, %v712
      %778 = vst.msk [vmem:[%s172 + $0xb0] sm:$0xff] %vm755, %v713
      %779 = vst.msk [vmem:[%s172 + $0xb8] sm:$0xff] %vm755, %v714
      %780 = vst.msk [vmem:[%s172 + $0xc0] sm:$0xff] %vm755, %v715
      %781 = vst.msk [vmem:[%s172 + $0xc8] sm:$0xff] %vm755, %v716
      %782 = vst.msk [vmem:[%s172 + $0xd0] sm:$0xff] %vm755, %v717
      %783 = vst.msk [vmem:[%s172 + $0xd8] sm:$0xff] %vm755, %v718
      %784 = vst.msk [vmem:[%s172 + $0xe0] sm:$0xff] %vm755, %v719
      %785 = vst.msk [vmem:[%s172 + $0xe8] sm:$0xff] %vm755, %v720
      %786 = vst.msk [vmem:[%s172 + $0xf0] sm:$0xff] %vm755, %v721
      %787 = vst.msk [vmem:[%s172 + $0xf8] sm:$0xff] %vm755, %v722
      %788 = vst.msk [vmem:[%s172 + $0x100] sm:$0xff] %vm755, %v723
      %789 = vst.msk [vmem:[%s172 + $0x108] sm:$0xff] %vm755, %v724
      %790 = vst.msk [vmem:[%s172 + $0x110] sm:$0xff] %vm755, %v725
      %791 = vst.msk [vmem:[%s172 + $0x118] sm:$0xff] %vm755, %v726
      %792 = vst.msk [vmem:[%s172 + $0x120] sm:$0xff] %vm755, %v727
      %793 = vst.msk [vmem:[%s172 + $0x128] sm:$0xff] %vm755, %v728
      %794 = vst.msk [vmem:[%s172 + $0x130] sm:$0xff] %vm755, %v729
      %795 = vst.msk [vmem:[%s172 + $0x138] sm:$0xff] %vm755, %v730
      %796 = vst.msk [vmem:[%s172 + $0x140] sm:$0xff] %vm755, %v731
      %797 = vst.msk [vmem:[%s172 + $0x148] sm:$0xff] %vm755, %v732
      %798 = vst.msk [vmem:[%s172 + $0x150] sm:$0xff] %vm755, %v733
      %799 = vst.msk [vmem:[%s172 + $0x158] sm:$0xff] %vm755, %v734
      %800 = vst.msk [vmem:[%s172 + $0x160] sm:$0xff] %vm755, %v735
      %801 = vst.msk [vmem:[%s172 + $0x168] sm:$0xff] %vm755, %v736
      %802 = vst.msk [vmem:[%s172 + $0x170] sm:$0xff] %vm755, %v737
      %803 = vst.msk [vmem:[%s172 + $0x178] sm:$0xff] %vm755, %v738
      %804 = vst.msk [vmem:[%s172 + $0x180] sm:$0xff] %vm755, %v739
      %805 = vst.msk [vmem:[%s172 + $0x188] sm:$0xff] %vm755, %v740
      %806 = vst.msk [vmem:[%s172 + $0x190] sm:$0xff] %vm755, %v741
      %807 = vst.msk [vmem:[%s172 + $0x198] sm:$0xff] %vm755, %v742
      %808 = vst.msk [vmem:[%s172 + $0x1a0] sm:$0xff] %vm755, %v743
      %809 = vst.msk [vmem:[%s172 + $0x1a8] sm:$0xff] %vm755, %v744
      %810 = vst.msk [vmem:[%s172 + $0x1b0] sm:$0xff] %vm755, %v745
      %811 = vst.msk [vmem:[%s172 + $0x1b8] sm:$0xff] %vm755, %v746
      %812 = vst.msk [vmem:[%s172 + $0x1c0] sm:$0xff] %vm755, %v747
      %813 = vst.msk [vmem:[%s172 + $0x1c8] sm:$0xff] %vm755, %v748
      %814 = vst.msk [vmem:[%s172 + $0x1d0] sm:$0xff] %vm755, %v749
      %815 = vst.msk [vmem:[%s172 + $0x1d8] sm:$0xff] %vm755, %v750
      %816 = vst.msk [vmem:[%s172 + $0x1e0] sm:$0xff] %vm755, %v751
      %817 = vst.msk [vmem:[%s172 + $0x1e8] sm:$0xff] %vm755, %v752
      %818 = vst.msk [vmem:[%s172 + $0x1f0] sm:$0xff] %vm755, %v753
      %819 = vst.msk [vmem:[%s172 + $0x1f8] sm:$0xff] %vm755, %v754
      %s820 = smul.u32 64, %s14
      %p821 = scmp.lt.s32.totalorder %s820, 127
      %s822 = scalar_select %p821, %s820, 127
      %s823 = smul.addr %s822, 8
      %s824 = scalar_lea.vmem %s3, %s823
      // Predicated region
      $region33: #{compentrans512_forward.15} parent=31 // pred_check
        %p825 = pneg %p100
      $region34: #{compentrans512_forward.15} parent=31 // pred_check_branch
        %827 = sbr.rel (%p825) target = $region36
      $region35: #{compentrans512_forward.15} parent=31 // pred_region
        %s828 = smul.u32 64, %s14
      $region36: #{compentrans512_forward.15} parent=31 // pred_fallthru
        _
    $region32: #{compentrans512_forward.15} parent=5 // pred_fallthru
      _
    %p829 = scmp.le.s32.totalorder 2, %s9
    // Predicated region
    $region37: #{compentrans512_forward.15} parent=5 // pred_check
      %p830 = pneg %p829
    $region38: #{compentrans512_forward.15} parent=5 // pred_check_branch
      %832 = sbr.rel (%p830) target = $region40
    $region39: #{compentrans512_forward.15} parent=5 // pred_region
      %s833 = ssub.s32 %s9, 2
      // Predicated region
      $region41: #{compentrans512_forward.15} parent=39 // pred_check
        %p834 = pneg %p106
      $region42: #{compentrans512_forward.15} parent=39 // pred_check_branch
        %836 = sbr.rel (%p834) target = $region44
      $region43: #{compentrans512_forward.15} parent=39 // pred_region
        %s837 = smul.u32 64, %s15
        %p838 = scmp.lt.s32.totalorder %s837, 127
        %s839 = scalar_select %p838, %s837, 127
        %s840 = smul.addr %s839, 8
        %s841 = scalar_lea.vmem %s3, %s840
      $region44: #{compentrans512_forward.15} parent=39 // pred_fallthru
        _
    $region40: #{compentrans512_forward.15} parent=5 // pred_fallthru
      _
  $region6: #{compentrans512_forward.15} parent=0 // loop_footer
    %s13 = sadd.s32 1, %s9
  $region7: #{compentrans512_forward.15} parent=0 // loop_footer_branch
    %8 = sbr.rel target = $region3
  $region8: #{compentrans512_forward.15} parent=0 // loop_exit
    _

// kernel: compentrans512_forward.16
$region0: #{compentrans512_forward.16}
  #allocation0 [shape = 'u32[]', space=smem, size = 0x4, offset = 0x4, fixed_abs, tag = 'smem constant byte address 0x4 - core index']
  #allocation1 [shape = 'u32[72,128]{1,0:T(1,128)}', space=vmem, size = 0x9000, scoped, tag = 'internal scratch']
  %s0 = inlined_call_operand.vmem [shape: bf16[1024,288], index: 0, kind: input, shape index: {}]
  %s1 = inlined_call_operand.vmem [shape: bf16[288,32], index: 1, kind: input, shape index: {}]
  %s2 = inlined_call_operand.vmem [shape: f32[1,32], index: 2, kind: input, shape index: {}]
  %s3 = inlined_call_operand.vmem [shape: f32[1024,32], index: 3, kind: output, shape index: {}]
  %s4 = sld [smem:[#allocation0]]
  $region45: #{compentrans512_forward.16} parent=0
    _
  %s6 = ssub.s32 1, %s4
  %s7 = scalar_select 0, %s6, %s4
  loop: start=0, step=1, limit=4
  $region2: #{compentrans512_forward.16} parent=0 // loop_pre_header
    _
  $region3: #{compentrans512_forward.16} parent=0 // loop_header
    %s9 = sphi 0, %s13
    %p10 = scmp.ge.s32.totalorder %s9, 4
    %s19 = sphi 0, %s21
    %s22 = sphi 0, %s19
    %s23 = sphi 0, %s22
    %s39 = sphi 0, %s23
    %s43 = sphi 0, %s43
    %s45 = sphi 0, %s43
    %s46 = sphi 0, %s45
    %s60 = sphi 0, %s46
    %s64 = sphi 0, %s64
    %s66 = sphi 0, %s64
    %s67 = sphi 0, %s66
    %s81 = sphi 0, %s67
    %s87 = sphi 0, %s89
    %s90 = sphi 0, %s87
    %s91 = sphi 0, %s90
    %s107 = sphi 0, %s91
  $region4: #{compentrans512_forward.16} parent=0 // loop_header_branch
    %12 = sbr.rel (%p10) target = $region8
  $region5: #{compentrans512_forward.16} parent=0 // loop_body
    %s14 = ssub.s32 %s9, 1
    %s15 = ssub.s32 %s9, 2
    %s16 = sadd.s32 %s9, 1
    %s17 = ssub.s32 %s9, %s16
    %p18 = scmp.eq.s32.totalorder %s17, 0
    %s20 = sadd.s32 %s19, 1
    %s21 = scalar_select %p18, %s19, %s20
    %p24 = pneg %p18
    %p25 = scmp.eq.s32.totalorder %s9, 1
    %p26 = por %p24, %p25
    %p27 = scmp.ne.s32.totalorder %s19, %s22
    %p28 = scmp.eq.s32.totalorder %s9, 0
    %p29 = por %p27, %p28
    %p30 = scmp.ne.s32.totalorder %s19, %s22
    %p31 = scmp.eq.s32.totalorder %s14, 1
    %p32 = por %p30, %p31
    %p33 = scmp.ne.s32.totalorder %s22, %s23
    %p34 = scmp.eq.s32.totalorder %s14, 0
    %p35 = por %p33, %p34
    %p36 = scmp.ne.s32.totalorder %s22, %s23
    %p37 = scmp.eq.s32.totalorder %s15, 1
    %p38 = por %p36, %p37
    %p40 = scmp.ne.s32.totalorder %s23, %s39
    %p41 = scmp.eq.s32.totalorder %s15, 0
    %p42 = por %p40, %p41
    %s44 = sadd.s32 %s43, 1
    %p47 = scmp.eq.s32.totalorder %s9, 1
    %p48 = scmp.ne.s32.totalorder %s43, %s45
    %p49 = scmp.eq.s32.totalorder %s9, 0
    %p50 = por %p48, %p49
    %p51 = scmp.ne.s32.totalorder %s43, %s45
    %p52 = scmp.eq.s32.totalorder %s14, 1
    %p53 = por %p51, %p52
    %p54 = scmp.ne.s32.totalorder %s45, %s46
    %p55 = scmp.eq.s32.totalorder %s14, 0
    %p56 = por %p54, %p55
    %p57 = scmp.ne.s32.totalorder %s45, %s46
    %p58 = scmp.eq.s32.totalorder %s15, 1
    %p59 = por %p57, %p58
    %p61 = scmp.ne.s32.totalorder %s46, %s60
    %p62 = scmp.eq.s32.totalorder %s15, 0
    %p63 = por %p61, %p62
    %s65 = sadd.s32 %s64, 1
    %p68 = scmp.eq.s32.totalorder %s9, 1
    %p69 = scmp.ne.s32.totalorder %s64, %s66
    %p70 = scmp.eq.s32.totalorder %s9, 0
    %p71 = por %p69, %p70
    %p72 = scmp.ne.s32.totalorder %s64, %s66
    %p73 = scmp.eq.s32.totalorder %s14, 1
    %p74 = por %p72, %p73
    %p75 = scmp.ne.s32.totalorder %s66, %s67
    %p76 = scmp.eq.s32.totalorder %s14, 0
    %p77 = por %p75, %p76
    %p78 = scmp.ne.s32.totalorder %s66, %s67
    %p79 = scmp.eq.s32.totalorder %s15, 1
    %p80 = por %p78, %p79
    %p82 = scmp.ne.s32.totalorder %s67, %s81
    %p83 = scmp.eq.s32.totalorder %s15, 0
    %p84 = por %p82, %p83
    %s85 = ssub.s32 %s9, %s16
    %p86 = scmp.eq.s32.totalorder %s85, 0
    %s88 = sadd.s32 %s87, 1
    %s89 = scalar_select %p86, %s87, %s88
    %p92 = pneg %p86
    %p93 = scmp.eq.s32.totalorder %s9, 1
    %p94 = por %p92, %p93
    %p95 = scmp.ne.s32.totalorder %s87, %s90
    %p96 = scmp.eq.s32.totalorder %s9, 0
    %p97 = por %p95, %p96
    %p98 = scmp.ne.s32.totalorder %s87, %s90
    %p99 = scmp.eq.s32.totalorder %s14, 1
    %p100 = por %p98, %p99
    %p101 = scmp.ne.s32.totalorder %s90, %s91
    %p102 = scmp.eq.s32.totalorder %s14, 0
    %p103 = por %p101, %p102
    %p104 = scmp.ne.s32.totalorder %s90, %s91
    %p105 = scmp.eq.s32.totalorder %s15, 1
    %p106 = por %p104, %p105
    %p108 = scmp.ne.s32.totalorder %s91, %s107
    %p109 = scmp.eq.s32.totalorder %s15, 0
    %p110 = por %p108, %p109
    %p111 = scmp.le.s32.totalorder 1, %s9
    %p112 = scmp.lt.s32.totalorder %s9, 3
    %p113 = pnand %p111, %p112
    %p114 = pneg %p113
    // Predicated region
    $region9: #{compentrans512_forward.16} parent=5 // pred_check
      _
    $region10: #{compentrans512_forward.16} parent=5 // pred_check_branch
      %116 = sbr.rel (%p113) target = $region12
    $region11: #{compentrans512_forward.16} parent=5 // pred_region
      %s117 = ssub.s32 %s9, 1
      // Predicated region
      $region13: #{compentrans512_forward.16} parent=11 // pred_check
        %p118 = pneg %p56
      $region14: #{compentrans512_forward.16} parent=11 // pred_check_branch
        %120 = sbr.rel (%p118) target = $region16
      $region15: #{compentrans512_forward.16} parent=11 // pred_region
        _
      $region16: #{compentrans512_forward.16} parent=11 // pred_fallthru
        _
      // Predicated region
      $region17: #{compentrans512_forward.16} parent=11 // pred_check
        %p121 = pneg %p77
      $region18: #{compentrans512_forward.16} parent=11 // pred_check_branch
        %123 = sbr.rel (%p121) target = $region20
      $region19: #{compentrans512_forward.16} parent=11 // pred_region
        _
      $region20: #{compentrans512_forward.16} parent=11 // pred_fallthru
        _
    $region12: #{compentrans512_forward.16} parent=5 // pred_fallthru
      _
    %p124 = scmp.lt.s32.totalorder %s9, 2
    // Predicated region
    $region21: #{compentrans512_forward.16} parent=5 // pred_check
      %p125 = pneg %p124
    $region22: #{compentrans512_forward.16} parent=5 // pred_check_branch
      %127 = sbr.rel (%p125) target = $region24
    $region23: #{compentrans512_forward.16} parent=5 // pred_region
      // Predicated region
      $region25: #{compentrans512_forward.16} parent=23 // pred_check
        %p128 = pneg %p29
      $region26: #{compentrans512_forward.16} parent=23 // pred_check_branch
        %130 = sbr.rel (%p128) target = $region28
      $region27: #{compentrans512_forward.16} parent=23 // pred_region
        %s131 = smul.u32 64, %s9
        %p132 = scmp.lt.s32.totalorder %s131, 127
        %s133 = scalar_select %p132, %s131, 127
        %s134 = smul.addr %s133, 3
        %s135 = smul.addr %s134, 4
        %s136 = scalar_lea.vmem %s0, %s135
        %s137 = smul.u32 64, %s9
      $region28: #{compentrans512_forward.16} parent=23 // pred_fallthru
        _
    $region24: #{compentrans512_forward.16} parent=5 // pred_fallthru
      _
    %p138 = scmp.le.s32.totalorder 1, %s9
    %p139 = scmp.lt.s32.totalorder %s9, 3
    %p140 = pnand %p138, %p139
    %p141 = pneg %p140
    // Predicated region
    $region29: #{compentrans512_forward.16} parent=5 // pred_check
      _
    $region30: #{compentrans512_forward.16} parent=5 // pred_check_branch
      %143 = sbr.rel (%p140) target = $region32
    $region31: #{compentrans512_forward.16} parent=5 // pred_region
      %s144 = ssub.s32 %s9, 1
      %s145 = smul.u32 64, %s14
      %p146 = scmp.lt.s32.totalorder %s145, 127
      %s147 = scalar_select %p146, %s145, 127
      %s148 = smul.addr %s147, 3
      %s149 = smul.addr %s148, 4
      %s150 = scalar_lea.vmem %s0, %s149
      %p151 = pneg %p35
      %p152 = pneg %p32
      %p153 = pneg %p56
      %p154 = pneg %p53
      %p155 = pneg %p77
      %p156 = pneg %p74
      %p157 = pneg %p103
      %p158 = pneg %p100
      %s159 = smul.u32 64, %s14
      %p160 = scmp.lt.s32.totalorder %s159, 127
      %s161 = scalar_select %p160, %s159, 127
      %s162 = smul.addr %s161, 8
      %s163 = scalar_lea.vmem %s3, %s162
      %s164 = smul.u32 64, %s14
      %p165 = scmp.lt.s32.totalorder %s164, 127
      %s166 = scalar_select %p165, %s164, 127
      %s167 = smul.addr %s166, 3
      %s168 = smul.addr %s167, 4
      %s169 = scalar_lea.vmem %s0, %s168
      %s170 = smul.u32 64, %s14
      %s171 = smul.u32 64, %s14
      %p172 = scmp.lt.s32.totalorder %s171, 127
      %s173 = scalar_select %p172, %s171, 127
      %s174 = smul.addr %s173, 8
      %s175 = scalar_lea.vmem %s3, %s174
      %s176 = smul.u32 64, %s14
      %v178 = vld [vmem:[%s169] sm:$0xff]
      %v179 = vld [vmem:[%s169 + $0x8] sm:$0xf]
      %v180 = vld [vmem:[%s169 + $0xc] sm:$0xff]
      %v181 = vld [vmem:[%s169 + $0x14] sm:$0xf]
      %v182 = vld [vmem:[%s169 + $0x18] sm:$0xff]
      %v183 = vld [vmem:[%s169 + $0x20] sm:$0xf]
      %v184 = vld [vmem:[%s169 + $0x24] sm:$0xff]
      %v185 = vld [vmem:[%s169 + $0x2c] sm:$0xf]
      %v186 = vld [vmem:[%s169 + $0x30] sm:$0xff]
      %v187 = vld [vmem:[%s169 + $0x38] sm:$0xf]
      %v188 = vld [vmem:[%s169 + $0x3c] sm:$0xff]
      %v189 = vld [vmem:[%s169 + $0x44] sm:$0xf]
      %v190 = vld [vmem:[%s169 + $0x48] sm:$0xff]
      %v191 = vld [vmem:[%s169 + $0x50] sm:$0xf]
      %v192 = vld [vmem:[%s169 + $0x54] sm:$0xff]
      %v193 = vld [vmem:[%s169 + $0x5c] sm:$0xf]
      %v194 = vld [vmem:[%s169 + $0x60] sm:$0xff]
      %v195 = vld [vmem:[%s169 + $0x68] sm:$0xf]
      %v196 = vld [vmem:[%s169 + $0x6c] sm:$0xff]
      %v197 = vld [vmem:[%s169 + $0x74] sm:$0xf]
      %v198 = vld [vmem:[%s169 + $0x78] sm:$0xff]
      %v199 = vld [vmem:[%s169 + $0x80] sm:$0xf]
      %v200 = vld [vmem:[%s169 + $0x84] sm:$0xff]
      %v201 = vld [vmem:[%s169 + $0x8c] sm:$0xf]
      %v202 = vld [vmem:[%s169 + $0x90] sm:$0xff]
      %v203 = vld [vmem:[%s169 + $0x98] sm:$0xf]
      %v204 = vld [vmem:[%s169 + $0x9c] sm:$0xff]
      %v205 = vld [vmem:[%s169 + $0xa4] sm:$0xf]
      %v206 = vld [vmem:[%s169 + $0xa8] sm:$0xff]
      %v207 = vld [vmem:[%s169 + $0xb0] sm:$0xf]
      %v208 = vld [vmem:[%s169 + $0xb4] sm:$0xff]
      %v209 = vld [vmem:[%s169 + $0xbc] sm:$0xf]
      %v210 = vld [vmem:[%s169 + $0xc0] sm:$0xff]
      %v211 = vld [vmem:[%s169 + $0xc8] sm:$0xf]
      %v212 = vld [vmem:[%s169 + $0xcc] sm:$0xff]
      %v213 = vld [vmem:[%s169 + $0xd4] sm:$0xf]
      %v214 = vld [vmem:[%s169 + $0xd8] sm:$0xff]
      %v215 = vld [vmem:[%s169 + $0xe0] sm:$0xf]
      %v216 = vld [vmem:[%s169 + $0xe4] sm:$0xff]
      %v217 = vld [vmem:[%s169 + $0xec] sm:$0xf]
      %v218 = vld [vmem:[%s169 + $0xf0] sm:$0xff]
      %v219 = vld [vmem:[%s169 + $0xf8] sm:$0xf]
      %v220 = vld [vmem:[%s169 + $0xfc] sm:$0xff]
      %v221 = vld [vmem:[%s169 + $0x104] sm:$0xf]
      %v222 = vld [vmem:[%s169 + $0x108] sm:$0xff]
      %v223 = vld [vmem:[%s169 + $0x110] sm:$0xf]
      %v224 = vld [vmem:[%s169 + $0x114] sm:$0xff]
      %v225 = vld [vmem:[%s169 + $0x11c] sm:$0xf]
      %v226 = vld [vmem:[%s169 + $0x120] sm:$0xff]
      %v227 = vld [vmem:[%s169 + $0x128] sm:$0xf]
      %v228 = vld [vmem:[%s169 + $0x12c] sm:$0xff]
      %v229 = vld [vmem:[%s169 + $0x134] sm:$0xf]
      %v230 = vld [vmem:[%s169 + $0x138] sm:$0xff]
      %v231 = vld [vmem:[%s169 + $0x140] sm:$0xf]
      %v232 = vld [vmem:[%s169 + $0x144] sm:$0xff]
      %v233 = vld [vmem:[%s169 + $0x14c] sm:$0xf]
      %v234 = vld [vmem:[%s169 + $0x150] sm:$0xff]
      %v235 = vld [vmem:[%s169 + $0x158] sm:$0xf]
      %v236 = vld [vmem:[%s169 + $0x15c] sm:$0xff]
      %v237 = vld [vmem:[%s169 + $0x164] sm:$0xf]
      %v238 = vld [vmem:[%s169 + $0x168] sm:$0xff]
      %v239 = vld [vmem:[%s169 + $0x170] sm:$0xf]
      %v240 = vld [vmem:[%s169 + $0x174] sm:$0xff]
      %v241 = vld [vmem:[%s169 + $0x17c] sm:$0xf]
      %v242 = vld [vmem:[%s169 + $0x180] sm:$0xff]
      %v243 = vld [vmem:[%s169 + $0x188] sm:$0xf]
      %v244 = vld [vmem:[%s169 + $0x18c] sm:$0xff]
      %v245 = vld [vmem:[%s169 + $0x194] sm:$0xf]
      %v246 = vld [vmem:[%s169 + $0x198] sm:$0xff]
      %v247 = vld [vmem:[%s169 + $0x1a0] sm:$0xf]
      %v248 = vld [vmem:[%s169 + $0x1a4] sm:$0xff]
      %v249 = vld [vmem:[%s169 + $0x1ac] sm:$0xf]
      %v250 = vld [vmem:[%s169 + $0x1b0] sm:$0xff]
      %v251 = vld [vmem:[%s169 + $0x1b8] sm:$0xf]
      %v252 = vld [vmem:[%s169 + $0x1bc] sm:$0xff]
      %v253 = vld [vmem:[%s169 + $0x1c4] sm:$0xf]
      %v254 = vld [vmem:[%s169 + $0x1c8] sm:$0xff]
      %v255 = vld [vmem:[%s169 + $0x1d0] sm:$0xf]
      %v256 = vld [vmem:[%s169 + $0x1d4] sm:$0xff]
      %v257 = vld [vmem:[%s169 + $0x1dc] sm:$0xf]
      %v258 = vld [vmem:[%s169 + $0x1e0] sm:$0xff]
      %v259 = vld [vmem:[%s169 + $0x1e8] sm:$0xf]
      %v260 = vld [vmem:[%s169 + $0x1ec] sm:$0xff]
      %v261 = vld [vmem:[%s169 + $0x1f4] sm:$0xf]
      %v262 = vld [vmem:[%s169 + $0x1f8] sm:$0xff]
      %v263 = vld [vmem:[%s169 + $0x200] sm:$0xf]
      %v264 = vld [vmem:[%s169 + $0x204] sm:$0xff]
      %v265 = vld [vmem:[%s169 + $0x20c] sm:$0xf]
      %v266 = vld [vmem:[%s169 + $0x210] sm:$0xff]
      %v267 = vld [vmem:[%s169 + $0x218] sm:$0xf]
      %v268 = vld [vmem:[%s169 + $0x21c] sm:$0xff]
      %v269 = vld [vmem:[%s169 + $0x224] sm:$0xf]
      %v270 = vld [vmem:[%s169 + $0x228] sm:$0xff]
      %v271 = vld [vmem:[%s169 + $0x230] sm:$0xf]
      %v272 = vld [vmem:[%s169 + $0x234] sm:$0xff]
      %v273 = vld [vmem:[%s169 + $0x23c] sm:$0xf]
      %v274 = vld [vmem:[%s169 + $0x240] sm:$0xff]
      %v275 = vld [vmem:[%s169 + $0x248] sm:$0xf]
      %v276 = vld [vmem:[%s169 + $0x24c] sm:$0xff]
      %v277 = vld [vmem:[%s169 + $0x254] sm:$0xf]
      %v278 = vld [vmem:[%s169 + $0x258] sm:$0xff]
      %v279 = vld [vmem:[%s169 + $0x260] sm:$0xf]
      %v280 = vld [vmem:[%s169 + $0x264] sm:$0xff]
      %v281 = vld [vmem:[%s169 + $0x26c] sm:$0xf]
      %v282 = vld [vmem:[%s169 + $0x270] sm:$0xff]
      %v283 = vld [vmem:[%s169 + $0x278] sm:$0xf]
      %v284 = vld [vmem:[%s169 + $0x27c] sm:$0xff]
      %v285 = vld [vmem:[%s169 + $0x284] sm:$0xf]
      %v286 = vld [vmem:[%s169 + $0x288] sm:$0xff]
      %v287 = vld [vmem:[%s169 + $0x290] sm:$0xf]
      %v288 = vld [vmem:[%s169 + $0x294] sm:$0xff]
      %v289 = vld [vmem:[%s169 + $0x29c] sm:$0xf]
      %v290 = vld [vmem:[%s169 + $0x2a0] sm:$0xff]
      %v291 = vld [vmem:[%s169 + $0x2a8] sm:$0xf]
      %v292 = vld [vmem:[%s169 + $0x2ac] sm:$0xff]
      %v293 = vld [vmem:[%s169 + $0x2b4] sm:$0xf]
      %v294 = vld [vmem:[%s169 + $0x2b8] sm:$0xff]
      %v295 = vld [vmem:[%s169 + $0x2c0] sm:$0xf]
      %v296 = vld [vmem:[%s169 + $0x2c4] sm:$0xff]
      %v297 = vld [vmem:[%s169 + $0x2cc] sm:$0xf]
      %v298 = vld [vmem:[%s169 + $0x2d0] sm:$0xff]
      %v299 = vld [vmem:[%s169 + $0x2d8] sm:$0xf]
      %v300 = vld [vmem:[%s169 + $0x2dc] sm:$0xff]
      %v301 = vld [vmem:[%s169 + $0x2e4] sm:$0xf]
      %v302 = vld [vmem:[%s169 + $0x2e8] sm:$0xff]
      %v303 = vld [vmem:[%s169 + $0x2f0] sm:$0xf]
      %v304 = vld [vmem:[%s169 + $0x2f4] sm:$0xff]
      %v305 = vld [vmem:[%s169 + $0x2fc] sm:$0xf]
      %v306 = vld [vmem:[%s1] sm:$0xf]
      %v307 = vld [vmem:[%s1 + $0x4] sm:$0xf]
      %v308 = vld [vmem:[%s1 + $0x8] sm:$0xf]
      %v309 = vld [vmem:[%s1 + $0xc] sm:$0xf]
      %v310 = vld [vmem:[%s1 + $0x10] sm:$0xf]
      %v311 = vld [vmem:[%s1 + $0x14] sm:$0xf]
      %v312 = vld [vmem:[%s1 + $0x18] sm:$0xf]
      %v313 = vld [vmem:[%s1 + $0x1c] sm:$0xf]
      %v314 = vld [vmem:[%s1 + $0x20] sm:$0xf]
      %v315 = vld [vmem:[%s1 + $0x24] sm:$0xf]
      %v316 = vld [vmem:[%s1 + $0x28] sm:$0xf]
      %v317 = vld [vmem:[%s1 + $0x2c] sm:$0xf]
      %v318 = vld [vmem:[%s1 + $0x30] sm:$0xf]
      %v319 = vld [vmem:[%s1 + $0x34] sm:$0xf]
      %v320 = vld [vmem:[%s1 + $0x38] sm:$0xf]
      %v321 = vld [vmem:[%s1 + $0x3c] sm:$0xf]
      %v322 = vld [vmem:[%s1 + $0x40] sm:$0xf]
      %v323 = vld [vmem:[%s1 + $0x44] sm:$0xf]
      %v324 = vld [vmem:[%s1 + $0x48] sm:$0xf]
      %v325 = vld [vmem:[%s1 + $0x4c] sm:$0xf]
      %v326 = vld [vmem:[%s1 + $0x50] sm:$0xf]
      %v327 = vld [vmem:[%s1 + $0x54] sm:$0xf]
      %v328 = vld [vmem:[%s1 + $0x58] sm:$0xf]
      %v329 = vld [vmem:[%s1 + $0x5c] sm:$0xf]
      %v330 = vld [vmem:[%s1 + $0x60] sm:$0xf]
      %v331 = vld [vmem:[%s1 + $0x64] sm:$0xf]
      %v332 = vld [vmem:[%s1 + $0x68] sm:$0xf]
      %v333 = vld [vmem:[%s1 + $0x6c] sm:$0xf]
      %v334 = vld [vmem:[%s1 + $0x70] sm:$0xf]
      %v335 = vld [vmem:[%s1 + $0x74] sm:$0xf]
      %v336 = vld [vmem:[%s1 + $0x78] sm:$0xf]
      %v337 = vld [vmem:[%s1 + $0x7c] sm:$0xf]
      %v338 = vld [vmem:[%s1 + $0x80] sm:$0xf]
      %v339 = vld [vmem:[%s1 + $0x84] sm:$0xf]
      %v340 = vld [vmem:[%s1 + $0x88] sm:$0xf]
      %v341 = vld [vmem:[%s1 + $0x8c] sm:$0xf]
      %v342 = vld [vmem:[%s2] sm:$0x1]
      %v344 = vperm.slane %v342, 0
      %v474 = vunpack.c.l.b16 %v178
      %v475 = vunpack.c.h.b16 %v178
      %v476 = vunpack.c.l.b16 %v179
      %v477 = vunpack.c.l.b16 %v180
      %v478 = vunpack.c.h.b16 %v180
      %v479 = vunpack.c.l.b16 %v181
      %v480 = vunpack.c.l.b16 %v182
      %v481 = vunpack.c.h.b16 %v182
      %v482 = vunpack.c.l.b16 %v183
      %v483 = vunpack.c.l.b16 %v184
      %v484 = vunpack.c.h.b16 %v184
      %v485 = vunpack.c.l.b16 %v185
      %v486 = vunpack.c.l.b16 %v186
      %v487 = vunpack.c.h.b16 %v186
      %v488 = vunpack.c.l.b16 %v187
      %v489 = vunpack.c.l.b16 %v188
      %v490 = vunpack.c.h.b16 %v188
      %v491 = vunpack.c.l.b16 %v189
      %v492 = vunpack.c.l.b16 %v190
      %v493 = vunpack.c.h.b16 %v190
      %v494 = vunpack.c.l.b16 %v191
      %v495 = vunpack.c.l.b16 %v192
      %v496 = vunpack.c.h.b16 %v192
      %v497 = vunpack.c.l.b16 %v193
      %v498 = vunpack.c.l.b16 %v194
      %v499 = vunpack.c.h.b16 %v194
      %v500 = vunpack.c.l.b16 %v195
      %v501 = vunpack.c.l.b16 %v196
      %v502 = vunpack.c.h.b16 %v196
      %v503 = vunpack.c.l.b16 %v197
      %v504 = vunpack.c.l.b16 %v198
      %v505 = vunpack.c.h.b16 %v198
      %v506 = vunpack.c.l.b16 %v199
      %v507 = vunpack.c.l.b16 %v200
      %v508 = vunpack.c.h.b16 %v200
      %v509 = vunpack.c.l.b16 %v201
      %v510 = vunpack.c.l.b16 %v202
      %v511 = vunpack.c.h.b16 %v202
      %v512 = vunpack.c.l.b16 %v203
      %v513 = vunpack.c.l.b16 %v204
      %v514 = vunpack.c.h.b16 %v204
      %v515 = vunpack.c.l.b16 %v205
      %v516 = vunpack.c.l.b16 %v206
      %v517 = vunpack.c.h.b16 %v206
      %v518 = vunpack.c.l.b16 %v207
      %v519 = vunpack.c.l.b16 %v208
      %v520 = vunpack.c.h.b16 %v208
      %v521 = vunpack.c.l.b16 %v209
      %v522 = vunpack.c.l.b16 %v210
      %v523 = vunpack.c.h.b16 %v210
      %v524 = vunpack.c.l.b16 %v211
      %v525 = vunpack.c.l.b16 %v212
      %v526 = vunpack.c.h.b16 %v212
      %v527 = vunpack.c.l.b16 %v213
      %v528 = vunpack.c.l.b16 %v214
      %v529 = vunpack.c.h.b16 %v214
      %v530 = vunpack.c.l.b16 %v215
      %v531 = vunpack.c.l.b16 %v216
      %v532 = vunpack.c.h.b16 %v216
      %v533 = vunpack.c.l.b16 %v217
      %v534 = vunpack.c.l.b16 %v218
      %v535 = vunpack.c.h.b16 %v218
      %v536 = vunpack.c.l.b16 %v219
      %v537 = vunpack.c.l.b16 %v220
      %v538 = vunpack.c.h.b16 %v220
      %v539 = vunpack.c.l.b16 %v221
      %v540 = vunpack.c.l.b16 %v222
      %v541 = vunpack.c.h.b16 %v222
      %v542 = vunpack.c.l.b16 %v223
      %v543 = vunpack.c.l.b16 %v224
      %v544 = vunpack.c.h.b16 %v224
      %v545 = vunpack.c.l.b16 %v225
      %v546 = vunpack.c.l.b16 %v226
      %v547 = vunpack.c.h.b16 %v226
      %v548 = vunpack.c.l.b16 %v227
      %v549 = vunpack.c.l.b16 %v228
      %v550 = vunpack.c.h.b16 %v228
      %v551 = vunpack.c.l.b16 %v229
      %v552 = vunpack.c.l.b16 %v230
      %v553 = vunpack.c.h.b16 %v230
      %v554 = vunpack.c.l.b16 %v231
      %v555 = vunpack.c.l.b16 %v232
      %v556 = vunpack.c.h.b16 %v232
      %v557 = vunpack.c.l.b16 %v233
      %v558 = vunpack.c.l.b16 %v234
      %v559 = vunpack.c.h.b16 %v234
      %v560 = vunpack.c.l.b16 %v235
      %v561 = vunpack.c.l.b16 %v236
      %v562 = vunpack.c.h.b16 %v236
      %v563 = vunpack.c.l.b16 %v237
      %v564 = vunpack.c.l.b16 %v238
      %v565 = vunpack.c.h.b16 %v238
      %v566 = vunpack.c.l.b16 %v239
      %v567 = vunpack.c.l.b16 %v240
      %v568 = vunpack.c.h.b16 %v240
      %v569 = vunpack.c.l.b16 %v241
      %v570 = vunpack.c.l.b16 %v242
      %v571 = vunpack.c.h.b16 %v242
      %v572 = vunpack.c.l.b16 %v243
      %v573 = vunpack.c.l.b16 %v244
      %v574 = vunpack.c.h.b16 %v244
      %v575 = vunpack.c.l.b16 %v245
      %v576 = vunpack.c.l.b16 %v246
      %v577 = vunpack.c.h.b16 %v246
      %v578 = vunpack.c.l.b16 %v247
      %v579 = vunpack.c.l.b16 %v248
      %v580 = vunpack.c.h.b16 %v248
      %v581 = vunpack.c.l.b16 %v249
      %v582 = vunpack.c.l.b16 %v250
      %v583 = vunpack.c.h.b16 %v250
      %v584 = vunpack.c.l.b16 %v251
      %v585 = vunpack.c.l.b16 %v252
      %v586 = vunpack.c.h.b16 %v252
      %v587 = vunpack.c.l.b16 %v253
      %v588 = vunpack.c.l.b16 %v254
      %v589 = vunpack.c.h.b16 %v254
      %v590 = vunpack.c.l.b16 %v255
      %v591 = vunpack.c.l.b16 %v256
      %v592 = vunpack.c.h.b16 %v256
      %v593 = vunpack.c.l.b16 %v257
      %v594 = vunpack.c.l.b16 %v258
      %v595 = vunpack.c.h.b16 %v258
      %v596 = vunpack.c.l.b16 %v259
      %v597 = vunpack.c.l.b16 %v260
      %v598 = vunpack.c.h.b16 %v260
      %v599 = vunpack.c.l.b16 %v261
      %v600 = vunpack.c.l.b16 %v262
      %v601 = vunpack.c.h.b16 %v262
      %v602 = vunpack.c.l.b16 %v263
      %v603 = vunpack.c.l.b16 %v264
      %v604 = vunpack.c.h.b16 %v264
      %v605 = vunpack.c.l.b16 %v265
      %v606 = vunpack.c.l.b16 %v266
      %v607 = vunpack.c.h.b16 %v266
      %v608 = vunpack.c.l.b16 %v267
      %v609 = vunpack.c.l.b16 %v268
      %v610 = vunpack.c.h.b16 %v268
      %v611 = vunpack.c.l.b16 %v269
      %v612 = vunpack.c.l.b16 %v270
      %v613 = vunpack.c.h.b16 %v270
      %v614 = vunpack.c.l.b16 %v271
      %v615 = vunpack.c.l.b16 %v272
      %v616 = vunpack.c.h.b16 %v272
      %v617 = vunpack.c.l.b16 %v273
      %v618 = vunpack.c.l.b16 %v274
      %v619 = vunpack.c.h.b16 %v274
      %v620 = vunpack.c.l.b16 %v275
      %v621 = vunpack.c.l.b16 %v276
      %v622 = vunpack.c.h.b16 %v276
      %v623 = vunpack.c.l.b16 %v277
      %v624 = vunpack.c.l.b16 %v278
      %v625 = vunpack.c.h.b16 %v278
      %v626 = vunpack.c.l.b16 %v279
      %v627 = vunpack.c.l.b16 %v280
      %v628 = vunpack.c.h.b16 %v280
      %v629 = vunpack.c.l.b16 %v281
      %v630 = vunpack.c.l.b16 %v282
      %v631 = vunpack.c.h.b16 %v282
      %v632 = vunpack.c.l.b16 %v283
      %v633 = vunpack.c.l.b16 %v284
      %v634 = vunpack.c.h.b16 %v284
      %v635 = vunpack.c.l.b16 %v285
      %v636 = vunpack.c.l.b16 %v286
      %v637 = vunpack.c.h.b16 %v286
      %v638 = vunpack.c.l.b16 %v287
      %v639 = vunpack.c.l.b16 %v288
      %v640 = vunpack.c.h.b16 %v288
      %v641 = vunpack.c.l.b16 %v289
      %v642 = vunpack.c.l.b16 %v290
      %v643 = vunpack.c.h.b16 %v290
      %v644 = vunpack.c.l.b16 %v291
      %v645 = vunpack.c.l.b16 %v292
      %v646 = vunpack.c.h.b16 %v292
      %v647 = vunpack.c.l.b16 %v293
      %v648 = vunpack.c.l.b16 %v294
      %v649 = vunpack.c.h.b16 %v294
      %v650 = vunpack.c.l.b16 %v295
      %v651 = vunpack.c.l.b16 %v296
      %v652 = vunpack.c.h.b16 %v296
      %v653 = vunpack.c.l.b16 %v297
      %v654 = vunpack.c.l.b16 %v298
      %v655 = vunpack.c.h.b16 %v298
      %v656 = vunpack.c.l.b16 %v299
      %v657 = vunpack.c.l.b16 %v300
      %v658 = vunpack.c.h.b16 %v300
      %v659 = vunpack.c.l.b16 %v301
      %v660 = vunpack.c.l.b16 %v302
      %v661 = vunpack.c.h.b16 %v302
      %v662 = vunpack.c.l.b16 %v303
      %v663 = vunpack.c.l.b16 %v304
      %v664 = vunpack.c.h.b16 %v304
      %v665 = vunpack.c.l.b16 %v305
      %v666 = vpack.c.b16 %v477, %v474
      %v667 = vpack.c.b16 %v478, %v475
      %v668 = vpack.c.b16 %v479, %v476
      %v669 = vpack.c.b16 %v483, %v480
      %v670 = vpack.c.b16 %v484, %v481
      %v671 = vpack.c.b16 %v485, %v482
      %v672 = vpack.c.b16 %v489, %v486
      %v673 = vpack.c.b16 %v490, %v487
      %v674 = vpack.c.b16 %v491, %v488
      %v675 = vpack.c.b16 %v495, %v492
      %v676 = vpack.c.b16 %v496, %v493
      %v677 = vpack.c.b16 %v497, %v494
      %v678 = vpack.c.b16 %v501, %v498
      %v679 = vpack.c.b16 %v502, %v499
      %v680 = vpack.c.b16 %v503, %v500
      %v681 = vpack.c.b16 %v507, %v504
      %v682 = vpack.c.b16 %v508, %v505
      %v683 = vpack.c.b16 %v509, %v506
      %v684 = vpack.c.b16 %v513, %v510
      %v685 = vpack.c.b16 %v514, %v511
      %v686 = vpack.c.b16 %v515, %v512
      %v687 = vpack.c.b16 %v519, %v516
      %v688 = vpack.c.b16 %v520, %v517
      %v689 = vpack.c.b16 %v521, %v518
      %v690 = vpack.c.b16 %v525, %v522
      %v691 = vpack.c.b16 %v526, %v523
      %v692 = vpack.c.b16 %v527, %v524
      %v693 = vpack.c.b16 %v531, %v528
      %v694 = vpack.c.b16 %v532, %v529
      %v695 = vpack.c.b16 %v533, %v530
      %v696 = vpack.c.b16 %v537, %v534
      %v697 = vpack.c.b16 %v538, %v535
      %v698 = vpack.c.b16 %v539, %v536
      %v699 = vpack.c.b16 %v543, %v540
      %v700 = vpack.c.b16 %v544, %v541
      %v701 = vpack.c.b16 %v545, %v542
      %v702 = vpack.c.b16 %v549, %v546
      %v703 = vpack.c.b16 %v550, %v547
      %v704 = vpack.c.b16 %v551, %v548
      %v705 = vpack.c.b16 %v555, %v552
      %v706 = vpack.c.b16 %v556, %v553
      %v707 = vpack.c.b16 %v557, %v554
      %v708 = vpack.c.b16 %v561, %v558
      %v709 = vpack.c.b16 %v562, %v559
      %v710 = vpack.c.b16 %v563, %v560
      %v711 = vpack.c.b16 %v567, %v564
      %v712 = vpack.c.b16 %v568, %v565
      %v713 = vpack.c.b16 %v569, %v566
      %v714 = vpack.c.b16 %v573, %v570
      %v715 = vpack.c.b16 %v574, %v571
      %v716 = vpack.c.b16 %v575, %v572
      %v717 = vpack.c.b16 %v579, %v576
      %v718 = vpack.c.b16 %v580, %v577
      %v719 = vpack.c.b16 %v581, %v578
      %v720 = vpack.c.b16 %v585, %v582
      %v721 = vpack.c.b16 %v586, %v583
      %v722 = vpack.c.b16 %v587, %v584
      %v723 = vpack.c.b16 %v591, %v588
      %v724 = vpack.c.b16 %v592, %v589
      %v725 = vpack.c.b16 %v593, %v590
      %v726 = vpack.c.b16 %v597, %v594
      %v727 = vpack.c.b16 %v598, %v595
      %v728 = vpack.c.b16 %v599, %v596
      %v729 = vpack.c.b16 %v603, %v600
      %v730 = vpack.c.b16 %v604, %v601
      %v731 = vpack.c.b16 %v605, %v602
      %v732 = vpack.c.b16 %v609, %v606
      %v733 = vpack.c.b16 %v610, %v607
      %v734 = vpack.c.b16 %v611, %v608
      %v735 = vpack.c.b16 %v615, %v612
      %v736 = vpack.c.b16 %v616, %v613
      %v737 = vpack.c.b16 %v617, %v614
      %v738 = vpack.c.b16 %v621, %v618
      %v739 = vpack.c.b16 %v622, %v619
      %v740 = vpack.c.b16 %v623, %v620
      %v741 = vpack.c.b16 %v627, %v624
      %v742 = vpack.c.b16 %v628, %v625
      %v743 = vpack.c.b16 %v629, %v626
      %v744 = vpack.c.b16 %v633, %v630
      %v745 = vpack.c.b16 %v634, %v631
      %v746 = vpack.c.b16 %v635, %v632
      %v747 = vpack.c.b16 %v639, %v636
      %v748 = vpack.c.b16 %v640, %v637
      %v749 = vpack.c.b16 %v641, %v638
      %v750 = vpack.c.b16 %v645, %v642
      %v751 = vpack.c.b16 %v646, %v643
      %v752 = vpack.c.b16 %v647, %v644
      %v753 = vpack.c.b16 %v651, %v648
      %v754 = vpack.c.b16 %v652, %v649
      %v755 = vpack.c.b16 %v653, %v650
      %v756 = vpack.c.b16 %v657, %v654
      %v757 = vpack.c.b16 %v658, %v655
      %v758 = vpack.c.b16 %v659, %v656
      %v759 = vpack.c.b16 %v663, %v660
      %v760 = vpack.c.b16 %v664, %v661
      %v761 = vpack.c.b16 %v665, %v662
      %v862 = vunpack.c.l.b16 %v306
      %v863 = vunpack.c.l.b16 %v307
      %v864 = vunpack.c.l.b16 %v308
      %v865 = vunpack.c.l.b16 %v309
      %v866 = vunpack.c.l.b16 %v310
      %v867 = vunpack.c.l.b16 %v311
      %v868 = vunpack.c.l.b16 %v312
      %v869 = vunpack.c.l.b16 %v313
      %v870 = vunpack.c.l.b16 %v314
      %v871 = vunpack.c.l.b16 %v315
      %v872 = vunpack.c.l.b16 %v316
      %v873 = vunpack.c.l.b16 %v317
      %v874 = vunpack.c.l.b16 %v318
      %v875 = vunpack.c.l.b16 %v319
      %v876 = vunpack.c.l.b16 %v320
      %v877 = vunpack.c.l.b16 %v321
      %v878 = vunpack.c.l.b16 %v322
      %v879 = vunpack.c.l.b16 %v323
      %v880 = vunpack.c.l.b16 %v324
      %v881 = vunpack.c.l.b16 %v325
      %v882 = vunpack.c.l.b16 %v326
      %v883 = vunpack.c.l.b16 %v327
      %v884 = vunpack.c.l.b16 %v328
      %v885 = vunpack.c.l.b16 %v329
      %v886 = vunpack.c.l.b16 %v330
      %v887 = vunpack.c.l.b16 %v331
      %v888 = vunpack.c.l.b16 %v332
      %v889 = vunpack.c.l.b16 %v333
      %v890 = vunpack.c.l.b16 %v334
      %v891 = vunpack.c.l.b16 %v335
      %v892 = vunpack.c.l.b16 %v336
      %v893 = vunpack.c.l.b16 %v337
      %v894 = vunpack.c.l.b16 %v338
      %v895 = vunpack.c.l.b16 %v339
      %v896 = vunpack.c.l.b16 %v340
      %v897 = vunpack.c.l.b16 %v341
      %v898 = vpack.c.b16 %v863, %v862
      %v899 = vpack.c.b16 %v865, %v864
      %v900 = vpack.c.b16 %v867, %v866
      %v901 = vpack.c.b16 %v869, %v868
      %v902 = vpack.c.b16 %v871, %v870
      %v903 = vpack.c.b16 %v873, %v872
      %v904 = vpack.c.b16 %v875, %v874
      %v905 = vpack.c.b16 %v877, %v876
      %v906 = vpack.c.b16 %v879, %v878
      %v907 = vpack.c.b16 %v881, %v880
      %v908 = vpack.c.b16 %v883, %v882
      %v909 = vpack.c.b16 %v885, %v884
      %v910 = vpack.c.b16 %v887, %v886
      %v911 = vpack.c.b16 %v889, %v888
      %v912 = vpack.c.b16 %v891, %v890
      %v913 = vpack.c.b16 %v893, %v892
      %v914 = vpack.c.b16 %v895, %v894
      %v915 = vpack.c.b16 %v897, %v896
      %vm934 = vcmask 261120
      %v936 = vsel %vm934, %v668, 0
      %v939 = vsel %vm934, %v671, 0
      %v942 = vsel %vm934, %v674, 0
      %v945 = vsel %vm934, %v677, 0
      %v948 = vsel %vm934, %v680, 0
      %v951 = vsel %vm934, %v683, 0
      %v954 = vsel %vm934, %v686, 0
      %v957 = vsel %vm934, %v689, 0
      %v960 = vsel %vm934, %v692, 0
      %v963 = vsel %vm934, %v695, 0
      %v966 = vsel %vm934, %v698, 0
      %v969 = vsel %vm934, %v701, 0
      %v972 = vsel %vm934, %v704, 0
      %v975 = vsel %vm934, %v707, 0
      %v978 = vsel %vm934, %v710, 0
      %v981 = vsel %vm934, %v713, 0
      %v984 = vsel %vm934, %v716, 0
      %v987 = vsel %vm934, %v719, 0
      %v990 = vsel %vm934, %v722, 0
      %v993 = vsel %vm934, %v725, 0
      %v996 = vsel %vm934, %v728, 0
      %v999 = vsel %vm934, %v731, 0
      %v1002 = vsel %vm934, %v734, 0
      %v1005 = vsel %vm934, %v737, 0
      %v1008 = vsel %vm934, %v740, 0
      %v1011 = vsel %vm934, %v743, 0
      %v1014 = vsel %vm934, %v746, 0
      %v1017 = vsel %vm934, %v749, 0
      %v1020 = vsel %vm934, %v752, 0
      %v1023 = vsel %vm934, %v755, 0
      %v1026 = vsel %vm934, %v758, 0
      %v1029 = vsel %vm934, %v761, 0
      %1031 = vmatpush.bf16.msra.mxu0 %v905
      %1032 = vmatpush.bf16.msra.mxu0 %v904
      %1033 = vmatpush.bf16.msra.mxu0 %v903
      %1034 = vmatpush.bf16.msra.mxu0 %v902
      %1035 = vmatpush.bf16.msra.mxu0 %v901
      %1036 = vmatpush.bf16.msra.mxu0 %v900
      %1037 = vmatpush.bf16.msra.mxu0 %v899
      %1038 = vmatpush.bf16.msra.mxu0 %v898
      %1039 = vmatmul.bf16.gmra.mxu0 %v666
      %v1040 = vpop.f32.mrf.mxu0
      %v1041 = vadd.f32 %v344, %v1040
      %v1042 = vpop.f32.mrf.mxu0
      %v1043 = vadd.f32 %v344, %v1042
      %1044 = vmatmul.bf16.gmra.mxu0 %v669
      %v1045 = vpop.f32.mrf.mxu0
      %v1046 = vadd.f32 %v344, %v1045
      %v1047 = vpop.f32.mrf.mxu0
      %v1048 = vadd.f32 %v344, %v1047
      %1049 = vmatmul.bf16.gmra.mxu0 %v672
      %v1050 = vpop.f32.mrf.mxu0
      %v1051 = vadd.f32 %v344, %v1050
      %v1052 = vpop.f32.mrf.mxu0
      %v1053 = vadd.f32 %v344, %v1052
      %1054 = vmatmul.bf16.gmra.mxu0 %v675
      %v1055 = vpop.f32.mrf.mxu0
      %v1056 = vadd.f32 %v344, %v1055
      %v1057 = vpop.f32.mrf.mxu0
      %v1058 = vadd.f32 %v344, %v1057
      %1059 = vmatmul.bf16.gmra.mxu0 %v678
      %v1060 = vpop.f32.mrf.mxu0
      %v1061 = vadd.f32 %v344, %v1060
      %v1062 = vpop.f32.mrf.mxu0
      %v1063 = vadd.f32 %v344, %v1062
      %1064 = vmatmul.bf16.gmra.mxu0 %v681
      %v1065 = vpop.f32.mrf.mxu0
      %v1066 = vadd.f32 %v344, %v1065
      %v1067 = vpop.f32.mrf.mxu0
      %v1068 = vadd.f32 %v344, %v1067
      %1069 = vmatmul.bf16.gmra.mxu0 %v684
      %v1070 = vpop.f32.mrf.mxu0
      %v1071 = vadd.f32 %v344, %v1070
      %v1072 = vpop.f32.mrf.mxu0
      %v1073 = vadd.f32 %v344, %v1072
      %1074 = vmatmul.bf16.gmra.mxu0 %v687
      %v1075 = vpop.f32.mrf.mxu0
      %v1076 = vadd.f32 %v344, %v1075
      %v1077 = vpop.f32.mrf.mxu0
      %v1078 = vadd.f32 %v344, %v1077
      %1079 = vmatmul.bf16.gmra.mxu0 %v690
      %v1080 = vpop.f32.mrf.mxu0
      %v1081 = vadd.f32 %v344, %v1080
      %v1082 = vpop.f32.mrf.mxu0
      %v1083 = vadd.f32 %v344, %v1082
      %1084 = vmatmul.bf16.gmra.mxu0 %v693
      %v1085 = vpop.f32.mrf.mxu0
      %v1086 = vadd.f32 %v344, %v1085
      %v1087 = vpop.f32.mrf.mxu0
      %v1088 = vadd.f32 %v344, %v1087
      %1089 = vmatmul.bf16.gmra.mxu0 %v696
      %v1090 = vpop.f32.mrf.mxu0
      %v1091 = vadd.f32 %v344, %v1090
      %v1092 = vpop.f32.mrf.mxu0
      %v1093 = vadd.f32 %v344, %v1092
      %1094 = vmatmul.bf16.gmra.mxu0 %v699
      %v1095 = vpop.f32.mrf.mxu0
      %v1096 = vadd.f32 %v344, %v1095
      %v1097 = vpop.f32.mrf.mxu0
      %v1098 = vadd.f32 %v344, %v1097
      %1099 = vmatmul.bf16.gmra.mxu0 %v702
      %v1100 = vpop.f32.mrf.mxu0
      %v1101 = vadd.f32 %v344, %v1100
      %v1102 = vpop.f32.mrf.mxu0
      %v1103 = vadd.f32 %v344, %v1102
      %1104 = vmatmul.bf16.gmra.mxu0 %v705
      %v1105 = vpop.f32.mrf.mxu0
      %v1106 = vadd.f32 %v344, %v1105
      %v1107 = vpop.f32.mrf.mxu0
      %v1108 = vadd.f32 %v344, %v1107
      %1109 = vmatmul.bf16.gmra.mxu0 %v708
      %v1110 = vpop.f32.mrf.mxu0
      %v1111 = vadd.f32 %v344, %v1110
      %v1112 = vpop.f32.mrf.mxu0
      %v1113 = vadd.f32 %v344, %v1112
      %1114 = vmatmul.bf16.gmra.mxu0 %v711
      %v1115 = vpop.f32.mrf.mxu0
      %v1116 = vadd.f32 %v344, %v1115
      %v1117 = vpop.f32.mrf.mxu0
      %v1118 = vadd.f32 %v344, %v1117
      %1119 = vmatmul.bf16.gmra.mxu0 %v714
      %v1120 = vpop.f32.mrf.mxu0
      %v1121 = vadd.f32 %v344, %v1120
      %v1122 = vpop.f32.mrf.mxu0
      %v1123 = vadd.f32 %v344, %v1122
      %1124 = vmatmul.bf16.gmra.mxu0 %v717
      %v1125 = vpop.f32.mrf.mxu0
      %v1126 = vadd.f32 %v344, %v1125
      %v1127 = vpop.f32.mrf.mxu0
      %v1128 = vadd.f32 %v344, %v1127
      %1129 = vmatmul.bf16.gmra.mxu0 %v720
      %v1130 = vpop.f32.mrf.mxu0
      %v1131 = vadd.f32 %v344, %v1130
      %v1132 = vpop.f32.mrf.mxu0
      %v1133 = vadd.f32 %v344, %v1132
      %1134 = vmatmul.bf16.gmra.mxu0 %v723
      %v1135 = vpop.f32.mrf.mxu0
      %v1136 = vadd.f32 %v344, %v1135
      %v1137 = vpop.f32.mrf.mxu0
      %v1138 = vadd.f32 %v344, %v1137
      %1139 = vmatmul.bf16.gmra.mxu0 %v726
      %v1140 = vpop.f32.mrf.mxu0
      %v1141 = vadd.f32 %v344, %v1140
      %v1142 = vpop.f32.mrf.mxu0
      %v1143 = vadd.f32 %v344, %v1142
      %1144 = vmatmul.bf16.gmra.mxu0 %v729
      %v1145 = vpop.f32.mrf.mxu0
      %v1146 = vadd.f32 %v344, %v1145
      %v1147 = vpop.f32.mrf.mxu0
      %v1148 = vadd.f32 %v344, %v1147
      %1149 = vmatmul.bf16.gmra.mxu0 %v732
      %v1150 = vpop.f32.mrf.mxu0
      %v1151 = vadd.f32 %v344, %v1150
      %v1152 = vpop.f32.mrf.mxu0
      %v1153 = vadd.f32 %v344, %v1152
      %1154 = vmatmul.bf16.gmra.mxu0 %v735
      %v1155 = vpop.f32.mrf.mxu0
      %v1156 = vadd.f32 %v344, %v1155
      %v1157 = vpop.f32.mrf.mxu0
      %v1158 = vadd.f32 %v344, %v1157
      %1159 = vmatmul.bf16.gmra.mxu0 %v738
      %v1160 = vpop.f32.mrf.mxu0
      %v1161 = vadd.f32 %v344, %v1160
      %v1162 = vpop.f32.mrf.mxu0
      %v1163 = vadd.f32 %v344, %v1162
      %1164 = vmatmul.bf16.gmra.mxu0 %v741
      %v1165 = vpop.f32.mrf.mxu0
      %v1166 = vadd.f32 %v344, %v1165
      %v1167 = vpop.f32.mrf.mxu0
      %v1168 = vadd.f32 %v344, %v1167
      %1169 = vmatmul.bf16.gmra.mxu0 %v744
      %v1170 = vpop.f32.mrf.mxu0
      %v1171 = vadd.f32 %v344, %v1170
      %v1172 = vpop.f32.mrf.mxu0
      %v1173 = vadd.f32 %v344, %v1172
      %1174 = vmatmul.bf16.gmra.mxu0 %v747
      %v1175 = vpop.f32.mrf.mxu0
      %v1176 = vadd.f32 %v344, %v1175
      %v1177 = vpop.f32.mrf.mxu0
      %v1178 = vadd.f32 %v344, %v1177
      %1179 = vmatmul.bf16.gmra.mxu0 %v750
      %v1180 = vpop.f32.mrf.mxu0
      %v1181 = vadd.f32 %v344, %v1180
      %v1182 = vpop.f32.mrf.mxu0
      %v1183 = vadd.f32 %v344, %v1182
      %1184 = vmatmul.bf16.gmra.mxu0 %v753
      %v1185 = vpop.f32.mrf.mxu0
      %v1186 = vadd.f32 %v344, %v1185
      %v1187 = vpop.f32.mrf.mxu0
      %v1188 = vadd.f32 %v344, %v1187
      %1189 = vmatmul.bf16.gmra.mxu0 %v756
      %v1190 = vpop.f32.mrf.mxu0
      %v1191 = vadd.f32 %v344, %v1190
      %v1192 = vpop.f32.mrf.mxu0
      %v1193 = vadd.f32 %v344, %v1192
      %1194 = vmatmul.bf16.gmra.mxu0 %v759
      %v1195 = vpop.f32.mrf.mxu0
      %v1196 = vadd.f32 %v344, %v1195
      %v1197 = vpop.f32.mrf.mxu0
      %v1198 = vadd.f32 %v344, %v1197
      %1199 = vdwg.mxu0
      %1200 = vmatpush.bf16.msra.mxu0 %v913
      %1201 = vmatpush.bf16.msra.mxu0 %v912
      %1202 = vmatpush.bf16.msra.mxu0 %v911
      %1203 = vmatpush.bf16.msra.mxu0 %v910
      %1204 = vmatpush.bf16.msra.mxu0 %v909
      %1205 = vmatpush.bf16.msra.mxu0 %v908
      %1206 = vmatpush.bf16.msra.mxu0 %v907
      %1207 = vmatpush.bf16.msra.mxu0 %v906
      %1208 = vmatmul.bf16.gmra.mxu0 %v667
      %v1209 = vpop.f32.mrf.mxu0
      %v1210 = vadd.f32 %v1041, %v1209
      %v1211 = vpop.f32.mrf.mxu0
      %v1212 = vadd.f32 %v1043, %v1211
      %1213 = vmatmul.bf16.gmra.mxu0 %v670
      %v1214 = vpop.f32.mrf.mxu0
      %v1215 = vadd.f32 %v1046, %v1214
      %v1216 = vpop.f32.mrf.mxu0
      %v1217 = vadd.f32 %v1048, %v1216
      %1218 = vmatmul.bf16.gmra.mxu0 %v673
      %v1219 = vpop.f32.mrf.mxu0
      %v1220 = vadd.f32 %v1051, %v1219
      %v1221 = vpop.f32.mrf.mxu0
      %v1222 = vadd.f32 %v1053, %v1221
      %1223 = vmatmul.bf16.gmra.mxu0 %v676
      %v1224 = vpop.f32.mrf.mxu0
      %v1225 = vadd.f32 %v1056, %v1224
      %v1226 = vpop.f32.mrf.mxu0
      %v1227 = vadd.f32 %v1058, %v1226
      %1228 = vmatmul.bf16.gmra.mxu0 %v679
      %v1229 = vpop.f32.mrf.mxu0
      %v1230 = vadd.f32 %v1061, %v1229
      %v1231 = vpop.f32.mrf.mxu0
      %v1232 = vadd.f32 %v1063, %v1231
      %1233 = vmatmul.bf16.gmra.mxu0 %v682
      %v1234 = vpop.f32.mrf.mxu0
      %v1235 = vadd.f32 %v1066, %v1234
      %v1236 = vpop.f32.mrf.mxu0
      %v1237 = vadd.f32 %v1068, %v1236
      %1238 = vmatmul.bf16.gmra.mxu0 %v685
      %v1239 = vpop.f32.mrf.mxu0
      %v1240 = vadd.f32 %v1071, %v1239
      %v1241 = vpop.f32.mrf.mxu0
      %v1242 = vadd.f32 %v1073, %v1241
      %1243 = vmatmul.bf16.gmra.mxu0 %v688
      %v1244 = vpop.f32.mrf.mxu0
      %v1245 = vadd.f32 %v1076, %v1244
      %v1246 = vpop.f32.mrf.mxu0
      %v1247 = vadd.f32 %v1078, %v1246
      %1248 = vmatmul.bf16.gmra.mxu0 %v691
      %v1249 = vpop.f32.mrf.mxu0
      %v1250 = vadd.f32 %v1081, %v1249
      %v1251 = vpop.f32.mrf.mxu0
      %v1252 = vadd.f32 %v1083, %v1251
      %1253 = vmatmul.bf16.gmra.mxu0 %v694
      %v1254 = vpop.f32.mrf.mxu0
      %v1255 = vadd.f32 %v1086, %v1254
      %v1256 = vpop.f32.mrf.mxu0
      %v1257 = vadd.f32 %v1088, %v1256
      %1258 = vmatmul.bf16.gmra.mxu0 %v697
      %v1259 = vpop.f32.mrf.mxu0
      %v1260 = vadd.f32 %v1091, %v1259
      %v1261 = vpop.f32.mrf.mxu0
      %v1262 = vadd.f32 %v1093, %v1261
      %1263 = vmatmul.bf16.gmra.mxu0 %v700
      %v1264 = vpop.f32.mrf.mxu0
      %v1265 = vadd.f32 %v1096, %v1264
      %v1266 = vpop.f32.mrf.mxu0
      %v1267 = vadd.f32 %v1098, %v1266
      %1268 = vmatmul.bf16.gmra.mxu0 %v703
      %v1269 = vpop.f32.mrf.mxu0
      %v1270 = vadd.f32 %v1101, %v1269
      %v1271 = vpop.f32.mrf.mxu0
      %v1272 = vadd.f32 %v1103, %v1271
      %1273 = vmatmul.bf16.gmra.mxu0 %v706
      %v1274 = vpop.f32.mrf.mxu0
      %v1275 = vadd.f32 %v1106, %v1274
      %v1276 = vpop.f32.mrf.mxu0
      %v1277 = vadd.f32 %v1108, %v1276
      %1278 = vmatmul.bf16.gmra.mxu0 %v709
      %v1279 = vpop.f32.mrf.mxu0
      %v1280 = vadd.f32 %v1111, %v1279
      %v1281 = vpop.f32.mrf.mxu0
      %v1282 = vadd.f32 %v1113, %v1281
      %1283 = vmatmul.bf16.gmra.mxu0 %v712
      %v1284 = vpop.f32.mrf.mxu0
      %v1285 = vadd.f32 %v1116, %v1284
      %v1286 = vpop.f32.mrf.mxu0
      %v1287 = vadd.f32 %v1118, %v1286
      %1288 = vmatmul.bf16.gmra.mxu0 %v715
      %v1289 = vpop.f32.mrf.mxu0
      %v1290 = vadd.f32 %v1121, %v1289
      %v1291 = vpop.f32.mrf.mxu0
      %v1292 = vadd.f32 %v1123, %v1291
      %1293 = vmatmul.bf16.gmra.mxu0 %v718
      %v1294 = vpop.f32.mrf.mxu0
      %v1295 = vadd.f32 %v1126, %v1294
      %v1296 = vpop.f32.mrf.mxu0
      %v1297 = vadd.f32 %v1128, %v1296
      %1298 = vmatmul.bf16.gmra.mxu0 %v721
      %v1299 = vpop.f32.mrf.mxu0
      %v1300 = vadd.f32 %v1131, %v1299
      %v1301 = vpop.f32.mrf.mxu0
      %v1302 = vadd.f32 %v1133, %v1301
      %1303 = vmatmul.bf16.gmra.mxu0 %v724
      %v1304 = vpop.f32.mrf.mxu0
      %v1305 = vadd.f32 %v1136, %v1304
      %v1306 = vpop.f32.mrf.mxu0
      %v1307 = vadd.f32 %v1138, %v1306
      %1308 = vmatmul.bf16.gmra.mxu0 %v727
      %v1309 = vpop.f32.mrf.mxu0
      %v1310 = vadd.f32 %v1141, %v1309
      %v1311 = vpop.f32.mrf.mxu0
      %v1312 = vadd.f32 %v1143, %v1311
      %1313 = vmatmul.bf16.gmra.mxu0 %v730
      %v1314 = vpop.f32.mrf.mxu0
      %v1315 = vadd.f32 %v1146, %v1314
      %v1316 = vpop.f32.mrf.mxu0
      %v1317 = vadd.f32 %v1148, %v1316
      %1318 = vmatmul.bf16.gmra.mxu0 %v733
      %v1319 = vpop.f32.mrf.mxu0
      %v1320 = vadd.f32 %v1151, %v1319
      %v1321 = vpop.f32.mrf.mxu0
      %v1322 = vadd.f32 %v1153, %v1321
      %1323 = vmatmul.bf16.gmra.mxu0 %v736
      %v1324 = vpop.f32.mrf.mxu0
      %v1325 = vadd.f32 %v1156, %v1324
      %v1326 = vpop.f32.mrf.mxu0
      %v1327 = vadd.f32 %v1158, %v1326
      %1328 = vmatmul.bf16.gmra.mxu0 %v739
      %v1329 = vpop.f32.mrf.mxu0
      %v1330 = vadd.f32 %v1161, %v1329
      %v1331 = vpop.f32.mrf.mxu0
      %v1332 = vadd.f32 %v1163, %v1331
      %1333 = vmatmul.bf16.gmra.mxu0 %v742
      %v1334 = vpop.f32.mrf.mxu0
      %v1335 = vadd.f32 %v1166, %v1334
      %v1336 = vpop.f32.mrf.mxu0
      %v1337 = vadd.f32 %v1168, %v1336
      %1338 = vmatmul.bf16.gmra.mxu0 %v745
      %v1339 = vpop.f32.mrf.mxu0
      %v1340 = vadd.f32 %v1171, %v1339
      %v1341 = vpop.f32.mrf.mxu0
      %v1342 = vadd.f32 %v1173, %v1341
      %1343 = vmatmul.bf16.gmra.mxu0 %v748
      %v1344 = vpop.f32.mrf.mxu0
      %v1345 = vadd.f32 %v1176, %v1344
      %v1346 = vpop.f32.mrf.mxu0
      %v1347 = vadd.f32 %v1178, %v1346
      %1348 = vmatmul.bf16.gmra.mxu0 %v751
      %v1349 = vpop.f32.mrf.mxu0
      %v1350 = vadd.f32 %v1181, %v1349
      %v1351 = vpop.f32.mrf.mxu0
      %v1352 = vadd.f32 %v1183, %v1351
      %1353 = vmatmul.bf16.gmra.mxu0 %v754
      %v1354 = vpop.f32.mrf.mxu0
      %v1355 = vadd.f32 %v1186, %v1354
      %v1356 = vpop.f32.mrf.mxu0
      %v1357 = vadd.f32 %v1188, %v1356
      %1358 = vmatmul.bf16.gmra.mxu0 %v757
      %v1359 = vpop.f32.mrf.mxu0
      %v1360 = vadd.f32 %v1191, %v1359
      %v1361 = vpop.f32.mrf.mxu0
      %v1362 = vadd.f32 %v1193, %v1361
      %1363 = vmatmul.bf16.gmra.mxu0 %v760
      %v1364 = vpop.f32.mrf.mxu0
      %v1365 = vadd.f32 %v1196, %v1364
      %v1366 = vpop.f32.mrf.mxu0
      %v1367 = vadd.f32 %v1198, %v1366
      %1368 = vdwg.mxu0
      %1369 = vmatpush.bf16.msra.mxu0 0
      %1370 = vmatpush.bf16.msra.mxu0 0
      %1371 = vmatpush.bf16.msra.mxu0 0
      %1372 = vmatpush.bf16.msra.mxu0 0
      %1373 = vmatpush.bf16.msra.mxu0 0
      %1374 = vmatpush.bf16.msra.mxu0 0
      %1375 = vmatpush.bf16.msra.mxu0 %v915
      %1376 = vmatpush.bf16.msra.mxu0 %v914
      %1377 = vmatmul.bf16.gmra.mxu0 %v936
      %v1378 = vpop.f32.mrf.mxu0
      %v1379 = vadd.f32 %v1210, %v1378
      %v1380 = vpop.f32.mrf.mxu0
      %v1381 = vadd.f32 %v1212, %v1380
      %1382 = vmatmul.bf16.gmra.mxu0 %v939
      %v1383 = vpop.f32.mrf.mxu0
      %v1384 = vadd.f32 %v1215, %v1383
      %v1385 = vpop.f32.mrf.mxu0
      %v1386 = vadd.f32 %v1217, %v1385
      %1387 = vmatmul.bf16.gmra.mxu0 %v942
      %v1388 = vpop.f32.mrf.mxu0
      %v1389 = vadd.f32 %v1220, %v1388
      %v1390 = vpop.f32.mrf.mxu0
      %v1391 = vadd.f32 %v1222, %v1390
      %1392 = vmatmul.bf16.gmra.mxu0 %v945
      %v1393 = vpop.f32.mrf.mxu0
      %v1394 = vadd.f32 %v1225, %v1393
      %v1395 = vpop.f32.mrf.mxu0
      %v1396 = vadd.f32 %v1227, %v1395
      %1397 = vmatmul.bf16.gmra.mxu0 %v948
      %v1398 = vpop.f32.mrf.mxu0
      %v1399 = vadd.f32 %v1230, %v1398
      %v1400 = vpop.f32.mrf.mxu0
      %v1401 = vadd.f32 %v1232, %v1400
      %1402 = vmatmul.bf16.gmra.mxu0 %v951
      %v1403 = vpop.f32.mrf.mxu0
      %v1404 = vadd.f32 %v1235, %v1403
      %v1405 = vpop.f32.mrf.mxu0
      %v1406 = vadd.f32 %v1237, %v1405
      %1407 = vmatmul.bf16.gmra.mxu0 %v954
      %v1408 = vpop.f32.mrf.mxu0
      %v1409 = vadd.f32 %v1240, %v1408
      %v1410 = vpop.f32.mrf.mxu0
      %v1411 = vadd.f32 %v1242, %v1410
      %1412 = vmatmul.bf16.gmra.mxu0 %v957
      %v1413 = vpop.f32.mrf.mxu0
      %v1414 = vadd.f32 %v1245, %v1413
      %v1415 = vpop.f32.mrf.mxu0
      %v1416 = vadd.f32 %v1247, %v1415
      %1417 = vmatmul.bf16.gmra.mxu0 %v960
      %v1418 = vpop.f32.mrf.mxu0
      %v1419 = vadd.f32 %v1250, %v1418
      %v1420 = vpop.f32.mrf.mxu0
      %v1421 = vadd.f32 %v1252, %v1420
      %1422 = vmatmul.bf16.gmra.mxu0 %v963
      %v1423 = vpop.f32.mrf.mxu0
      %v1424 = vadd.f32 %v1255, %v1423
      %v1425 = vpop.f32.mrf.mxu0
      %v1426 = vadd.f32 %v1257, %v1425
      %1427 = vmatmul.bf16.gmra.mxu0 %v966
      %v1428 = vpop.f32.mrf.mxu0
      %v1429 = vadd.f32 %v1260, %v1428
      %v1430 = vpop.f32.mrf.mxu0
      %v1431 = vadd.f32 %v1262, %v1430
      %1432 = vmatmul.bf16.gmra.mxu0 %v969
      %v1433 = vpop.f32.mrf.mxu0
      %v1434 = vadd.f32 %v1265, %v1433
      %v1435 = vpop.f32.mrf.mxu0
      %v1436 = vadd.f32 %v1267, %v1435
      %1437 = vmatmul.bf16.gmra.mxu0 %v972
      %v1438 = vpop.f32.mrf.mxu0
      %v1439 = vadd.f32 %v1270, %v1438
      %v1440 = vpop.f32.mrf.mxu0
      %v1441 = vadd.f32 %v1272, %v1440
      %1442 = vmatmul.bf16.gmra.mxu0 %v975
      %v1443 = vpop.f32.mrf.mxu0
      %v1444 = vadd.f32 %v1275, %v1443
      %v1445 = vpop.f32.mrf.mxu0
      %v1446 = vadd.f32 %v1277, %v1445
      %1447 = vmatmul.bf16.gmra.mxu0 %v978
      %v1448 = vpop.f32.mrf.mxu0
      %v1449 = vadd.f32 %v1280, %v1448
      %v1450 = vpop.f32.mrf.mxu0
      %v1451 = vadd.f32 %v1282, %v1450
      %1452 = vmatmul.bf16.gmra.mxu0 %v981
      %v1453 = vpop.f32.mrf.mxu0
      %v1454 = vadd.f32 %v1285, %v1453
      %v1455 = vpop.f32.mrf.mxu0
      %v1456 = vadd.f32 %v1287, %v1455
      %1457 = vmatmul.bf16.gmra.mxu0 %v984
      %v1458 = vpop.f32.mrf.mxu0
      %v1459 = vadd.f32 %v1290, %v1458
      %v1460 = vpop.f32.mrf.mxu0
      %v1461 = vadd.f32 %v1292, %v1460
      %1462 = vmatmul.bf16.gmra.mxu0 %v987
      %v1463 = vpop.f32.mrf.mxu0
      %v1464 = vadd.f32 %v1295, %v1463
      %v1465 = vpop.f32.mrf.mxu0
      %v1466 = vadd.f32 %v1297, %v1465
      %1467 = vmatmul.bf16.gmra.mxu0 %v990
      %v1468 = vpop.f32.mrf.mxu0
      %v1469 = vadd.f32 %v1300, %v1468
      %v1470 = vpop.f32.mrf.mxu0
      %v1471 = vadd.f32 %v1302, %v1470
      %1472 = vmatmul.bf16.gmra.mxu0 %v993
      %v1473 = vpop.f32.mrf.mxu0
      %v1474 = vadd.f32 %v1305, %v1473
      %v1475 = vpop.f32.mrf.mxu0
      %v1476 = vadd.f32 %v1307, %v1475
      %1477 = vmatmul.bf16.gmra.mxu0 %v996
      %v1478 = vpop.f32.mrf.mxu0
      %v1479 = vadd.f32 %v1310, %v1478
      %v1480 = vpop.f32.mrf.mxu0
      %v1481 = vadd.f32 %v1312, %v1480
      %1482 = vmatmul.bf16.gmra.mxu0 %v999
      %v1483 = vpop.f32.mrf.mxu0
      %v1484 = vadd.f32 %v1315, %v1483
      %v1485 = vpop.f32.mrf.mxu0
      %v1486 = vadd.f32 %v1317, %v1485
      %1487 = vmatmul.bf16.gmra.mxu0 %v1002
      %v1488 = vpop.f32.mrf.mxu0
      %v1489 = vadd.f32 %v1320, %v1488
      %v1490 = vpop.f32.mrf.mxu0
      %v1491 = vadd.f32 %v1322, %v1490
      %1492 = vmatmul.bf16.gmra.mxu0 %v1005
      %v1493 = vpop.f32.mrf.mxu0
      %v1494 = vadd.f32 %v1325, %v1493
      %v1495 = vpop.f32.mrf.mxu0
      %v1496 = vadd.f32 %v1327, %v1495
      %1497 = vmatmul.bf16.gmra.mxu0 %v1008
      %v1498 = vpop.f32.mrf.mxu0
      %v1499 = vadd.f32 %v1330, %v1498
      %v1500 = vpop.f32.mrf.mxu0
      %v1501 = vadd.f32 %v1332, %v1500
      %1502 = vmatmul.bf16.gmra.mxu0 %v1011
      %v1503 = vpop.f32.mrf.mxu0
      %v1504 = vadd.f32 %v1335, %v1503
      %v1505 = vpop.f32.mrf.mxu0
      %v1506 = vadd.f32 %v1337, %v1505
      %1507 = vmatmul.bf16.gmra.mxu0 %v1014
      %v1508 = vpop.f32.mrf.mxu0
      %v1509 = vadd.f32 %v1340, %v1508
      %v1510 = vpop.f32.mrf.mxu0
      %v1511 = vadd.f32 %v1342, %v1510
      %1512 = vmatmul.bf16.gmra.mxu0 %v1017
      %v1513 = vpop.f32.mrf.mxu0
      %v1514 = vadd.f32 %v1345, %v1513
      %v1515 = vpop.f32.mrf.mxu0
      %v1516 = vadd.f32 %v1347, %v1515
      %1517 = vmatmul.bf16.gmra.mxu0 %v1020
      %v1518 = vpop.f32.mrf.mxu0
      %v1519 = vadd.f32 %v1350, %v1518
      %v1520 = vpop.f32.mrf.mxu0
      %v1521 = vadd.f32 %v1352, %v1520
      %1522 = vmatmul.bf16.gmra.mxu0 %v1023
      %v1523 = vpop.f32.mrf.mxu0
      %v1524 = vadd.f32 %v1355, %v1523
      %v1525 = vpop.f32.mrf.mxu0
      %v1526 = vadd.f32 %v1357, %v1525
      %1527 = vmatmul.bf16.gmra.mxu0 %v1026
      %v1528 = vpop.f32.mrf.mxu0
      %v1529 = vadd.f32 %v1360, %v1528
      %v1530 = vpop.f32.mrf.mxu0
      %v1531 = vadd.f32 %v1362, %v1530
      %1532 = vmatmul.bf16.gmra.mxu0 %v1029
      %v1533 = vpop.f32.mrf.mxu0
      %v1534 = vadd.f32 %v1365, %v1533
      %v1535 = vpop.f32.mrf.mxu0
      %v1536 = vadd.f32 %v1367, %v1535
      %1537 = vdwg.mxu0
      %1538 = vst.msk [vmem:[%s175] sm:$0xff] %vm934, %v1379
      %1539 = vst.msk [vmem:[%s175 + $0x8] sm:$0xff] %vm934, %v1381
      %1540 = vst.msk [vmem:[%s175 + $0x10] sm:$0xff] %vm934, %v1384
      %1541 = vst.msk [vmem:[%s175 + $0x18] sm:$0xff] %vm934, %v1386
      %1542 = vst.msk [vmem:[%s175 + $0x20] sm:$0xff] %vm934, %v1389
      %1543 = vst.msk [vmem:[%s175 + $0x28] sm:$0xff] %vm934, %v1391
      %1544 = vst.msk [vmem:[%s175 + $0x30] sm:$0xff] %vm934, %v1394
      %1545 = vst.msk [vmem:[%s175 + $0x38] sm:$0xff] %vm934, %v1396
      %1546 = vst.msk [vmem:[%s175 + $0x40] sm:$0xff] %vm934, %v1399
      %1547 = vst.msk [vmem:[%s175 + $0x48] sm:$0xff] %vm934, %v1401
      %1548 = vst.msk [vmem:[%s175 + $0x50] sm:$0xff] %vm934, %v1404
      %1549 = vst.msk [vmem:[%s175 + $0x58] sm:$0xff] %vm934, %v1406
      %1550 = vst.msk [vmem:[%s175 + $0x60] sm:$0xff] %vm934, %v1409
      %1551 = vst.msk [vmem:[%s175 + $0x68] sm:$0xff] %vm934, %v1411
      %1552 = vst.msk [vmem:[%s175 + $0x70] sm:$0xff] %vm934, %v1414
      %1553 = vst.msk [vmem:[%s175 + $0x78] sm:$0xff] %vm934, %v1416
      %1554 = vst.msk [vmem:[%s175 + $0x80] sm:$0xff] %vm934, %v1419
      %1555 = vst.msk [vmem:[%s175 + $0x88] sm:$0xff] %vm934, %v1421
      %1556 = vst.msk [vmem:[%s175 + $0x90] sm:$0xff] %vm934, %v1424
      %1557 = vst.msk [vmem:[%s175 + $0x98] sm:$0xff] %vm934, %v1426
      %1558 = vst.msk [vmem:[%s175 + $0xa0] sm:$0xff] %vm934, %v1429
      %1559 = vst.msk [vmem:[%s175 + $0xa8] sm:$0xff] %vm934, %v1431
      %1560 = vst.msk [vmem:[%s175 + $0xb0] sm:$0xff] %vm934, %v1434
      %1561 = vst.msk [vmem:[%s175 + $0xb8] sm:$0xff] %vm934, %v1436
      %1562 = vst.msk [vmem:[%s175 + $0xc0] sm:$0xff] %vm934, %v1439
      %1563 = vst.msk [vmem:[%s175 + $0xc8] sm:$0xff] %vm934, %v1441
      %1564 = vst.msk [vmem:[%s175 + $0xd0] sm:$0xff] %vm934, %v1444
      %1565 = vst.msk [vmem:[%s175 + $0xd8] sm:$0xff] %vm934, %v1446
      %1566 = vst.msk [vmem:[%s175 + $0xe0] sm:$0xff] %vm934, %v1449
      %1567 = vst.msk [vmem:[%s175 + $0xe8] sm:$0xff] %vm934, %v1451
      %1568 = vst.msk [vmem:[%s175 + $0xf0] sm:$0xff] %vm934, %v1454
      %1569 = vst.msk [vmem:[%s175 + $0xf8] sm:$0xff] %vm934, %v1456
      %1570 = vst.msk [vmem:[%s175 + $0x100] sm:$0xff] %vm934, %v1459
      %1571 = vst.msk [vmem:[%s175 + $0x108] sm:$0xff] %vm934, %v1461
      %1572 = vst.msk [vmem:[%s175 + $0x110] sm:$0xff] %vm934, %v1464
      %1573 = vst.msk [vmem:[%s175 + $0x118] sm:$0xff] %vm934, %v1466
      %1574 = vst.msk [vmem:[%s175 + $0x120] sm:$0xff] %vm934, %v1469
      %1575 = vst.msk [vmem:[%s175 + $0x128] sm:$0xff] %vm934, %v1471
      %1576 = vst.msk [vmem:[%s175 + $0x130] sm:$0xff] %vm934, %v1474
      %1577 = vst.msk [vmem:[%s175 + $0x138] sm:$0xff] %vm934, %v1476
      %1578 = vst.msk [vmem:[%s175 + $0x140] sm:$0xff] %vm934, %v1479
      %1579 = vst.msk [vmem:[%s175 + $0x148] sm:$0xff] %vm934, %v1481
      %1580 = vst.msk [vmem:[%s175 + $0x150] sm:$0xff] %vm934, %v1484
      %1581 = vst.msk [vmem:[%s175 + $0x158] sm:$0xff] %vm934, %v1486
      %1582 = vst.msk [vmem:[%s175 + $0x160] sm:$0xff] %vm934, %v1489
      %1583 = vst.msk [vmem:[%s175 + $0x168] sm:$0xff] %vm934, %v1491
      %1584 = vst.msk [vmem:[%s175 + $0x170] sm:$0xff] %vm934, %v1494
      %1585 = vst.msk [vmem:[%s175 + $0x178] sm:$0xff] %vm934, %v1496
      %1586 = vst.msk [vmem:[%s175 + $0x180] sm:$0xff] %vm934, %v1499
      %1587 = vst.msk [vmem:[%s175 + $0x188] sm:$0xff] %vm934, %v1501
      %1588 = vst.msk [vmem:[%s175 + $0x190] sm:$0xff] %vm934, %v1504
      %1589 = vst.msk [vmem:[%s175 + $0x198] sm:$0xff] %vm934, %v1506
      %1590 = vst.msk [vmem:[%s175 + $0x1a0] sm:$0xff] %vm934, %v1509
      %1591 = vst.msk [vmem:[%s175 + $0x1a8] sm:$0xff] %vm934, %v1511
      %1592 = vst.msk [vmem:[%s175 + $0x1b0] sm:$0xff] %vm934, %v1514
      %1593 = vst.msk [vmem:[%s175 + $0x1b8] sm:$0xff] %vm934, %v1516
      %1594 = vst.msk [vmem:[%s175 + $0x1c0] sm:$0xff] %vm934, %v1519
      %1595 = vst.msk [vmem:[%s175 + $0x1c8] sm:$0xff] %vm934, %v1521
      %1596 = vst.msk [vmem:[%s175 + $0x1d0] sm:$0xff] %vm934, %v1524
      %1597 = vst.msk [vmem:[%s175 + $0x1d8] sm:$0xff] %vm934, %v1526
      %1598 = vst.msk [vmem:[%s175 + $0x1e0] sm:$0xff] %vm934, %v1529
      %1599 = vst.msk [vmem:[%s175 + $0x1e8] sm:$0xff] %vm934, %v1531
      %1600 = vst.msk [vmem:[%s175 + $0x1f0] sm:$0xff] %vm934, %v1534
      %1601 = vst.msk [vmem:[%s175 + $0x1f8] sm:$0xff] %vm934, %v1536
      %s1602 = smul.u32 64, %s14
      %p1603 = scmp.lt.s32.totalorder %s1602, 127
      %s1604 = scalar_select %p1603, %s1602, 127
      %s1605 = smul.addr %s1604, 8
      %s1606 = scalar_lea.vmem %s3, %s1605
      // Predicated region
      $region33: #{compentrans512_forward.16} parent=31 // pred_check
        %p1607 = pneg %p100
      $region34: #{compentrans512_forward.16} parent=31 // pred_check_branch
        %1609 = sbr.rel (%p1607) target = $region36
      $region35: #{compentrans512_forward.16} parent=31 // pred_region
        %s1610 = smul.u32 64, %s14
      $region36: #{compentrans512_forward.16} parent=31 // pred_fallthru
        _
    $region32: #{compentrans512_forward.16} parent=5 // pred_fallthru
      _
    %p1611 = scmp.le.s32.totalorder 2, %s9
    // Predicated region
    $region37: #{compentrans512_forward.16} parent=5 // pred_check
      %p1612 = pneg %p1611
    $region38: #{compentrans512_forward.16} parent=5 // pred_check_branch
      %1614 = sbr.rel (%p1612) target = $region40
    $region39: #{compentrans512_forward.16} parent=5 // pred_region
      %s1615 = ssub.s32 %s9, 2
      // Predicated region
      $region41: #{compentrans512_forward.16} parent=39 // pred_check
        %p1616 = pneg %p106
      $region42: #{compentrans512_forward.16} parent=39 // pred_check_branch
        %1618 = sbr.rel (%p1616) target = $region44
      $region43: #{compentrans512_forward.16} parent=39 // pred_region
        %s1619 = smul.u32 64, %s15
        %p1620 = scmp.lt.s32.totalorder %s1619, 127
        %s1621 = scalar_select %p1620, %s1619, 127
        %s1622 = smul.addr %s1621, 8
        %s1623 = scalar_lea.vmem %s3, %s1622
      $region44: #{compentrans512_forward.16} parent=39 // pred_fallthru
        _
    $region40: #{compentrans512_forward.16} parent=5 // pred_fallthru
      _
  $region6: #{compentrans512_forward.16} parent=0 // loop_footer
    %s13 = sadd.s32 1, %s9
  $region7: #{compentrans512_forward.16} parent=0 // loop_footer_branch
    %8 = sbr.rel target = $region3
  $region8: #{compentrans512_forward.16} parent=0 // loop_exit
    _

// kernel: compentrans512_forward.17
$region0: #{compentrans512_forward.17}
  #allocation0 [shape = 'u32[]', space=smem, size = 0x4, offset = 0x4, fixed_abs, tag = 'smem constant byte address 0x4 - core index']
  #allocation1 [shape = 'u32[72,128]{1,0:T(1,128)}', space=vmem, size = 0x9000, scoped, tag = 'internal scratch']
  %s0 = inlined_call_operand.vmem [shape: bf16[256,27], index: 0, kind: input, shape index: {}]
  %s1 = inlined_call_operand.vmem [shape: bf16[27,32], index: 1, kind: input, shape index: {}]
  %s2 = inlined_call_operand.vmem [shape: f32[1,32], index: 2, kind: input, shape index: {}]
  %s3 = inlined_call_operand.vmem [shape: f32[256,32], index: 3, kind: output, shape index: {}]
  %s4 = sld [smem:[#allocation0]]
  $region22: #{compentrans512_forward.17} parent=0
    _
  %s6 = ssub.s32 1, %s4
  %s7 = scalar_select 0, %s6, %s4
  // Predicated region
  $region2: #{compentrans512_forward.17} parent=0 // pred_check
    _
  $region3: #{compentrans512_forward.17} parent=0 // pred_check_branch
    %9 = sbr.rel (0) target = $region5
  $region4: #{compentrans512_forward.17} parent=0 // pred_region
    _
  $region5: #{compentrans512_forward.17} parent=0 // pred_fallthru
    _
  // Predicated region
  $region6: #{compentrans512_forward.17} parent=0 // pred_check
    _
  $region7: #{compentrans512_forward.17} parent=0 // pred_check_branch
    %11 = sbr.rel (0) target = $region9
  $region8: #{compentrans512_forward.17} parent=0 // pred_region
    _
  $region9: #{compentrans512_forward.17} parent=0 // pred_fallthru
    _
  // Predicated region
  $region10: #{compentrans512_forward.17} parent=0 // pred_check
    _
  $region11: #{compentrans512_forward.17} parent=0 // pred_check_branch
    %13 = sbr.rel (0) target = $region13
  $region12: #{compentrans512_forward.17} parent=0 // pred_region
    _
  $region13: #{compentrans512_forward.17} parent=0 // pred_fallthru
    _
  %v15 = vld [vmem:[%s0] sm:$0xf]
  %v16 = vld [vmem:[%s0 + $0x4] sm:$0xf]
  %v17 = vld [vmem:[%s0 + $0x8] sm:$0xf]
  %v18 = vld [vmem:[%s0 + $0xc] sm:$0xf]
  %v19 = vld [vmem:[%s0 + $0x10] sm:$0xf]
  %v20 = vld [vmem:[%s0 + $0x14] sm:$0xf]
  %v21 = vld [vmem:[%s0 + $0x18] sm:$0xf]
  %v22 = vld [vmem:[%s0 + $0x1c] sm:$0xf]
  %v23 = vld [vmem:[%s0 + $0x20] sm:$0xf]
  %v24 = vld [vmem:[%s0 + $0x24] sm:$0xf]
  %v25 = vld [vmem:[%s0 + $0x28] sm:$0xf]
  %v26 = vld [vmem:[%s0 + $0x2c] sm:$0xf]
  %v27 = vld [vmem:[%s0 + $0x30] sm:$0xf]
  %v28 = vld [vmem:[%s0 + $0x34] sm:$0xf]
  %v29 = vld [vmem:[%s0 + $0x38] sm:$0xf]
  %v30 = vld [vmem:[%s0 + $0x3c] sm:$0xf]
  %v31 = vld [vmem:[%s0 + $0x40] sm:$0xf]
  %v32 = vld [vmem:[%s0 + $0x44] sm:$0xf]
  %v33 = vld [vmem:[%s0 + $0x48] sm:$0xf]
  %v34 = vld [vmem:[%s0 + $0x4c] sm:$0xf]
  %v35 = vld [vmem:[%s0 + $0x50] sm:$0xf]
  %v36 = vld [vmem:[%s0 + $0x54] sm:$0xf]
  %v37 = vld [vmem:[%s0 + $0x58] sm:$0xf]
  %v38 = vld [vmem:[%s0 + $0x5c] sm:$0xf]
  %v39 = vld [vmem:[%s0 + $0x60] sm:$0xf]
  %v40 = vld [vmem:[%s0 + $0x64] sm:$0xf]
  %v41 = vld [vmem:[%s0 + $0x68] sm:$0xf]
  %v42 = vld [vmem:[%s0 + $0x6c] sm:$0xf]
  %v43 = vld [vmem:[%s0 + $0x70] sm:$0xf]
  %v44 = vld [vmem:[%s0 + $0x74] sm:$0xf]
  %v45 = vld [vmem:[%s0 + $0x78] sm:$0xf]
  %v46 = vld [vmem:[%s0 + $0x7c] sm:$0xf]
  %v47 = vld [vmem:[%s1] sm:$0xf]
  %v48 = vld [vmem:[%s1 + $0x4] sm:$0xf]
  %v49 = vld [vmem:[%s1 + $0x8] sm:$0xf]
  %v50 = vld [vmem:[%s1 + $0xc] sm:$0x3]
  %v51 = vld [vmem:[%s2] sm:$0x1]
  %v53 = vperm.slane %v51, 0
  %v87 = vunpack.c.l.b16 %v15
  %v88 = vunpack.c.l.b16 %v16
  %v89 = vunpack.c.l.b16 %v17
  %v90 = vunpack.c.l.b16 %v18
  %v91 = vunpack.c.l.b16 %v19
  %v92 = vunpack.c.l.b16 %v20
  %v93 = vunpack.c.l.b16 %v21
  %v94 = vunpack.c.l.b16 %v22
  %v95 = vunpack.c.l.b16 %v23
  %v96 = vunpack.c.l.b16 %v24
  %v97 = vunpack.c.l.b16 %v25
  %v98 = vunpack.c.l.b16 %v26
  %v99 = vunpack.c.l.b16 %v27
  %v100 = vunpack.c.l.b16 %v28
  %v101 = vunpack.c.l.b16 %v29
  %v102 = vunpack.c.l.b16 %v30
  %v103 = vunpack.c.l.b16 %v31
  %v104 = vunpack.c.l.b16 %v32
  %v105 = vunpack.c.l.b16 %v33
  %v106 = vunpack.c.l.b16 %v34
  %v107 = vunpack.c.l.b16 %v35
  %v108 = vunpack.c.l.b16 %v36
  %v109 = vunpack.c.l.b16 %v37
  %v110 = vunpack.c.l.b16 %v38
  %v111 = vunpack.c.l.b16 %v39
  %v112 = vunpack.c.l.b16 %v40
  %v113 = vunpack.c.l.b16 %v41
  %v114 = vunpack.c.l.b16 %v42
  %v115 = vunpack.c.l.b16 %v43
  %v116 = vunpack.c.l.b16 %v44
  %v117 = vunpack.c.l.b16 %v45
  %v118 = vunpack.c.l.b16 %v46
  %v119 = vpack.c.b16 %v88, %v87
  %v120 = vpack.c.b16 %v90, %v89
  %v121 = vpack.c.b16 %v92, %v91
  %v122 = vpack.c.b16 %v94, %v93
  %v123 = vpack.c.b16 %v96, %v95
  %v124 = vpack.c.b16 %v98, %v97
  %v125 = vpack.c.b16 %v100, %v99
  %v126 = vpack.c.b16 %v102, %v101
  %v127 = vpack.c.b16 %v104, %v103
  %v128 = vpack.c.b16 %v106, %v105
  %v129 = vpack.c.b16 %v108, %v107
  %v130 = vpack.c.b16 %v110, %v109
  %v131 = vpack.c.b16 %v112, %v111
  %v132 = vpack.c.b16 %v114, %v113
  %v133 = vpack.c.b16 %v116, %v115
  %v134 = vpack.c.b16 %v118, %v117
  %v139 = vunpack.c.l.b16 %v47
  %v140 = vunpack.c.l.b16 %v48
  %v141 = vunpack.c.l.b16 %v49
  %v142 = vunpack.c.l.b16 %v50
  %v143 = vpack.c.b16 %v140, %v139
  %v144 = vpack.c.b16 %v142, %v141
  %vm146 = vcmask 220160
  %v148 = vsel %vm146, %v119, 0
  %v151 = vsel %vm146, %v120, 0
  %v154 = vsel %vm146, %v121, 0
  %v157 = vsel %vm146, %v122, 0
  %v160 = vsel %vm146, %v123, 0
  %v163 = vsel %vm146, %v124, 0
  %v166 = vsel %vm146, %v125, 0
  %v169 = vsel %vm146, %v126, 0
  %v172 = vsel %vm146, %v127, 0
  %v175 = vsel %vm146, %v128, 0
  %v178 = vsel %vm146, %v129, 0
  %v181 = vsel %vm146, %v130, 0
  %v184 = vsel %vm146, %v131, 0
  %v187 = vsel %vm146, %v132, 0
  %v190 = vsel %vm146, %v133, 0
  %v193 = vsel %vm146, %v134, 0
  %vm195 = vcmask 1044480
  %vm196 = vcmask 1045504
  %v197 = vsel %vm195, 4294967295, 65535
  %v198 = vsel %vm196, %v197, 0
  %v200 = vand.u32 %v144, %v198
  %202 = vmatpush.bf16.msra.mxu0 0
  %203 = vmatpush.bf16.msra.mxu0 0
  %204 = vmatpush.bf16.msra.mxu0 0
  %205 = vmatpush.bf16.msra.mxu0 0
  %206 = vmatpush.bf16.msra.mxu0 0
  %207 = vmatpush.bf16.msra.mxu0 0
  %208 = vmatpush.bf16.msra.mxu0 %v200
  %209 = vmatpush.bf16.msra.mxu0 %v143
  %210 = vmatmul.bf16.gmra.mxu0 %v148
  %v211 = vpop.f32.mrf.mxu0
  %v212 = vadd.f32 %v53, %v211
  %v213 = vpop.f32.mrf.mxu0
  %v214 = vadd.f32 %v53, %v213
  %215 = vmatmul.bf16.gmra.mxu0 %v151
  %v216 = vpop.f32.mrf.mxu0
  %v217 = vadd.f32 %v53, %v216
  %v218 = vpop.f32.mrf.mxu0
  %v219 = vadd.f32 %v53, %v218
  %220 = vmatmul.bf16.gmra.mxu0 %v154
  %v221 = vpop.f32.mrf.mxu0
  %v222 = vadd.f32 %v53, %v221
  %v223 = vpop.f32.mrf.mxu0
  %v224 = vadd.f32 %v53, %v223
  %225 = vmatmul.bf16.gmra.mxu0 %v157
  %v226 = vpop.f32.mrf.mxu0
  %v227 = vadd.f32 %v53, %v226
  %v228 = vpop.f32.mrf.mxu0
  %v229 = vadd.f32 %v53, %v228
  %230 = vmatmul.bf16.gmra.mxu0 %v160
  %v231 = vpop.f32.mrf.mxu0
  %v232 = vadd.f32 %v53, %v231
  %v233 = vpop.f32.mrf.mxu0
  %v234 = vadd.f32 %v53, %v233
  %235 = vmatmul.bf16.gmra.mxu0 %v163
  %v236 = vpop.f32.mrf.mxu0
  %v237 = vadd.f32 %v53, %v236
  %v238 = vpop.f32.mrf.mxu0
  %v239 = vadd.f32 %v53, %v238
  %240 = vmatmul.bf16.gmra.mxu0 %v166
  %v241 = vpop.f32.mrf.mxu0
  %v242 = vadd.f32 %v53, %v241
  %v243 = vpop.f32.mrf.mxu0
  %v244 = vadd.f32 %v53, %v243
  %245 = vmatmul.bf16.gmra.mxu0 %v169
  %v246 = vpop.f32.mrf.mxu0
  %v247 = vadd.f32 %v53, %v246
  %v248 = vpop.f32.mrf.mxu0
  %v249 = vadd.f32 %v53, %v248
  %250 = vmatmul.bf16.gmra.mxu0 %v172
  %v251 = vpop.f32.mrf.mxu0
  %v252 = vadd.f32 %v53, %v251
  %v253 = vpop.f32.mrf.mxu0
  %v254 = vadd.f32 %v53, %v253
  %255 = vmatmul.bf16.gmra.mxu0 %v175
  %v256 = vpop.f32.mrf.mxu0
  %v257 = vadd.f32 %v53, %v256
  %v258 = vpop.f32.mrf.mxu0
  %v259 = vadd.f32 %v53, %v258
  %260 = vmatmul.bf16.gmra.mxu0 %v178
  %v261 = vpop.f32.mrf.mxu0
  %v262 = vadd.f32 %v53, %v261
  %v263 = vpop.f32.mrf.mxu0
  %v264 = vadd.f32 %v53, %v263
  %265 = vmatmul.bf16.gmra.mxu0 %v181
  %v266 = vpop.f32.mrf.mxu0
  %v267 = vadd.f32 %v53, %v266
  %v268 = vpop.f32.mrf.mxu0
  %v269 = vadd.f32 %v53, %v268
  %270 = vmatmul.bf16.gmra.mxu0 %v184
  %v271 = vpop.f32.mrf.mxu0
  %v272 = vadd.f32 %v53, %v271
  %v273 = vpop.f32.mrf.mxu0
  %v274 = vadd.f32 %v53, %v273
  %275 = vmatmul.bf16.gmra.mxu0 %v187
  %v276 = vpop.f32.mrf.mxu0
  %v277 = vadd.f32 %v53, %v276
  %v278 = vpop.f32.mrf.mxu0
  %v279 = vadd.f32 %v53, %v278
  %280 = vmatmul.bf16.gmra.mxu0 %v190
  %v281 = vpop.f32.mrf.mxu0
  %v282 = vadd.f32 %v53, %v281
  %v283 = vpop.f32.mrf.mxu0
  %v284 = vadd.f32 %v53, %v283
  %285 = vmatmul.bf16.gmra.mxu0 %v193
  %v286 = vpop.f32.mrf.mxu0
  %v287 = vadd.f32 %v53, %v286
  %v288 = vpop.f32.mrf.mxu0
  %v289 = vadd.f32 %v53, %v288
  %290 = vdwg.mxu0
  %v291 = vmax.f32 %v212, 0.0
  %v292 = vmax.f32 %v214, 0.0
  %v293 = vmax.f32 %v217, 0.0
  %v294 = vmax.f32 %v219, 0.0
  %v295 = vmax.f32 %v222, 0.0
  %v296 = vmax.f32 %v224, 0.0
  %v297 = vmax.f32 %v227, 0.0
  %v298 = vmax.f32 %v229, 0.0
  %v299 = vmax.f32 %v232, 0.0
  %v300 = vmax.f32 %v234, 0.0
  %v301 = vmax.f32 %v237, 0.0
  %v302 = vmax.f32 %v239, 0.0
  %v303 = vmax.f32 %v242, 0.0
  %v304 = vmax.f32 %v244, 0.0
  %v305 = vmax.f32 %v247, 0.0
  %v306 = vmax.f32 %v249, 0.0
  %v307 = vmax.f32 %v252, 0.0
  %v308 = vmax.f32 %v254, 0.0
  %v309 = vmax.f32 %v257, 0.0
  %v310 = vmax.f32 %v259, 0.0
  %v311 = vmax.f32 %v262, 0.0
  %v312 = vmax.f32 %v264, 0.0
  %v313 = vmax.f32 %v267, 0.0
  %v314 = vmax.f32 %v269, 0.0
  %v315 = vmax.f32 %v272, 0.0
  %v316 = vmax.f32 %v274, 0.0
  %v317 = vmax.f32 %v277, 0.0
  %v318 = vmax.f32 %v279, 0.0
  %v319 = vmax.f32 %v282, 0.0
  %v320 = vmax.f32 %v284, 0.0
  %v321 = vmax.f32 %v287, 0.0
  %v322 = vmax.f32 %v289, 0.0
  %vm323 = vcmask 261120
  %324 = vst.msk [vmem:[%s3] sm:$0xff] %vm323, %v291
  %325 = vst.msk [vmem:[%s3 + $0x8] sm:$0xff] %vm323, %v292
  %326 = vst.msk [vmem:[%s3 + $0x10] sm:$0xff] %vm323, %v293
  %327 = vst.msk [vmem:[%s3 + $0x18] sm:$0xff] %vm323, %v294
  %328 = vst.msk [vmem:[%s3 + $0x20] sm:$0xff] %vm323, %v295
  %329 = vst.msk [vmem:[%s3 + $0x28] sm:$0xff] %vm323, %v296
  %330 = vst.msk [vmem:[%s3 + $0x30] sm:$0xff] %vm323, %v297
  %331 = vst.msk [vmem:[%s3 + $0x38] sm:$0xff] %vm323, %v298
  %332 = vst.msk [vmem:[%s3 + $0x40] sm:$0xff] %vm323, %v299
  %333 = vst.msk [vmem:[%s3 + $0x48] sm:$0xff] %vm323, %v300
  %334 = vst.msk [vmem:[%s3 + $0x50] sm:$0xff] %vm323, %v301
  %335 = vst.msk [vmem:[%s3 + $0x58] sm:$0xff] %vm323, %v302
  %336 = vst.msk [vmem:[%s3 + $0x60] sm:$0xff] %vm323, %v303
  %337 = vst.msk [vmem:[%s3 + $0x68] sm:$0xff] %vm323, %v304
  %338 = vst.msk [vmem:[%s3 + $0x70] sm:$0xff] %vm323, %v305
  %339 = vst.msk [vmem:[%s3 + $0x78] sm:$0xff] %vm323, %v306
  %340 = vst.msk [vmem:[%s3 + $0x80] sm:$0xff] %vm323, %v307
  %341 = vst.msk [vmem:[%s3 + $0x88] sm:$0xff] %vm323, %v308
  %342 = vst.msk [vmem:[%s3 + $0x90] sm:$0xff] %vm323, %v309
  %343 = vst.msk [vmem:[%s3 + $0x98] sm:$0xff] %vm323, %v310
  %344 = vst.msk [vmem:[%s3 + $0xa0] sm:$0xff] %vm323, %v311
  %345 = vst.msk [vmem:[%s3 + $0xa8] sm:$0xff] %vm323, %v312
  %346 = vst.msk [vmem:[%s3 + $0xb0] sm:$0xff] %vm323, %v313
  %347 = vst.msk [vmem:[%s3 + $0xb8] sm:$0xff] %vm323, %v314
  %348 = vst.msk [vmem:[%s3 + $0xc0] sm:$0xff] %vm323, %v315
  %349 = vst.msk [vmem:[%s3 + $0xc8] sm:$0xff] %vm323, %v316
  %350 = vst.msk [vmem:[%s3 + $0xd0] sm:$0xff] %vm323, %v317
  %351 = vst.msk [vmem:[%s3 + $0xd8] sm:$0xff] %vm323, %v318
  %352 = vst.msk [vmem:[%s3 + $0xe0] sm:$0xff] %vm323, %v319
  %353 = vst.msk [vmem:[%s3 + $0xe8] sm:$0xff] %vm323, %v320
  %354 = vst.msk [vmem:[%s3 + $0xf0] sm:$0xff] %vm323, %v321
  %355 = vst.msk [vmem:[%s3 + $0xf8] sm:$0xff] %vm323, %v322
  // Predicated region
  $region14: #{compentrans512_forward.17} parent=0 // pred_check
    _
  $region15: #{compentrans512_forward.17} parent=0 // pred_check_branch
    %357 = sbr.rel (0) target = $region17
  $region16: #{compentrans512_forward.17} parent=0 // pred_region
    _
  $region17: #{compentrans512_forward.17} parent=0 // pred_fallthru
    _
  // Predicated region
  $region18: #{compentrans512_forward.17} parent=0 // pred_check
    _
  $region19: #{compentrans512_forward.17} parent=0 // pred_check_branch
    %359 = sbr.rel (0) target = $region21
  $region20: #{compentrans512_forward.17} parent=0 // pred_region
    _
  $region21: #{compentrans512_forward.17} parent=0 // pred_fallthru
    _

// kernel: compentrans512_forward.18
$region0: #{compentrans512_forward.18}
  #allocation0 [shape = 'u32[]', space=smem, size = 0x4, offset = 0x4, fixed_abs, tag = 'smem constant byte address 0x4 - core index']
  #allocation1 [shape = 'u32[72,128]{1,0:T(1,128)}', space=vmem, size = 0x9000, scoped, tag = 'internal scratch']
  %s0 = inlined_call_operand.vmem [shape: bf16[256,32], index: 0, kind: input, shape index: {}]
  %s1 = inlined_call_operand.vmem [shape: bf16[32,64], index: 1, kind: input, shape index: {}]
  %s2 = inlined_call_operand.vmem [shape: f32[1,64], index: 2, kind: input, shape index: {}]
  %s3 = inlined_call_operand.vmem [shape: f32[256,64], index: 3, kind: output, shape index: {}]
  %s4 = sld [smem:[#allocation0]]
  $region22: #{compentrans512_forward.18} parent=0
    _
  %s6 = ssub.s32 1, %s4
  %s7 = scalar_select 0, %s6, %s4
  // Predicated region
  $region2: #{compentrans512_forward.18} parent=0 // pred_check
    _
  $region3: #{compentrans512_forward.18} parent=0 // pred_check_branch
    %9 = sbr.rel (0) target = $region5
  $region4: #{compentrans512_forward.18} parent=0 // pred_region
    _
  $region5: #{compentrans512_forward.18} parent=0 // pred_fallthru
    _
  // Predicated region
  $region6: #{compentrans512_forward.18} parent=0 // pred_check
    _
  $region7: #{compentrans512_forward.18} parent=0 // pred_check_branch
    %11 = sbr.rel (0) target = $region9
  $region8: #{compentrans512_forward.18} parent=0 // pred_region
    _
  $region9: #{compentrans512_forward.18} parent=0 // pred_fallthru
    _
  // Predicated region
  $region10: #{compentrans512_forward.18} parent=0 // pred_check
    _
  $region11: #{compentrans512_forward.18} parent=0 // pred_check_branch
    %13 = sbr.rel (0) target = $region13
  $region12: #{compentrans512_forward.18} parent=0 // pred_region
    _
  $region13: #{compentrans512_forward.18} parent=0 // pred_fallthru
    _
  %v15 = vld [vmem:[%s0] sm:$0xf]
  %v16 = vld [vmem:[%s0 + $0x4] sm:$0xf]
  %v17 = vld [vmem:[%s0 + $0x8] sm:$0xf]
  %v18 = vld [vmem:[%s0 + $0xc] sm:$0xf]
  %v19 = vld [vmem:[%s0 + $0x10] sm:$0xf]
  %v20 = vld [vmem:[%s0 + $0x14] sm:$0xf]
  %v21 = vld [vmem:[%s0 + $0x18] sm:$0xf]
  %v22 = vld [vmem:[%s0 + $0x1c] sm:$0xf]
  %v23 = vld [vmem:[%s0 + $0x20] sm:$0xf]
  %v24 = vld [vmem:[%s0 + $0x24] sm:$0xf]
  %v25 = vld [vmem:[%s0 + $0x28] sm:$0xf]
  %v26 = vld [vmem:[%s0 + $0x2c] sm:$0xf]
  %v27 = vld [vmem:[%s0 + $0x30] sm:$0xf]
  %v28 = vld [vmem:[%s0 + $0x34] sm:$0xf]
  %v29 = vld [vmem:[%s0 + $0x38] sm:$0xf]
  %v30 = vld [vmem:[%s0 + $0x3c] sm:$0xf]
  %v31 = vld [vmem:[%s0 + $0x40] sm:$0xf]
  %v32 = vld [vmem:[%s0 + $0x44] sm:$0xf]
  %v33 = vld [vmem:[%s0 + $0x48] sm:$0xf]
  %v34 = vld [vmem:[%s0 + $0x4c] sm:$0xf]
  %v35 = vld [vmem:[%s0 + $0x50] sm:$0xf]
  %v36 = vld [vmem:[%s0 + $0x54] sm:$0xf]
  %v37 = vld [vmem:[%s0 + $0x58] sm:$0xf]
  %v38 = vld [vmem:[%s0 + $0x5c] sm:$0xf]
  %v39 = vld [vmem:[%s0 + $0x60] sm:$0xf]
  %v40 = vld [vmem:[%s0 + $0x64] sm:$0xf]
  %v41 = vld [vmem:[%s0 + $0x68] sm:$0xf]
  %v42 = vld [vmem:[%s0 + $0x6c] sm:$0xf]
  %v43 = vld [vmem:[%s0 + $0x70] sm:$0xf]
  %v44 = vld [vmem:[%s0 + $0x74] sm:$0xf]
  %v45 = vld [vmem:[%s0 + $0x78] sm:$0xf]
  %v46 = vld [vmem:[%s0 + $0x7c] sm:$0xf]
  %v47 = vld [vmem:[%s1] sm:$0xf]
  %v48 = vld [vmem:[%s1 + $0x4] sm:$0xf]
  %v49 = vld [vmem:[%s1 + $0x8] sm:$0xf]
  %v50 = vld [vmem:[%s1 + $0xc] sm:$0xf]
  %v51 = vld [vmem:[%s2] sm:$0x1]
  %v53 = vperm.slane %v51, 0
  %v87 = vunpack.c.l.b16 %v15
  %v88 = vunpack.c.l.b16 %v16
  %v89 = vunpack.c.l.b16 %v17
  %v90 = vunpack.c.l.b16 %v18
  %v91 = vunpack.c.l.b16 %v19
  %v92 = vunpack.c.l.b16 %v20
  %v93 = vunpack.c.l.b16 %v21
  %v94 = vunpack.c.l.b16 %v22
  %v95 = vunpack.c.l.b16 %v23
  %v96 = vunpack.c.l.b16 %v24
  %v97 = vunpack.c.l.b16 %v25
  %v98 = vunpack.c.l.b16 %v26
  %v99 = vunpack.c.l.b16 %v27
  %v100 = vunpack.c.l.b16 %v28
  %v101 = vunpack.c.l.b16 %v29
  %v102 = vunpack.c.l.b16 %v30
  %v103 = vunpack.c.l.b16 %v31
  %v104 = vunpack.c.l.b16 %v32
  %v105 = vunpack.c.l.b16 %v33
  %v106 = vunpack.c.l.b16 %v34
  %v107 = vunpack.c.l.b16 %v35
  %v108 = vunpack.c.l.b16 %v36
  %v109 = vunpack.c.l.b16 %v37
  %v110 = vunpack.c.l.b16 %v38
  %v111 = vunpack.c.l.b16 %v39
  %v112 = vunpack.c.l.b16 %v40
  %v113 = vunpack.c.l.b16 %v41
  %v114 = vunpack.c.l.b16 %v42
  %v115 = vunpack.c.l.b16 %v43
  %v116 = vunpack.c.l.b16 %v44
  %v117 = vunpack.c.l.b16 %v45
  %v118 = vunpack.c.l.b16 %v46
  %v119 = vpack.c.b16 %v88, %v87
  %v120 = vpack.c.b16 %v90, %v89
  %v121 = vpack.c.b16 %v92, %v91
  %v122 = vpack.c.b16 %v94, %v93
  %v123 = vpack.c.b16 %v96, %v95
  %v124 = vpack.c.b16 %v98, %v97
  %v125 = vpack.c.b16 %v100, %v99
  %v126 = vpack.c.b16 %v102, %v101
  %v127 = vpack.c.b16 %v104, %v103
  %v128 = vpack.c.b16 %v106, %v105
  %v129 = vpack.c.b16 %v108, %v107
  %v130 = vpack.c.b16 %v110, %v109
  %v131 = vpack.c.b16 %v112, %v111
  %v132 = vpack.c.b16 %v114, %v113
  %v133 = vpack.c.b16 %v116, %v115
  %v134 = vpack.c.b16 %v118, %v117
  %v139 = vunpack.c.l.b16 %v47
  %v140 = vunpack.c.l.b16 %v48
  %v141 = vunpack.c.l.b16 %v49
  %v142 = vunpack.c.l.b16 %v50
  %v143 = vpack.c.b16 %v140, %v139
  %v144 = vpack.c.b16 %v142, %v141
  %vm147 = vcmask 261120
  %v149 = vsel %vm147, %v119, 0
  %v152 = vsel %vm147, %v120, 0
  %v155 = vsel %vm147, %v121, 0
  %v158 = vsel %vm147, %v122, 0
  %v161 = vsel %vm147, %v123, 0
  %v164 = vsel %vm147, %v124, 0
  %v167 = vsel %vm147, %v125, 0
  %v170 = vsel %vm147, %v126, 0
  %v173 = vsel %vm147, %v127, 0
  %v176 = vsel %vm147, %v128, 0
  %v179 = vsel %vm147, %v129, 0
  %v182 = vsel %vm147, %v130, 0
  %v185 = vsel %vm147, %v131, 0
  %v188 = vsel %vm147, %v132, 0
  %v191 = vsel %vm147, %v133, 0
  %v194 = vsel %vm147, %v134, 0
  %196 = vmatpush.bf16.msra.mxu0 0
  %197 = vmatpush.bf16.msra.mxu0 0
  %198 = vmatpush.bf16.msra.mxu0 0
  %199 = vmatpush.bf16.msra.mxu0 0
  %200 = vmatpush.bf16.msra.mxu0 0
  %201 = vmatpush.bf16.msra.mxu0 0
  %202 = vmatpush.bf16.msra.mxu0 %v144
  %203 = vmatpush.bf16.msra.mxu0 %v143
  %204 = vmatmul.bf16.gmra.mxu0 %v149
  %v205 = vpop.f32.mrf.mxu0
  %v206 = vadd.f32 %v53, %v205
  %v207 = vpop.f32.mrf.mxu0
  %v208 = vadd.f32 %v53, %v207
  %209 = vmatmul.bf16.gmra.mxu0 %v152
  %v210 = vpop.f32.mrf.mxu0
  %v211 = vadd.f32 %v53, %v210
  %v212 = vpop.f32.mrf.mxu0
  %v213 = vadd.f32 %v53, %v212
  %214 = vmatmul.bf16.gmra.mxu0 %v155
  %v215 = vpop.f32.mrf.mxu0
  %v216 = vadd.f32 %v53, %v215
  %v217 = vpop.f32.mrf.mxu0
  %v218 = vadd.f32 %v53, %v217
  %219 = vmatmul.bf16.gmra.mxu0 %v158
  %v220 = vpop.f32.mrf.mxu0
  %v221 = vadd.f32 %v53, %v220
  %v222 = vpop.f32.mrf.mxu0
  %v223 = vadd.f32 %v53, %v222
  %224 = vmatmul.bf16.gmra.mxu0 %v161
  %v225 = vpop.f32.mrf.mxu0
  %v226 = vadd.f32 %v53, %v225
  %v227 = vpop.f32.mrf.mxu0
  %v228 = vadd.f32 %v53, %v227
  %229 = vmatmul.bf16.gmra.mxu0 %v164
  %v230 = vpop.f32.mrf.mxu0
  %v231 = vadd.f32 %v53, %v230
  %v232 = vpop.f32.mrf.mxu0
  %v233 = vadd.f32 %v53, %v232
  %234 = vmatmul.bf16.gmra.mxu0 %v167
  %v235 = vpop.f32.mrf.mxu0
  %v236 = vadd.f32 %v53, %v235
  %v237 = vpop.f32.mrf.mxu0
  %v238 = vadd.f32 %v53, %v237
  %239 = vmatmul.bf16.gmra.mxu0 %v170
  %v240 = vpop.f32.mrf.mxu0
  %v241 = vadd.f32 %v53, %v240
  %v242 = vpop.f32.mrf.mxu0
  %v243 = vadd.f32 %v53, %v242
  %244 = vmatmul.bf16.gmra.mxu0 %v173
  %v245 = vpop.f32.mrf.mxu0
  %v246 = vadd.f32 %v53, %v245
  %v247 = vpop.f32.mrf.mxu0
  %v248 = vadd.f32 %v53, %v247
  %249 = vmatmul.bf16.gmra.mxu0 %v176
  %v250 = vpop.f32.mrf.mxu0
  %v251 = vadd.f32 %v53, %v250
  %v252 = vpop.f32.mrf.mxu0
  %v253 = vadd.f32 %v53, %v252
  %254 = vmatmul.bf16.gmra.mxu0 %v179
  %v255 = vpop.f32.mrf.mxu0
  %v256 = vadd.f32 %v53, %v255
  %v257 = vpop.f32.mrf.mxu0
  %v258 = vadd.f32 %v53, %v257
  %259 = vmatmul.bf16.gmra.mxu0 %v182
  %v260 = vpop.f32.mrf.mxu0
  %v261 = vadd.f32 %v53, %v260
  %v262 = vpop.f32.mrf.mxu0
  %v263 = vadd.f32 %v53, %v262
  %264 = vmatmul.bf16.gmra.mxu0 %v185
  %v265 = vpop.f32.mrf.mxu0
  %v266 = vadd.f32 %v53, %v265
  %v267 = vpop.f32.mrf.mxu0
  %v268 = vadd.f32 %v53, %v267
  %269 = vmatmul.bf16.gmra.mxu0 %v188
  %v270 = vpop.f32.mrf.mxu0
  %v271 = vadd.f32 %v53, %v270
  %v272 = vpop.f32.mrf.mxu0
  %v273 = vadd.f32 %v53, %v272
  %274 = vmatmul.bf16.gmra.mxu0 %v191
  %v275 = vpop.f32.mrf.mxu0
  %v276 = vadd.f32 %v53, %v275
  %v277 = vpop.f32.mrf.mxu0
  %v278 = vadd.f32 %v53, %v277
  %279 = vmatmul.bf16.gmra.mxu0 %v194
  %v280 = vpop.f32.mrf.mxu0
  %v281 = vadd.f32 %v53, %v280
  %v282 = vpop.f32.mrf.mxu0
  %v283 = vadd.f32 %v53, %v282
  %284 = vdwg.mxu0
  %v285 = vmax.f32 %v206, 0.0
  %v286 = vmax.f32 %v208, 0.0
  %v287 = vmax.f32 %v211, 0.0
  %v288 = vmax.f32 %v213, 0.0
  %v289 = vmax.f32 %v216, 0.0
  %v290 = vmax.f32 %v218, 0.0
  %v291 = vmax.f32 %v221, 0.0
  %v292 = vmax.f32 %v223, 0.0
  %v293 = vmax.f32 %v226, 0.0
  %v294 = vmax.f32 %v228, 0.0
  %v295 = vmax.f32 %v231, 0.0
  %v296 = vmax.f32 %v233, 0.0
  %v297 = vmax.f32 %v236, 0.0
  %v298 = vmax.f32 %v238, 0.0
  %v299 = vmax.f32 %v241, 0.0
  %v300 = vmax.f32 %v243, 0.0
  %v301 = vmax.f32 %v246, 0.0
  %v302 = vmax.f32 %v248, 0.0
  %v303 = vmax.f32 %v251, 0.0
  %v304 = vmax.f32 %v253, 0.0
  %v305 = vmax.f32 %v256, 0.0
  %v306 = vmax.f32 %v258, 0.0
  %v307 = vmax.f32 %v261, 0.0
  %v308 = vmax.f32 %v263, 0.0
  %v309 = vmax.f32 %v266, 0.0
  %v310 = vmax.f32 %v268, 0.0
  %v311 = vmax.f32 %v271, 0.0
  %v312 = vmax.f32 %v273, 0.0
  %v313 = vmax.f32 %v276, 0.0
  %v314 = vmax.f32 %v278, 0.0
  %v315 = vmax.f32 %v281, 0.0
  %v316 = vmax.f32 %v283, 0.0
  %vm317 = vcmask 523264
  %318 = vst.msk [vmem:[%s3] sm:$0xff] %vm317, %v285
  %319 = vst.msk [vmem:[%s3 + $0x8] sm:$0xff] %vm317, %v286
  %320 = vst.msk [vmem:[%s3 + $0x10] sm:$0xff] %vm317, %v287
  %321 = vst.msk [vmem:[%s3 + $0x18] sm:$0xff] %vm317, %v288
  %322 = vst.msk [vmem:[%s3 + $0x20] sm:$0xff] %vm317, %v289
  %323 = vst.msk [vmem:[%s3 + $0x28] sm:$0xff] %vm317, %v290
  %324 = vst.msk [vmem:[%s3 + $0x30] sm:$0xff] %vm317, %v291
  %325 = vst.msk [vmem:[%s3 + $0x38] sm:$0xff] %vm317, %v292
  %326 = vst.msk [vmem:[%s3 + $0x40] sm:$0xff] %vm317, %v293
  %327 = vst.msk [vmem:[%s3 + $0x48] sm:$0xff] %vm317, %v294
  %328 = vst.msk [vmem:[%s3 + $0x50] sm:$0xff] %vm317, %v295
  %329 = vst.msk [vmem:[%s3 + $0x58] sm:$0xff] %vm317, %v296
  %330 = vst.msk [vmem:[%s3 + $0x60] sm:$0xff] %vm317, %v297
  %331 = vst.msk [vmem:[%s3 + $0x68] sm:$0xff] %vm317, %v298
  %332 = vst.msk [vmem:[%s3 + $0x70] sm:$0xff] %vm317, %v299
  %333 = vst.msk [vmem:[%s3 + $0x78] sm:$0xff] %vm317, %v300
  %334 = vst.msk [vmem:[%s3 + $0x80] sm:$0xff] %vm317, %v301
  %335 = vst.msk [vmem:[%s3 + $0x88] sm:$0xff] %vm317, %v302
  %336 = vst.msk [vmem:[%s3 + $0x90] sm:$0xff] %vm317, %v303
  %337 = vst.msk [vmem:[%s3 + $0x98] sm:$0xff] %vm317, %v304
  %338 = vst.msk [vmem:[%s3 + $0xa0] sm:$0xff] %vm317, %v305
  %339 = vst.msk [vmem:[%s3 + $0xa8] sm:$0xff] %vm317, %v306
  %340 = vst.msk [vmem:[%s3 + $0xb0] sm:$0xff] %vm317, %v307
  %341 = vst.msk [vmem:[%s3 + $0xb8] sm:$0xff] %vm317, %v308
  %342 = vst.msk [vmem:[%s3 + $0xc0] sm:$0xff] %vm317, %v309
  %343 = vst.msk [vmem:[%s3 + $0xc8] sm:$0xff] %vm317, %v310
  %344 = vst.msk [vmem:[%s3 + $0xd0] sm:$0xff] %vm317, %v311
  %345 = vst.msk [vmem:[%s3 + $0xd8] sm:$0xff] %vm317, %v312
  %346 = vst.msk [vmem:[%s3 + $0xe0] sm:$0xff] %vm317, %v313
  %347 = vst.msk [vmem:[%s3 + $0xe8] sm:$0xff] %vm317, %v314
  %348 = vst.msk [vmem:[%s3 + $0xf0] sm:$0xff] %vm317, %v315
  %349 = vst.msk [vmem:[%s3 + $0xf8] sm:$0xff] %vm317, %v316
  // Predicated region
  $region14: #{compentrans512_forward.18} parent=0 // pred_check
    _
  $region15: #{compentrans512_forward.18} parent=0 // pred_check_branch
    %351 = sbr.rel (0) target = $region17
  $region16: #{compentrans512_forward.18} parent=0 // pred_region
    _
  $region17: #{compentrans512_forward.18} parent=0 // pred_fallthru
    _
  // Predicated region
  $region18: #{compentrans512_forward.18} parent=0 // pred_check
    _
  $region19: #{compentrans512_forward.18} parent=0 // pred_check_branch
    %353 = sbr.rel (0) target = $region21
  $region20: #{compentrans512_forward.18} parent=0 // pred_region
    _
  $region21: #{compentrans512_forward.18} parent=0 // pred_fallthru
    _

// kernel: compentrans512_forward.19
$region0: #{compentrans512_forward.19}
  #allocation0 [shape = 'u32[]', space=smem, size = 0x4, offset = 0x4, fixed_abs, tag = 'smem constant byte address 0x4 - core index']
  #allocation1 [shape = 'u32[72,128]{1,0:T(1,128)}', space=vmem, size = 0x9000, scoped, tag = 'internal scratch']
  %s0 = inlined_call_operand.vmem [shape: bf16[256,576], index: 0, kind: input, shape index: {}]
  %s1 = inlined_call_operand.vmem [shape: bf16[576,64], index: 1, kind: input, shape index: {}]
  %s2 = inlined_call_operand.vmem [shape: f32[1,64], index: 2, kind: input, shape index: {}]
  %s3 = inlined_call_operand.vmem [shape: f32[256,64], index: 3, kind: output, shape index: {}]
  %s4 = sld [smem:[#allocation0]]
  $region22: #{compentrans512_forward.19} parent=0
    _
  %s6 = ssub.s32 1, %s4
  %s7 = scalar_select 0, %s6, %s4
  // Predicated region
  $region2: #{compentrans512_forward.19} parent=0 // pred_check
    _
  $region3: #{compentrans512_forward.19} parent=0 // pred_check_branch
    %9 = sbr.rel (0) target = $region5
  $region4: #{compentrans512_forward.19} parent=0 // pred_region
    _
  $region5: #{compentrans512_forward.19} parent=0 // pred_fallthru
    _
  // Predicated region
  $region6: #{compentrans512_forward.19} parent=0 // pred_check
    _
  $region7: #{compentrans512_forward.19} parent=0 // pred_check_branch
    %11 = sbr.rel (0) target = $region9
  $region8: #{compentrans512_forward.19} parent=0 // pred_region
    _
  $region9: #{compentrans512_forward.19} parent=0 // pred_fallthru
    _
  // Predicated region
  $region10: #{compentrans512_forward.19} parent=0 // pred_check
    _
  $region11: #{compentrans512_forward.19} parent=0 // pred_check_branch
    %13 = sbr.rel (0) target = $region13
  $region12: #{compentrans512_forward.19} parent=0 // pred_region
    _
  $region13: #{compentrans512_forward.19} parent=0 // pred_fallthru
    _
  %v15 = vld [vmem:[%s0] sm:$0xff]
  %v16 = vld [vmem:[%s0 + $0x8] sm:$0xff]
  %v17 = vld [vmem:[%s0 + $0x10] sm:$0xf]
  %v18 = vld [vmem:[%s0 + $0x14] sm:$0xff]
  %v19 = vld [vmem:[%s0 + $0x1c] sm:$0xff]
  %v20 = vld [vmem:[%s0 + $0x24] sm:$0xf]
  %v21 = vld [vmem:[%s0 + $0x28] sm:$0xff]
  %v22 = vld [vmem:[%s0 + $0x30] sm:$0xff]
  %v23 = vld [vmem:[%s0 + $0x38] sm:$0xf]
  %v24 = vld [vmem:[%s0 + $0x3c] sm:$0xff]
  %v25 = vld [vmem:[%s0 + $0x44] sm:$0xff]
  %v26 = vld [vmem:[%s0 + $0x4c] sm:$0xf]
  %v27 = vld [vmem:[%s0 + $0x50] sm:$0xff]
  %v28 = vld [vmem:[%s0 + $0x58] sm:$0xff]
  %v29 = vld [vmem:[%s0 + $0x60] sm:$0xf]
  %v30 = vld [vmem:[%s0 + $0x64] sm:$0xff]
  %v31 = vld [vmem:[%s0 + $0x6c] sm:$0xff]
  %v32 = vld [vmem:[%s0 + $0x74] sm:$0xf]
  %v33 = vld [vmem:[%s0 + $0x78] sm:$0xff]
  %v34 = vld [vmem:[%s0 + $0x80] sm:$0xff]
  %v35 = vld [vmem:[%s0 + $0x88] sm:$0xf]
  %v36 = vld [vmem:[%s0 + $0x8c] sm:$0xff]
  %v37 = vld [vmem:[%s0 + $0x94] sm:$0xff]
  %v38 = vld [vmem:[%s0 + $0x9c] sm:$0xf]
  %v39 = vld [vmem:[%s0 + $0xa0] sm:$0xff]
  %v40 = vld [vmem:[%s0 + $0xa8] sm:$0xff]
  %v41 = vld [vmem:[%s0 + $0xb0] sm:$0xf]
  %v42 = vld [vmem:[%s0 + $0xb4] sm:$0xff]
  %v43 = vld [vmem:[%s0 + $0xbc] sm:$0xff]
  %v44 = vld [vmem:[%s0 + $0xc4] sm:$0xf]
  %v45 = vld [vmem:[%s0 + $0xc8] sm:$0xff]
  %v46 = vld [vmem:[%s0 + $0xd0] sm:$0xff]
  %v47 = vld [vmem:[%s0 + $0xd8] sm:$0xf]
  %v48 = vld [vmem:[%s0 + $0xdc] sm:$0xff]
  %v49 = vld [vmem:[%s0 + $0xe4] sm:$0xff]
  %v50 = vld [vmem:[%s0 + $0xec] sm:$0xf]
  %v51 = vld [vmem:[%s0 + $0xf0] sm:$0xff]
  %v52 = vld [vmem:[%s0 + $0xf8] sm:$0xff]
  %v53 = vld [vmem:[%s0 + $0x100] sm:$0xf]
  %v54 = vld [vmem:[%s0 + $0x104] sm:$0xff]
  %v55 = vld [vmem:[%s0 + $0x10c] sm:$0xff]
  %v56 = vld [vmem:[%s0 + $0x114] sm:$0xf]
  %v57 = vld [vmem:[%s0 + $0x118] sm:$0xff]
  %v58 = vld [vmem:[%s0 + $0x120] sm:$0xff]
  %v59 = vld [vmem:[%s0 + $0x128] sm:$0xf]
  %v60 = vld [vmem:[%s0 + $0x12c] sm:$0xff]
  %v61 = vld [vmem:[%s0 + $0x134] sm:$0xff]
  %v62 = vld [vmem:[%s0 + $0x13c] sm:$0xf]
  %v63 = vld [vmem:[%s0 + $0x140] sm:$0xff]
  %v64 = vld [vmem:[%s0 + $0x148] sm:$0xff]
  %v65 = vld [vmem:[%s0 + $0x150] sm:$0xf]
  %v66 = vld [vmem:[%s0 + $0x154] sm:$0xff]
  %v67 = vld [vmem:[%s0 + $0x15c] sm:$0xff]
  %v68 = vld [vmem:[%s0 + $0x164] sm:$0xf]
  %v69 = vld [vmem:[%s0 + $0x168] sm:$0xff]
  %v70 = vld [vmem:[%s0 + $0x170] sm:$0xff]
  %v71 = vld [vmem:[%s0 + $0x178] sm:$0xf]
  %v72 = vld [vmem:[%s0 + $0x17c] sm:$0xff]
  %v73 = vld [vmem:[%s0 + $0x184] sm:$0xff]
  %v74 = vld [vmem:[%s0 + $0x18c] sm:$0xf]
  %v75 = vld [vmem:[%s0 + $0x190] sm:$0xff]
  %v76 = vld [vmem:[%s0 + $0x198] sm:$0xff]
  %v77 = vld [vmem:[%s0 + $0x1a0] sm:$0xf]
  %v78 = vld [vmem:[%s0 + $0x1a4] sm:$0xff]
  %v79 = vld [vmem:[%s0 + $0x1ac] sm:$0xff]
  %v80 = vld [vmem:[%s0 + $0x1b4] sm:$0xf]
  %v81 = vld [vmem:[%s0 + $0x1b8] sm:$0xff]
  %v82 = vld [vmem:[%s0 + $0x1c0] sm:$0xff]
  %v83 = vld [vmem:[%s0 + $0x1c8] sm:$0xf]
  %v84 = vld [vmem:[%s0 + $0x1cc] sm:$0xff]
  %v85 = vld [vmem:[%s0 + $0x1d4] sm:$0xff]
  %v86 = vld [vmem:[%s0 + $0x1dc] sm:$0xf]
  %v87 = vld [vmem:[%s0 + $0x1e0] sm:$0xff]
  %v88 = vld [vmem:[%s0 + $0x1e8] sm:$0xff]
  %v89 = vld [vmem:[%s0 + $0x1f0] sm:$0xf]
  %v90 = vld [vmem:[%s0 + $0x1f4] sm:$0xff]
  %v91 = vld [vmem:[%s0 + $0x1fc] sm:$0xff]
  %v92 = vld [vmem:[%s0 + $0x204] sm:$0xf]
  %v93 = vld [vmem:[%s0 + $0x208] sm:$0xff]
  %v94 = vld [vmem:[%s0 + $0x210] sm:$0xff]
  %v95 = vld [vmem:[%s0 + $0x218] sm:$0xf]
  %v96 = vld [vmem:[%s0 + $0x21c] sm:$0xff]
  %v97 = vld [vmem:[%s0 + $0x224] sm:$0xff]
  %v98 = vld [vmem:[%s0 + $0x22c] sm:$0xf]
  %v99 = vld [vmem:[%s0 + $0x230] sm:$0xff]
  %v100 = vld [vmem:[%s0 + $0x238] sm:$0xff]
  %v101 = vld [vmem:[%s0 + $0x240] sm:$0xf]
  %v102 = vld [vmem:[%s0 + $0x244] sm:$0xff]
  %v103 = vld [vmem:[%s0 + $0x24c] sm:$0xff]
  %v104 = vld [vmem:[%s0 + $0x254] sm:$0xf]
  %v105 = vld [vmem:[%s0 + $0x258] sm:$0xff]
  %v106 = vld [vmem:[%s0 + $0x260] sm:$0xff]
  %v107 = vld [vmem:[%s0 + $0x268] sm:$0xf]
  %v108 = vld [vmem:[%s0 + $0x26c] sm:$0xff]
  %v109 = vld [vmem:[%s0 + $0x274] sm:$0xff]
  %v110 = vld [vmem:[%s0 + $0x27c] sm:$0xf]
  %v111 = vld [vmem:[%s1] sm:$0xf]
  %v112 = vld [vmem:[%s1 + $0x4] sm:$0xf]
  %v113 = vld [vmem:[%s1 + $0x8] sm:$0xf]
  %v114 = vld [vmem:[%s1 + $0xc] sm:$0xf]
  %v115 = vld [vmem:[%s1 + $0x10] sm:$0xf]
  %v116 = vld [vmem:[%s1 + $0x14] sm:$0xf]
  %v117 = vld [vmem:[%s1 + $0x18] sm:$0xf]
  %v118 = vld [vmem:[%s1 + $0x1c] sm:$0xf]
  %v119 = vld [vmem:[%s1 + $0x20] sm:$0xf]
  %v120 = vld [vmem:[%s1 + $0x24] sm:$0xf]
  %v121 = vld [vmem:[%s1 + $0x28] sm:$0xf]
  %v122 = vld [vmem:[%s1 + $0x2c] sm:$0xf]
  %v123 = vld [vmem:[%s1 + $0x30] sm:$0xf]
  %v124 = vld [vmem:[%s1 + $0x34] sm:$0xf]
  %v125 = vld [vmem:[%s1 + $0x38] sm:$0xf]
  %v126 = vld [vmem:[%s1 + $0x3c] sm:$0xf]
  %v127 = vld [vmem:[%s1 + $0x40] sm:$0xf]
  %v128 = vld [vmem:[%s1 + $0x44] sm:$0xf]
  %v129 = vld [vmem:[%s1 + $0x48] sm:$0xf]
  %v130 = vld [vmem:[%s1 + $0x4c] sm:$0xf]
  %v131 = vld [vmem:[%s1 + $0x50] sm:$0xf]
  %v132 = vld [vmem:[%s1 + $0x54] sm:$0xf]
  %v133 = vld [vmem:[%s1 + $0x58] sm:$0xf]
  %v134 = vld [vmem:[%s1 + $0x5c] sm:$0xf]
  %v135 = vld [vmem:[%s1 + $0x60] sm:$0xf]
  %v136 = vld [vmem:[%s1 + $0x64] sm:$0xf]
  %v137 = vld [vmem:[%s1 + $0x68] sm:$0xf]
  %v138 = vld [vmem:[%s1 + $0x6c] sm:$0xf]
  %v139 = vld [vmem:[%s1 + $0x70] sm:$0xf]
  %v140 = vld [vmem:[%s1 + $0x74] sm:$0xf]
  %v141 = vld [vmem:[%s1 + $0x78] sm:$0xf]
  %v142 = vld [vmem:[%s1 + $0x7c] sm:$0xf]
  %v143 = vld [vmem:[%s1 + $0x80] sm:$0xf]
  %v144 = vld [vmem:[%s1 + $0x84] sm:$0xf]
  %v145 = vld [vmem:[%s1 + $0x88] sm:$0xf]
  %v146 = vld [vmem:[%s1 + $0x8c] sm:$0xf]
  %v147 = vld [vmem:[%s1 + $0x90] sm:$0xf]
  %v148 = vld [vmem:[%s1 + $0x94] sm:$0xf]
  %v149 = vld [vmem:[%s1 + $0x98] sm:$0xf]
  %v150 = vld [vmem:[%s1 + $0x9c] sm:$0xf]
  %v151 = vld [vmem:[%s1 + $0xa0] sm:$0xf]
  %v152 = vld [vmem:[%s1 + $0xa4] sm:$0xf]
  %v153 = vld [vmem:[%s1 + $0xa8] sm:$0xf]
  %v154 = vld [vmem:[%s1 + $0xac] sm:$0xf]
  %v155 = vld [vmem:[%s1 + $0xb0] sm:$0xf]
  %v156 = vld [vmem:[%s1 + $0xb4] sm:$0xf]
  %v157 = vld [vmem:[%s1 + $0xb8] sm:$0xf]
  %v158 = vld [vmem:[%s1 + $0xbc] sm:$0xf]
  %v159 = vld [vmem:[%s1 + $0xc0] sm:$0xf]
  %v160 = vld [vmem:[%s1 + $0xc4] sm:$0xf]
  %v161 = vld [vmem:[%s1 + $0xc8] sm:$0xf]
  %v162 = vld [vmem:[%s1 + $0xcc] sm:$0xf]
  %v163 = vld [vmem:[%s1 + $0xd0] sm:$0xf]
  %v164 = vld [vmem:[%s1 + $0xd4] sm:$0xf]
  %v165 = vld [vmem:[%s1 + $0xd8] sm:$0xf]
  %v166 = vld [vmem:[%s1 + $0xdc] sm:$0xf]
  %v167 = vld [vmem:[%s1 + $0xe0] sm:$0xf]
  %v168 = vld [vmem:[%s1 + $0xe4] sm:$0xf]
  %v169 = vld [vmem:[%s1 + $0xe8] sm:$0xf]
  %v170 = vld [vmem:[%s1 + $0xec] sm:$0xf]
  %v171 = vld [vmem:[%s1 + $0xf0] sm:$0xf]
  %v172 = vld [vmem:[%s1 + $0xf4] sm:$0xf]
  %v173 = vld [vmem:[%s1 + $0xf8] sm:$0xf]
  %v174 = vld [vmem:[%s1 + $0xfc] sm:$0xf]
  %v175 = vld [vmem:[%s1 + $0x100] sm:$0xf]
  %v176 = vld [vmem:[%s1 + $0x104] sm:$0xf]
  %v177 = vld [vmem:[%s1 + $0x108] sm:$0xf]
  %v178 = vld [vmem:[%s1 + $0x10c] sm:$0xf]
  %v179 = vld [vmem:[%s1 + $0x110] sm:$0xf]
  %v180 = vld [vmem:[%s1 + $0x114] sm:$0xf]
  %v181 = vld [vmem:[%s1 + $0x118] sm:$0xf]
  %v182 = vld [vmem:[%s1 + $0x11c] sm:$0xf]
  %v183 = vld [vmem:[%s2] sm:$0x1]
  %v185 = vperm.slane %v183, 0
  %v283 = vunpack.c.l.b16 %v15
  %v284 = vunpack.c.h.b16 %v15
  %v285 = vunpack.c.l.b16 %v16
  %v286 = vunpack.c.h.b16 %v16
  %v287 = vunpack.c.l.b16 %v17
  %v288 = vunpack.c.l.b16 %v18
  %v289 = vunpack.c.h.b16 %v18
  %v290 = vunpack.c.l.b16 %v19
  %v291 = vunpack.c.h.b16 %v19
  %v292 = vunpack.c.l.b16 %v20
  %v293 = vunpack.c.l.b16 %v21
  %v294 = vunpack.c.h.b16 %v21
  %v295 = vunpack.c.l.b16 %v22
  %v296 = vunpack.c.h.b16 %v22
  %v297 = vunpack.c.l.b16 %v23
  %v298 = vunpack.c.l.b16 %v24
  %v299 = vunpack.c.h.b16 %v24
  %v300 = vunpack.c.l.b16 %v25
  %v301 = vunpack.c.h.b16 %v25
  %v302 = vunpack.c.l.b16 %v26
  %v303 = vunpack.c.l.b16 %v27
  %v304 = vunpack.c.h.b16 %v27
  %v305 = vunpack.c.l.b16 %v28
  %v306 = vunpack.c.h.b16 %v28
  %v307 = vunpack.c.l.b16 %v29
  %v308 = vunpack.c.l.b16 %v30
  %v309 = vunpack.c.h.b16 %v30
  %v310 = vunpack.c.l.b16 %v31
  %v311 = vunpack.c.h.b16 %v31
  %v312 = vunpack.c.l.b16 %v32
  %v313 = vunpack.c.l.b16 %v33
  %v314 = vunpack.c.h.b16 %v33
  %v315 = vunpack.c.l.b16 %v34
  %v316 = vunpack.c.h.b16 %v34
  %v317 = vunpack.c.l.b16 %v35
  %v318 = vunpack.c.l.b16 %v36
  %v319 = vunpack.c.h.b16 %v36
  %v320 = vunpack.c.l.b16 %v37
  %v321 = vunpack.c.h.b16 %v37
  %v322 = vunpack.c.l.b16 %v38
  %v323 = vunpack.c.l.b16 %v39
  %v324 = vunpack.c.h.b16 %v39
  %v325 = vunpack.c.l.b16 %v40
  %v326 = vunpack.c.h.b16 %v40
  %v327 = vunpack.c.l.b16 %v41
  %v328 = vunpack.c.l.b16 %v42
  %v329 = vunpack.c.h.b16 %v42
  %v330 = vunpack.c.l.b16 %v43
  %v331 = vunpack.c.h.b16 %v43
  %v332 = vunpack.c.l.b16 %v44
  %v333 = vunpack.c.l.b16 %v45
  %v334 = vunpack.c.h.b16 %v45
  %v335 = vunpack.c.l.b16 %v46
  %v336 = vunpack.c.h.b16 %v46
  %v337 = vunpack.c.l.b16 %v47
  %v338 = vunpack.c.l.b16 %v48
  %v339 = vunpack.c.h.b16 %v48
  %v340 = vunpack.c.l.b16 %v49
  %v341 = vunpack.c.h.b16 %v49
  %v342 = vunpack.c.l.b16 %v50
  %v343 = vunpack.c.l.b16 %v51
  %v344 = vunpack.c.h.b16 %v51
  %v345 = vunpack.c.l.b16 %v52
  %v346 = vunpack.c.h.b16 %v52
  %v347 = vunpack.c.l.b16 %v53
  %v348 = vunpack.c.l.b16 %v54
  %v349 = vunpack.c.h.b16 %v54
  %v350 = vunpack.c.l.b16 %v55
  %v351 = vunpack.c.h.b16 %v55
  %v352 = vunpack.c.l.b16 %v56
  %v353 = vunpack.c.l.b16 %v57
  %v354 = vunpack.c.h.b16 %v57
  %v355 = vunpack.c.l.b16 %v58
  %v356 = vunpack.c.h.b16 %v58
  %v357 = vunpack.c.l.b16 %v59
  %v358 = vunpack.c.l.b16 %v60
  %v359 = vunpack.c.h.b16 %v60
  %v360 = vunpack.c.l.b16 %v61
  %v361 = vunpack.c.h.b16 %v61
  %v362 = vunpack.c.l.b16 %v62
  %v363 = vunpack.c.l.b16 %v63
  %v364 = vunpack.c.h.b16 %v63
  %v365 = vunpack.c.l.b16 %v64
  %v366 = vunpack.c.h.b16 %v64
  %v367 = vunpack.c.l.b16 %v65
  %v368 = vunpack.c.l.b16 %v66
  %v369 = vunpack.c.h.b16 %v66
  %v370 = vunpack.c.l.b16 %v67
  %v371 = vunpack.c.h.b16 %v67
  %v372 = vunpack.c.l.b16 %v68
  %v373 = vunpack.c.l.b16 %v69
  %v374 = vunpack.c.h.b16 %v69
  %v375 = vunpack.c.l.b16 %v70
  %v376 = vunpack.c.h.b16 %v70
  %v377 = vunpack.c.l.b16 %v71
  %v378 = vunpack.c.l.b16 %v72
  %v379 = vunpack.c.h.b16 %v72
  %v380 = vunpack.c.l.b16 %v73
  %v381 = vunpack.c.h.b16 %v73
  %v382 = vunpack.c.l.b16 %v74
  %v383 = vunpack.c.l.b16 %v75
  %v384 = vunpack.c.h.b16 %v75
  %v385 = vunpack.c.l.b16 %v76
  %v386 = vunpack.c.h.b16 %v76
  %v387 = vunpack.c.l.b16 %v77
  %v388 = vunpack.c.l.b16 %v78
  %v389 = vunpack.c.h.b16 %v78
  %v390 = vunpack.c.l.b16 %v79
  %v391 = vunpack.c.h.b16 %v79
  %v392 = vunpack.c.l.b16 %v80
  %v393 = vunpack.c.l.b16 %v81
  %v394 = vunpack.c.h.b16 %v81
  %v395 = vunpack.c.l.b16 %v82
  %v396 = vunpack.c.h.b16 %v82
  %v397 = vunpack.c.l.b16 %v83
  %v398 = vunpack.c.l.b16 %v84
  %v399 = vunpack.c.h.b16 %v84
  %v400 = vunpack.c.l.b16 %v85
  %v401 = vunpack.c.h.b16 %v85
  %v402 = vunpack.c.l.b16 %v86
  %v403 = vunpack.c.l.b16 %v87
  %v404 = vunpack.c.h.b16 %v87
  %v405 = vunpack.c.l.b16 %v88
  %v406 = vunpack.c.h.b16 %v88
  %v407 = vunpack.c.l.b16 %v89
  %v408 = vunpack.c.l.b16 %v90
  %v409 = vunpack.c.h.b16 %v90
  %v410 = vunpack.c.l.b16 %v91
  %v411 = vunpack.c.h.b16 %v91
  %v412 = vunpack.c.l.b16 %v92
  %v413 = vunpack.c.l.b16 %v93
  %v414 = vunpack.c.h.b16 %v93
  %v415 = vunpack.c.l.b16 %v94
  %v416 = vunpack.c.h.b16 %v94
  %v417 = vunpack.c.l.b16 %v95
  %v418 = vunpack.c.l.b16 %v96
  %v419 = vunpack.c.h.b16 %v96
  %v420 = vunpack.c.l.b16 %v97
  %v421 = vunpack.c.h.b16 %v97
  %v422 = vunpack.c.l.b16 %v98
  %v423 = vunpack.c.l.b16 %v99
  %v424 = vunpack.c.h.b16 %v99
  %v425 = vunpack.c.l.b16 %v100
  %v426 = vunpack.c.h.b16 %v100
  %v427 = vunpack.c.l.b16 %v101
  %v428 = vunpack.c.l.b16 %v102
  %v429 = vunpack.c.h.b16 %v102
  %v430 = vunpack.c.l.b16 %v103
  %v431 = vunpack.c.h.b16 %v103
  %v432 = vunpack.c.l.b16 %v104
  %v433 = vunpack.c.l.b16 %v105
  %v434 = vunpack.c.h.b16 %v105
  %v435 = vunpack.c.l.b16 %v106
  %v436 = vunpack.c.h.b16 %v106
  %v437 = vunpack.c.l.b16 %v107
  %v438 = vunpack.c.l.b16 %v108
  %v439 = vunpack.c.h.b16 %v108
  %v440 = vunpack.c.l.b16 %v109
  %v441 = vunpack.c.h.b16 %v109
  %v442 = vunpack.c.l.b16 %v110
  %v443 = vpack.c.b16 %v288, %v283
  %v444 = vpack.c.b16 %v289, %v284
  %v445 = vpack.c.b16 %v290, %v285
  %v446 = vpack.c.b16 %v291, %v286
  %v447 = vpack.c.b16 %v292, %v287
  %v448 = vpack.c.b16 %v298, %v293
  %v449 = vpack.c.b16 %v299, %v294
  %v450 = vpack.c.b16 %v300, %v295
  %v451 = vpack.c.b16 %v301, %v296
  %v452 = vpack.c.b16 %v302, %v297
  %v453 = vpack.c.b16 %v308, %v303
  %v454 = vpack.c.b16 %v309, %v304
  %v455 = vpack.c.b16 %v310, %v305
  %v456 = vpack.c.b16 %v311, %v306
  %v457 = vpack.c.b16 %v312, %v307
  %v458 = vpack.c.b16 %v318, %v313
  %v459 = vpack.c.b16 %v319, %v314
  %v460 = vpack.c.b16 %v320, %v315
  %v461 = vpack.c.b16 %v321, %v316
  %v462 = vpack.c.b16 %v322, %v317
  %v463 = vpack.c.b16 %v328, %v323
  %v464 = vpack.c.b16 %v329, %v324
  %v465 = vpack.c.b16 %v330, %v325
  %v466 = vpack.c.b16 %v331, %v326
  %v467 = vpack.c.b16 %v332, %v327
  %v468 = vpack.c.b16 %v338, %v333
  %v469 = vpack.c.b16 %v339, %v334
  %v470 = vpack.c.b16 %v340, %v335
  %v471 = vpack.c.b16 %v341, %v336
  %v472 = vpack.c.b16 %v342, %v337
  %v473 = vpack.c.b16 %v348, %v343
  %v474 = vpack.c.b16 %v349, %v344
  %v475 = vpack.c.b16 %v350, %v345
  %v476 = vpack.c.b16 %v351, %v346
  %v477 = vpack.c.b16 %v352, %v347
  %v478 = vpack.c.b16 %v358, %v353
  %v479 = vpack.c.b16 %v359, %v354
  %v480 = vpack.c.b16 %v360, %v355
  %v481 = vpack.c.b16 %v361, %v356
  %v482 = vpack.c.b16 %v362, %v357
  %v483 = vpack.c.b16 %v368, %v363
  %v484 = vpack.c.b16 %v369, %v364
  %v485 = vpack.c.b16 %v370, %v365
  %v486 = vpack.c.b16 %v371, %v366
  %v487 = vpack.c.b16 %v372, %v367
  %v488 = vpack.c.b16 %v378, %v373
  %v489 = vpack.c.b16 %v379, %v374
  %v490 = vpack.c.b16 %v380, %v375
  %v491 = vpack.c.b16 %v381, %v376
  %v492 = vpack.c.b16 %v382, %v377
  %v493 = vpack.c.b16 %v388, %v383
  %v494 = vpack.c.b16 %v389, %v384
  %v495 = vpack.c.b16 %v390, %v385
  %v496 = vpack.c.b16 %v391, %v386
  %v497 = vpack.c.b16 %v392, %v387
  %v498 = vpack.c.b16 %v398, %v393
  %v499 = vpack.c.b16 %v399, %v394
  %v500 = vpack.c.b16 %v400, %v395
  %v501 = vpack.c.b16 %v401, %v396
  %v502 = vpack.c.b16 %v402, %v397
  %v503 = vpack.c.b16 %v408, %v403
  %v504 = vpack.c.b16 %v409, %v404
  %v505 = vpack.c.b16 %v410, %v405
  %v506 = vpack.c.b16 %v411, %v406
  %v507 = vpack.c.b16 %v412, %v407
  %v508 = vpack.c.b16 %v418, %v413
  %v509 = vpack.c.b16 %v419, %v414
  %v510 = vpack.c.b16 %v420, %v415
  %v511 = vpack.c.b16 %v421, %v416
  %v512 = vpack.c.b16 %v422, %v417
  %v513 = vpack.c.b16 %v428, %v423
  %v514 = vpack.c.b16 %v429, %v424
  %v515 = vpack.c.b16 %v430, %v425
  %v516 = vpack.c.b16 %v431, %v426
  %v517 = vpack.c.b16 %v432, %v427
  %v518 = vpack.c.b16 %v438, %v433
  %v519 = vpack.c.b16 %v439, %v434
  %v520 = vpack.c.b16 %v440, %v435
  %v521 = vpack.c.b16 %v441, %v436
  %v522 = vpack.c.b16 %v442, %v437
  %v659 = vunpack.c.l.b16 %v111
  %v660 = vunpack.c.l.b16 %v112
  %v661 = vunpack.c.l.b16 %v113
  %v662 = vunpack.c.l.b16 %v114
  %v663 = vunpack.c.l.b16 %v115
  %v664 = vunpack.c.l.b16 %v116
  %v665 = vunpack.c.l.b16 %v117
  %v666 = vunpack.c.l.b16 %v118
  %v667 = vunpack.c.l.b16 %v119
  %v668 = vunpack.c.l.b16 %v120
  %v669 = vunpack.c.l.b16 %v121
  %v670 = vunpack.c.l.b16 %v122
  %v671 = vunpack.c.l.b16 %v123
  %v672 = vunpack.c.l.b16 %v124
  %v673 = vunpack.c.l.b16 %v125
  %v674 = vunpack.c.l.b16 %v126
  %v675 = vunpack.c.l.b16 %v127
  %v676 = vunpack.c.l.b16 %v128
  %v677 = vunpack.c.l.b16 %v129
  %v678 = vunpack.c.l.b16 %v130
  %v679 = vunpack.c.l.b16 %v131
  %v680 = vunpack.c.l.b16 %v132
  %v681 = vunpack.c.l.b16 %v133
  %v682 = vunpack.c.l.b16 %v134
  %v683 = vunpack.c.l.b16 %v135
  %v684 = vunpack.c.l.b16 %v136
  %v685 = vunpack.c.l.b16 %v137
  %v686 = vunpack.c.l.b16 %v138
  %v687 = vunpack.c.l.b16 %v139
  %v688 = vunpack.c.l.b16 %v140
  %v689 = vunpack.c.l.b16 %v141
  %v690 = vunpack.c.l.b16 %v142
  %v691 = vunpack.c.l.b16 %v143
  %v692 = vunpack.c.l.b16 %v144
  %v693 = vunpack.c.l.b16 %v145
  %v694 = vunpack.c.l.b16 %v146
  %v695 = vunpack.c.l.b16 %v147
  %v696 = vunpack.c.l.b16 %v148
  %v697 = vunpack.c.l.b16 %v149
  %v698 = vunpack.c.l.b16 %v150
  %v699 = vunpack.c.l.b16 %v151
  %v700 = vunpack.c.l.b16 %v152
  %v701 = vunpack.c.l.b16 %v153
  %v702 = vunpack.c.l.b16 %v154
  %v703 = vunpack.c.l.b16 %v155
  %v704 = vunpack.c.l.b16 %v156
  %v705 = vunpack.c.l.b16 %v157
  %v706 = vunpack.c.l.b16 %v158
  %v707 = vunpack.c.l.b16 %v159
  %v708 = vunpack.c.l.b16 %v160
  %v709 = vunpack.c.l.b16 %v161
  %v710 = vunpack.c.l.b16 %v162
  %v711 = vunpack.c.l.b16 %v163
  %v712 = vunpack.c.l.b16 %v164
  %v713 = vunpack.c.l.b16 %v165
  %v714 = vunpack.c.l.b16 %v166
  %v715 = vunpack.c.l.b16 %v167
  %v716 = vunpack.c.l.b16 %v168
  %v717 = vunpack.c.l.b16 %v169
  %v718 = vunpack.c.l.b16 %v170
  %v719 = vunpack.c.l.b16 %v171
  %v720 = vunpack.c.l.b16 %v172
  %v721 = vunpack.c.l.b16 %v173
  %v722 = vunpack.c.l.b16 %v174
  %v723 = vunpack.c.l.b16 %v175
  %v724 = vunpack.c.l.b16 %v176
  %v725 = vunpack.c.l.b16 %v177
  %v726 = vunpack.c.l.b16 %v178
  %v727 = vunpack.c.l.b16 %v179
  %v728 = vunpack.c.l.b16 %v180
  %v729 = vunpack.c.l.b16 %v181
  %v730 = vunpack.c.l.b16 %v182
  %v731 = vpack.c.b16 %v660, %v659
  %v732 = vpack.c.b16 %v662, %v661
  %v733 = vpack.c.b16 %v664, %v663
  %v734 = vpack.c.b16 %v666, %v665
  %v735 = vpack.c.b16 %v668, %v667
  %v736 = vpack.c.b16 %v670, %v669
  %v737 = vpack.c.b16 %v672, %v671
  %v738 = vpack.c.b16 %v674, %v673
  %v739 = vpack.c.b16 %v676, %v675
  %v740 = vpack.c.b16 %v678, %v677
  %v741 = vpack.c.b16 %v680, %v679
  %v742 = vpack.c.b16 %v682, %v681
  %v743 = vpack.c.b16 %v684, %v683
  %v744 = vpack.c.b16 %v686, %v685
  %v745 = vpack.c.b16 %v688, %v687
  %v746 = vpack.c.b16 %v690, %v689
  %v747 = vpack.c.b16 %v692, %v691
  %v748 = vpack.c.b16 %v694, %v693
  %v749 = vpack.c.b16 %v696, %v695
  %v750 = vpack.c.b16 %v698, %v697
  %v751 = vpack.c.b16 %v700, %v699
  %v752 = vpack.c.b16 %v702, %v701
  %v753 = vpack.c.b16 %v704, %v703
  %v754 = vpack.c.b16 %v706, %v705
  %v755 = vpack.c.b16 %v708, %v707
  %v756 = vpack.c.b16 %v710, %v709
  %v757 = vpack.c.b16 %v712, %v711
  %v758 = vpack.c.b16 %v714, %v713
  %v759 = vpack.c.b16 %v716, %v715
  %v760 = vpack.c.b16 %v718, %v717
  %v761 = vpack.c.b16 %v720, %v719
  %v762 = vpack.c.b16 %v722, %v721
  %v763 = vpack.c.b16 %v724, %v723
  %v764 = vpack.c.b16 %v726, %v725
  %v765 = vpack.c.b16 %v728, %v727
  %v766 = vpack.c.b16 %v730, %v729
  %vm803 = vcmask 523264
  %v805 = vsel %vm803, %v447, 0
  %v808 = vsel %vm803, %v452, 0
  %v811 = vsel %vm803, %v457, 0
  %v814 = vsel %vm803, %v462, 0
  %v817 = vsel %vm803, %v467, 0
  %v820 = vsel %vm803, %v472, 0
  %v823 = vsel %vm803, %v477, 0
  %v826 = vsel %vm803, %v482, 0
  %v829 = vsel %vm803, %v487, 0
  %v832 = vsel %vm803, %v492, 0
  %v835 = vsel %vm803, %v497, 0
  %v838 = vsel %vm803, %v502, 0
  %v841 = vsel %vm803, %v507, 0
  %v844 = vsel %vm803, %v512, 0
  %v847 = vsel %vm803, %v517, 0
  %v850 = vsel %vm803, %v522, 0
  %852 = vmatpush.bf16.msra.mxu0 %v738
  %853 = vmatpush.bf16.msra.mxu0 %v737
  %854 = vmatpush.bf16.msra.mxu0 %v736
  %855 = vmatpush.bf16.msra.mxu0 %v735
  %856 = vmatpush.bf16.msra.mxu0 %v734
  %857 = vmatpush.bf16.msra.mxu0 %v733
  %858 = vmatpush.bf16.msra.mxu0 %v732
  %859 = vmatpush.bf16.msra.mxu0 %v731
  %860 = vmatmul.bf16.gmra.mxu0 %v443
  %v861 = vpop.f32.mrf.mxu0
  %v862 = vadd.f32 %v185, %v861
  %v863 = vpop.f32.mrf.mxu0
  %v864 = vadd.f32 %v185, %v863
  %865 = vmatmul.bf16.gmra.mxu0 %v448
  %v866 = vpop.f32.mrf.mxu0
  %v867 = vadd.f32 %v185, %v866
  %v868 = vpop.f32.mrf.mxu0
  %v869 = vadd.f32 %v185, %v868
  %870 = vmatmul.bf16.gmra.mxu0 %v453
  %v871 = vpop.f32.mrf.mxu0
  %v872 = vadd.f32 %v185, %v871
  %v873 = vpop.f32.mrf.mxu0
  %v874 = vadd.f32 %v185, %v873
  %875 = vmatmul.bf16.gmra.mxu0 %v458
  %v876 = vpop.f32.mrf.mxu0
  %v877 = vadd.f32 %v185, %v876
  %v878 = vpop.f32.mrf.mxu0
  %v879 = vadd.f32 %v185, %v878
  %880 = vmatmul.bf16.gmra.mxu0 %v463
  %v881 = vpop.f32.mrf.mxu0
  %v882 = vadd.f32 %v185, %v881
  %v883 = vpop.f32.mrf.mxu0
  %v884 = vadd.f32 %v185, %v883
  %885 = vmatmul.bf16.gmra.mxu0 %v468
  %v886 = vpop.f32.mrf.mxu0
  %v887 = vadd.f32 %v185, %v886
  %v888 = vpop.f32.mrf.mxu0
  %v889 = vadd.f32 %v185, %v888
  %890 = vmatmul.bf16.gmra.mxu0 %v473
  %v891 = vpop.f32.mrf.mxu0
  %v892 = vadd.f32 %v185, %v891
  %v893 = vpop.f32.mrf.mxu0
  %v894 = vadd.f32 %v185, %v893
  %895 = vmatmul.bf16.gmra.mxu0 %v478
  %v896 = vpop.f32.mrf.mxu0
  %v897 = vadd.f32 %v185, %v896
  %v898 = vpop.f32.mrf.mxu0
  %v899 = vadd.f32 %v185, %v898
  %900 = vmatmul.bf16.gmra.mxu0 %v483
  %v901 = vpop.f32.mrf.mxu0
  %v902 = vadd.f32 %v185, %v901
  %v903 = vpop.f32.mrf.mxu0
  %v904 = vadd.f32 %v185, %v903
  %905 = vmatmul.bf16.gmra.mxu0 %v488
  %v906 = vpop.f32.mrf.mxu0
  %v907 = vadd.f32 %v185, %v906
  %v908 = vpop.f32.mrf.mxu0
  %v909 = vadd.f32 %v185, %v908
  %910 = vmatmul.bf16.gmra.mxu0 %v493
  %v911 = vpop.f32.mrf.mxu0
  %v912 = vadd.f32 %v185, %v911
  %v913 = vpop.f32.mrf.mxu0
  %v914 = vadd.f32 %v185, %v913
  %915 = vmatmul.bf16.gmra.mxu0 %v498
  %v916 = vpop.f32.mrf.mxu0
  %v917 = vadd.f32 %v185, %v916
  %v918 = vpop.f32.mrf.mxu0
  %v919 = vadd.f32 %v185, %v918
  %920 = vmatmul.bf16.gmra.mxu0 %v503
  %v921 = vpop.f32.mrf.mxu0
  %v922 = vadd.f32 %v185, %v921
  %v923 = vpop.f32.mrf.mxu0
  %v924 = vadd.f32 %v185, %v923
  %925 = vmatmul.bf16.gmra.mxu0 %v508
  %v926 = vpop.f32.mrf.mxu0
  %v927 = vadd.f32 %v185, %v926
  %v928 = vpop.f32.mrf.mxu0
  %v929 = vadd.f32 %v185, %v928
  %930 = vmatmul.bf16.gmra.mxu0 %v513
  %v931 = vpop.f32.mrf.mxu0
  %v932 = vadd.f32 %v185, %v931
  %v933 = vpop.f32.mrf.mxu0
  %v934 = vadd.f32 %v185, %v933
  %935 = vmatmul.bf16.gmra.mxu0 %v518
  %v936 = vpop.f32.mrf.mxu0
  %v937 = vadd.f32 %v185, %v936
  %v938 = vpop.f32.mrf.mxu0
  %v939 = vadd.f32 %v185, %v938
  %940 = vdwg.mxu0
  %941 = vmatpush.bf16.msra.mxu0 %v746
  %942 = vmatpush.bf16.msra.mxu0 %v745
  %943 = vmatpush.bf16.msra.mxu0 %v744
  %944 = vmatpush.bf16.msra.mxu0 %v743
  %945 = vmatpush.bf16.msra.mxu0 %v742
  %946 = vmatpush.bf16.msra.mxu0 %v741
  %947 = vmatpush.bf16.msra.mxu0 %v740
  %948 = vmatpush.bf16.msra.mxu0 %v739
  %949 = vmatmul.bf16.gmra.mxu0 %v444
  %v950 = vpop.f32.mrf.mxu0
  %v951 = vadd.f32 %v862, %v950
  %v952 = vpop.f32.mrf.mxu0
  %v953 = vadd.f32 %v864, %v952
  %954 = vmatmul.bf16.gmra.mxu0 %v449
  %v955 = vpop.f32.mrf.mxu0
  %v956 = vadd.f32 %v867, %v955
  %v957 = vpop.f32.mrf.mxu0
  %v958 = vadd.f32 %v869, %v957
  %959 = vmatmul.bf16.gmra.mxu0 %v454
  %v960 = vpop.f32.mrf.mxu0
  %v961 = vadd.f32 %v872, %v960
  %v962 = vpop.f32.mrf.mxu0
  %v963 = vadd.f32 %v874, %v962
  %964 = vmatmul.bf16.gmra.mxu0 %v459
  %v965 = vpop.f32.mrf.mxu0
  %v966 = vadd.f32 %v877, %v965
  %v967 = vpop.f32.mrf.mxu0
  %v968 = vadd.f32 %v879, %v967
  %969 = vmatmul.bf16.gmra.mxu0 %v464
  %v970 = vpop.f32.mrf.mxu0
  %v971 = vadd.f32 %v882, %v970
  %v972 = vpop.f32.mrf.mxu0
  %v973 = vadd.f32 %v884, %v972
  %974 = vmatmul.bf16.gmra.mxu0 %v469
  %v975 = vpop.f32.mrf.mxu0
  %v976 = vadd.f32 %v887, %v975
  %v977 = vpop.f32.mrf.mxu0
  %v978 = vadd.f32 %v889, %v977
  %979 = vmatmul.bf16.gmra.mxu0 %v474
  %v980 = vpop.f32.mrf.mxu0
  %v981 = vadd.f32 %v892, %v980
  %v982 = vpop.f32.mrf.mxu0
  %v983 = vadd.f32 %v894, %v982
  %984 = vmatmul.bf16.gmra.mxu0 %v479
  %v985 = vpop.f32.mrf.mxu0
  %v986 = vadd.f32 %v897, %v985
  %v987 = vpop.f32.mrf.mxu0
  %v988 = vadd.f32 %v899, %v987
  %989 = vmatmul.bf16.gmra.mxu0 %v484
  %v990 = vpop.f32.mrf.mxu0
  %v991 = vadd.f32 %v902, %v990
  %v992 = vpop.f32.mrf.mxu0
  %v993 = vadd.f32 %v904, %v992
  %994 = vmatmul.bf16.gmra.mxu0 %v489
  %v995 = vpop.f32.mrf.mxu0
  %v996 = vadd.f32 %v907, %v995
  %v997 = vpop.f32.mrf.mxu0
  %v998 = vadd.f32 %v909, %v997
  %999 = vmatmul.bf16.gmra.mxu0 %v494
  %v1000 = vpop.f32.mrf.mxu0
  %v1001 = vadd.f32 %v912, %v1000
  %v1002 = vpop.f32.mrf.mxu0
  %v1003 = vadd.f32 %v914, %v1002
  %1004 = vmatmul.bf16.gmra.mxu0 %v499
  %v1005 = vpop.f32.mrf.mxu0
  %v1006 = vadd.f32 %v917, %v1005
  %v1007 = vpop.f32.mrf.mxu0
  %v1008 = vadd.f32 %v919, %v1007
  %1009 = vmatmul.bf16.gmra.mxu0 %v504
  %v1010 = vpop.f32.mrf.mxu0
  %v1011 = vadd.f32 %v922, %v1010
  %v1012 = vpop.f32.mrf.mxu0
  %v1013 = vadd.f32 %v924, %v1012
  %1014 = vmatmul.bf16.gmra.mxu0 %v509
  %v1015 = vpop.f32.mrf.mxu0
  %v1016 = vadd.f32 %v927, %v1015
  %v1017 = vpop.f32.mrf.mxu0
  %v1018 = vadd.f32 %v929, %v1017
  %1019 = vmatmul.bf16.gmra.mxu0 %v514
  %v1020 = vpop.f32.mrf.mxu0
  %v1021 = vadd.f32 %v932, %v1020
  %v1022 = vpop.f32.mrf.mxu0
  %v1023 = vadd.f32 %v934, %v1022
  %1024 = vmatmul.bf16.gmra.mxu0 %v519
  %v1025 = vpop.f32.mrf.mxu0
  %v1026 = vadd.f32 %v937, %v1025
  %v1027 = vpop.f32.mrf.mxu0
  %v1028 = vadd.f32 %v939, %v1027
  %1029 = vdwg.mxu0
  %1030 = vmatpush.bf16.msra.mxu0 %v754
  %1031 = vmatpush.bf16.msra.mxu0 %v753
  %1032 = vmatpush.bf16.msra.mxu0 %v752
  %1033 = vmatpush.bf16.msra.mxu0 %v751
  %1034 = vmatpush.bf16.msra.mxu0 %v750
  %1035 = vmatpush.bf16.msra.mxu0 %v749
  %1036 = vmatpush.bf16.msra.mxu0 %v748
  %1037 = vmatpush.bf16.msra.mxu0 %v747
  %1038 = vmatmul.bf16.gmra.mxu0 %v445
  %v1039 = vpop.f32.mrf.mxu0
  %v1040 = vadd.f32 %v951, %v1039
  %v1041 = vpop.f32.mrf.mxu0
  %v1042 = vadd.f32 %v953, %v1041
  %1043 = vmatmul.bf16.gmra.mxu0 %v450
  %v1044 = vpop.f32.mrf.mxu0
  %v1045 = vadd.f32 %v956, %v1044
  %v1046 = vpop.f32.mrf.mxu0
  %v1047 = vadd.f32 %v958, %v1046
  %1048 = vmatmul.bf16.gmra.mxu0 %v455
  %v1049 = vpop.f32.mrf.mxu0
  %v1050 = vadd.f32 %v961, %v1049
  %v1051 = vpop.f32.mrf.mxu0
  %v1052 = vadd.f32 %v963, %v1051
  %1053 = vmatmul.bf16.gmra.mxu0 %v460
  %v1054 = vpop.f32.mrf.mxu0
  %v1055 = vadd.f32 %v966, %v1054
  %v1056 = vpop.f32.mrf.mxu0
  %v1057 = vadd.f32 %v968, %v1056
  %1058 = vmatmul.bf16.gmra.mxu0 %v465
  %v1059 = vpop.f32.mrf.mxu0
  %v1060 = vadd.f32 %v971, %v1059
  %v1061 = vpop.f32.mrf.mxu0
  %v1062 = vadd.f32 %v973, %v1061
  %1063 = vmatmul.bf16.gmra.mxu0 %v470
  %v1064 = vpop.f32.mrf.mxu0
  %v1065 = vadd.f32 %v976, %v1064
  %v1066 = vpop.f32.mrf.mxu0
  %v1067 = vadd.f32 %v978, %v1066
  %1068 = vmatmul.bf16.gmra.mxu0 %v475
  %v1069 = vpop.f32.mrf.mxu0
  %v1070 = vadd.f32 %v981, %v1069
  %v1071 = vpop.f32.mrf.mxu0
  %v1072 = vadd.f32 %v983, %v1071
  %1073 = vmatmul.bf16.gmra.mxu0 %v480
  %v1074 = vpop.f32.mrf.mxu0
  %v1075 = vadd.f32 %v986, %v1074
  %v1076 = vpop.f32.mrf.mxu0
  %v1077 = vadd.f32 %v988, %v1076
  %1078 = vmatmul.bf16.gmra.mxu0 %v485
  %v1079 = vpop.f32.mrf.mxu0
  %v1080 = vadd.f32 %v991, %v1079
  %v1081 = vpop.f32.mrf.mxu0
  %v1082 = vadd.f32 %v993, %v1081
  %1083 = vmatmul.bf16.gmra.mxu0 %v490
  %v1084 = vpop.f32.mrf.mxu0
  %v1085 = vadd.f32 %v996, %v1084
  %v1086 = vpop.f32.mrf.mxu0
  %v1087 = vadd.f32 %v998, %v1086
  %1088 = vmatmul.bf16.gmra.mxu0 %v495
  %v1089 = vpop.f32.mrf.mxu0
  %v1090 = vadd.f32 %v1001, %v1089
  %v1091 = vpop.f32.mrf.mxu0
  %v1092 = vadd.f32 %v1003, %v1091
  %1093 = vmatmul.bf16.gmra.mxu0 %v500
  %v1094 = vpop.f32.mrf.mxu0
  %v1095 = vadd.f32 %v1006, %v1094
  %v1096 = vpop.f32.mrf.mxu0
  %v1097 = vadd.f32 %v1008, %v1096
  %1098 = vmatmul.bf16.gmra.mxu0 %v505
  %v1099 = vpop.f32.mrf.mxu0
  %v1100 = vadd.f32 %v1011, %v1099
  %v1101 = vpop.f32.mrf.mxu0
  %v1102 = vadd.f32 %v1013, %v1101
  %1103 = vmatmul.bf16.gmra.mxu0 %v510
  %v1104 = vpop.f32.mrf.mxu0
  %v1105 = vadd.f32 %v1016, %v1104
  %v1106 = vpop.f32.mrf.mxu0
  %v1107 = vadd.f32 %v1018, %v1106
  %1108 = vmatmul.bf16.gmra.mxu0 %v515
  %v1109 = vpop.f32.mrf.mxu0
  %v1110 = vadd.f32 %v1021, %v1109
  %v1111 = vpop.f32.mrf.mxu0
  %v1112 = vadd.f32 %v1023, %v1111
  %1113 = vmatmul.bf16.gmra.mxu0 %v520
  %v1114 = vpop.f32.mrf.mxu0
  %v1115 = vadd.f32 %v1026, %v1114
  %v1116 = vpop.f32.mrf.mxu0
  %v1117 = vadd.f32 %v1028, %v1116
  %1118 = vdwg.mxu0
  %1119 = vmatpush.bf16.msra.mxu0 %v762
  %1120 = vmatpush.bf16.msra.mxu0 %v761
  %1121 = vmatpush.bf16.msra.mxu0 %v760
  %1122 = vmatpush.bf16.msra.mxu0 %v759
  %1123 = vmatpush.bf16.msra.mxu0 %v758
  %1124 = vmatpush.bf16.msra.mxu0 %v757
  %1125 = vmatpush.bf16.msra.mxu0 %v756
  %1126 = vmatpush.bf16.msra.mxu0 %v755
  %1127 = vmatmul.bf16.gmra.mxu0 %v446
  %v1128 = vpop.f32.mrf.mxu0
  %v1129 = vadd.f32 %v1040, %v1128
  %v1130 = vpop.f32.mrf.mxu0
  %v1131 = vadd.f32 %v1042, %v1130
  %1132 = vmatmul.bf16.gmra.mxu0 %v451
  %v1133 = vpop.f32.mrf.mxu0
  %v1134 = vadd.f32 %v1045, %v1133
  %v1135 = vpop.f32.mrf.mxu0
  %v1136 = vadd.f32 %v1047, %v1135
  %1137 = vmatmul.bf16.gmra.mxu0 %v456
  %v1138 = vpop.f32.mrf.mxu0
  %v1139 = vadd.f32 %v1050, %v1138
  %v1140 = vpop.f32.mrf.mxu0
  %v1141 = vadd.f32 %v1052, %v1140
  %1142 = vmatmul.bf16.gmra.mxu0 %v461
  %v1143 = vpop.f32.mrf.mxu0
  %v1144 = vadd.f32 %v1055, %v1143
  %v1145 = vpop.f32.mrf.mxu0
  %v1146 = vadd.f32 %v1057, %v1145
  %1147 = vmatmul.bf16.gmra.mxu0 %v466
  %v1148 = vpop.f32.mrf.mxu0
  %v1149 = vadd.f32 %v1060, %v1148
  %v1150 = vpop.f32.mrf.mxu0
  %v1151 = vadd.f32 %v1062, %v1150
  %1152 = vmatmul.bf16.gmra.mxu0 %v471
  %v1153 = vpop.f32.mrf.mxu0
  %v1154 = vadd.f32 %v1065, %v1153
  %v1155 = vpop.f32.mrf.mxu0
  %v1156 = vadd.f32 %v1067, %v1155
  %1157 = vmatmul.bf16.gmra.mxu0 %v476
  %v1158 = vpop.f32.mrf.mxu0
  %v1159 = vadd.f32 %v1070, %v1158
  %v1160 = vpop.f32.mrf.mxu0
  %v1161 = vadd.f32 %v1072, %v1160
  %1162 = vmatmul.bf16.gmra.mxu0 %v481
  %v1163 = vpop.f32.mrf.mxu0
  %v1164 = vadd.f32 %v1075, %v1163
  %v1165 = vpop.f32.mrf.mxu0
  %v1166 = vadd.f32 %v1077, %v1165
  %1167 = vmatmul.bf16.gmra.mxu0 %v486
  %v1168 = vpop.f32.mrf.mxu0
  %v1169 = vadd.f32 %v1080, %v1168
  %v1170 = vpop.f32.mrf.mxu0
  %v1171 = vadd.f32 %v1082, %v1170
  %1172 = vmatmul.bf16.gmra.mxu0 %v491
  %v1173 = vpop.f32.mrf.mxu0
  %v1174 = vadd.f32 %v1085, %v1173
  %v1175 = vpop.f32.mrf.mxu0
  %v1176 = vadd.f32 %v1087, %v1175
  %1177 = vmatmul.bf16.gmra.mxu0 %v496
  %v1178 = vpop.f32.mrf.mxu0
  %v1179 = vadd.f32 %v1090, %v1178
  %v1180 = vpop.f32.mrf.mxu0
  %v1181 = vadd.f32 %v1092, %v1180
  %1182 = vmatmul.bf16.gmra.mxu0 %v501
  %v1183 = vpop.f32.mrf.mxu0
  %v1184 = vadd.f32 %v1095, %v1183
  %v1185 = vpop.f32.mrf.mxu0
  %v1186 = vadd.f32 %v1097, %v1185
  %1187 = vmatmul.bf16.gmra.mxu0 %v506
  %v1188 = vpop.f32.mrf.mxu0
  %v1189 = vadd.f32 %v1100, %v1188
  %v1190 = vpop.f32.mrf.mxu0
  %v1191 = vadd.f32 %v1102, %v1190
  %1192 = vmatmul.bf16.gmra.mxu0 %v511
  %v1193 = vpop.f32.mrf.mxu0
  %v1194 = vadd.f32 %v1105, %v1193
  %v1195 = vpop.f32.mrf.mxu0
  %v1196 = vadd.f32 %v1107, %v1195
  %1197 = vmatmul.bf16.gmra.mxu0 %v516
  %v1198 = vpop.f32.mrf.mxu0
  %v1199 = vadd.f32 %v1110, %v1198
  %v1200 = vpop.f32.mrf.mxu0
  %v1201 = vadd.f32 %v1112, %v1200
  %1202 = vmatmul.bf16.gmra.mxu0 %v521
  %v1203 = vpop.f32.mrf.mxu0
  %v1204 = vadd.f32 %v1115, %v1203
  %v1205 = vpop.f32.mrf.mxu0
  %v1206 = vadd.f32 %v1117, %v1205
  %1207 = vdwg.mxu0
  %1208 = vmatpush.bf16.msra.mxu0 0
  %1209 = vmatpush.bf16.msra.mxu0 0
  %1210 = vmatpush.bf16.msra.mxu0 0
  %1211 = vmatpush.bf16.msra.mxu0 0
  %1212 = vmatpush.bf16.msra.mxu0 %v766
  %1213 = vmatpush.bf16.msra.mxu0 %v765
  %1214 = vmatpush.bf16.msra.mxu0 %v764
  %1215 = vmatpush.bf16.msra.mxu0 %v763
  %1216 = vmatmul.bf16.gmra.mxu0 %v805
  %v1217 = vpop.f32.mrf.mxu0
  %v1218 = vadd.f32 %v1129, %v1217
  %v1219 = vpop.f32.mrf.mxu0
  %v1220 = vadd.f32 %v1131, %v1219
  %1221 = vmatmul.bf16.gmra.mxu0 %v808
  %v1222 = vpop.f32.mrf.mxu0
  %v1223 = vadd.f32 %v1134, %v1222
  %v1224 = vpop.f32.mrf.mxu0
  %v1225 = vadd.f32 %v1136, %v1224
  %1226 = vmatmul.bf16.gmra.mxu0 %v811
  %v1227 = vpop.f32.mrf.mxu0
  %v1228 = vadd.f32 %v1139, %v1227
  %v1229 = vpop.f32.mrf.mxu0
  %v1230 = vadd.f32 %v1141, %v1229
  %1231 = vmatmul.bf16.gmra.mxu0 %v814
  %v1232 = vpop.f32.mrf.mxu0
  %v1233 = vadd.f32 %v1144, %v1232
  %v1234 = vpop.f32.mrf.mxu0
  %v1235 = vadd.f32 %v1146, %v1234
  %1236 = vmatmul.bf16.gmra.mxu0 %v817
  %v1237 = vpop.f32.mrf.mxu0
  %v1238 = vadd.f32 %v1149, %v1237
  %v1239 = vpop.f32.mrf.mxu0
  %v1240 = vadd.f32 %v1151, %v1239
  %1241 = vmatmul.bf16.gmra.mxu0 %v820
  %v1242 = vpop.f32.mrf.mxu0
  %v1243 = vadd.f32 %v1154, %v1242
  %v1244 = vpop.f32.mrf.mxu0
  %v1245 = vadd.f32 %v1156, %v1244
  %1246 = vmatmul.bf16.gmra.mxu0 %v823
  %v1247 = vpop.f32.mrf.mxu0
  %v1248 = vadd.f32 %v1159, %v1247
  %v1249 = vpop.f32.mrf.mxu0
  %v1250 = vadd.f32 %v1161, %v1249
  %1251 = vmatmul.bf16.gmra.mxu0 %v826
  %v1252 = vpop.f32.mrf.mxu0
  %v1253 = vadd.f32 %v1164, %v1252
  %v1254 = vpop.f32.mrf.mxu0
  %v1255 = vadd.f32 %v1166, %v1254
  %1256 = vmatmul.bf16.gmra.mxu0 %v829
  %v1257 = vpop.f32.mrf.mxu0
  %v1258 = vadd.f32 %v1169, %v1257
  %v1259 = vpop.f32.mrf.mxu0
  %v1260 = vadd.f32 %v1171, %v1259
  %1261 = vmatmul.bf16.gmra.mxu0 %v832
  %v1262 = vpop.f32.mrf.mxu0
  %v1263 = vadd.f32 %v1174, %v1262
  %v1264 = vpop.f32.mrf.mxu0
  %v1265 = vadd.f32 %v1176, %v1264
  %1266 = vmatmul.bf16.gmra.mxu0 %v835
  %v1267 = vpop.f32.mrf.mxu0
  %v1268 = vadd.f32 %v1179, %v1267
  %v1269 = vpop.f32.mrf.mxu0
  %v1270 = vadd.f32 %v1181, %v1269
  %1271 = vmatmul.bf16.gmra.mxu0 %v838
  %v1272 = vpop.f32.mrf.mxu0
  %v1273 = vadd.f32 %v1184, %v1272
  %v1274 = vpop.f32.mrf.mxu0
  %v1275 = vadd.f32 %v1186, %v1274
  %1276 = vmatmul.bf16.gmra.mxu0 %v841
  %v1277 = vpop.f32.mrf.mxu0
  %v1278 = vadd.f32 %v1189, %v1277
  %v1279 = vpop.f32.mrf.mxu0
  %v1280 = vadd.f32 %v1191, %v1279
  %1281 = vmatmul.bf16.gmra.mxu0 %v844
  %v1282 = vpop.f32.mrf.mxu0
  %v1283 = vadd.f32 %v1194, %v1282
  %v1284 = vpop.f32.mrf.mxu0
  %v1285 = vadd.f32 %v1196, %v1284
  %1286 = vmatmul.bf16.gmra.mxu0 %v847
  %v1287 = vpop.f32.mrf.mxu0
  %v1288 = vadd.f32 %v1199, %v1287
  %v1289 = vpop.f32.mrf.mxu0
  %v1290 = vadd.f32 %v1201, %v1289
  %1291 = vmatmul.bf16.gmra.mxu0 %v850
  %v1292 = vpop.f32.mrf.mxu0
  %v1293 = vadd.f32 %v1204, %v1292
  %v1294 = vpop.f32.mrf.mxu0
  %v1295 = vadd.f32 %v1206, %v1294
  %1296 = vdwg.mxu0
  %1297 = vst.msk [vmem:[%s3] sm:$0xff] %vm803, %v1218
  %1298 = vst.msk [vmem:[%s3 + $0x8] sm:$0xff] %vm803, %v1220
  %1299 = vst.msk [vmem:[%s3 + $0x10] sm:$0xff] %vm803, %v1223
  %1300 = vst.msk [vmem:[%s3 + $0x18] sm:$0xff] %vm803, %v1225
  %1301 = vst.msk [vmem:[%s3 + $0x20] sm:$0xff] %vm803, %v1228
  %1302 = vst.msk [vmem:[%s3 + $0x28] sm:$0xff] %vm803, %v1230
  %1303 = vst.msk [vmem:[%s3 + $0x30] sm:$0xff] %vm803, %v1233
  %1304 = vst.msk [vmem:[%s3 + $0x38] sm:$0xff] %vm803, %v1235
  %1305 = vst.msk [vmem:[%s3 + $0x40] sm:$0xff] %vm803, %v1238
  %1306 = vst.msk [vmem:[%s3 + $0x48] sm:$0xff] %vm803, %v1240
  %1307 = vst.msk [vmem:[%s3 + $0x50] sm:$0xff] %vm803, %v1243
  %1308 = vst.msk [vmem:[%s3 + $0x58] sm:$0xff] %vm803, %v1245
  %1309 = vst.msk [vmem:[%s3 + $0x60] sm:$0xff] %vm803, %v1248
  %1310 = vst.msk [vmem:[%s3 + $0x68] sm:$0xff] %vm803, %v1250
  %1311 = vst.msk [vmem:[%s3 + $0x70] sm:$0xff] %vm803, %v1253
  %1312 = vst.msk [vmem:[%s3 + $0x78] sm:$0xff] %vm803, %v1255
  %1313 = vst.msk [vmem:[%s3 + $0x80] sm:$0xff] %vm803, %v1258
  %1314 = vst.msk [vmem:[%s3 + $0x88] sm:$0xff] %vm803, %v1260
  %1315 = vst.msk [vmem:[%s3 + $0x90] sm:$0xff] %vm803, %v1263
  %1316 = vst.msk [vmem:[%s3 + $0x98] sm:$0xff] %vm803, %v1265
  %1317 = vst.msk [vmem:[%s3 + $0xa0] sm:$0xff] %vm803, %v1268
  %1318 = vst.msk [vmem:[%s3 + $0xa8] sm:$0xff] %vm803, %v1270
  %1319 = vst.msk [vmem:[%s3 + $0xb0] sm:$0xff] %vm803, %v1273
  %1320 = vst.msk [vmem:[%s3 + $0xb8] sm:$0xff] %vm803, %v1275
  %1321 = vst.msk [vmem:[%s3 + $0xc0] sm:$0xff] %vm803, %v1278
  %1322 = vst.msk [vmem:[%s3 + $0xc8] sm:$0xff] %vm803, %v1280
  %1323 = vst.msk [vmem:[%s3 + $0xd0] sm:$0xff] %vm803, %v1283
  %1324 = vst.msk [vmem:[%s3 + $0xd8] sm:$0xff] %vm803, %v1285
  %1325 = vst.msk [vmem:[%s3 + $0xe0] sm:$0xff] %vm803, %v1288
  %1326 = vst.msk [vmem:[%s3 + $0xe8] sm:$0xff] %vm803, %v1290
  %1327 = vst.msk [vmem:[%s3 + $0xf0] sm:$0xff] %vm803, %v1293
  %1328 = vst.msk [vmem:[%s3 + $0xf8] sm:$0xff] %vm803, %v1295
  // Predicated region
  $region14: #{compentrans512_forward.19} parent=0 // pred_check
    _
  $region15: #{compentrans512_forward.19} parent=0 // pred_check_branch
    %1330 = sbr.rel (0) target = $region17
  $region16: #{compentrans512_forward.19} parent=0 // pred_region
    _
  $region17: #{compentrans512_forward.19} parent=0 // pred_fallthru
    _
  // Predicated region
  $region18: #{compentrans512_forward.19} parent=0 // pred_check
    _
  $region19: #{compentrans512_forward.19} parent=0 // pred_check_branch
    %1332 = sbr.rel (0) target = $region21
  $region20: #{compentrans512_forward.19} parent=0 // pred_region
    _
  $region21: #{compentrans512_forward.19} parent=0 // pred_fallthru
    _

// kernel: compentrans512_forward.20
$region0: #{compentrans512_forward.20}
  #allocation0 [shape = 'u32[]', space=smem, size = 0x4, offset = 0x4, fixed_abs, tag = 'smem constant byte address 0x4 - core index']
  #allocation1 [shape = 'u32[72,128]{1,0:T(1,128)}', space=vmem, size = 0x9000, scoped, tag = 'internal scratch']
  %s0 = inlined_call_operand.vmem [shape: bf16[64,288], index: 0, kind: input, shape index: {}]
  %s1 = inlined_call_operand.vmem [shape: bf16[288,64], index: 1, kind: input, shape index: {}]
  %s2 = inlined_call_operand.vmem [shape: f32[1,64], index: 2, kind: input, shape index: {}]
  %s3 = inlined_call_operand.vmem [shape: f32[64,64], index: 3, kind: output, shape index: {}]
  %s4 = sld [smem:[#allocation0]]
  $region22: #{compentrans512_forward.20} parent=0
    _
  %s6 = ssub.s32 1, %s4
  %s7 = scalar_select 0, %s6, %s4
  // Predicated region
  $region2: #{compentrans512_forward.20} parent=0 // pred_check
    _
  $region3: #{compentrans512_forward.20} parent=0 // pred_check_branch
    %9 = sbr.rel (0) target = $region5
  $region4: #{compentrans512_forward.20} parent=0 // pred_region
    _
  $region5: #{compentrans512_forward.20} parent=0 // pred_fallthru
    _
  // Predicated region
  $region6: #{compentrans512_forward.20} parent=0 // pred_check
    _
  $region7: #{compentrans512_forward.20} parent=0 // pred_check_branch
    %11 = sbr.rel (0) target = $region9
  $region8: #{compentrans512_forward.20} parent=0 // pred_region
    _
  $region9: #{compentrans512_forward.20} parent=0 // pred_fallthru
    _
  // Predicated region
  $region10: #{compentrans512_forward.20} parent=0 // pred_check
    _
  $region11: #{compentrans512_forward.20} parent=0 // pred_check_branch
    %13 = sbr.rel (0) target = $region13
  $region12: #{compentrans512_forward.20} parent=0 // pred_region
    _
  $region13: #{compentrans512_forward.20} parent=0 // pred_fallthru
    _
  %v15 = vld [vmem:[%s0] sm:$0xff]
  %v16 = vld [vmem:[%s0 + $0x8] sm:$0xf]
  %v17 = vld [vmem:[%s0 + $0xc] sm:$0xff]
  %v18 = vld [vmem:[%s0 + $0x14] sm:$0xf]
  %v19 = vld [vmem:[%s0 + $0x18] sm:$0xff]
  %v20 = vld [vmem:[%s0 + $0x20] sm:$0xf]
  %v21 = vld [vmem:[%s0 + $0x24] sm:$0xff]
  %v22 = vld [vmem:[%s0 + $0x2c] sm:$0xf]
  %v23 = vld [vmem:[%s0 + $0x30] sm:$0xff]
  %v24 = vld [vmem:[%s0 + $0x38] sm:$0xf]
  %v25 = vld [vmem:[%s0 + $0x3c] sm:$0xff]
  %v26 = vld [vmem:[%s0 + $0x44] sm:$0xf]
  %v27 = vld [vmem:[%s0 + $0x48] sm:$0xff]
  %v28 = vld [vmem:[%s0 + $0x50] sm:$0xf]
  %v29 = vld [vmem:[%s0 + $0x54] sm:$0xff]
  %v30 = vld [vmem:[%s0 + $0x5c] sm:$0xf]
  %v31 = vld [vmem:[%s1] sm:$0xf]
  %v32 = vld [vmem:[%s1 + $0x4] sm:$0xf]
  %v33 = vld [vmem:[%s1 + $0x8] sm:$0xf]
  %v34 = vld [vmem:[%s1 + $0xc] sm:$0xf]
  %v35 = vld [vmem:[%s1 + $0x10] sm:$0xf]
  %v36 = vld [vmem:[%s1 + $0x14] sm:$0xf]
  %v37 = vld [vmem:[%s1 + $0x18] sm:$0xf]
  %v38 = vld [vmem:[%s1 + $0x1c] sm:$0xf]
  %v39 = vld [vmem:[%s1 + $0x20] sm:$0xf]
  %v40 = vld [vmem:[%s1 + $0x24] sm:$0xf]
  %v41 = vld [vmem:[%s1 + $0x28] sm:$0xf]
  %v42 = vld [vmem:[%s1 + $0x2c] sm:$0xf]
  %v43 = vld [vmem:[%s1 + $0x30] sm:$0xf]
  %v44 = vld [vmem:[%s1 + $0x34] sm:$0xf]
  %v45 = vld [vmem:[%s1 + $0x38] sm:$0xf]
  %v46 = vld [vmem:[%s1 + $0x3c] sm:$0xf]
  %v47 = vld [vmem:[%s1 + $0x40] sm:$0xf]
  %v48 = vld [vmem:[%s1 + $0x44] sm:$0xf]
  %v49 = vld [vmem:[%s1 + $0x48] sm:$0xf]
  %v50 = vld [vmem:[%s1 + $0x4c] sm:$0xf]
  %v51 = vld [vmem:[%s1 + $0x50] sm:$0xf]
  %v52 = vld [vmem:[%s1 + $0x54] sm:$0xf]
  %v53 = vld [vmem:[%s1 + $0x58] sm:$0xf]
  %v54 = vld [vmem:[%s1 + $0x5c] sm:$0xf]
  %v55 = vld [vmem:[%s1 + $0x60] sm:$0xf]
  %v56 = vld [vmem:[%s1 + $0x64] sm:$0xf]
  %v57 = vld [vmem:[%s1 + $0x68] sm:$0xf]
  %v58 = vld [vmem:[%s1 + $0x6c] sm:$0xf]
  %v59 = vld [vmem:[%s1 + $0x70] sm:$0xf]
  %v60 = vld [vmem:[%s1 + $0x74] sm:$0xf]
  %v61 = vld [vmem:[%s1 + $0x78] sm:$0xf]
  %v62 = vld [vmem:[%s1 + $0x7c] sm:$0xf]
  %v63 = vld [vmem:[%s1 + $0x80] sm:$0xf]
  %v64 = vld [vmem:[%s1 + $0x84] sm:$0xf]
  %v65 = vld [vmem:[%s1 + $0x88] sm:$0xf]
  %v66 = vld [vmem:[%s1 + $0x8c] sm:$0xf]
  %v67 = vld [vmem:[%s2] sm:$0x1]
  %v69 = vperm.slane %v67, 0
  %v87 = vunpack.c.l.b16 %v15
  %v88 = vunpack.c.h.b16 %v15
  %v89 = vunpack.c.l.b16 %v16
  %v90 = vunpack.c.l.b16 %v17
  %v91 = vunpack.c.h.b16 %v17
  %v92 = vunpack.c.l.b16 %v18
  %v93 = vunpack.c.l.b16 %v19
  %v94 = vunpack.c.h.b16 %v19
  %v95 = vunpack.c.l.b16 %v20
  %v96 = vunpack.c.l.b16 %v21
  %v97 = vunpack.c.h.b16 %v21
  %v98 = vunpack.c.l.b16 %v22
  %v99 = vunpack.c.l.b16 %v23
  %v100 = vunpack.c.h.b16 %v23
  %v101 = vunpack.c.l.b16 %v24
  %v102 = vunpack.c.l.b16 %v25
  %v103 = vunpack.c.h.b16 %v25
  %v104 = vunpack.c.l.b16 %v26
  %v105 = vunpack.c.l.b16 %v27
  %v106 = vunpack.c.h.b16 %v27
  %v107 = vunpack.c.l.b16 %v28
  %v108 = vunpack.c.l.b16 %v29
  %v109 = vunpack.c.h.b16 %v29
  %v110 = vunpack.c.l.b16 %v30
  %v111 = vpack.c.b16 %v90, %v87
  %v112 = vpack.c.b16 %v91, %v88
  %v113 = vpack.c.b16 %v92, %v89
  %v114 = vpack.c.b16 %v96, %v93
  %v115 = vpack.c.b16 %v97, %v94
  %v116 = vpack.c.b16 %v98, %v95
  %v117 = vpack.c.b16 %v102, %v99
  %v118 = vpack.c.b16 %v103, %v100
  %v119 = vpack.c.b16 %v104, %v101
  %v120 = vpack.c.b16 %v108, %v105
  %v121 = vpack.c.b16 %v109, %v106
  %v122 = vpack.c.b16 %v110, %v107
  %v167 = vunpack.c.l.b16 %v31
  %v168 = vunpack.c.l.b16 %v32
  %v169 = vunpack.c.l.b16 %v33
  %v170 = vunpack.c.l.b16 %v34
  %v171 = vunpack.c.l.b16 %v35
  %v172 = vunpack.c.l.b16 %v36
  %v173 = vunpack.c.l.b16 %v37
  %v174 = vunpack.c.l.b16 %v38
  %v175 = vunpack.c.l.b16 %v39
  %v176 = vunpack.c.l.b16 %v40
  %v177 = vunpack.c.l.b16 %v41
  %v178 = vunpack.c.l.b16 %v42
  %v179 = vunpack.c.l.b16 %v43
  %v180 = vunpack.c.l.b16 %v44
  %v181 = vunpack.c.l.b16 %v45
  %v182 = vunpack.c.l.b16 %v46
  %v183 = vunpack.c.l.b16 %v47
  %v184 = vunpack.c.l.b16 %v48
  %v185 = vunpack.c.l.b16 %v49
  %v186 = vunpack.c.l.b16 %v50
  %v187 = vunpack.c.l.b16 %v51
  %v188 = vunpack.c.l.b16 %v52
  %v189 = vunpack.c.l.b16 %v53
  %v190 = vunpack.c.l.b16 %v54
  %v191 = vunpack.c.l.b16 %v55
  %v192 = vunpack.c.l.b16 %v56
  %v193 = vunpack.c.l.b16 %v57
  %v194 = vunpack.c.l.b16 %v58
  %v195 = vunpack.c.l.b16 %v59
  %v196 = vunpack.c.l.b16 %v60
  %v197 = vunpack.c.l.b16 %v61
  %v198 = vunpack.c.l.b16 %v62
  %v199 = vunpack.c.l.b16 %v63
  %v200 = vunpack.c.l.b16 %v64
  %v201 = vunpack.c.l.b16 %v65
  %v202 = vunpack.c.l.b16 %v66
  %v203 = vpack.c.b16 %v168, %v167
  %v204 = vpack.c.b16 %v170, %v169
  %v205 = vpack.c.b16 %v172, %v171
  %v206 = vpack.c.b16 %v174, %v173
  %v207 = vpack.c.b16 %v176, %v175
  %v208 = vpack.c.b16 %v178, %v177
  %v209 = vpack.c.b16 %v180, %v179
  %v210 = vpack.c.b16 %v182, %v181
  %v211 = vpack.c.b16 %v184, %v183
  %v212 = vpack.c.b16 %v186, %v185
  %v213 = vpack.c.b16 %v188, %v187
  %v214 = vpack.c.b16 %v190, %v189
  %v215 = vpack.c.b16 %v192, %v191
  %v216 = vpack.c.b16 %v194, %v193
  %v217 = vpack.c.b16 %v196, %v195
  %v218 = vpack.c.b16 %v198, %v197
  %v219 = vpack.c.b16 %v200, %v199
  %v220 = vpack.c.b16 %v202, %v201
  %vm239 = vcmask 261120
  %v241 = vsel %vm239, %v113, 0
  %v244 = vsel %vm239, %v116, 0
  %v247 = vsel %vm239, %v119, 0
  %v250 = vsel %vm239, %v122, 0
  %252 = vmatpush.bf16.msra.mxu0 %v210
  %253 = vmatpush.bf16.msra.mxu0 %v209
  %254 = vmatpush.bf16.msra.mxu0 %v208
  %255 = vmatpush.bf16.msra.mxu0 %v207
  %256 = vmatpush.bf16.msra.mxu0 %v206
  %257 = vmatpush.bf16.msra.mxu0 %v205
  %258 = vmatpush.bf16.msra.mxu0 %v204
  %259 = vmatpush.bf16.msra.mxu0 %v203
  %260 = vmatmul.bf16.gmra.mxu0 %v111
  %v261 = vpop.f32.mrf.mxu0
  %v262 = vadd.f32 %v69, %v261
  %v263 = vpop.f32.mrf.mxu0
  %v264 = vadd.f32 %v69, %v263
  %265 = vmatmul.bf16.gmra.mxu0 %v114
  %v266 = vpop.f32.mrf.mxu0
  %v267 = vadd.f32 %v69, %v266
  %v268 = vpop.f32.mrf.mxu0
  %v269 = vadd.f32 %v69, %v268
  %270 = vmatmul.bf16.gmra.mxu0 %v117
  %v271 = vpop.f32.mrf.mxu0
  %v272 = vadd.f32 %v69, %v271
  %v273 = vpop.f32.mrf.mxu0
  %v274 = vadd.f32 %v69, %v273
  %275 = vmatmul.bf16.gmra.mxu0 %v120
  %v276 = vpop.f32.mrf.mxu0
  %v277 = vadd.f32 %v69, %v276
  %v278 = vpop.f32.mrf.mxu0
  %v279 = vadd.f32 %v69, %v278
  %280 = vdwg.mxu0
  %281 = vmatpush.bf16.msra.mxu0 %v218
  %282 = vmatpush.bf16.msra.mxu0 %v217
  %283 = vmatpush.bf16.msra.mxu0 %v216
  %284 = vmatpush.bf16.msra.mxu0 %v215
  %285 = vmatpush.bf16.msra.mxu0 %v214
  %286 = vmatpush.bf16.msra.mxu0 %v213
  %287 = vmatpush.bf16.msra.mxu0 %v212
  %288 = vmatpush.bf16.msra.mxu0 %v211
  %289 = vmatmul.bf16.gmra.mxu0 %v112
  %v290 = vpop.f32.mrf.mxu0
  %v291 = vadd.f32 %v262, %v290
  %v292 = vpop.f32.mrf.mxu0
  %v293 = vadd.f32 %v264, %v292
  %294 = vmatmul.bf16.gmra.mxu0 %v115
  %v295 = vpop.f32.mrf.mxu0
  %v296 = vadd.f32 %v267, %v295
  %v297 = vpop.f32.mrf.mxu0
  %v298 = vadd.f32 %v269, %v297
  %299 = vmatmul.bf16.gmra.mxu0 %v118
  %v300 = vpop.f32.mrf.mxu0
  %v301 = vadd.f32 %v272, %v300
  %v302 = vpop.f32.mrf.mxu0
  %v303 = vadd.f32 %v274, %v302
  %304 = vmatmul.bf16.gmra.mxu0 %v121
  %v305 = vpop.f32.mrf.mxu0
  %v306 = vadd.f32 %v277, %v305
  %v307 = vpop.f32.mrf.mxu0
  %v308 = vadd.f32 %v279, %v307
  %309 = vdwg.mxu0
  %310 = vmatpush.bf16.msra.mxu0 0
  %311 = vmatpush.bf16.msra.mxu0 0
  %312 = vmatpush.bf16.msra.mxu0 0
  %313 = vmatpush.bf16.msra.mxu0 0
  %314 = vmatpush.bf16.msra.mxu0 0
  %315 = vmatpush.bf16.msra.mxu0 0
  %316 = vmatpush.bf16.msra.mxu0 %v220
  %317 = vmatpush.bf16.msra.mxu0 %v219
  %318 = vmatmul.bf16.gmra.mxu0 %v241
  %v319 = vpop.f32.mrf.mxu0
  %v320 = vadd.f32 %v291, %v319
  %v321 = vpop.f32.mrf.mxu0
  %v322 = vadd.f32 %v293, %v321
  %323 = vmatmul.bf16.gmra.mxu0 %v244
  %v324 = vpop.f32.mrf.mxu0
  %v325 = vadd.f32 %v296, %v324
  %v326 = vpop.f32.mrf.mxu0
  %v327 = vadd.f32 %v298, %v326
  %328 = vmatmul.bf16.gmra.mxu0 %v247
  %v329 = vpop.f32.mrf.mxu0
  %v330 = vadd.f32 %v301, %v329
  %v331 = vpop.f32.mrf.mxu0
  %v332 = vadd.f32 %v303, %v331
  %333 = vmatmul.bf16.gmra.mxu0 %v250
  %v334 = vpop.f32.mrf.mxu0
  %v335 = vadd.f32 %v306, %v334
  %v336 = vpop.f32.mrf.mxu0
  %v337 = vadd.f32 %v308, %v336
  %338 = vdwg.mxu0
  %v339 = vmax.f32 %v320, 0.0
  %v340 = vmax.f32 %v322, 0.0
  %v341 = vmax.f32 %v325, 0.0
  %v342 = vmax.f32 %v327, 0.0
  %v343 = vmax.f32 %v330, 0.0
  %v344 = vmax.f32 %v332, 0.0
  %v345 = vmax.f32 %v335, 0.0
  %v346 = vmax.f32 %v337, 0.0
  %vm347 = vcmask 523264
  %348 = vst.msk [vmem:[%s3] sm:$0xff] %vm347, %v339
  %349 = vst.msk [vmem:[%s3 + $0x8] sm:$0xff] %vm347, %v340
  %350 = vst.msk [vmem:[%s3 + $0x10] sm:$0xff] %vm347, %v341
  %351 = vst.msk [vmem:[%s3 + $0x18] sm:$0xff] %vm347, %v342
  %352 = vst.msk [vmem:[%s3 + $0x20] sm:$0xff] %vm347, %v343
  %353 = vst.msk [vmem:[%s3 + $0x28] sm:$0xff] %vm347, %v344
  %354 = vst.msk [vmem:[%s3 + $0x30] sm:$0xff] %vm347, %v345
  %355 = vst.msk [vmem:[%s3 + $0x38] sm:$0xff] %vm347, %v346
  // Predicated region
  $region14: #{compentrans512_forward.20} parent=0 // pred_check
    _
  $region15: #{compentrans512_forward.20} parent=0 // pred_check_branch
    %357 = sbr.rel (0) target = $region17
  $region16: #{compentrans512_forward.20} parent=0 // pred_region
    _
  $region17: #{compentrans512_forward.20} parent=0 // pred_fallthru
    _
  // Predicated region
  $region18: #{compentrans512_forward.20} parent=0 // pred_check
    _
  $region19: #{compentrans512_forward.20} parent=0 // pred_check_branch
    %359 = sbr.rel (0) target = $region21
  $region20: #{compentrans512_forward.20} parent=0 // pred_region
    _
  $region21: #{compentrans512_forward.20} parent=0 // pred_fallthru
    _

// kernel: compentrans512_forward.21
$region0: #{compentrans512_forward.21}
  #allocation0 [shape = 'u32[]', space=smem, size = 0x4, offset = 0x4, fixed_abs, tag = 'smem constant byte address 0x4 - core index']
  #allocation1 [shape = 'u32[72,128]{1,0:T(1,128)}', space=vmem, size = 0x9000, scoped, tag = 'internal scratch']
  %s0 = inlined_call_operand.vmem [shape: bf16[64,576], index: 0, kind: input, shape index: {}]
  %s1 = inlined_call_operand.vmem [shape: bf16[576,64], index: 1, kind: input, shape index: {}]
  %s2 = inlined_call_operand.vmem [shape: f32[1,64], index: 2, kind: input, shape index: {}]
  %s3 = inlined_call_operand.vmem [shape: f32[64,64], index: 3, kind: output, shape index: {}]
  %s4 = sld [smem:[#allocation0]]
  $region22: #{compentrans512_forward.21} parent=0
    _
  %s6 = ssub.s32 1, %s4
  %s7 = scalar_select 0, %s6, %s4
  // Predicated region
  $region2: #{compentrans512_forward.21} parent=0 // pred_check
    _
  $region3: #{compentrans512_forward.21} parent=0 // pred_check_branch
    %9 = sbr.rel (0) target = $region5
  $region4: #{compentrans512_forward.21} parent=0 // pred_region
    _
  $region5: #{compentrans512_forward.21} parent=0 // pred_fallthru
    _
  // Predicated region
  $region6: #{compentrans512_forward.21} parent=0 // pred_check
    _
  $region7: #{compentrans512_forward.21} parent=0 // pred_check_branch
    %11 = sbr.rel (0) target = $region9
  $region8: #{compentrans512_forward.21} parent=0 // pred_region
    _
  $region9: #{compentrans512_forward.21} parent=0 // pred_fallthru
    _
  // Predicated region
  $region10: #{compentrans512_forward.21} parent=0 // pred_check
    _
  $region11: #{compentrans512_forward.21} parent=0 // pred_check_branch
    %13 = sbr.rel (0) target = $region13
  $region12: #{compentrans512_forward.21} parent=0 // pred_region
    _
  $region13: #{compentrans512_forward.21} parent=0 // pred_fallthru
    _
  %v15 = vld [vmem:[%s0] sm:$0xff]
  %v16 = vld [vmem:[%s0 + $0x8] sm:$0xff]
  %v17 = vld [vmem:[%s0 + $0x10] sm:$0xf]
  %v18 = vld [vmem:[%s0 + $0x14] sm:$0xff]
  %v19 = vld [vmem:[%s0 + $0x1c] sm:$0xff]
  %v20 = vld [vmem:[%s0 + $0x24] sm:$0xf]
  %v21 = vld [vmem:[%s0 + $0x28] sm:$0xff]
  %v22 = vld [vmem:[%s0 + $0x30] sm:$0xff]
  %v23 = vld [vmem:[%s0 + $0x38] sm:$0xf]
  %v24 = vld [vmem:[%s0 + $0x3c] sm:$0xff]
  %v25 = vld [vmem:[%s0 + $0x44] sm:$0xff]
  %v26 = vld [vmem:[%s0 + $0x4c] sm:$0xf]
  %v27 = vld [vmem:[%s0 + $0x50] sm:$0xff]
  %v28 = vld [vmem:[%s0 + $0x58] sm:$0xff]
  %v29 = vld [vmem:[%s0 + $0x60] sm:$0xf]
  %v30 = vld [vmem:[%s0 + $0x64] sm:$0xff]
  %v31 = vld [vmem:[%s0 + $0x6c] sm:$0xff]
  %v32 = vld [vmem:[%s0 + $0x74] sm:$0xf]
  %v33 = vld [vmem:[%s0 + $0x78] sm:$0xff]
  %v34 = vld [vmem:[%s0 + $0x80] sm:$0xff]
  %v35 = vld [vmem:[%s0 + $0x88] sm:$0xf]
  %v36 = vld [vmem:[%s0 + $0x8c] sm:$0xff]
  %v37 = vld [vmem:[%s0 + $0x94] sm:$0xff]
  %v38 = vld [vmem:[%s0 + $0x9c] sm:$0xf]
  %v39 = vld [vmem:[%s1] sm:$0xf]
  %v40 = vld [vmem:[%s1 + $0x4] sm:$0xf]
  %v41 = vld [vmem:[%s1 + $0x8] sm:$0xf]
  %v42 = vld [vmem:[%s1 + $0xc] sm:$0xf]
  %v43 = vld [vmem:[%s1 + $0x10] sm:$0xf]
  %v44 = vld [vmem:[%s1 + $0x14] sm:$0xf]
  %v45 = vld [vmem:[%s1 + $0x18] sm:$0xf]
  %v46 = vld [vmem:[%s1 + $0x1c] sm:$0xf]
  %v47 = vld [vmem:[%s1 + $0x20] sm:$0xf]
  %v48 = vld [vmem:[%s1 + $0x24] sm:$0xf]
  %v49 = vld [vmem:[%s1 + $0x28] sm:$0xf]
  %v50 = vld [vmem:[%s1 + $0x2c] sm:$0xf]
  %v51 = vld [vmem:[%s1 + $0x30] sm:$0xf]
  %v52 = vld [vmem:[%s1 + $0x34] sm:$0xf]
  %v53 = vld [vmem:[%s1 + $0x38] sm:$0xf]
  %v54 = vld [vmem:[%s1 + $0x3c] sm:$0xf]
  %v55 = vld [vmem:[%s1 + $0x40] sm:$0xf]
  %v56 = vld [vmem:[%s1 + $0x44] sm:$0xf]
  %v57 = vld [vmem:[%s1 + $0x48] sm:$0xf]
  %v58 = vld [vmem:[%s1 + $0x4c] sm:$0xf]
  %v59 = vld [vmem:[%s1 + $0x50] sm:$0xf]
  %v60 = vld [vmem:[%s1 + $0x54] sm:$0xf]
  %v61 = vld [vmem:[%s1 + $0x58] sm:$0xf]
  %v62 = vld [vmem:[%s1 + $0x5c] sm:$0xf]
  %v63 = vld [vmem:[%s1 + $0x60] sm:$0xf]
  %v64 = vld [vmem:[%s1 + $0x64] sm:$0xf]
  %v65 = vld [vmem:[%s1 + $0x68] sm:$0xf]
  %v66 = vld [vmem:[%s1 + $0x6c] sm:$0xf]
  %v67 = vld [vmem:[%s1 + $0x70] sm:$0xf]
  %v68 = vld [vmem:[%s1 + $0x74] sm:$0xf]
  %v69 = vld [vmem:[%s1 + $0x78] sm:$0xf]
  %v70 = vld [vmem:[%s1 + $0x7c] sm:$0xf]
  %v71 = vld [vmem:[%s1 + $0x80] sm:$0xf]
  %v72 = vld [vmem:[%s1 + $0x84] sm:$0xf]
  %v73 = vld [vmem:[%s1 + $0x88] sm:$0xf]
  %v74 = vld [vmem:[%s1 + $0x8c] sm:$0xf]
  %v75 = vld [vmem:[%s1 + $0x90] sm:$0xf]
  %v76 = vld [vmem:[%s1 + $0x94] sm:$0xf]
  %v77 = vld [vmem:[%s1 + $0x98] sm:$0xf]
  %v78 = vld [vmem:[%s1 + $0x9c] sm:$0xf]
  %v79 = vld [vmem:[%s1 + $0xa0] sm:$0xf]
  %v80 = vld [vmem:[%s1 + $0xa4] sm:$0xf]
  %v81 = vld [vmem:[%s1 + $0xa8] sm:$0xf]
  %v82 = vld [vmem:[%s1 + $0xac] sm:$0xf]
  %v83 = vld [vmem:[%s1 + $0xb0] sm:$0xf]
  %v84 = vld [vmem:[%s1 + $0xb4] sm:$0xf]
  %v85 = vld [vmem:[%s1 + $0xb8] sm:$0xf]
  %v86 = vld [vmem:[%s1 + $0xbc] sm:$0xf]
  %v87 = vld [vmem:[%s1 + $0xc0] sm:$0xf]
  %v88 = vld [vmem:[%s1 + $0xc4] sm:$0xf]
  %v89 = vld [vmem:[%s1 + $0xc8] sm:$0xf]
  %v90 = vld [vmem:[%s1 + $0xcc] sm:$0xf]
  %v91 = vld [vmem:[%s1 + $0xd0] sm:$0xf]
  %v92 = vld [vmem:[%s1 + $0xd4] sm:$0xf]
  %v93 = vld [vmem:[%s1 + $0xd8] sm:$0xf]
  %v94 = vld [vmem:[%s1 + $0xdc] sm:$0xf]
  %v95 = vld [vmem:[%s1 + $0xe0] sm:$0xf]
  %v96 = vld [vmem:[%s1 + $0xe4] sm:$0xf]
  %v97 = vld [vmem:[%s1 + $0xe8] sm:$0xf]
  %v98 = vld [vmem:[%s1 + $0xec] sm:$0xf]
  %v99 = vld [vmem:[%s1 + $0xf0] sm:$0xf]
  %v100 = vld [vmem:[%s1 + $0xf4] sm:$0xf]
  %v101 = vld [vmem:[%s1 + $0xf8] sm:$0xf]
  %v102 = vld [vmem:[%s1 + $0xfc] sm:$0xf]
  %v103 = vld [vmem:[%s1 + $0x100] sm:$0xf]
  %v104 = vld [vmem:[%s1 + $0x104] sm:$0xf]
  %v105 = vld [vmem:[%s1 + $0x108] sm:$0xf]
  %v106 = vld [vmem:[%s1 + $0x10c] sm:$0xf]
  %v107 = vld [vmem:[%s1 + $0x110] sm:$0xf]
  %v108 = vld [vmem:[%s1 + $0x114] sm:$0xf]
  %v109 = vld [vmem:[%s1 + $0x118] sm:$0xf]
  %v110 = vld [vmem:[%s1 + $0x11c] sm:$0xf]
  %v111 = vld [vmem:[%s2] sm:$0x1]
  %v113 = vperm.slane %v111, 0
  %v139 = vunpack.c.l.b16 %v15
  %v140 = vunpack.c.h.b16 %v15
  %v141 = vunpack.c.l.b16 %v16
  %v142 = vunpack.c.h.b16 %v16
  %v143 = vunpack.c.l.b16 %v17
  %v144 = vunpack.c.l.b16 %v18
  %v145 = vunpack.c.h.b16 %v18
  %v146 = vunpack.c.l.b16 %v19
  %v147 = vunpack.c.h.b16 %v19
  %v148 = vunpack.c.l.b16 %v20
  %v149 = vunpack.c.l.b16 %v21
  %v150 = vunpack.c.h.b16 %v21
  %v151 = vunpack.c.l.b16 %v22
  %v152 = vunpack.c.h.b16 %v22
  %v153 = vunpack.c.l.b16 %v23
  %v154 = vunpack.c.l.b16 %v24
  %v155 = vunpack.c.h.b16 %v24
  %v156 = vunpack.c.l.b16 %v25
  %v157 = vunpack.c.h.b16 %v25
  %v158 = vunpack.c.l.b16 %v26
  %v159 = vunpack.c.l.b16 %v27
  %v160 = vunpack.c.h.b16 %v27
  %v161 = vunpack.c.l.b16 %v28
  %v162 = vunpack.c.h.b16 %v28
  %v163 = vunpack.c.l.b16 %v29
  %v164 = vunpack.c.l.b16 %v30
  %v165 = vunpack.c.h.b16 %v30
  %v166 = vunpack.c.l.b16 %v31
  %v167 = vunpack.c.h.b16 %v31
  %v168 = vunpack.c.l.b16 %v32
  %v169 = vunpack.c.l.b16 %v33
  %v170 = vunpack.c.h.b16 %v33
  %v171 = vunpack.c.l.b16 %v34
  %v172 = vunpack.c.h.b16 %v34
  %v173 = vunpack.c.l.b16 %v35
  %v174 = vunpack.c.l.b16 %v36
  %v175 = vunpack.c.h.b16 %v36
  %v176 = vunpack.c.l.b16 %v37
  %v177 = vunpack.c.h.b16 %v37
  %v178 = vunpack.c.l.b16 %v38
  %v179 = vpack.c.b16 %v144, %v139
  %v180 = vpack.c.b16 %v145, %v140
  %v181 = vpack.c.b16 %v146, %v141
  %v182 = vpack.c.b16 %v147, %v142
  %v183 = vpack.c.b16 %v148, %v143
  %v184 = vpack.c.b16 %v154, %v149
  %v185 = vpack.c.b16 %v155, %v150
  %v186 = vpack.c.b16 %v156, %v151
  %v187 = vpack.c.b16 %v157, %v152
  %v188 = vpack.c.b16 %v158, %v153
  %v189 = vpack.c.b16 %v164, %v159
  %v190 = vpack.c.b16 %v165, %v160
  %v191 = vpack.c.b16 %v166, %v161
  %v192 = vpack.c.b16 %v167, %v162
  %v193 = vpack.c.b16 %v168, %v163
  %v194 = vpack.c.b16 %v174, %v169
  %v195 = vpack.c.b16 %v175, %v170
  %v196 = vpack.c.b16 %v176, %v171
  %v197 = vpack.c.b16 %v177, %v172
  %v198 = vpack.c.b16 %v178, %v173
  %v287 = vunpack.c.l.b16 %v39
  %v288 = vunpack.c.l.b16 %v40
  %v289 = vunpack.c.l.b16 %v41
  %v290 = vunpack.c.l.b16 %v42
  %v291 = vunpack.c.l.b16 %v43
  %v292 = vunpack.c.l.b16 %v44
  %v293 = vunpack.c.l.b16 %v45
  %v294 = vunpack.c.l.b16 %v46
  %v295 = vunpack.c.l.b16 %v47
  %v296 = vunpack.c.l.b16 %v48
  %v297 = vunpack.c.l.b16 %v49
  %v298 = vunpack.c.l.b16 %v50
  %v299 = vunpack.c.l.b16 %v51
  %v300 = vunpack.c.l.b16 %v52
  %v301 = vunpack.c.l.b16 %v53
  %v302 = vunpack.c.l.b16 %v54
  %v303 = vunpack.c.l.b16 %v55
  %v304 = vunpack.c.l.b16 %v56
  %v305 = vunpack.c.l.b16 %v57
  %v306 = vunpack.c.l.b16 %v58
  %v307 = vunpack.c.l.b16 %v59
  %v308 = vunpack.c.l.b16 %v60
  %v309 = vunpack.c.l.b16 %v61
  %v310 = vunpack.c.l.b16 %v62
  %v311 = vunpack.c.l.b16 %v63
  %v312 = vunpack.c.l.b16 %v64
  %v313 = vunpack.c.l.b16 %v65
  %v314 = vunpack.c.l.b16 %v66
  %v315 = vunpack.c.l.b16 %v67
  %v316 = vunpack.c.l.b16 %v68
  %v317 = vunpack.c.l.b16 %v69
  %v318 = vunpack.c.l.b16 %v70
  %v319 = vunpack.c.l.b16 %v71
  %v320 = vunpack.c.l.b16 %v72
  %v321 = vunpack.c.l.b16 %v73
  %v322 = vunpack.c.l.b16 %v74
  %v323 = vunpack.c.l.b16 %v75
  %v324 = vunpack.c.l.b16 %v76
  %v325 = vunpack.c.l.b16 %v77
  %v326 = vunpack.c.l.b16 %v78
  %v327 = vunpack.c.l.b16 %v79
  %v328 = vunpack.c.l.b16 %v80
  %v329 = vunpack.c.l.b16 %v81
  %v330 = vunpack.c.l.b16 %v82
  %v331 = vunpack.c.l.b16 %v83
  %v332 = vunpack.c.l.b16 %v84
  %v333 = vunpack.c.l.b16 %v85
  %v334 = vunpack.c.l.b16 %v86
  %v335 = vunpack.c.l.b16 %v87
  %v336 = vunpack.c.l.b16 %v88
  %v337 = vunpack.c.l.b16 %v89
  %v338 = vunpack.c.l.b16 %v90
  %v339 = vunpack.c.l.b16 %v91
  %v340 = vunpack.c.l.b16 %v92
  %v341 = vunpack.c.l.b16 %v93
  %v342 = vunpack.c.l.b16 %v94
  %v343 = vunpack.c.l.b16 %v95
  %v344 = vunpack.c.l.b16 %v96
  %v345 = vunpack.c.l.b16 %v97
  %v346 = vunpack.c.l.b16 %v98
  %v347 = vunpack.c.l.b16 %v99
  %v348 = vunpack.c.l.b16 %v100
  %v349 = vunpack.c.l.b16 %v101
  %v350 = vunpack.c.l.b16 %v102
  %v351 = vunpack.c.l.b16 %v103
  %v352 = vunpack.c.l.b16 %v104
  %v353 = vunpack.c.l.b16 %v105
  %v354 = vunpack.c.l.b16 %v106
  %v355 = vunpack.c.l.b16 %v107
  %v356 = vunpack.c.l.b16 %v108
  %v357 = vunpack.c.l.b16 %v109
  %v358 = vunpack.c.l.b16 %v110
  %v359 = vpack.c.b16 %v288, %v287
  %v360 = vpack.c.b16 %v290, %v289
  %v361 = vpack.c.b16 %v292, %v291
  %v362 = vpack.c.b16 %v294, %v293
  %v363 = vpack.c.b16 %v296, %v295
  %v364 = vpack.c.b16 %v298, %v297
  %v365 = vpack.c.b16 %v300, %v299
  %v366 = vpack.c.b16 %v302, %v301
  %v367 = vpack.c.b16 %v304, %v303
  %v368 = vpack.c.b16 %v306, %v305
  %v369 = vpack.c.b16 %v308, %v307
  %v370 = vpack.c.b16 %v310, %v309
  %v371 = vpack.c.b16 %v312, %v311
  %v372 = vpack.c.b16 %v314, %v313
  %v373 = vpack.c.b16 %v316, %v315
  %v374 = vpack.c.b16 %v318, %v317
  %v375 = vpack.c.b16 %v320, %v319
  %v376 = vpack.c.b16 %v322, %v321
  %v377 = vpack.c.b16 %v324, %v323
  %v378 = vpack.c.b16 %v326, %v325
  %v379 = vpack.c.b16 %v328, %v327
  %v380 = vpack.c.b16 %v330, %v329
  %v381 = vpack.c.b16 %v332, %v331
  %v382 = vpack.c.b16 %v334, %v333
  %v383 = vpack.c.b16 %v336, %v335
  %v384 = vpack.c.b16 %v338, %v337
  %v385 = vpack.c.b16 %v340, %v339
  %v386 = vpack.c.b16 %v342, %v341
  %v387 = vpack.c.b16 %v344, %v343
  %v388 = vpack.c.b16 %v346, %v345
  %v389 = vpack.c.b16 %v348, %v347
  %v390 = vpack.c.b16 %v350, %v349
  %v391 = vpack.c.b16 %v352, %v351
  %v392 = vpack.c.b16 %v354, %v353
  %v393 = vpack.c.b16 %v356, %v355
  %v394 = vpack.c.b16 %v358, %v357
  %vm431 = vcmask 523264
  %v433 = vsel %vm431, %v183, 0
  %v436 = vsel %vm431, %v188, 0
  %v439 = vsel %vm431, %v193, 0
  %v442 = vsel %vm431, %v198, 0
  %444 = vmatpush.bf16.msra.mxu0 %v366
  %445 = vmatpush.bf16.msra.mxu0 %v365
  %446 = vmatpush.bf16.msra.mxu0 %v364
  %447 = vmatpush.bf16.msra.mxu0 %v363
  %448 = vmatpush.bf16.msra.mxu0 %v362
  %449 = vmatpush.bf16.msra.mxu0 %v361
  %450 = vmatpush.bf16.msra.mxu0 %v360
  %451 = vmatpush.bf16.msra.mxu0 %v359
  %452 = vmatmul.bf16.gmra.mxu0 %v179
  %v453 = vpop.f32.mrf.mxu0
  %v454 = vadd.f32 %v113, %v453
  %v455 = vpop.f32.mrf.mxu0
  %v456 = vadd.f32 %v113, %v455
  %457 = vmatmul.bf16.gmra.mxu0 %v184
  %v458 = vpop.f32.mrf.mxu0
  %v459 = vadd.f32 %v113, %v458
  %v460 = vpop.f32.mrf.mxu0
  %v461 = vadd.f32 %v113, %v460
  %462 = vmatmul.bf16.gmra.mxu0 %v189
  %v463 = vpop.f32.mrf.mxu0
  %v464 = vadd.f32 %v113, %v463
  %v465 = vpop.f32.mrf.mxu0
  %v466 = vadd.f32 %v113, %v465
  %467 = vmatmul.bf16.gmra.mxu0 %v194
  %v468 = vpop.f32.mrf.mxu0
  %v469 = vadd.f32 %v113, %v468
  %v470 = vpop.f32.mrf.mxu0
  %v471 = vadd.f32 %v113, %v470
  %472 = vdwg.mxu0
  %473 = vmatpush.bf16.msra.mxu0 %v374
  %474 = vmatpush.bf16.msra.mxu0 %v373
  %475 = vmatpush.bf16.msra.mxu0 %v372
  %476 = vmatpush.bf16.msra.mxu0 %v371
  %477 = vmatpush.bf16.msra.mxu0 %v370
  %478 = vmatpush.bf16.msra.mxu0 %v369
  %479 = vmatpush.bf16.msra.mxu0 %v368
  %480 = vmatpush.bf16.msra.mxu0 %v367
  %481 = vmatmul.bf16.gmra.mxu0 %v180
  %v482 = vpop.f32.mrf.mxu0
  %v483 = vadd.f32 %v454, %v482
  %v484 = vpop.f32.mrf.mxu0
  %v485 = vadd.f32 %v456, %v484
  %486 = vmatmul.bf16.gmra.mxu0 %v185
  %v487 = vpop.f32.mrf.mxu0
  %v488 = vadd.f32 %v459, %v487
  %v489 = vpop.f32.mrf.mxu0
  %v490 = vadd.f32 %v461, %v489
  %491 = vmatmul.bf16.gmra.mxu0 %v190
  %v492 = vpop.f32.mrf.mxu0
  %v493 = vadd.f32 %v464, %v492
  %v494 = vpop.f32.mrf.mxu0
  %v495 = vadd.f32 %v466, %v494
  %496 = vmatmul.bf16.gmra.mxu0 %v195
  %v497 = vpop.f32.mrf.mxu0
  %v498 = vadd.f32 %v469, %v497
  %v499 = vpop.f32.mrf.mxu0
  %v500 = vadd.f32 %v471, %v499
  %501 = vdwg.mxu0
  %502 = vmatpush.bf16.msra.mxu0 %v382
  %503 = vmatpush.bf16.msra.mxu0 %v381
  %504 = vmatpush.bf16.msra.mxu0 %v380
  %505 = vmatpush.bf16.msra.mxu0 %v379
  %506 = vmatpush.bf16.msra.mxu0 %v378
  %507 = vmatpush.bf16.msra.mxu0 %v377
  %508 = vmatpush.bf16.msra.mxu0 %v376
  %509 = vmatpush.bf16.msra.mxu0 %v375
  %510 = vmatmul.bf16.gmra.mxu0 %v181
  %v511 = vpop.f32.mrf.mxu0
  %v512 = vadd.f32 %v483, %v511
  %v513 = vpop.f32.mrf.mxu0
  %v514 = vadd.f32 %v485, %v513
  %515 = vmatmul.bf16.gmra.mxu0 %v186
  %v516 = vpop.f32.mrf.mxu0
  %v517 = vadd.f32 %v488, %v516
  %v518 = vpop.f32.mrf.mxu0
  %v519 = vadd.f32 %v490, %v518
  %520 = vmatmul.bf16.gmra.mxu0 %v191
  %v521 = vpop.f32.mrf.mxu0
  %v522 = vadd.f32 %v493, %v521
  %v523 = vpop.f32.mrf.mxu0
  %v524 = vadd.f32 %v495, %v523
  %525 = vmatmul.bf16.gmra.mxu0 %v196
  %v526 = vpop.f32.mrf.mxu0
  %v527 = vadd.f32 %v498, %v526
  %v528 = vpop.f32.mrf.mxu0
  %v529 = vadd.f32 %v500, %v528
  %530 = vdwg.mxu0
  %531 = vmatpush.bf16.msra.mxu0 %v390
  %532 = vmatpush.bf16.msra.mxu0 %v389
  %533 = vmatpush.bf16.msra.mxu0 %v388
  %534 = vmatpush.bf16.msra.mxu0 %v387
  %535 = vmatpush.bf16.msra.mxu0 %v386
  %536 = vmatpush.bf16.msra.mxu0 %v385
  %537 = vmatpush.bf16.msra.mxu0 %v384
  %538 = vmatpush.bf16.msra.mxu0 %v383
  %539 = vmatmul.bf16.gmra.mxu0 %v182
  %v540 = vpop.f32.mrf.mxu0
  %v541 = vadd.f32 %v512, %v540
  %v542 = vpop.f32.mrf.mxu0
  %v543 = vadd.f32 %v514, %v542
  %544 = vmatmul.bf16.gmra.mxu0 %v187
  %v545 = vpop.f32.mrf.mxu0
  %v546 = vadd.f32 %v517, %v545
  %v547 = vpop.f32.mrf.mxu0
  %v548 = vadd.f32 %v519, %v547
  %549 = vmatmul.bf16.gmra.mxu0 %v192
  %v550 = vpop.f32.mrf.mxu0
  %v551 = vadd.f32 %v522, %v550
  %v552 = vpop.f32.mrf.mxu0
  %v553 = vadd.f32 %v524, %v552
  %554 = vmatmul.bf16.gmra.mxu0 %v197
  %v555 = vpop.f32.mrf.mxu0
  %v556 = vadd.f32 %v527, %v555
  %v557 = vpop.f32.mrf.mxu0
  %v558 = vadd.f32 %v529, %v557
  %559 = vdwg.mxu0
  %560 = vmatpush.bf16.msra.mxu0 0
  %561 = vmatpush.bf16.msra.mxu0 0
  %562 = vmatpush.bf16.msra.mxu0 0
  %563 = vmatpush.bf16.msra.mxu0 0
  %564 = vmatpush.bf16.msra.mxu0 %v394
  %565 = vmatpush.bf16.msra.mxu0 %v393
  %566 = vmatpush.bf16.msra.mxu0 %v392
  %567 = vmatpush.bf16.msra.mxu0 %v391
  %568 = vmatmul.bf16.gmra.mxu0 %v433
  %v569 = vpop.f32.mrf.mxu0
  %v570 = vadd.f32 %v541, %v569
  %v571 = vpop.f32.mrf.mxu0
  %v572 = vadd.f32 %v543, %v571
  %573 = vmatmul.bf16.gmra.mxu0 %v436
  %v574 = vpop.f32.mrf.mxu0
  %v575 = vadd.f32 %v546, %v574
  %v576 = vpop.f32.mrf.mxu0
  %v577 = vadd.f32 %v548, %v576
  %578 = vmatmul.bf16.gmra.mxu0 %v439
  %v579 = vpop.f32.mrf.mxu0
  %v580 = vadd.f32 %v551, %v579
  %v581 = vpop.f32.mrf.mxu0
  %v582 = vadd.f32 %v553, %v581
  %583 = vmatmul.bf16.gmra.mxu0 %v442
  %v584 = vpop.f32.mrf.mxu0
  %v585 = vadd.f32 %v556, %v584
  %v586 = vpop.f32.mrf.mxu0
  %v587 = vadd.f32 %v558, %v586
  %588 = vdwg.mxu0
  %589 = vst.msk [vmem:[%s3] sm:$0xff] %vm431, %v570
  %590 = vst.msk [vmem:[%s3 + $0x8] sm:$0xff] %vm431, %v572
  %591 = vst.msk [vmem:[%s3 + $0x10] sm:$0xff] %vm431, %v575
  %592 = vst.msk [vmem:[%s3 + $0x18] sm:$0xff] %vm431, %v577
  %593 = vst.msk [vmem:[%s3 + $0x20] sm:$0xff] %vm431, %v580
  %594 = vst.msk [vmem:[%s3 + $0x28] sm:$0xff] %vm431, %v582
  %595 = vst.msk [vmem:[%s3 + $0x30] sm:$0xff] %vm431, %v585
  %596 = vst.msk [vmem:[%s3 + $0x38] sm:$0xff] %vm431, %v587
  // Predicated region
  $region14: #{compentrans512_forward.21} parent=0 // pred_check
    _
  $region15: #{compentrans512_forward.21} parent=0 // pred_check_branch
    %598 = sbr.rel (0) target = $region17
  $region16: #{compentrans512_forward.21} parent=0 // pred_region
    _
  $region17: #{compentrans512_forward.21} parent=0 // pred_fallthru
    _
  // Predicated region
  $region18: #{compentrans512_forward.21} parent=0 // pred_check
    _
  $region19: #{compentrans512_forward.21} parent=0 // pred_check_branch
    %600 = sbr.rel (0) target = $region21
  $region20: #{compentrans512_forward.21} parent=0 // pred_region
    _
  $region21: #{compentrans512_forward.21} parent=0 // pred_fallthru
    _

// kernel: compentrans512_forward.22
$region0: #{compentrans512_forward.22}
  #allocation0 [shape = 'u32[]', space=smem, size = 0x4, offset = 0x4, fixed_abs, tag = 'smem constant byte address 0x4 - core index']
  #allocation1 [shape = 'u32[72,128]{1,0:T(1,128)}', space=vmem, size = 0x9000, scoped, tag = 'internal scratch']
  %s0 = inlined_call_operand.vmem [shape: bf16[16,576], index: 0, kind: input, shape index: {}]
  %s1 = inlined_call_operand.vmem [shape: bf16[576,128], index: 1, kind: input, shape index: {}]
  %s2 = inlined_call_operand.vmem [shape: f32[1,128], index: 2, kind: input, shape index: {}]
  %s3 = inlined_call_operand.vmem [shape: f32[16,128], index: 3, kind: output, shape index: {}]
  %s4 = sld [smem:[#allocation0]]
  $region22: #{compentrans512_forward.22} parent=0
    _
  %s6 = ssub.s32 1, %s4
  %s7 = scalar_select 0, %s6, %s4
  // Predicated region
  $region2: #{compentrans512_forward.22} parent=0 // pred_check
    _
  $region3: #{compentrans512_forward.22} parent=0 // pred_check_branch
    %9 = sbr.rel (0) target = $region5
  $region4: #{compentrans512_forward.22} parent=0 // pred_region
    _
  $region5: #{compentrans512_forward.22} parent=0 // pred_fallthru
    _
  // Predicated region
  $region6: #{compentrans512_forward.22} parent=0 // pred_check
    _
  $region7: #{compentrans512_forward.22} parent=0 // pred_check_branch
    %11 = sbr.rel (0) target = $region9
  $region8: #{compentrans512_forward.22} parent=0 // pred_region
    _
  $region9: #{compentrans512_forward.22} parent=0 // pred_fallthru
    _
  // Predicated region
  $region10: #{compentrans512_forward.22} parent=0 // pred_check
    _
  $region11: #{compentrans512_forward.22} parent=0 // pred_check_branch
    %13 = sbr.rel (0) target = $region13
  $region12: #{compentrans512_forward.22} parent=0 // pred_region
    _
  $region13: #{compentrans512_forward.22} parent=0 // pred_fallthru
    _
  %v15 = vld [vmem:[%s0] sm:$0xff]
  %v16 = vld [vmem:[%s0 + $0x8] sm:$0xff]
  %v17 = vld [vmem:[%s0 + $0x10] sm:$0xf]
  %v18 = vld [vmem:[%s0 + $0x14] sm:$0xff]
  %v19 = vld [vmem:[%s0 + $0x1c] sm:$0xff]
  %v20 = vld [vmem:[%s0 + $0x24] sm:$0xf]
  %v21 = vld [vmem:[%s1] sm:$0xf]
  %v22 = vld [vmem:[%s1 + $0x4] sm:$0xf]
  %v23 = vld [vmem:[%s1 + $0x8] sm:$0xf]
  %v24 = vld [vmem:[%s1 + $0xc] sm:$0xf]
  %v25 = vld [vmem:[%s1 + $0x10] sm:$0xf]
  %v26 = vld [vmem:[%s1 + $0x14] sm:$0xf]
  %v27 = vld [vmem:[%s1 + $0x18] sm:$0xf]
  %v28 = vld [vmem:[%s1 + $0x1c] sm:$0xf]
  %v29 = vld [vmem:[%s1 + $0x20] sm:$0xf]
  %v30 = vld [vmem:[%s1 + $0x24] sm:$0xf]
  %v31 = vld [vmem:[%s1 + $0x28] sm:$0xf]
  %v32 = vld [vmem:[%s1 + $0x2c] sm:$0xf]
  %v33 = vld [vmem:[%s1 + $0x30] sm:$0xf]
  %v34 = vld [vmem:[%s1 + $0x34] sm:$0xf]
  %v35 = vld [vmem:[%s1 + $0x38] sm:$0xf]
  %v36 = vld [vmem:[%s1 + $0x3c] sm:$0xf]
  %v37 = vld [vmem:[%s1 + $0x40] sm:$0xf]
  %v38 = vld [vmem:[%s1 + $0x44] sm:$0xf]
  %v39 = vld [vmem:[%s1 + $0x48] sm:$0xf]
  %v40 = vld [vmem:[%s1 + $0x4c] sm:$0xf]
  %v41 = vld [vmem:[%s1 + $0x50] sm:$0xf]
  %v42 = vld [vmem:[%s1 + $0x54] sm:$0xf]
  %v43 = vld [vmem:[%s1 + $0x58] sm:$0xf]
  %v44 = vld [vmem:[%s1 + $0x5c] sm:$0xf]
  %v45 = vld [vmem:[%s1 + $0x60] sm:$0xf]
  %v46 = vld [vmem:[%s1 + $0x64] sm:$0xf]
  %v47 = vld [vmem:[%s1 + $0x68] sm:$0xf]
  %v48 = vld [vmem:[%s1 + $0x6c] sm:$0xf]
  %v49 = vld [vmem:[%s1 + $0x70] sm:$0xf]
  %v50 = vld [vmem:[%s1 + $0x74] sm:$0xf]
  %v51 = vld [vmem:[%s1 + $0x78] sm:$0xf]
  %v52 = vld [vmem:[%s1 + $0x7c] sm:$0xf]
  %v53 = vld [vmem:[%s1 + $0x80] sm:$0xf]
  %v54 = vld [vmem:[%s1 + $0x84] sm:$0xf]
  %v55 = vld [vmem:[%s1 + $0x88] sm:$0xf]
  %v56 = vld [vmem:[%s1 + $0x8c] sm:$0xf]
  %v57 = vld [vmem:[%s1 + $0x90] sm:$0xf]
  %v58 = vld [vmem:[%s1 + $0x94] sm:$0xf]
  %v59 = vld [vmem:[%s1 + $0x98] sm:$0xf]
  %v60 = vld [vmem:[%s1 + $0x9c] sm:$0xf]
  %v61 = vld [vmem:[%s1 + $0xa0] sm:$0xf]
  %v62 = vld [vmem:[%s1 + $0xa4] sm:$0xf]
  %v63 = vld [vmem:[%s1 + $0xa8] sm:$0xf]
  %v64 = vld [vmem:[%s1 + $0xac] sm:$0xf]
  %v65 = vld [vmem:[%s1 + $0xb0] sm:$0xf]
  %v66 = vld [vmem:[%s1 + $0xb4] sm:$0xf]
  %v67 = vld [vmem:[%s1 + $0xb8] sm:$0xf]
  %v68 = vld [vmem:[%s1 + $0xbc] sm:$0xf]
  %v69 = vld [vmem:[%s1 + $0xc0] sm:$0xf]
  %v70 = vld [vmem:[%s1 + $0xc4] sm:$0xf]
  %v71 = vld [vmem:[%s1 + $0xc8] sm:$0xf]
  %v72 = vld [vmem:[%s1 + $0xcc] sm:$0xf]
  %v73 = vld [vmem:[%s1 + $0xd0] sm:$0xf]
  %v74 = vld [vmem:[%s1 + $0xd4] sm:$0xf]
  %v75 = vld [vmem:[%s1 + $0xd8] sm:$0xf]
  %v76 = vld [vmem:[%s1 + $0xdc] sm:$0xf]
  %v77 = vld [vmem:[%s1 + $0xe0] sm:$0xf]
  %v78 = vld [vmem:[%s1 + $0xe4] sm:$0xf]
  %v79 = vld [vmem:[%s1 + $0xe8] sm:$0xf]
  %v80 = vld [vmem:[%s1 + $0xec] sm:$0xf]
  %v81 = vld [vmem:[%s1 + $0xf0] sm:$0xf]
  %v82 = vld [vmem:[%s1 + $0xf4] sm:$0xf]
  %v83 = vld [vmem:[%s1 + $0xf8] sm:$0xf]
  %v84 = vld [vmem:[%s1 + $0xfc] sm:$0xf]
  %v85 = vld [vmem:[%s1 + $0x100] sm:$0xf]
  %v86 = vld [vmem:[%s1 + $0x104] sm:$0xf]
  %v87 = vld [vmem:[%s1 + $0x108] sm:$0xf]
  %v88 = vld [vmem:[%s1 + $0x10c] sm:$0xf]
  %v89 = vld [vmem:[%s1 + $0x110] sm:$0xf]
  %v90 = vld [vmem:[%s1 + $0x114] sm:$0xf]
  %v91 = vld [vmem:[%s1 + $0x118] sm:$0xf]
  %v92 = vld [vmem:[%s1 + $0x11c] sm:$0xf]
  %v93 = vld [vmem:[%s2] sm:$0x1]
  %v95 = vperm.slane %v93, 0
  %v103 = vunpack.c.l.b16 %v15
  %v104 = vunpack.c.h.b16 %v15
  %v105 = vunpack.c.l.b16 %v16
  %v106 = vunpack.c.h.b16 %v16
  %v107 = vunpack.c.l.b16 %v17
  %v108 = vunpack.c.l.b16 %v18
  %v109 = vunpack.c.h.b16 %v18
  %v110 = vunpack.c.l.b16 %v19
  %v111 = vunpack.c.h.b16 %v19
  %v112 = vunpack.c.l.b16 %v20
  %v113 = vpack.c.b16 %v108, %v103
  %v114 = vpack.c.b16 %v109, %v104
  %v115 = vpack.c.b16 %v110, %v105
  %v116 = vpack.c.b16 %v111, %v106
  %v117 = vpack.c.b16 %v112, %v107
  %v194 = vunpack.c.l.b16 %v21
  %v195 = vunpack.c.l.b16 %v22
  %v196 = vunpack.c.l.b16 %v23
  %v197 = vunpack.c.l.b16 %v24
  %v198 = vunpack.c.l.b16 %v25
  %v199 = vunpack.c.l.b16 %v26
  %v200 = vunpack.c.l.b16 %v27
  %v201 = vunpack.c.l.b16 %v28
  %v202 = vunpack.c.l.b16 %v29
  %v203 = vunpack.c.l.b16 %v30
  %v204 = vunpack.c.l.b16 %v31
  %v205 = vunpack.c.l.b16 %v32
  %v206 = vunpack.c.l.b16 %v33
  %v207 = vunpack.c.l.b16 %v34
  %v208 = vunpack.c.l.b16 %v35
  %v209 = vunpack.c.l.b16 %v36
  %v210 = vunpack.c.l.b16 %v37
  %v211 = vunpack.c.l.b16 %v38
  %v212 = vunpack.c.l.b16 %v39
  %v213 = vunpack.c.l.b16 %v40
  %v214 = vunpack.c.l.b16 %v41
  %v215 = vunpack.c.l.b16 %v42
  %v216 = vunpack.c.l.b16 %v43
  %v217 = vunpack.c.l.b16 %v44
  %v218 = vunpack.c.l.b16 %v45
  %v219 = vunpack.c.l.b16 %v46
  %v220 = vunpack.c.l.b16 %v47
  %v221 = vunpack.c.l.b16 %v48
  %v222 = vunpack.c.l.b16 %v49
  %v223 = vunpack.c.l.b16 %v50
  %v224 = vunpack.c.l.b16 %v51
  %v225 = vunpack.c.l.b16 %v52
  %v226 = vunpack.c.l.b16 %v53
  %v227 = vunpack.c.l.b16 %v54
  %v228 = vunpack.c.l.b16 %v55
  %v229 = vunpack.c.l.b16 %v56
  %v230 = vunpack.c.l.b16 %v57
  %v231 = vunpack.c.l.b16 %v58
  %v232 = vunpack.c.l.b16 %v59
  %v233 = vunpack.c.l.b16 %v60
  %v234 = vunpack.c.l.b16 %v61
  %v235 = vunpack.c.l.b16 %v62
  %v236 = vunpack.c.l.b16 %v63
  %v237 = vunpack.c.l.b16 %v64
  %v238 = vunpack.c.l.b16 %v65
  %v239 = vunpack.c.l.b16 %v66
  %v240 = vunpack.c.l.b16 %v67
  %v241 = vunpack.c.l.b16 %v68
  %v242 = vunpack.c.l.b16 %v69
  %v243 = vunpack.c.l.b16 %v70
  %v244 = vunpack.c.l.b16 %v71
  %v245 = vunpack.c.l.b16 %v72
  %v246 = vunpack.c.l.b16 %v73
  %v247 = vunpack.c.l.b16 %v74
  %v248 = vunpack.c.l.b16 %v75
  %v249 = vunpack.c.l.b16 %v76
  %v250 = vunpack.c.l.b16 %v77
  %v251 = vunpack.c.l.b16 %v78
  %v252 = vunpack.c.l.b16 %v79
  %v253 = vunpack.c.l.b16 %v80
  %v254 = vunpack.c.l.b16 %v81
  %v255 = vunpack.c.l.b16 %v82
  %v256 = vunpack.c.l.b16 %v83
  %v257 = vunpack.c.l.b16 %v84
  %v258 = vunpack.c.l.b16 %v85
  %v259 = vunpack.c.l.b16 %v86
  %v260 = vunpack.c.l.b16 %v87
  %v261 = vunpack.c.l.b16 %v88
  %v262 = vunpack.c.l.b16 %v89
  %v263 = vunpack.c.l.b16 %v90
  %v264 = vunpack.c.l.b16 %v91
  %v265 = vunpack.c.l.b16 %v92
  %v266 = vpack.c.b16 %v195, %v194
  %v267 = vpack.c.b16 %v197, %v196
  %v268 = vpack.c.b16 %v199, %v198
  %v269 = vpack.c.b16 %v201, %v200
  %v270 = vpack.c.b16 %v203, %v202
  %v271 = vpack.c.b16 %v205, %v204
  %v272 = vpack.c.b16 %v207, %v206
  %v273 = vpack.c.b16 %v209, %v208
  %v274 = vpack.c.b16 %v211, %v210
  %v275 = vpack.c.b16 %v213, %v212
  %v276 = vpack.c.b16 %v215, %v214
  %v277 = vpack.c.b16 %v217, %v216
  %v278 = vpack.c.b16 %v219, %v218
  %v279 = vpack.c.b16 %v221, %v220
  %v280 = vpack.c.b16 %v223, %v222
  %v281 = vpack.c.b16 %v225, %v224
  %v282 = vpack.c.b16 %v227, %v226
  %v283 = vpack.c.b16 %v229, %v228
  %v284 = vpack.c.b16 %v231, %v230
  %v285 = vpack.c.b16 %v233, %v232
  %v286 = vpack.c.b16 %v235, %v234
  %v287 = vpack.c.b16 %v237, %v236
  %v288 = vpack.c.b16 %v239, %v238
  %v289 = vpack.c.b16 %v241, %v240
  %v290 = vpack.c.b16 %v243, %v242
  %v291 = vpack.c.b16 %v245, %v244
  %v292 = vpack.c.b16 %v247, %v246
  %v293 = vpack.c.b16 %v249, %v248
  %v294 = vpack.c.b16 %v251, %v250
  %v295 = vpack.c.b16 %v253, %v252
  %v296 = vpack.c.b16 %v255, %v254
  %v297 = vpack.c.b16 %v257, %v256
  %v298 = vpack.c.b16 %v259, %v258
  %v299 = vpack.c.b16 %v261, %v260
  %v300 = vpack.c.b16 %v263, %v262
  %v301 = vpack.c.b16 %v265, %v264
  %vm338 = vcmask 523264
  %v340 = vsel %vm338, %v117, 0
  %342 = vmatpush.bf16.msra.mxu0 %v273
  %343 = vmatpush.bf16.msra.mxu0 %v272
  %344 = vmatpush.bf16.msra.mxu0 %v271
  %345 = vmatpush.bf16.msra.mxu0 %v270
  %346 = vmatpush.bf16.msra.mxu0 %v269
  %347 = vmatpush.bf16.msra.mxu0 %v268
  %348 = vmatpush.bf16.msra.mxu0 %v267
  %349 = vmatpush.bf16.msra.mxu0 %v266
  %350 = vmatmul.bf16.gmra.mxu0 %v113
  %v351 = vpop.f32.mrf.mxu0
  %v352 = vadd.f32 %v95, %v351
  %v353 = vpop.f32.mrf.mxu0
  %v354 = vadd.f32 %v95, %v353
  %355 = vdwg.mxu0
  %356 = vmatpush.bf16.msra.mxu0 %v281
  %357 = vmatpush.bf16.msra.mxu0 %v280
  %358 = vmatpush.bf16.msra.mxu0 %v279
  %359 = vmatpush.bf16.msra.mxu0 %v278
  %360 = vmatpush.bf16.msra.mxu0 %v277
  %361 = vmatpush.bf16.msra.mxu0 %v276
  %362 = vmatpush.bf16.msra.mxu0 %v275
  %363 = vmatpush.bf16.msra.mxu0 %v274
  %364 = vmatmul.bf16.gmra.mxu0 %v114
  %v365 = vpop.f32.mrf.mxu0
  %v366 = vadd.f32 %v352, %v365
  %v367 = vpop.f32.mrf.mxu0
  %v368 = vadd.f32 %v354, %v367
  %369 = vdwg.mxu0
  %370 = vmatpush.bf16.msra.mxu0 %v289
  %371 = vmatpush.bf16.msra.mxu0 %v288
  %372 = vmatpush.bf16.msra.mxu0 %v287
  %373 = vmatpush.bf16.msra.mxu0 %v286
  %374 = vmatpush.bf16.msra.mxu0 %v285
  %375 = vmatpush.bf16.msra.mxu0 %v284
  %376 = vmatpush.bf16.msra.mxu0 %v283
  %377 = vmatpush.bf16.msra.mxu0 %v282
  %378 = vmatmul.bf16.gmra.mxu0 %v115
  %v379 = vpop.f32.mrf.mxu0
  %v380 = vadd.f32 %v366, %v379
  %v381 = vpop.f32.mrf.mxu0
  %v382 = vadd.f32 %v368, %v381
  %383 = vdwg.mxu0
  %384 = vmatpush.bf16.msra.mxu0 %v297
  %385 = vmatpush.bf16.msra.mxu0 %v296
  %386 = vmatpush.bf16.msra.mxu0 %v295
  %387 = vmatpush.bf16.msra.mxu0 %v294
  %388 = vmatpush.bf16.msra.mxu0 %v293
  %389 = vmatpush.bf16.msra.mxu0 %v292
  %390 = vmatpush.bf16.msra.mxu0 %v291
  %391 = vmatpush.bf16.msra.mxu0 %v290
  %392 = vmatmul.bf16.gmra.mxu0 %v116
  %v393 = vpop.f32.mrf.mxu0
  %v394 = vadd.f32 %v380, %v393
  %v395 = vpop.f32.mrf.mxu0
  %v396 = vadd.f32 %v382, %v395
  %397 = vdwg.mxu0
  %398 = vmatpush.bf16.msra.mxu0 0
  %399 = vmatpush.bf16.msra.mxu0 0
  %400 = vmatpush.bf16.msra.mxu0 0
  %401 = vmatpush.bf16.msra.mxu0 0
  %402 = vmatpush.bf16.msra.mxu0 %v301
  %403 = vmatpush.bf16.msra.mxu0 %v300
  %404 = vmatpush.bf16.msra.mxu0 %v299
  %405 = vmatpush.bf16.msra.mxu0 %v298
  %406 = vmatmul.bf16.gmra.mxu0 %v340
  %v407 = vpop.f32.mrf.mxu0
  %v408 = vadd.f32 %v394, %v407
  %v409 = vpop.f32.mrf.mxu0
  %v410 = vadd.f32 %v396, %v409
  %411 = vdwg.mxu0
  %v412 = vmax.f32 %v408, 0.0
  %v413 = vmax.f32 %v410, 0.0
  %414 = vst [vmem:[%s3] sm:$0xff] %v412
  %415 = vst [vmem:[%s3 + $0x8] sm:$0xff] %v413
  // Predicated region
  $region14: #{compentrans512_forward.22} parent=0 // pred_check
    _
  $region15: #{compentrans512_forward.22} parent=0 // pred_check_branch
    %417 = sbr.rel (0) target = $region17
  $region16: #{compentrans512_forward.22} parent=0 // pred_region
    _
  $region17: #{compentrans512_forward.22} parent=0 // pred_fallthru
    _
  // Predicated region
  $region18: #{compentrans512_forward.22} parent=0 // pred_check
    _
  $region19: #{compentrans512_forward.22} parent=0 // pred_check_branch
    %419 = sbr.rel (0) target = $region21
  $region20: #{compentrans512_forward.22} parent=0 // pred_region
    _
  $region21: #{compentrans512_forward.22} parent=0 // pred_fallthru
    _

// kernel: compentrans512_forward.23
$region0: #{compentrans512_forward.23}
  #allocation0 [shape = 'u32[]', space=smem, size = 0x4, offset = 0x4, fixed_abs, tag = 'smem constant byte address 0x4 - core index']
  #allocation1 [shape = 'u32[72,128]{1,0:T(1,128)}', space=vmem, size = 0x9000, scoped, tag = 'internal scratch']
  %s0 = inlined_call_operand.vmem [shape: bf16[16,1152], index: 0, kind: input, shape index: {}]
  %s1 = inlined_call_operand.vmem [shape: bf16[1152,256], index: 1, kind: input, shape index: {}]
  %s2 = inlined_call_operand.vmem [shape: f32[1,256], index: 2, kind: input, shape index: {}]
  %s3 = inlined_call_operand.vmem [shape: f32[16,256], index: 3, kind: output, shape index: {}]
  %s4 = sld [smem:[#allocation0]]
  $region22: #{compentrans512_forward.23} parent=0
    _
  %s6 = ssub.s32 1, %s4
  %s7 = scalar_select 0, %s6, %s4
  // Predicated region
  $region2: #{compentrans512_forward.23} parent=0 // pred_check
    _
  $region3: #{compentrans512_forward.23} parent=0 // pred_check_branch
    %9 = sbr.rel (0) target = $region5
  $region4: #{compentrans512_forward.23} parent=0 // pred_region
    _
  $region5: #{compentrans512_forward.23} parent=0 // pred_fallthru
    _
  // Predicated region
  $region6: #{compentrans512_forward.23} parent=0 // pred_check
    _
  $region7: #{compentrans512_forward.23} parent=0 // pred_check_branch
    %11 = sbr.rel (0) target = $region9
  $region8: #{compentrans512_forward.23} parent=0 // pred_region
    _
  $region9: #{compentrans512_forward.23} parent=0 // pred_fallthru
    _
  // Predicated region
  $region10: #{compentrans512_forward.23} parent=0 // pred_check
    _
  $region11: #{compentrans512_forward.23} parent=0 // pred_check_branch
    %13 = sbr.rel (0) target = $region13
  $region12: #{compentrans512_forward.23} parent=0 // pred_region
    _
  $region13: #{compentrans512_forward.23} parent=0 // pred_fallthru
    _
  %v14 = vld [vmem:[%s0] sm:$0xff]
  %v15 = vld [vmem:[%s0 + $0x8] sm:$0xff]
  %v16 = vld [vmem:[%s0 + $0x10] sm:$0xff]
  %v17 = vld [vmem:[%s0 + $0x18] sm:$0xff]
  %v18 = vld [vmem:[%s0 + $0x20] sm:$0xf]
  %v19 = vld [vmem:[%s0 + $0x24] sm:$0xff]
  %v20 = vld [vmem:[%s0 + $0x2c] sm:$0xff]
  %v21 = vld [vmem:[%s0 + $0x34] sm:$0xff]
  %v22 = vld [vmem:[%s0 + $0x3c] sm:$0xff]
  %v23 = vld [vmem:[%s0 + $0x44] sm:$0xf]
  %v24 = vld [vmem:[%s1] sm:$0xff]
  %v25 = vld [vmem:[%s1 + $0x8] sm:$0xff]
  %v26 = vld [vmem:[%s1 + $0x10] sm:$0xff]
  %v27 = vld [vmem:[%s1 + $0x18] sm:$0xff]
  %v28 = vld [vmem:[%s1 + $0x20] sm:$0xff]
  %v29 = vld [vmem:[%s1 + $0x28] sm:$0xff]
  %v30 = vld [vmem:[%s1 + $0x30] sm:$0xff]
  %v31 = vld [vmem:[%s1 + $0x38] sm:$0xff]
  %v32 = vld [vmem:[%s1 + $0x40] sm:$0xff]
  %v33 = vld [vmem:[%s1 + $0x48] sm:$0xff]
  %v34 = vld [vmem:[%s1 + $0x50] sm:$0xff]
  %v35 = vld [vmem:[%s1 + $0x58] sm:$0xff]
  %v36 = vld [vmem:[%s1 + $0x60] sm:$0xff]
  %v37 = vld [vmem:[%s1 + $0x68] sm:$0xff]
  %v38 = vld [vmem:[%s1 + $0x70] sm:$0xff]
  %v39 = vld [vmem:[%s1 + $0x78] sm:$0xff]
  %v40 = vld [vmem:[%s1 + $0x80] sm:$0xff]
  %v41 = vld [vmem:[%s1 + $0x88] sm:$0xff]
  %v42 = vld [vmem:[%s1 + $0x90] sm:$0xff]
  %v43 = vld [vmem:[%s1 + $0x98] sm:$0xff]
  %v44 = vld [vmem:[%s1 + $0xa0] sm:$0xff]
  %v45 = vld [vmem:[%s1 + $0xa8] sm:$0xff]
  %v46 = vld [vmem:[%s1 + $0xb0] sm:$0xff]
  %v47 = vld [vmem:[%s1 + $0xb8] sm:$0xff]
  %v48 = vld [vmem:[%s1 + $0xc0] sm:$0xff]
  %v49 = vld [vmem:[%s1 + $0xc8] sm:$0xff]
  %v50 = vld [vmem:[%s1 + $0xd0] sm:$0xff]
  %v51 = vld [vmem:[%s1 + $0xd8] sm:$0xff]
  %v52 = vld [vmem:[%s1 + $0xe0] sm:$0xff]
  %v53 = vld [vmem:[%s1 + $0xe8] sm:$0xff]
  %v54 = vld [vmem:[%s1 + $0xf0] sm:$0xff]
  %v55 = vld [vmem:[%s1 + $0xf8] sm:$0xff]
  %v56 = vld [vmem:[%s1 + $0x100] sm:$0xff]
  %v57 = vld [vmem:[%s1 + $0x108] sm:$0xff]
  %v58 = vld [vmem:[%s1 + $0x110] sm:$0xff]
  %v59 = vld [vmem:[%s1 + $0x118] sm:$0xff]
  %v60 = vld [vmem:[%s1 + $0x120] sm:$0xff]
  %v61 = vld [vmem:[%s1 + $0x128] sm:$0xff]
  %v62 = vld [vmem:[%s1 + $0x130] sm:$0xff]
  %v63 = vld [vmem:[%s1 + $0x138] sm:$0xff]
  %v64 = vld [vmem:[%s1 + $0x140] sm:$0xff]
  %v65 = vld [vmem:[%s1 + $0x148] sm:$0xff]
  %v66 = vld [vmem:[%s1 + $0x150] sm:$0xff]
  %v67 = vld [vmem:[%s1 + $0x158] sm:$0xff]
  %v68 = vld [vmem:[%s1 + $0x160] sm:$0xff]
  %v69 = vld [vmem:[%s1 + $0x168] sm:$0xff]
  %v70 = vld [vmem:[%s1 + $0x170] sm:$0xff]
  %v71 = vld [vmem:[%s1 + $0x178] sm:$0xff]
  %v72 = vld [vmem:[%s1 + $0x180] sm:$0xff]
  %v73 = vld [vmem:[%s1 + $0x188] sm:$0xff]
  %v74 = vld [vmem:[%s1 + $0x190] sm:$0xff]
  %v75 = vld [vmem:[%s1 + $0x198] sm:$0xff]
  %v76 = vld [vmem:[%s1 + $0x1a0] sm:$0xff]
  %v77 = vld [vmem:[%s1 + $0x1a8] sm:$0xff]
  %v78 = vld [vmem:[%s1 + $0x1b0] sm:$0xff]
  %v79 = vld [vmem:[%s1 + $0x1b8] sm:$0xff]
  %v80 = vld [vmem:[%s1 + $0x1c0] sm:$0xff]
  %v81 = vld [vmem:[%s1 + $0x1c8] sm:$0xff]
  %v82 = vld [vmem:[%s1 + $0x1d0] sm:$0xff]
  %v83 = vld [vmem:[%s1 + $0x1d8] sm:$0xff]
  %v84 = vld [vmem:[%s1 + $0x1e0] sm:$0xff]
  %v85 = vld [vmem:[%s1 + $0x1e8] sm:$0xff]
  %v86 = vld [vmem:[%s1 + $0x1f0] sm:$0xff]
  %v87 = vld [vmem:[%s1 + $0x1f8] sm:$0xff]
  %v88 = vld [vmem:[%s1 + $0x200] sm:$0xff]
  %v89 = vld [vmem:[%s1 + $0x208] sm:$0xff]
  %v90 = vld [vmem:[%s1 + $0x210] sm:$0xff]
  %v91 = vld [vmem:[%s1 + $0x218] sm:$0xff]
  %v92 = vld [vmem:[%s1 + $0x220] sm:$0xff]
  %v93 = vld [vmem:[%s1 + $0x228] sm:$0xff]
  %v94 = vld [vmem:[%s1 + $0x230] sm:$0xff]
  %v95 = vld [vmem:[%s1 + $0x238] sm:$0xff]
  %v96 = vld [vmem:[%s1 + $0x240] sm:$0xff]
  %v97 = vld [vmem:[%s1 + $0x248] sm:$0xff]
  %v98 = vld [vmem:[%s1 + $0x250] sm:$0xff]
  %v99 = vld [vmem:[%s1 + $0x258] sm:$0xff]
  %v100 = vld [vmem:[%s1 + $0x260] sm:$0xff]
  %v101 = vld [vmem:[%s1 + $0x268] sm:$0xff]
  %v102 = vld [vmem:[%s1 + $0x270] sm:$0xff]
  %v103 = vld [vmem:[%s1 + $0x278] sm:$0xff]
  %v104 = vld [vmem:[%s1 + $0x280] sm:$0xff]
  %v105 = vld [vmem:[%s1 + $0x288] sm:$0xff]
  %v106 = vld [vmem:[%s1 + $0x290] sm:$0xff]
  %v107 = vld [vmem:[%s1 + $0x298] sm:$0xff]
  %v108 = vld [vmem:[%s1 + $0x2a0] sm:$0xff]
  %v109 = vld [vmem:[%s1 + $0x2a8] sm:$0xff]
  %v110 = vld [vmem:[%s1 + $0x2b0] sm:$0xff]
  %v111 = vld [vmem:[%s1 + $0x2b8] sm:$0xff]
  %v112 = vld [vmem:[%s1 + $0x2c0] sm:$0xff]
  %v113 = vld [vmem:[%s1 + $0x2c8] sm:$0xff]
  %v114 = vld [vmem:[%s1 + $0x2d0] sm:$0xff]
  %v115 = vld [vmem:[%s1 + $0x2d8] sm:$0xff]
  %v116 = vld [vmem:[%s1 + $0x2e0] sm:$0xff]
  %v117 = vld [vmem:[%s1 + $0x2e8] sm:$0xff]
  %v118 = vld [vmem:[%s1 + $0x2f0] sm:$0xff]
  %v119 = vld [vmem:[%s1 + $0x2f8] sm:$0xff]
  %v120 = vld [vmem:[%s1 + $0x300] sm:$0xff]
  %v121 = vld [vmem:[%s1 + $0x308] sm:$0xff]
  %v122 = vld [vmem:[%s1 + $0x310] sm:$0xff]
  %v123 = vld [vmem:[%s1 + $0x318] sm:$0xff]
  %v124 = vld [vmem:[%s1 + $0x320] sm:$0xff]
  %v125 = vld [vmem:[%s1 + $0x328] sm:$0xff]
  %v126 = vld [vmem:[%s1 + $0x330] sm:$0xff]
  %v127 = vld [vmem:[%s1 + $0x338] sm:$0xff]
  %v128 = vld [vmem:[%s1 + $0x340] sm:$0xff]
  %v129 = vld [vmem:[%s1 + $0x348] sm:$0xff]
  %v130 = vld [vmem:[%s1 + $0x350] sm:$0xff]
  %v131 = vld [vmem:[%s1 + $0x358] sm:$0xff]
  %v132 = vld [vmem:[%s1 + $0x360] sm:$0xff]
  %v133 = vld [vmem:[%s1 + $0x368] sm:$0xff]
  %v134 = vld [vmem:[%s1 + $0x370] sm:$0xff]
  %v135 = vld [vmem:[%s1 + $0x378] sm:$0xff]
  %v136 = vld [vmem:[%s1 + $0x380] sm:$0xff]
  %v137 = vld [vmem:[%s1 + $0x388] sm:$0xff]
  %v138 = vld [vmem:[%s1 + $0x390] sm:$0xff]
  %v139 = vld [vmem:[%s1 + $0x398] sm:$0xff]
  %v140 = vld [vmem:[%s1 + $0x3a0] sm:$0xff]
  %v141 = vld [vmem:[%s1 + $0x3a8] sm:$0xff]
  %v142 = vld [vmem:[%s1 + $0x3b0] sm:$0xff]
  %v143 = vld [vmem:[%s1 + $0x3b8] sm:$0xff]
  %v144 = vld [vmem:[%s1 + $0x3c0] sm:$0xff]
  %v145 = vld [vmem:[%s1 + $0x3c8] sm:$0xff]
  %v146 = vld [vmem:[%s1 + $0x3d0] sm:$0xff]
  %v147 = vld [vmem:[%s1 + $0x3d8] sm:$0xff]
  %v148 = vld [vmem:[%s1 + $0x3e0] sm:$0xff]
  %v149 = vld [vmem:[%s1 + $0x3e8] sm:$0xff]
  %v150 = vld [vmem:[%s1 + $0x3f0] sm:$0xff]
  %v151 = vld [vmem:[%s1 + $0x3f8] sm:$0xff]
  %v152 = vld [vmem:[%s1 + $0x400] sm:$0xff]
  %v153 = vld [vmem:[%s1 + $0x408] sm:$0xff]
  %v154 = vld [vmem:[%s1 + $0x410] sm:$0xff]
  %v155 = vld [vmem:[%s1 + $0x418] sm:$0xff]
  %v156 = vld [vmem:[%s1 + $0x420] sm:$0xff]
  %v157 = vld [vmem:[%s1 + $0x428] sm:$0xff]
  %v158 = vld [vmem:[%s1 + $0x430] sm:$0xff]
  %v159 = vld [vmem:[%s1 + $0x438] sm:$0xff]
  %v160 = vld [vmem:[%s1 + $0x440] sm:$0xff]
  %v161 = vld [vmem:[%s1 + $0x448] sm:$0xff]
  %v162 = vld [vmem:[%s1 + $0x450] sm:$0xff]
  %v163 = vld [vmem:[%s1 + $0x458] sm:$0xff]
  %v164 = vld [vmem:[%s1 + $0x460] sm:$0xff]
  %v165 = vld [vmem:[%s1 + $0x468] sm:$0xff]
  %v166 = vld [vmem:[%s1 + $0x470] sm:$0xff]
  %v167 = vld [vmem:[%s1 + $0x478] sm:$0xff]
  %v168 = vld [vmem:[%s2] sm:$0x3]
  %v170 = vperm.slane %v168, 0
  %v171 = vperm.slane %v168, 1
  %v184 = vunpack.c.l.b16 %v14
  %v185 = vunpack.c.h.b16 %v14
  %v186 = vunpack.c.l.b16 %v15
  %v187 = vunpack.c.h.b16 %v15
  %v188 = vunpack.c.l.b16 %v16
  %v189 = vunpack.c.h.b16 %v16
  %v190 = vunpack.c.l.b16 %v17
  %v191 = vunpack.c.h.b16 %v17
  %v192 = vunpack.c.l.b16 %v18
  %v193 = vunpack.c.l.b16 %v19
  %v194 = vunpack.c.h.b16 %v19
  %v195 = vunpack.c.l.b16 %v20
  %v196 = vunpack.c.h.b16 %v20
  %v197 = vunpack.c.l.b16 %v21
  %v198 = vunpack.c.h.b16 %v21
  %v199 = vunpack.c.l.b16 %v22
  %v200 = vunpack.c.h.b16 %v22
  %v201 = vunpack.c.l.b16 %v23
  %v202 = vpack.c.b16 %v193, %v184
  %v203 = vpack.c.b16 %v194, %v185
  %v204 = vpack.c.b16 %v195, %v186
  %v205 = vpack.c.b16 %v196, %v187
  %v206 = vpack.c.b16 %v197, %v188
  %v207 = vpack.c.b16 %v198, %v189
  %v208 = vpack.c.b16 %v199, %v190
  %v209 = vpack.c.b16 %v200, %v191
  %v210 = vpack.c.b16 %v201, %v192
  %v364 = vunpack.c.l.b16 %v24
  %v365 = vunpack.c.h.b16 %v24
  %v366 = vunpack.c.l.b16 %v25
  %v367 = vunpack.c.h.b16 %v25
  %v368 = vunpack.c.l.b16 %v26
  %v369 = vunpack.c.h.b16 %v26
  %v370 = vunpack.c.l.b16 %v27
  %v371 = vunpack.c.h.b16 %v27
  %v372 = vunpack.c.l.b16 %v28
  %v373 = vunpack.c.h.b16 %v28
  %v374 = vunpack.c.l.b16 %v29
  %v375 = vunpack.c.h.b16 %v29
  %v376 = vunpack.c.l.b16 %v30
  %v377 = vunpack.c.h.b16 %v30
  %v378 = vunpack.c.l.b16 %v31
  %v379 = vunpack.c.h.b16 %v31
  %v380 = vunpack.c.l.b16 %v32
  %v381 = vunpack.c.h.b16 %v32
  %v382 = vunpack.c.l.b16 %v33
  %v383 = vunpack.c.h.b16 %v33
  %v384 = vunpack.c.l.b16 %v34
  %v385 = vunpack.c.h.b16 %v34
  %v386 = vunpack.c.l.b16 %v35
  %v387 = vunpack.c.h.b16 %v35
  %v388 = vunpack.c.l.b16 %v36
  %v389 = vunpack.c.h.b16 %v36
  %v390 = vunpack.c.l.b16 %v37
  %v391 = vunpack.c.h.b16 %v37
  %v392 = vunpack.c.l.b16 %v38
  %v393 = vunpack.c.h.b16 %v38
  %v394 = vunpack.c.l.b16 %v39
  %v395 = vunpack.c.h.b16 %v39
  %v396 = vunpack.c.l.b16 %v40
  %v397 = vunpack.c.h.b16 %v40
  %v398 = vunpack.c.l.b16 %v41
  %v399 = vunpack.c.h.b16 %v41
  %v400 = vunpack.c.l.b16 %v42
  %v401 = vunpack.c.h.b16 %v42
  %v402 = vunpack.c.l.b16 %v43
  %v403 = vunpack.c.h.b16 %v43
  %v404 = vunpack.c.l.b16 %v44
  %v405 = vunpack.c.h.b16 %v44
  %v406 = vunpack.c.l.b16 %v45
  %v407 = vunpack.c.h.b16 %v45
  %v408 = vunpack.c.l.b16 %v46
  %v409 = vunpack.c.h.b16 %v46
  %v410 = vunpack.c.l.b16 %v47
  %v411 = vunpack.c.h.b16 %v47
  %v412 = vunpack.c.l.b16 %v48
  %v413 = vunpack.c.h.b16 %v48
  %v414 = vunpack.c.l.b16 %v49
  %v415 = vunpack.c.h.b16 %v49
  %v416 = vunpack.c.l.b16 %v50
  %v417 = vunpack.c.h.b16 %v50
  %v418 = vunpack.c.l.b16 %v51
  %v419 = vunpack.c.h.b16 %v51
  %v420 = vunpack.c.l.b16 %v52
  %v421 = vunpack.c.h.b16 %v52
  %v422 = vunpack.c.l.b16 %v53
  %v423 = vunpack.c.h.b16 %v53
  %v424 = vunpack.c.l.b16 %v54
  %v425 = vunpack.c.h.b16 %v54
  %v426 = vunpack.c.l.b16 %v55
  %v427 = vunpack.c.h.b16 %v55
  %v428 = vunpack.c.l.b16 %v56
  %v429 = vunpack.c.h.b16 %v56
  %v430 = vunpack.c.l.b16 %v57
  %v431 = vunpack.c.h.b16 %v57
  %v432 = vunpack.c.l.b16 %v58
  %v433 = vunpack.c.h.b16 %v58
  %v434 = vunpack.c.l.b16 %v59
  %v435 = vunpack.c.h.b16 %v59
  %v436 = vunpack.c.l.b16 %v60
  %v437 = vunpack.c.h.b16 %v60
  %v438 = vunpack.c.l.b16 %v61
  %v439 = vunpack.c.h.b16 %v61
  %v440 = vunpack.c.l.b16 %v62
  %v441 = vunpack.c.h.b16 %v62
  %v442 = vunpack.c.l.b16 %v63
  %v443 = vunpack.c.h.b16 %v63
  %v444 = vunpack.c.l.b16 %v64
  %v445 = vunpack.c.h.b16 %v64
  %v446 = vunpack.c.l.b16 %v65
  %v447 = vunpack.c.h.b16 %v65
  %v448 = vunpack.c.l.b16 %v66
  %v449 = vunpack.c.h.b16 %v66
  %v450 = vunpack.c.l.b16 %v67
  %v451 = vunpack.c.h.b16 %v67
  %v452 = vunpack.c.l.b16 %v68
  %v453 = vunpack.c.h.b16 %v68
  %v454 = vunpack.c.l.b16 %v69
  %v455 = vunpack.c.h.b16 %v69
  %v456 = vunpack.c.l.b16 %v70
  %v457 = vunpack.c.h.b16 %v70
  %v458 = vunpack.c.l.b16 %v71
  %v459 = vunpack.c.h.b16 %v71
  %v460 = vunpack.c.l.b16 %v72
  %v461 = vunpack.c.h.b16 %v72
  %v462 = vunpack.c.l.b16 %v73
  %v463 = vunpack.c.h.b16 %v73
  %v464 = vunpack.c.l.b16 %v74
  %v465 = vunpack.c.h.b16 %v74
  %v466 = vunpack.c.l.b16 %v75
  %v467 = vunpack.c.h.b16 %v75
  %v468 = vunpack.c.l.b16 %v76
  %v469 = vunpack.c.h.b16 %v76
  %v470 = vunpack.c.l.b16 %v77
  %v471 = vunpack.c.h.b16 %v77
  %v472 = vunpack.c.l.b16 %v78
  %v473 = vunpack.c.h.b16 %v78
  %v474 = vunpack.c.l.b16 %v79
  %v475 = vunpack.c.h.b16 %v79
  %v476 = vunpack.c.l.b16 %v80
  %v477 = vunpack.c.h.b16 %v80
  %v478 = vunpack.c.l.b16 %v81
  %v479 = vunpack.c.h.b16 %v81
  %v480 = vunpack.c.l.b16 %v82
  %v481 = vunpack.c.h.b16 %v82
  %v482 = vunpack.c.l.b16 %v83
  %v483 = vunpack.c.h.b16 %v83
  %v484 = vunpack.c.l.b16 %v84
  %v485 = vunpack.c.h.b16 %v84
  %v486 = vunpack.c.l.b16 %v85
  %v487 = vunpack.c.h.b16 %v85
  %v488 = vunpack.c.l.b16 %v86
  %v489 = vunpack.c.h.b16 %v86
  %v490 = vunpack.c.l.b16 %v87
  %v491 = vunpack.c.h.b16 %v87
  %v492 = vunpack.c.l.b16 %v88
  %v493 = vunpack.c.h.b16 %v88
  %v494 = vunpack.c.l.b16 %v89
  %v495 = vunpack.c.h.b16 %v89
  %v496 = vunpack.c.l.b16 %v90
  %v497 = vunpack.c.h.b16 %v90
  %v498 = vunpack.c.l.b16 %v91
  %v499 = vunpack.c.h.b16 %v91
  %v500 = vunpack.c.l.b16 %v92
  %v501 = vunpack.c.h.b16 %v92
  %v502 = vunpack.c.l.b16 %v93
  %v503 = vunpack.c.h.b16 %v93
  %v504 = vunpack.c.l.b16 %v94
  %v505 = vunpack.c.h.b16 %v94
  %v506 = vunpack.c.l.b16 %v95
  %v507 = vunpack.c.h.b16 %v95
  %v508 = vunpack.c.l.b16 %v96
  %v509 = vunpack.c.h.b16 %v96
  %v510 = vunpack.c.l.b16 %v97
  %v511 = vunpack.c.h.b16 %v97
  %v512 = vunpack.c.l.b16 %v98
  %v513 = vunpack.c.h.b16 %v98
  %v514 = vunpack.c.l.b16 %v99
  %v515 = vunpack.c.h.b16 %v99
  %v516 = vunpack.c.l.b16 %v100
  %v517 = vunpack.c.h.b16 %v100
  %v518 = vunpack.c.l.b16 %v101
  %v519 = vunpack.c.h.b16 %v101
  %v520 = vunpack.c.l.b16 %v102
  %v521 = vunpack.c.h.b16 %v102
  %v522 = vunpack.c.l.b16 %v103
  %v523 = vunpack.c.h.b16 %v103
  %v524 = vunpack.c.l.b16 %v104
  %v525 = vunpack.c.h.b16 %v104
  %v526 = vunpack.c.l.b16 %v105
  %v527 = vunpack.c.h.b16 %v105
  %v528 = vunpack.c.l.b16 %v106
  %v529 = vunpack.c.h.b16 %v106
  %v530 = vunpack.c.l.b16 %v107
  %v531 = vunpack.c.h.b16 %v107
  %v532 = vunpack.c.l.b16 %v108
  %v533 = vunpack.c.h.b16 %v108
  %v534 = vunpack.c.l.b16 %v109
  %v535 = vunpack.c.h.b16 %v109
  %v536 = vunpack.c.l.b16 %v110
  %v537 = vunpack.c.h.b16 %v110
  %v538 = vunpack.c.l.b16 %v111
  %v539 = vunpack.c.h.b16 %v111
  %v540 = vunpack.c.l.b16 %v112
  %v541 = vunpack.c.h.b16 %v112
  %v542 = vunpack.c.l.b16 %v113
  %v543 = vunpack.c.h.b16 %v113
  %v544 = vunpack.c.l.b16 %v114
  %v545 = vunpack.c.h.b16 %v114
  %v546 = vunpack.c.l.b16 %v115
  %v547 = vunpack.c.h.b16 %v115
  %v548 = vunpack.c.l.b16 %v116
  %v549 = vunpack.c.h.b16 %v116
  %v550 = vunpack.c.l.b16 %v117
  %v551 = vunpack.c.h.b16 %v117
  %v552 = vunpack.c.l.b16 %v118
  %v553 = vunpack.c.h.b16 %v118
  %v554 = vunpack.c.l.b16 %v119
  %v555 = vunpack.c.h.b16 %v119
  %v556 = vunpack.c.l.b16 %v120
  %v557 = vunpack.c.h.b16 %v120
  %v558 = vunpack.c.l.b16 %v121
  %v559 = vunpack.c.h.b16 %v121
  %v560 = vunpack.c.l.b16 %v122
  %v561 = vunpack.c.h.b16 %v122
  %v562 = vunpack.c.l.b16 %v123
  %v563 = vunpack.c.h.b16 %v123
  %v564 = vunpack.c.l.b16 %v124
  %v565 = vunpack.c.h.b16 %v124
  %v566 = vunpack.c.l.b16 %v125
  %v567 = vunpack.c.h.b16 %v125
  %v568 = vunpack.c.l.b16 %v126
  %v569 = vunpack.c.h.b16 %v126
  %v570 = vunpack.c.l.b16 %v127
  %v571 = vunpack.c.h.b16 %v127
  %v572 = vunpack.c.l.b16 %v128
  %v573 = vunpack.c.h.b16 %v128
  %v574 = vunpack.c.l.b16 %v129
  %v575 = vunpack.c.h.b16 %v129
  %v576 = vunpack.c.l.b16 %v130
  %v577 = vunpack.c.h.b16 %v130
  %v578 = vunpack.c.l.b16 %v131
  %v579 = vunpack.c.h.b16 %v131
  %v580 = vunpack.c.l.b16 %v132
  %v581 = vunpack.c.h.b16 %v132
  %v582 = vunpack.c.l.b16 %v133
  %v583 = vunpack.c.h.b16 %v133
  %v584 = vunpack.c.l.b16 %v134
  %v585 = vunpack.c.h.b16 %v134
  %v586 = vunpack.c.l.b16 %v135
  %v587 = vunpack.c.h.b16 %v135
  %v588 = vunpack.c.l.b16 %v136
  %v589 = vunpack.c.h.b16 %v136
  %v590 = vunpack.c.l.b16 %v137
  %v591 = vunpack.c.h.b16 %v137
  %v592 = vunpack.c.l.b16 %v138
  %v593 = vunpack.c.h.b16 %v138
  %v594 = vunpack.c.l.b16 %v139
  %v595 = vunpack.c.h.b16 %v139
  %v596 = vunpack.c.l.b16 %v140
  %v597 = vunpack.c.h.b16 %v140
  %v598 = vunpack.c.l.b16 %v141
  %v599 = vunpack.c.h.b16 %v141
  %v600 = vunpack.c.l.b16 %v142
  %v601 = vunpack.c.h.b16 %v142
  %v602 = vunpack.c.l.b16 %v143
  %v603 = vunpack.c.h.b16 %v143
  %v604 = vunpack.c.l.b16 %v144
  %v605 = vunpack.c.h.b16 %v144
  %v606 = vunpack.c.l.b16 %v145
  %v607 = vunpack.c.h.b16 %v145
  %v608 = vunpack.c.l.b16 %v146
  %v609 = vunpack.c.h.b16 %v146
  %v610 = vunpack.c.l.b16 %v147
  %v611 = vunpack.c.h.b16 %v147
  %v612 = vunpack.c.l.b16 %v148
  %v613 = vunpack.c.h.b16 %v148
  %v614 = vunpack.c.l.b16 %v149
  %v615 = vunpack.c.h.b16 %v149
  %v616 = vunpack.c.l.b16 %v150
  %v617 = vunpack.c.h.b16 %v150
  %v618 = vunpack.c.l.b16 %v151
  %v619 = vunpack.c.h.b16 %v151
  %v620 = vunpack.c.l.b16 %v152
  %v621 = vunpack.c.h.b16 %v152
  %v622 = vunpack.c.l.b16 %v153
  %v623 = vunpack.c.h.b16 %v153
  %v624 = vunpack.c.l.b16 %v154
  %v625 = vunpack.c.h.b16 %v154
  %v626 = vunpack.c.l.b16 %v155
  %v627 = vunpack.c.h.b16 %v155
  %v628 = vunpack.c.l.b16 %v156
  %v629 = vunpack.c.h.b16 %v156
  %v630 = vunpack.c.l.b16 %v157
  %v631 = vunpack.c.h.b16 %v157
  %v632 = vunpack.c.l.b16 %v158
  %v633 = vunpack.c.h.b16 %v158
  %v634 = vunpack.c.l.b16 %v159
  %v635 = vunpack.c.h.b16 %v159
  %v636 = vunpack.c.l.b16 %v160
  %v637 = vunpack.c.h.b16 %v160
  %v638 = vunpack.c.l.b16 %v161
  %v639 = vunpack.c.h.b16 %v161
  %v640 = vunpack.c.l.b16 %v162
  %v641 = vunpack.c.h.b16 %v162
  %v642 = vunpack.c.l.b16 %v163
  %v643 = vunpack.c.h.b16 %v163
  %v644 = vunpack.c.l.b16 %v164
  %v645 = vunpack.c.h.b16 %v164
  %v646 = vunpack.c.l.b16 %v165
  %v647 = vunpack.c.h.b16 %v165
  %v648 = vunpack.c.l.b16 %v166
  %v649 = vunpack.c.h.b16 %v166
  %v650 = vunpack.c.l.b16 %v167
  %v651 = vunpack.c.h.b16 %v167
  %v652 = vpack.c.b16 %v366, %v364
  %v653 = vpack.c.b16 %v367, %v365
  %v654 = vpack.c.b16 %v370, %v368
  %v655 = vpack.c.b16 %v371, %v369
  %v656 = vpack.c.b16 %v374, %v372
  %v657 = vpack.c.b16 %v375, %v373
  %v658 = vpack.c.b16 %v378, %v376
  %v659 = vpack.c.b16 %v379, %v377
  %v660 = vpack.c.b16 %v382, %v380
  %v661 = vpack.c.b16 %v383, %v381
  %v662 = vpack.c.b16 %v386, %v384
  %v663 = vpack.c.b16 %v387, %v385
  %v664 = vpack.c.b16 %v390, %v388
  %v665 = vpack.c.b16 %v391, %v389
  %v666 = vpack.c.b16 %v394, %v392
  %v667 = vpack.c.b16 %v395, %v393
  %v668 = vpack.c.b16 %v398, %v396
  %v669 = vpack.c.b16 %v399, %v397
  %v670 = vpack.c.b16 %v402, %v400
  %v671 = vpack.c.b16 %v403, %v401
  %v672 = vpack.c.b16 %v406, %v404
  %v673 = vpack.c.b16 %v407, %v405
  %v674 = vpack.c.b16 %v410, %v408
  %v675 = vpack.c.b16 %v411, %v409
  %v676 = vpack.c.b16 %v414, %v412
  %v677 = vpack.c.b16 %v415, %v413
  %v678 = vpack.c.b16 %v418, %v416
  %v679 = vpack.c.b16 %v419, %v417
  %v680 = vpack.c.b16 %v422, %v420
  %v681 = vpack.c.b16 %v423, %v421
  %v682 = vpack.c.b16 %v426, %v424
  %v683 = vpack.c.b16 %v427, %v425
  %v684 = vpack.c.b16 %v430, %v428
  %v685 = vpack.c.b16 %v431, %v429
  %v686 = vpack.c.b16 %v434, %v432
  %v687 = vpack.c.b16 %v435, %v433
  %v688 = vpack.c.b16 %v438, %v436
  %v689 = vpack.c.b16 %v439, %v437
  %v690 = vpack.c.b16 %v442, %v440
  %v691 = vpack.c.b16 %v443, %v441
  %v692 = vpack.c.b16 %v446, %v444
  %v693 = vpack.c.b16 %v447, %v445
  %v694 = vpack.c.b16 %v450, %v448
  %v695 = vpack.c.b16 %v451, %v449
  %v696 = vpack.c.b16 %v454, %v452
  %v697 = vpack.c.b16 %v455, %v453
  %v698 = vpack.c.b16 %v458, %v456
  %v699 = vpack.c.b16 %v459, %v457
  %v700 = vpack.c.b16 %v462, %v460
  %v701 = vpack.c.b16 %v463, %v461
  %v702 = vpack.c.b16 %v466, %v464
  %v703 = vpack.c.b16 %v467, %v465
  %v704 = vpack.c.b16 %v470, %v468
  %v705 = vpack.c.b16 %v471, %v469
  %v706 = vpack.c.b16 %v474, %v472
  %v707 = vpack.c.b16 %v475, %v473
  %v708 = vpack.c.b16 %v478, %v476
  %v709 = vpack.c.b16 %v479, %v477
  %v710 = vpack.c.b16 %v482, %v480
  %v711 = vpack.c.b16 %v483, %v481
  %v712 = vpack.c.b16 %v486, %v484
  %v713 = vpack.c.b16 %v487, %v485
  %v714 = vpack.c.b16 %v490, %v488
  %v715 = vpack.c.b16 %v491, %v489
  %v716 = vpack.c.b16 %v494, %v492
  %v717 = vpack.c.b16 %v495, %v493
  %v718 = vpack.c.b16 %v498, %v496
  %v719 = vpack.c.b16 %v499, %v497
  %v720 = vpack.c.b16 %v502, %v500
  %v721 = vpack.c.b16 %v503, %v501
  %v722 = vpack.c.b16 %v506, %v504
  %v723 = vpack.c.b16 %v507, %v505
  %v724 = vpack.c.b16 %v510, %v508
  %v725 = vpack.c.b16 %v511, %v509
  %v726 = vpack.c.b16 %v514, %v512
  %v727 = vpack.c.b16 %v515, %v513
  %v728 = vpack.c.b16 %v518, %v516
  %v729 = vpack.c.b16 %v519, %v517
  %v730 = vpack.c.b16 %v522, %v520
  %v731 = vpack.c.b16 %v523, %v521
  %v732 = vpack.c.b16 %v526, %v524
  %v733 = vpack.c.b16 %v527, %v525
  %v734 = vpack.c.b16 %v530, %v528
  %v735 = vpack.c.b16 %v531, %v529
  %v736 = vpack.c.b16 %v534, %v532
  %v737 = vpack.c.b16 %v535, %v533
  %v738 = vpack.c.b16 %v538, %v536
  %v739 = vpack.c.b16 %v539, %v537
  %v740 = vpack.c.b16 %v542, %v540
  %v741 = vpack.c.b16 %v543, %v541
  %v742 = vpack.c.b16 %v546, %v544
  %v743 = vpack.c.b16 %v547, %v545
  %v744 = vpack.c.b16 %v550, %v548
  %v745 = vpack.c.b16 %v551, %v549
  %v746 = vpack.c.b16 %v554, %v552
  %v747 = vpack.c.b16 %v555, %v553
  %v748 = vpack.c.b16 %v558, %v556
  %v749 = vpack.c.b16 %v559, %v557
  %v750 = vpack.c.b16 %v562, %v560
  %v751 = vpack.c.b16 %v563, %v561
  %v752 = vpack.c.b16 %v566, %v564
  %v753 = vpack.c.b16 %v567, %v565
  %v754 = vpack.c.b16 %v570, %v568
  %v755 = vpack.c.b16 %v571, %v569
  %v756 = vpack.c.b16 %v574, %v572
  %v757 = vpack.c.b16 %v575, %v573
  %v758 = vpack.c.b16 %v578, %v576
  %v759 = vpack.c.b16 %v579, %v577
  %v760 = vpack.c.b16 %v582, %v580
  %v761 = vpack.c.b16 %v583, %v581
  %v762 = vpack.c.b16 %v586, %v584
  %v763 = vpack.c.b16 %v587, %v585
  %v764 = vpack.c.b16 %v590, %v588
  %v765 = vpack.c.b16 %v591, %v589
  %v766 = vpack.c.b16 %v594, %v592
  %v767 = vpack.c.b16 %v595, %v593
  %v768 = vpack.c.b16 %v598, %v596
  %v769 = vpack.c.b16 %v599, %v597
  %v770 = vpack.c.b16 %v602, %v600
  %v771 = vpack.c.b16 %v603, %v601
  %v772 = vpack.c.b16 %v606, %v604
  %v773 = vpack.c.b16 %v607, %v605
  %v774 = vpack.c.b16 %v610, %v608
  %v775 = vpack.c.b16 %v611, %v609
  %v776 = vpack.c.b16 %v614, %v612
  %v777 = vpack.c.b16 %v615, %v613
  %v778 = vpack.c.b16 %v618, %v616
  %v779 = vpack.c.b16 %v619, %v617
  %v780 = vpack.c.b16 %v622, %v620
  %v781 = vpack.c.b16 %v623, %v621
  %v782 = vpack.c.b16 %v626, %v624
  %v783 = vpack.c.b16 %v627, %v625
  %v784 = vpack.c.b16 %v630, %v628
  %v785 = vpack.c.b16 %v631, %v629
  %v786 = vpack.c.b16 %v634, %v632
  %v787 = vpack.c.b16 %v635, %v633
  %v788 = vpack.c.b16 %v638, %v636
  %v789 = vpack.c.b16 %v639, %v637
  %v790 = vpack.c.b16 %v642, %v640
  %v791 = vpack.c.b16 %v643, %v641
  %v792 = vpack.c.b16 %v646, %v644
  %v793 = vpack.c.b16 %v647, %v645
  %v794 = vpack.c.b16 %v650, %v648
  %v795 = vpack.c.b16 %v651, %v649
  %940 = vmatpush.bf16.msra.mxu0 %v666
  %941 = vmatpush.bf16.msra.mxu0 %v664
  %942 = vmatpush.bf16.msra.mxu0 %v662
  %943 = vmatpush.bf16.msra.mxu0 %v660
  %944 = vmatpush.bf16.msra.mxu0 %v658
  %945 = vmatpush.bf16.msra.mxu0 %v656
  %946 = vmatpush.bf16.msra.mxu0 %v654
  %947 = vmatpush.bf16.msra.mxu0 %v652
  %948 = vmatmul.bf16.gmra.mxu0 %v202
  %v949 = vpop.f32.mrf.mxu0
  %v950 = vadd.f32 %v170, %v949
  %v951 = vpop.f32.mrf.mxu0
  %v952 = vadd.f32 %v170, %v951
  %953 = vdwg.mxu0
  %954 = vmatpush.bf16.msra.mxu0 %v682
  %955 = vmatpush.bf16.msra.mxu0 %v680
  %956 = vmatpush.bf16.msra.mxu0 %v678
  %957 = vmatpush.bf16.msra.mxu0 %v676
  %958 = vmatpush.bf16.msra.mxu0 %v674
  %959 = vmatpush.bf16.msra.mxu0 %v672
  %960 = vmatpush.bf16.msra.mxu0 %v670
  %961 = vmatpush.bf16.msra.mxu0 %v668
  %962 = vmatmul.bf16.gmra.mxu0 %v203
  %v963 = vpop.f32.mrf.mxu0
  %v964 = vadd.f32 %v950, %v963
  %v965 = vpop.f32.mrf.mxu0
  %v966 = vadd.f32 %v952, %v965
  %967 = vdwg.mxu0
  %968 = vmatpush.bf16.msra.mxu0 %v698
  %969 = vmatpush.bf16.msra.mxu0 %v696
  %970 = vmatpush.bf16.msra.mxu0 %v694
  %971 = vmatpush.bf16.msra.mxu0 %v692
  %972 = vmatpush.bf16.msra.mxu0 %v690
  %973 = vmatpush.bf16.msra.mxu0 %v688
  %974 = vmatpush.bf16.msra.mxu0 %v686
  %975 = vmatpush.bf16.msra.mxu0 %v684
  %976 = vmatmul.bf16.gmra.mxu0 %v204
  %v977 = vpop.f32.mrf.mxu0
  %v978 = vadd.f32 %v964, %v977
  %v979 = vpop.f32.mrf.mxu0
  %v980 = vadd.f32 %v966, %v979
  %981 = vdwg.mxu0
  %982 = vmatpush.bf16.msra.mxu0 %v714
  %983 = vmatpush.bf16.msra.mxu0 %v712
  %984 = vmatpush.bf16.msra.mxu0 %v710
  %985 = vmatpush.bf16.msra.mxu0 %v708
  %986 = vmatpush.bf16.msra.mxu0 %v706
  %987 = vmatpush.bf16.msra.mxu0 %v704
  %988 = vmatpush.bf16.msra.mxu0 %v702
  %989 = vmatpush.bf16.msra.mxu0 %v700
  %990 = vmatmul.bf16.gmra.mxu0 %v205
  %v991 = vpop.f32.mrf.mxu0
  %v992 = vadd.f32 %v978, %v991
  %v993 = vpop.f32.mrf.mxu0
  %v994 = vadd.f32 %v980, %v993
  %995 = vdwg.mxu0
  %996 = vmatpush.bf16.msra.mxu0 %v730
  %997 = vmatpush.bf16.msra.mxu0 %v728
  %998 = vmatpush.bf16.msra.mxu0 %v726
  %999 = vmatpush.bf16.msra.mxu0 %v724
  %1000 = vmatpush.bf16.msra.mxu0 %v722
  %1001 = vmatpush.bf16.msra.mxu0 %v720
  %1002 = vmatpush.bf16.msra.mxu0 %v718
  %1003 = vmatpush.bf16.msra.mxu0 %v716
  %1004 = vmatmul.bf16.gmra.mxu0 %v206
  %v1005 = vpop.f32.mrf.mxu0
  %v1006 = vadd.f32 %v992, %v1005
  %v1007 = vpop.f32.mrf.mxu0
  %v1008 = vadd.f32 %v994, %v1007
  %1009 = vdwg.mxu0
  %1010 = vmatpush.bf16.msra.mxu0 %v746
  %1011 = vmatpush.bf16.msra.mxu0 %v744
  %1012 = vmatpush.bf16.msra.mxu0 %v742
  %1013 = vmatpush.bf16.msra.mxu0 %v740
  %1014 = vmatpush.bf16.msra.mxu0 %v738
  %1015 = vmatpush.bf16.msra.mxu0 %v736
  %1016 = vmatpush.bf16.msra.mxu0 %v734
  %1017 = vmatpush.bf16.msra.mxu0 %v732
  %1018 = vmatmul.bf16.gmra.mxu0 %v207
  %v1019 = vpop.f32.mrf.mxu0
  %v1020 = vadd.f32 %v1006, %v1019
  %v1021 = vpop.f32.mrf.mxu0
  %v1022 = vadd.f32 %v1008, %v1021
  %1023 = vdwg.mxu0
  %1024 = vmatpush.bf16.msra.mxu0 %v762
  %1025 = vmatpush.bf16.msra.mxu0 %v760
  %1026 = vmatpush.bf16.msra.mxu0 %v758
  %1027 = vmatpush.bf16.msra.mxu0 %v756
  %1028 = vmatpush.bf16.msra.mxu0 %v754
  %1029 = vmatpush.bf16.msra.mxu0 %v752
  %1030 = vmatpush.bf16.msra.mxu0 %v750
  %1031 = vmatpush.bf16.msra.mxu0 %v748
  %1032 = vmatmul.bf16.gmra.mxu0 %v208
  %v1033 = vpop.f32.mrf.mxu0
  %v1034 = vadd.f32 %v1020, %v1033
  %v1035 = vpop.f32.mrf.mxu0
  %v1036 = vadd.f32 %v1022, %v1035
  %1037 = vdwg.mxu0
  %1038 = vmatpush.bf16.msra.mxu0 %v778
  %1039 = vmatpush.bf16.msra.mxu0 %v776
  %1040 = vmatpush.bf16.msra.mxu0 %v774
  %1041 = vmatpush.bf16.msra.mxu0 %v772
  %1042 = vmatpush.bf16.msra.mxu0 %v770
  %1043 = vmatpush.bf16.msra.mxu0 %v768
  %1044 = vmatpush.bf16.msra.mxu0 %v766
  %1045 = vmatpush.bf16.msra.mxu0 %v764
  %1046 = vmatmul.bf16.gmra.mxu0 %v209
  %v1047 = vpop.f32.mrf.mxu0
  %v1048 = vadd.f32 %v1034, %v1047
  %v1049 = vpop.f32.mrf.mxu0
  %v1050 = vadd.f32 %v1036, %v1049
  %1051 = vdwg.mxu0
  %1052 = vmatpush.bf16.msra.mxu0 %v794
  %1053 = vmatpush.bf16.msra.mxu0 %v792
  %1054 = vmatpush.bf16.msra.mxu0 %v790
  %1055 = vmatpush.bf16.msra.mxu0 %v788
  %1056 = vmatpush.bf16.msra.mxu0 %v786
  %1057 = vmatpush.bf16.msra.mxu0 %v784
  %1058 = vmatpush.bf16.msra.mxu0 %v782
  %1059 = vmatpush.bf16.msra.mxu0 %v780
  %1060 = vmatmul.bf16.gmra.mxu0 %v210
  %v1061 = vpop.f32.mrf.mxu0
  %v1062 = vadd.f32 %v1048, %v1061
  %v1063 = vpop.f32.mrf.mxu0
  %v1064 = vadd.f32 %v1050, %v1063
  %1065 = vdwg.mxu0
  %1066 = vmatpush.bf16.msra.mxu0 %v667
  %1067 = vmatpush.bf16.msra.mxu0 %v665
  %1068 = vmatpush.bf16.msra.mxu0 %v663
  %1069 = vmatpush.bf16.msra.mxu0 %v661
  %1070 = vmatpush.bf16.msra.mxu0 %v659
  %1071 = vmatpush.bf16.msra.mxu0 %v657
  %1072 = vmatpush.bf16.msra.mxu0 %v655
  %1073 = vmatpush.bf16.msra.mxu0 %v653
  %1074 = vmatmul.bf16.gmra.mxu0 %v202
  %v1075 = vpop.f32.mrf.mxu0
  %v1076 = vadd.f32 %v171, %v1075
  %v1077 = vpop.f32.mrf.mxu0
  %v1078 = vadd.f32 %v171, %v1077
  %1079 = vdwg.mxu0
  %1080 = vmatpush.bf16.msra.mxu0 %v683
  %1081 = vmatpush.bf16.msra.mxu0 %v681
  %1082 = vmatpush.bf16.msra.mxu0 %v679
  %1083 = vmatpush.bf16.msra.mxu0 %v677
  %1084 = vmatpush.bf16.msra.mxu0 %v675
  %1085 = vmatpush.bf16.msra.mxu0 %v673
  %1086 = vmatpush.bf16.msra.mxu0 %v671
  %1087 = vmatpush.bf16.msra.mxu0 %v669
  %1088 = vmatmul.bf16.gmra.mxu0 %v203
  %v1089 = vpop.f32.mrf.mxu0
  %v1090 = vadd.f32 %v1076, %v1089
  %v1091 = vpop.f32.mrf.mxu0
  %v1092 = vadd.f32 %v1078, %v1091
  %1093 = vdwg.mxu0
  %1094 = vmatpush.bf16.msra.mxu0 %v699
  %1095 = vmatpush.bf16.msra.mxu0 %v697
  %1096 = vmatpush.bf16.msra.mxu0 %v695
  %1097 = vmatpush.bf16.msra.mxu0 %v693
  %1098 = vmatpush.bf16.msra.mxu0 %v691
  %1099 = vmatpush.bf16.msra.mxu0 %v689
  %1100 = vmatpush.bf16.msra.mxu0 %v687
  %1101 = vmatpush.bf16.msra.mxu0 %v685
  %1102 = vmatmul.bf16.gmra.mxu0 %v204
  %v1103 = vpop.f32.mrf.mxu0
  %v1104 = vadd.f32 %v1090, %v1103
  %v1105 = vpop.f32.mrf.mxu0
  %v1106 = vadd.f32 %v1092, %v1105
  %1107 = vdwg.mxu0
  %1108 = vmatpush.bf16.msra.mxu0 %v715
  %1109 = vmatpush.bf16.msra.mxu0 %v713
  %1110 = vmatpush.bf16.msra.mxu0 %v711
  %1111 = vmatpush.bf16.msra.mxu0 %v709
  %1112 = vmatpush.bf16.msra.mxu0 %v707
  %1113 = vmatpush.bf16.msra.mxu0 %v705
  %1114 = vmatpush.bf16.msra.mxu0 %v703
  %1115 = vmatpush.bf16.msra.mxu0 %v701
  %1116 = vmatmul.bf16.gmra.mxu0 %v205
  %v1117 = vpop.f32.mrf.mxu0
  %v1118 = vadd.f32 %v1104, %v1117
  %v1119 = vpop.f32.mrf.mxu0
  %v1120 = vadd.f32 %v1106, %v1119
  %1121 = vdwg.mxu0
  %1122 = vmatpush.bf16.msra.mxu0 %v731
  %1123 = vmatpush.bf16.msra.mxu0 %v729
  %1124 = vmatpush.bf16.msra.mxu0 %v727
  %1125 = vmatpush.bf16.msra.mxu0 %v725
  %1126 = vmatpush.bf16.msra.mxu0 %v723
  %1127 = vmatpush.bf16.msra.mxu0 %v721
  %1128 = vmatpush.bf16.msra.mxu0 %v719
  %1129 = vmatpush.bf16.msra.mxu0 %v717
  %1130 = vmatmul.bf16.gmra.mxu0 %v206
  %v1131 = vpop.f32.mrf.mxu0
  %v1132 = vadd.f32 %v1118, %v1131
  %v1133 = vpop.f32.mrf.mxu0
  %v1134 = vadd.f32 %v1120, %v1133
  %1135 = vdwg.mxu0
  %1136 = vmatpush.bf16.msra.mxu0 %v747
  %1137 = vmatpush.bf16.msra.mxu0 %v745
  %1138 = vmatpush.bf16.msra.mxu0 %v743
  %1139 = vmatpush.bf16.msra.mxu0 %v741
  %1140 = vmatpush.bf16.msra.mxu0 %v739
  %1141 = vmatpush.bf16.msra.mxu0 %v737
  %1142 = vmatpush.bf16.msra.mxu0 %v735
  %1143 = vmatpush.bf16.msra.mxu0 %v733
  %1144 = vmatmul.bf16.gmra.mxu0 %v207
  %v1145 = vpop.f32.mrf.mxu0
  %v1146 = vadd.f32 %v1132, %v1145
  %v1147 = vpop.f32.mrf.mxu0
  %v1148 = vadd.f32 %v1134, %v1147
  %1149 = vdwg.mxu0
  %1150 = vmatpush.bf16.msra.mxu0 %v763
  %1151 = vmatpush.bf16.msra.mxu0 %v761
  %1152 = vmatpush.bf16.msra.mxu0 %v759
  %1153 = vmatpush.bf16.msra.mxu0 %v757
  %1154 = vmatpush.bf16.msra.mxu0 %v755
  %1155 = vmatpush.bf16.msra.mxu0 %v753
  %1156 = vmatpush.bf16.msra.mxu0 %v751
  %1157 = vmatpush.bf16.msra.mxu0 %v749
  %1158 = vmatmul.bf16.gmra.mxu0 %v208
  %v1159 = vpop.f32.mrf.mxu0
  %v1160 = vadd.f32 %v1146, %v1159
  %v1161 = vpop.f32.mrf.mxu0
  %v1162 = vadd.f32 %v1148, %v1161
  %1163 = vdwg.mxu0
  %1164 = vmatpush.bf16.msra.mxu0 %v779
  %1165 = vmatpush.bf16.msra.mxu0 %v777
  %1166 = vmatpush.bf16.msra.mxu0 %v775
  %1167 = vmatpush.bf16.msra.mxu0 %v773
  %1168 = vmatpush.bf16.msra.mxu0 %v771
  %1169 = vmatpush.bf16.msra.mxu0 %v769
  %1170 = vmatpush.bf16.msra.mxu0 %v767
  %1171 = vmatpush.bf16.msra.mxu0 %v765
  %1172 = vmatmul.bf16.gmra.mxu0 %v209
  %v1173 = vpop.f32.mrf.mxu0
  %v1174 = vadd.f32 %v1160, %v1173
  %v1175 = vpop.f32.mrf.mxu0
  %v1176 = vadd.f32 %v1162, %v1175
  %1177 = vdwg.mxu0
  %1178 = vmatpush.bf16.msra.mxu0 %v795
  %1179 = vmatpush.bf16.msra.mxu0 %v793
  %1180 = vmatpush.bf16.msra.mxu0 %v791
  %1181 = vmatpush.bf16.msra.mxu0 %v789
  %1182 = vmatpush.bf16.msra.mxu0 %v787
  %1183 = vmatpush.bf16.msra.mxu0 %v785
  %1184 = vmatpush.bf16.msra.mxu0 %v783
  %1185 = vmatpush.bf16.msra.mxu0 %v781
  %1186 = vmatmul.bf16.gmra.mxu0 %v210
  %v1187 = vpop.f32.mrf.mxu0
  %v1188 = vadd.f32 %v1174, %v1187
  %v1189 = vpop.f32.mrf.mxu0
  %v1190 = vadd.f32 %v1176, %v1189
  %1191 = vdwg.mxu0
  %v1192 = vmax.f32 %v1062, 0.0
  %v1193 = vmax.f32 %v1188, 0.0
  %v1194 = vmax.f32 %v1064, 0.0
  %v1195 = vmax.f32 %v1190, 0.0
  %1196 = vst [vmem:[%s3] sm:$0xff] %v1192
  %1197 = vst [vmem:[%s3 + $0x8] sm:$0xff] %v1193
  %1198 = vst [vmem:[%s3 + $0x10] sm:$0xff] %v1194
  %1199 = vst [vmem:[%s3 + $0x18] sm:$0xff] %v1195
  // Predicated region
  $region14: #{compentrans512_forward.23} parent=0 // pred_check
    _
  $region15: #{compentrans512_forward.23} parent=0 // pred_check_branch
    %1201 = sbr.rel (0) target = $region17
  $region16: #{compentrans512_forward.23} parent=0 // pred_region
    _
  $region17: #{compentrans512_forward.23} parent=0 // pred_fallthru
    _
  // Predicated region
  $region18: #{compentrans512_forward.23} parent=0 // pred_check
    _
  $region19: #{compentrans512_forward.23} parent=0 // pred_check_branch
    %1203 = sbr.rel (0) target = $region21
  $region20: #{compentrans512_forward.23} parent=0 // pred_region
    _
  $region21: #{compentrans512_forward.23} parent=0 // pred_fallthru
    _

// kernel: compentrans512_forward.24
$region0: #{compentrans512_forward.24}
  #allocation0 [shape = 'u32[]', space=smem, size = 0x4, offset = 0x4, fixed_abs, tag = 'smem constant byte address 0x4 - core index']
  #allocation1 [shape = 'u32[72,128]{1,0:T(1,128)}', space=vmem, size = 0x9000, scoped, tag = 'internal scratch']
  %s0 = inlined_call_operand.vmem [shape: bf16[8,2304], index: 0, kind: input, shape index: {}]
  %s1 = inlined_call_operand.vmem [shape: bf16[2304,128], index: 1, kind: input, shape index: {}]
  %s2 = inlined_call_operand.vmem [shape: f32[1,128], index: 2, kind: input, shape index: {}]
  %s3 = inlined_call_operand.vmem [shape: f32[8,128], index: 3, kind: output, shape index: {}]
  %s4 = sld [smem:[#allocation0]]
  $region22: #{compentrans512_forward.24} parent=0
    _
  %s6 = ssub.s32 1, %s4
  %s7 = scalar_select 0, %s6, %s4
  // Predicated region
  $region2: #{compentrans512_forward.24} parent=0 // pred_check
    _
  $region3: #{compentrans512_forward.24} parent=0 // pred_check_branch
    %9 = sbr.rel (0) target = $region5
  $region4: #{compentrans512_forward.24} parent=0 // pred_region
    _
  $region5: #{compentrans512_forward.24} parent=0 // pred_fallthru
    _
  // Predicated region
  $region6: #{compentrans512_forward.24} parent=0 // pred_check
    _
  $region7: #{compentrans512_forward.24} parent=0 // pred_check_branch
    %11 = sbr.rel (0) target = $region9
  $region8: #{compentrans512_forward.24} parent=0 // pred_region
    _
  $region9: #{compentrans512_forward.24} parent=0 // pred_fallthru
    _
  // Predicated region
  $region10: #{compentrans512_forward.24} parent=0 // pred_check
    _
  $region11: #{compentrans512_forward.24} parent=0 // pred_check_branch
    %13 = sbr.rel (0) target = $region13
  $region12: #{compentrans512_forward.24} parent=0 // pred_region
    _
  $region13: #{compentrans512_forward.24} parent=0 // pred_fallthru
    _
  %v14 = vld [vmem:[%s0] sm:$0xff]
  %v15 = vld [vmem:[%s0 + $0x8] sm:$0xff]
  %v16 = vld [vmem:[%s0 + $0x10] sm:$0xff]
  %v17 = vld [vmem:[%s0 + $0x18] sm:$0xff]
  %v18 = vld [vmem:[%s0 + $0x20] sm:$0xff]
  %v19 = vld [vmem:[%s0 + $0x28] sm:$0xff]
  %v20 = vld [vmem:[%s0 + $0x30] sm:$0xff]
  %v21 = vld [vmem:[%s0 + $0x38] sm:$0xff]
  %v22 = vld [vmem:[%s0 + $0x40] sm:$0xff]
  %v23 = vld [vmem:[%s1] sm:$0xf]
  %v24 = vld [vmem:[%s1 + $0x4] sm:$0xf]
  %v25 = vld [vmem:[%s1 + $0x8] sm:$0xf]
  %v26 = vld [vmem:[%s1 + $0xc] sm:$0xf]
  %v27 = vld [vmem:[%s1 + $0x10] sm:$0xf]
  %v28 = vld [vmem:[%s1 + $0x14] sm:$0xf]
  %v29 = vld [vmem:[%s1 + $0x18] sm:$0xf]
  %v30 = vld [vmem:[%s1 + $0x1c] sm:$0xf]
  %v31 = vld [vmem:[%s1 + $0x20] sm:$0xf]
  %v32 = vld [vmem:[%s1 + $0x24] sm:$0xf]
  %v33 = vld [vmem:[%s1 + $0x28] sm:$0xf]
  %v34 = vld [vmem:[%s1 + $0x2c] sm:$0xf]
  %v35 = vld [vmem:[%s1 + $0x30] sm:$0xf]
  %v36 = vld [vmem:[%s1 + $0x34] sm:$0xf]
  %v37 = vld [vmem:[%s1 + $0x38] sm:$0xf]
  %v38 = vld [vmem:[%s1 + $0x3c] sm:$0xf]
  %v39 = vld [vmem:[%s1 + $0x40] sm:$0xf]
  %v40 = vld [vmem:[%s1 + $0x44] sm:$0xf]
  %v41 = vld [vmem:[%s1 + $0x48] sm:$0xf]
  %v42 = vld [vmem:[%s1 + $0x4c] sm:$0xf]
  %v43 = vld [vmem:[%s1 + $0x50] sm:$0xf]
  %v44 = vld [vmem:[%s1 + $0x54] sm:$0xf]
  %v45 = vld [vmem:[%s1 + $0x58] sm:$0xf]
  %v46 = vld [vmem:[%s1 + $0x5c] sm:$0xf]
  %v47 = vld [vmem:[%s1 + $0x60] sm:$0xf]
  %v48 = vld [vmem:[%s1 + $0x64] sm:$0xf]
  %v49 = vld [vmem:[%s1 + $0x68] sm:$0xf]
  %v50 = vld [vmem:[%s1 + $0x6c] sm:$0xf]
  %v51 = vld [vmem:[%s1 + $0x70] sm:$0xf]
  %v52 = vld [vmem:[%s1 + $0x74] sm:$0xf]
  %v53 = vld [vmem:[%s1 + $0x78] sm:$0xf]
  %v54 = vld [vmem:[%s1 + $0x7c] sm:$0xf]
  %v55 = vld [vmem:[%s1 + $0x80] sm:$0xf]
  %v56 = vld [vmem:[%s1 + $0x84] sm:$0xf]
  %v57 = vld [vmem:[%s1 + $0x88] sm:$0xf]
  %v58 = vld [vmem:[%s1 + $0x8c] sm:$0xf]
  %v59 = vld [vmem:[%s1 + $0x90] sm:$0xf]
  %v60 = vld [vmem:[%s1 + $0x94] sm:$0xf]
  %v61 = vld [vmem:[%s1 + $0x98] sm:$0xf]
  %v62 = vld [vmem:[%s1 + $0x9c] sm:$0xf]
  %v63 = vld [vmem:[%s1 + $0xa0] sm:$0xf]
  %v64 = vld [vmem:[%s1 + $0xa4] sm:$0xf]
  %v65 = vld [vmem:[%s1 + $0xa8] sm:$0xf]
  %v66 = vld [vmem:[%s1 + $0xac] sm:$0xf]
  %v67 = vld [vmem:[%s1 + $0xb0] sm:$0xf]
  %v68 = vld [vmem:[%s1 + $0xb4] sm:$0xf]
  %v69 = vld [vmem:[%s1 + $0xb8] sm:$0xf]
  %v70 = vld [vmem:[%s1 + $0xbc] sm:$0xf]
  %v71 = vld [vmem:[%s1 + $0xc0] sm:$0xf]
  %v72 = vld [vmem:[%s1 + $0xc4] sm:$0xf]
  %v73 = vld [vmem:[%s1 + $0xc8] sm:$0xf]
  %v74 = vld [vmem:[%s1 + $0xcc] sm:$0xf]
  %v75 = vld [vmem:[%s1 + $0xd0] sm:$0xf]
  %v76 = vld [vmem:[%s1 + $0xd4] sm:$0xf]
  %v77 = vld [vmem:[%s1 + $0xd8] sm:$0xf]
  %v78 = vld [vmem:[%s1 + $0xdc] sm:$0xf]
  %v79 = vld [vmem:[%s1 + $0xe0] sm:$0xf]
  %v80 = vld [vmem:[%s1 + $0xe4] sm:$0xf]
  %v81 = vld [vmem:[%s1 + $0xe8] sm:$0xf]
  %v82 = vld [vmem:[%s1 + $0xec] sm:$0xf]
  %v83 = vld [vmem:[%s1 + $0xf0] sm:$0xf]
  %v84 = vld [vmem:[%s1 + $0xf4] sm:$0xf]
  %v85 = vld [vmem:[%s1 + $0xf8] sm:$0xf]
  %v86 = vld [vmem:[%s1 + $0xfc] sm:$0xf]
  %v87 = vld [vmem:[%s1 + $0x100] sm:$0xf]
  %v88 = vld [vmem:[%s1 + $0x104] sm:$0xf]
  %v89 = vld [vmem:[%s1 + $0x108] sm:$0xf]
  %v90 = vld [vmem:[%s1 + $0x10c] sm:$0xf]
  %v91 = vld [vmem:[%s1 + $0x110] sm:$0xf]
  %v92 = vld [vmem:[%s1 + $0x114] sm:$0xf]
  %v93 = vld [vmem:[%s1 + $0x118] sm:$0xf]
  %v94 = vld [vmem:[%s1 + $0x11c] sm:$0xf]
  %v95 = vld [vmem:[%s1 + $0x120] sm:$0xf]
  %v96 = vld [vmem:[%s1 + $0x124] sm:$0xf]
  %v97 = vld [vmem:[%s1 + $0x128] sm:$0xf]
  %v98 = vld [vmem:[%s1 + $0x12c] sm:$0xf]
  %v99 = vld [vmem:[%s1 + $0x130] sm:$0xf]
  %v100 = vld [vmem:[%s1 + $0x134] sm:$0xf]
  %v101 = vld [vmem:[%s1 + $0x138] sm:$0xf]
  %v102 = vld [vmem:[%s1 + $0x13c] sm:$0xf]
  %v103 = vld [vmem:[%s1 + $0x140] sm:$0xf]
  %v104 = vld [vmem:[%s1 + $0x144] sm:$0xf]
  %v105 = vld [vmem:[%s1 + $0x148] sm:$0xf]
  %v106 = vld [vmem:[%s1 + $0x14c] sm:$0xf]
  %v107 = vld [vmem:[%s1 + $0x150] sm:$0xf]
  %v108 = vld [vmem:[%s1 + $0x154] sm:$0xf]
  %v109 = vld [vmem:[%s1 + $0x158] sm:$0xf]
  %v110 = vld [vmem:[%s1 + $0x15c] sm:$0xf]
  %v111 = vld [vmem:[%s1 + $0x160] sm:$0xf]
  %v112 = vld [vmem:[%s1 + $0x164] sm:$0xf]
  %v113 = vld [vmem:[%s1 + $0x168] sm:$0xf]
  %v114 = vld [vmem:[%s1 + $0x16c] sm:$0xf]
  %v115 = vld [vmem:[%s1 + $0x170] sm:$0xf]
  %v116 = vld [vmem:[%s1 + $0x174] sm:$0xf]
  %v117 = vld [vmem:[%s1 + $0x178] sm:$0xf]
  %v118 = vld [vmem:[%s1 + $0x17c] sm:$0xf]
  %v119 = vld [vmem:[%s1 + $0x180] sm:$0xf]
  %v120 = vld [vmem:[%s1 + $0x184] sm:$0xf]
  %v121 = vld [vmem:[%s1 + $0x188] sm:$0xf]
  %v122 = vld [vmem:[%s1 + $0x18c] sm:$0xf]
  %v123 = vld [vmem:[%s1 + $0x190] sm:$0xf]
  %v124 = vld [vmem:[%s1 + $0x194] sm:$0xf]
  %v125 = vld [vmem:[%s1 + $0x198] sm:$0xf]
  %v126 = vld [vmem:[%s1 + $0x19c] sm:$0xf]
  %v127 = vld [vmem:[%s1 + $0x1a0] sm:$0xf]
  %v128 = vld [vmem:[%s1 + $0x1a4] sm:$0xf]
  %v129 = vld [vmem:[%s1 + $0x1a8] sm:$0xf]
  %v130 = vld [vmem:[%s1 + $0x1ac] sm:$0xf]
  %v131 = vld [vmem:[%s1 + $0x1b0] sm:$0xf]
  %v132 = vld [vmem:[%s1 + $0x1b4] sm:$0xf]
  %v133 = vld [vmem:[%s1 + $0x1b8] sm:$0xf]
  %v134 = vld [vmem:[%s1 + $0x1bc] sm:$0xf]
  %v135 = vld [vmem:[%s1 + $0x1c0] sm:$0xf]
  %v136 = vld [vmem:[%s1 + $0x1c4] sm:$0xf]
  %v137 = vld [vmem:[%s1 + $0x1c8] sm:$0xf]
  %v138 = vld [vmem:[%s1 + $0x1cc] sm:$0xf]
  %v139 = vld [vmem:[%s1 + $0x1d0] sm:$0xf]
  %v140 = vld [vmem:[%s1 + $0x1d4] sm:$0xf]
  %v141 = vld [vmem:[%s1 + $0x1d8] sm:$0xf]
  %v142 = vld [vmem:[%s1 + $0x1dc] sm:$0xf]
  %v143 = vld [vmem:[%s1 + $0x1e0] sm:$0xf]
  %v144 = vld [vmem:[%s1 + $0x1e4] sm:$0xf]
  %v145 = vld [vmem:[%s1 + $0x1e8] sm:$0xf]
  %v146 = vld [vmem:[%s1 + $0x1ec] sm:$0xf]
  %v147 = vld [vmem:[%s1 + $0x1f0] sm:$0xf]
  %v148 = vld [vmem:[%s1 + $0x1f4] sm:$0xf]
  %v149 = vld [vmem:[%s1 + $0x1f8] sm:$0xf]
  %v150 = vld [vmem:[%s1 + $0x1fc] sm:$0xf]
  %v151 = vld [vmem:[%s1 + $0x200] sm:$0xf]
  %v152 = vld [vmem:[%s1 + $0x204] sm:$0xf]
  %v153 = vld [vmem:[%s1 + $0x208] sm:$0xf]
  %v154 = vld [vmem:[%s1 + $0x20c] sm:$0xf]
  %v155 = vld [vmem:[%s1 + $0x210] sm:$0xf]
  %v156 = vld [vmem:[%s1 + $0x214] sm:$0xf]
  %v157 = vld [vmem:[%s1 + $0x218] sm:$0xf]
  %v158 = vld [vmem:[%s1 + $0x21c] sm:$0xf]
  %v159 = vld [vmem:[%s1 + $0x220] sm:$0xf]
  %v160 = vld [vmem:[%s1 + $0x224] sm:$0xf]
  %v161 = vld [vmem:[%s1 + $0x228] sm:$0xf]
  %v162 = vld [vmem:[%s1 + $0x22c] sm:$0xf]
  %v163 = vld [vmem:[%s1 + $0x230] sm:$0xf]
  %v164 = vld [vmem:[%s1 + $0x234] sm:$0xf]
  %v165 = vld [vmem:[%s1 + $0x238] sm:$0xf]
  %v166 = vld [vmem:[%s1 + $0x23c] sm:$0xf]
  %v167 = vld [vmem:[%s1 + $0x240] sm:$0xf]
  %v168 = vld [vmem:[%s1 + $0x244] sm:$0xf]
  %v169 = vld [vmem:[%s1 + $0x248] sm:$0xf]
  %v170 = vld [vmem:[%s1 + $0x24c] sm:$0xf]
  %v171 = vld [vmem:[%s1 + $0x250] sm:$0xf]
  %v172 = vld [vmem:[%s1 + $0x254] sm:$0xf]
  %v173 = vld [vmem:[%s1 + $0x258] sm:$0xf]
  %v174 = vld [vmem:[%s1 + $0x25c] sm:$0xf]
  %v175 = vld [vmem:[%s1 + $0x260] sm:$0xf]
  %v176 = vld [vmem:[%s1 + $0x264] sm:$0xf]
  %v177 = vld [vmem:[%s1 + $0x268] sm:$0xf]
  %v178 = vld [vmem:[%s1 + $0x26c] sm:$0xf]
  %v179 = vld [vmem:[%s1 + $0x270] sm:$0xf]
  %v180 = vld [vmem:[%s1 + $0x274] sm:$0xf]
  %v181 = vld [vmem:[%s1 + $0x278] sm:$0xf]
  %v182 = vld [vmem:[%s1 + $0x27c] sm:$0xf]
  %v183 = vld [vmem:[%s1 + $0x280] sm:$0xf]
  %v184 = vld [vmem:[%s1 + $0x284] sm:$0xf]
  %v185 = vld [vmem:[%s1 + $0x288] sm:$0xf]
  %v186 = vld [vmem:[%s1 + $0x28c] sm:$0xf]
  %v187 = vld [vmem:[%s1 + $0x290] sm:$0xf]
  %v188 = vld [vmem:[%s1 + $0x294] sm:$0xf]
  %v189 = vld [vmem:[%s1 + $0x298] sm:$0xf]
  %v190 = vld [vmem:[%s1 + $0x29c] sm:$0xf]
  %v191 = vld [vmem:[%s1 + $0x2a0] sm:$0xf]
  %v192 = vld [vmem:[%s1 + $0x2a4] sm:$0xf]
  %v193 = vld [vmem:[%s1 + $0x2a8] sm:$0xf]
  %v194 = vld [vmem:[%s1 + $0x2ac] sm:$0xf]
  %v195 = vld [vmem:[%s1 + $0x2b0] sm:$0xf]
  %v196 = vld [vmem:[%s1 + $0x2b4] sm:$0xf]
  %v197 = vld [vmem:[%s1 + $0x2b8] sm:$0xf]
  %v198 = vld [vmem:[%s1 + $0x2bc] sm:$0xf]
  %v199 = vld [vmem:[%s1 + $0x2c0] sm:$0xf]
  %v200 = vld [vmem:[%s1 + $0x2c4] sm:$0xf]
  %v201 = vld [vmem:[%s1 + $0x2c8] sm:$0xf]
  %v202 = vld [vmem:[%s1 + $0x2cc] sm:$0xf]
  %v203 = vld [vmem:[%s1 + $0x2d0] sm:$0xf]
  %v204 = vld [vmem:[%s1 + $0x2d4] sm:$0xf]
  %v205 = vld [vmem:[%s1 + $0x2d8] sm:$0xf]
  %v206 = vld [vmem:[%s1 + $0x2dc] sm:$0xf]
  %v207 = vld [vmem:[%s1 + $0x2e0] sm:$0xf]
  %v208 = vld [vmem:[%s1 + $0x2e4] sm:$0xf]
  %v209 = vld [vmem:[%s1 + $0x2e8] sm:$0xf]
  %v210 = vld [vmem:[%s1 + $0x2ec] sm:$0xf]
  %v211 = vld [vmem:[%s1 + $0x2f0] sm:$0xf]
  %v212 = vld [vmem:[%s1 + $0x2f4] sm:$0xf]
  %v213 = vld [vmem:[%s1 + $0x2f8] sm:$0xf]
  %v214 = vld [vmem:[%s1 + $0x2fc] sm:$0xf]
  %v215 = vld [vmem:[%s1 + $0x300] sm:$0xf]
  %v216 = vld [vmem:[%s1 + $0x304] sm:$0xf]
  %v217 = vld [vmem:[%s1 + $0x308] sm:$0xf]
  %v218 = vld [vmem:[%s1 + $0x30c] sm:$0xf]
  %v219 = vld [vmem:[%s1 + $0x310] sm:$0xf]
  %v220 = vld [vmem:[%s1 + $0x314] sm:$0xf]
  %v221 = vld [vmem:[%s1 + $0x318] sm:$0xf]
  %v222 = vld [vmem:[%s1 + $0x31c] sm:$0xf]
  %v223 = vld [vmem:[%s1 + $0x320] sm:$0xf]
  %v224 = vld [vmem:[%s1 + $0x324] sm:$0xf]
  %v225 = vld [vmem:[%s1 + $0x328] sm:$0xf]
  %v226 = vld [vmem:[%s1 + $0x32c] sm:$0xf]
  %v227 = vld [vmem:[%s1 + $0x330] sm:$0xf]
  %v228 = vld [vmem:[%s1 + $0x334] sm:$0xf]
  %v229 = vld [vmem:[%s1 + $0x338] sm:$0xf]
  %v230 = vld [vmem:[%s1 + $0x33c] sm:$0xf]
  %v231 = vld [vmem:[%s1 + $0x340] sm:$0xf]
  %v232 = vld [vmem:[%s1 + $0x344] sm:$0xf]
  %v233 = vld [vmem:[%s1 + $0x348] sm:$0xf]
  %v234 = vld [vmem:[%s1 + $0x34c] sm:$0xf]
  %v235 = vld [vmem:[%s1 + $0x350] sm:$0xf]
  %v236 = vld [vmem:[%s1 + $0x354] sm:$0xf]
  %v237 = vld [vmem:[%s1 + $0x358] sm:$0xf]
  %v238 = vld [vmem:[%s1 + $0x35c] sm:$0xf]
  %v239 = vld [vmem:[%s1 + $0x360] sm:$0xf]
  %v240 = vld [vmem:[%s1 + $0x364] sm:$0xf]
  %v241 = vld [vmem:[%s1 + $0x368] sm:$0xf]
  %v242 = vld [vmem:[%s1 + $0x36c] sm:$0xf]
  %v243 = vld [vmem:[%s1 + $0x370] sm:$0xf]
  %v244 = vld [vmem:[%s1 + $0x374] sm:$0xf]
  %v245 = vld [vmem:[%s1 + $0x378] sm:$0xf]
  %v246 = vld [vmem:[%s1 + $0x37c] sm:$0xf]
  %v247 = vld [vmem:[%s1 + $0x380] sm:$0xf]
  %v248 = vld [vmem:[%s1 + $0x384] sm:$0xf]
  %v249 = vld [vmem:[%s1 + $0x388] sm:$0xf]
  %v250 = vld [vmem:[%s1 + $0x38c] sm:$0xf]
  %v251 = vld [vmem:[%s1 + $0x390] sm:$0xf]
  %v252 = vld [vmem:[%s1 + $0x394] sm:$0xf]
  %v253 = vld [vmem:[%s1 + $0x398] sm:$0xf]
  %v254 = vld [vmem:[%s1 + $0x39c] sm:$0xf]
  %v255 = vld [vmem:[%s1 + $0x3a0] sm:$0xf]
  %v256 = vld [vmem:[%s1 + $0x3a4] sm:$0xf]
  %v257 = vld [vmem:[%s1 + $0x3a8] sm:$0xf]
  %v258 = vld [vmem:[%s1 + $0x3ac] sm:$0xf]
  %v259 = vld [vmem:[%s1 + $0x3b0] sm:$0xf]
  %v260 = vld [vmem:[%s1 + $0x3b4] sm:$0xf]
  %v261 = vld [vmem:[%s1 + $0x3b8] sm:$0xf]
  %v262 = vld [vmem:[%s1 + $0x3bc] sm:$0xf]
  %v263 = vld [vmem:[%s1 + $0x3c0] sm:$0xf]
  %v264 = vld [vmem:[%s1 + $0x3c4] sm:$0xf]
  %v265 = vld [vmem:[%s1 + $0x3c8] sm:$0xf]
  %v266 = vld [vmem:[%s1 + $0x3cc] sm:$0xf]
  %v267 = vld [vmem:[%s1 + $0x3d0] sm:$0xf]
  %v268 = vld [vmem:[%s1 + $0x3d4] sm:$0xf]
  %v269 = vld [vmem:[%s1 + $0x3d8] sm:$0xf]
  %v270 = vld [vmem:[%s1 + $0x3dc] sm:$0xf]
  %v271 = vld [vmem:[%s1 + $0x3e0] sm:$0xf]
  %v272 = vld [vmem:[%s1 + $0x3e4] sm:$0xf]
  %v273 = vld [vmem:[%s1 + $0x3e8] sm:$0xf]
  %v274 = vld [vmem:[%s1 + $0x3ec] sm:$0xf]
  %v275 = vld [vmem:[%s1 + $0x3f0] sm:$0xf]
  %v276 = vld [vmem:[%s1 + $0x3f4] sm:$0xf]
  %v277 = vld [vmem:[%s1 + $0x3f8] sm:$0xf]
  %v278 = vld [vmem:[%s1 + $0x3fc] sm:$0xf]
  %v279 = vld [vmem:[%s1 + $0x400] sm:$0xf]
  %v280 = vld [vmem:[%s1 + $0x404] sm:$0xf]
  %v281 = vld [vmem:[%s1 + $0x408] sm:$0xf]
  %v282 = vld [vmem:[%s1 + $0x40c] sm:$0xf]
  %v283 = vld [vmem:[%s1 + $0x410] sm:$0xf]
  %v284 = vld [vmem:[%s1 + $0x414] sm:$0xf]
  %v285 = vld [vmem:[%s1 + $0x418] sm:$0xf]
  %v286 = vld [vmem:[%s1 + $0x41c] sm:$0xf]
  %v287 = vld [vmem:[%s1 + $0x420] sm:$0xf]
  %v288 = vld [vmem:[%s1 + $0x424] sm:$0xf]
  %v289 = vld [vmem:[%s1 + $0x428] sm:$0xf]
  %v290 = vld [vmem:[%s1 + $0x42c] sm:$0xf]
  %v291 = vld [vmem:[%s1 + $0x430] sm:$0xf]
  %v292 = vld [vmem:[%s1 + $0x434] sm:$0xf]
  %v293 = vld [vmem:[%s1 + $0x438] sm:$0xf]
  %v294 = vld [vmem:[%s1 + $0x43c] sm:$0xf]
  %v295 = vld [vmem:[%s1 + $0x440] sm:$0xf]
  %v296 = vld [vmem:[%s1 + $0x444] sm:$0xf]
  %v297 = vld [vmem:[%s1 + $0x448] sm:$0xf]
  %v298 = vld [vmem:[%s1 + $0x44c] sm:$0xf]
  %v299 = vld [vmem:[%s1 + $0x450] sm:$0xf]
  %v300 = vld [vmem:[%s1 + $0x454] sm:$0xf]
  %v301 = vld [vmem:[%s1 + $0x458] sm:$0xf]
  %v302 = vld [vmem:[%s1 + $0x45c] sm:$0xf]
  %v303 = vld [vmem:[%s1 + $0x460] sm:$0xf]
  %v304 = vld [vmem:[%s1 + $0x464] sm:$0xf]
  %v305 = vld [vmem:[%s1 + $0x468] sm:$0xf]
  %v306 = vld [vmem:[%s1 + $0x46c] sm:$0xf]
  %v307 = vld [vmem:[%s1 + $0x470] sm:$0xf]
  %v308 = vld [vmem:[%s1 + $0x474] sm:$0xf]
  %v309 = vld [vmem:[%s1 + $0x478] sm:$0xf]
  %v310 = vld [vmem:[%s1 + $0x47c] sm:$0xf]
  %v311 = vld [vmem:[%s2] sm:$0x1]
  %v313 = vperm.slane %v311, 0
  %v324 = vunpack.c.l.b16 %v14
  %v325 = vunpack.c.h.b16 %v14
  %v326 = vunpack.c.l.b16 %v15
  %v327 = vunpack.c.h.b16 %v15
  %v328 = vunpack.c.l.b16 %v16
  %v329 = vunpack.c.h.b16 %v16
  %v330 = vunpack.c.l.b16 %v17
  %v331 = vunpack.c.h.b16 %v17
  %v332 = vunpack.c.l.b16 %v18
  %v333 = vunpack.c.h.b16 %v18
  %v334 = vunpack.c.l.b16 %v19
  %v335 = vunpack.c.h.b16 %v19
  %v336 = vunpack.c.l.b16 %v20
  %v337 = vunpack.c.h.b16 %v20
  %v338 = vunpack.c.l.b16 %v21
  %v339 = vunpack.c.h.b16 %v21
  %v340 = vunpack.c.l.b16 %v22
  %v341 = vunpack.c.h.b16 %v22
  %v342 = vpack.c.b16 %v324, %v324
  %v343 = vpack.c.b16 %v325, %v325
  %v344 = vpack.c.b16 %v326, %v326
  %v345 = vpack.c.b16 %v327, %v327
  %v346 = vpack.c.b16 %v328, %v328
  %v347 = vpack.c.b16 %v329, %v329
  %v348 = vpack.c.b16 %v330, %v330
  %v349 = vpack.c.b16 %v331, %v331
  %v350 = vpack.c.b16 %v332, %v332
  %v351 = vpack.c.b16 %v333, %v333
  %v352 = vpack.c.b16 %v334, %v334
  %v353 = vpack.c.b16 %v335, %v335
  %v354 = vpack.c.b16 %v336, %v336
  %v355 = vpack.c.b16 %v337, %v337
  %v356 = vpack.c.b16 %v338, %v338
  %v357 = vpack.c.b16 %v339, %v339
  %v358 = vpack.c.b16 %v340, %v340
  %v359 = vpack.c.b16 %v341, %v341
  %v666 = vunpack.c.l.b16 %v23
  %v667 = vunpack.c.l.b16 %v24
  %v668 = vunpack.c.l.b16 %v25
  %v669 = vunpack.c.l.b16 %v26
  %v670 = vunpack.c.l.b16 %v27
  %v671 = vunpack.c.l.b16 %v28
  %v672 = vunpack.c.l.b16 %v29
  %v673 = vunpack.c.l.b16 %v30
  %v674 = vunpack.c.l.b16 %v31
  %v675 = vunpack.c.l.b16 %v32
  %v676 = vunpack.c.l.b16 %v33
  %v677 = vunpack.c.l.b16 %v34
  %v678 = vunpack.c.l.b16 %v35
  %v679 = vunpack.c.l.b16 %v36
  %v680 = vunpack.c.l.b16 %v37
  %v681 = vunpack.c.l.b16 %v38
  %v682 = vunpack.c.l.b16 %v39
  %v683 = vunpack.c.l.b16 %v40
  %v684 = vunpack.c.l.b16 %v41
  %v685 = vunpack.c.l.b16 %v42
  %v686 = vunpack.c.l.b16 %v43
  %v687 = vunpack.c.l.b16 %v44
  %v688 = vunpack.c.l.b16 %v45
  %v689 = vunpack.c.l.b16 %v46
  %v690 = vunpack.c.l.b16 %v47
  %v691 = vunpack.c.l.b16 %v48
  %v692 = vunpack.c.l.b16 %v49
  %v693 = vunpack.c.l.b16 %v50
  %v694 = vunpack.c.l.b16 %v51
  %v695 = vunpack.c.l.b16 %v52
  %v696 = vunpack.c.l.b16 %v53
  %v697 = vunpack.c.l.b16 %v54
  %v698 = vunpack.c.l.b16 %v55
  %v699 = vunpack.c.l.b16 %v56
  %v700 = vunpack.c.l.b16 %v57
  %v701 = vunpack.c.l.b16 %v58
  %v702 = vunpack.c.l.b16 %v59
  %v703 = vunpack.c.l.b16 %v60
  %v704 = vunpack.c.l.b16 %v61
  %v705 = vunpack.c.l.b16 %v62
  %v706 = vunpack.c.l.b16 %v63
  %v707 = vunpack.c.l.b16 %v64
  %v708 = vunpack.c.l.b16 %v65
  %v709 = vunpack.c.l.b16 %v66
  %v710 = vunpack.c.l.b16 %v67
  %v711 = vunpack.c.l.b16 %v68
  %v712 = vunpack.c.l.b16 %v69
  %v713 = vunpack.c.l.b16 %v70
  %v714 = vunpack.c.l.b16 %v71
  %v715 = vunpack.c.l.b16 %v72
  %v716 = vunpack.c.l.b16 %v73
  %v717 = vunpack.c.l.b16 %v74
  %v718 = vunpack.c.l.b16 %v75
  %v719 = vunpack.c.l.b16 %v76
  %v720 = vunpack.c.l.b16 %v77
  %v721 = vunpack.c.l.b16 %v78
  %v722 = vunpack.c.l.b16 %v79
  %v723 = vunpack.c.l.b16 %v80
  %v724 = vunpack.c.l.b16 %v81
  %v725 = vunpack.c.l.b16 %v82
  %v726 = vunpack.c.l.b16 %v83
  %v727 = vunpack.c.l.b16 %v84
  %v728 = vunpack.c.l.b16 %v85
  %v729 = vunpack.c.l.b16 %v86
  %v730 = vunpack.c.l.b16 %v87
  %v731 = vunpack.c.l.b16 %v88
  %v732 = vunpack.c.l.b16 %v89
  %v733 = vunpack.c.l.b16 %v90
  %v734 = vunpack.c.l.b16 %v91
  %v735 = vunpack.c.l.b16 %v92
  %v736 = vunpack.c.l.b16 %v93
  %v737 = vunpack.c.l.b16 %v94
  %v738 = vunpack.c.l.b16 %v95
  %v739 = vunpack.c.l.b16 %v96
  %v740 = vunpack.c.l.b16 %v97
  %v741 = vunpack.c.l.b16 %v98
  %v742 = vunpack.c.l.b16 %v99
  %v743 = vunpack.c.l.b16 %v100
  %v744 = vunpack.c.l.b16 %v101
  %v745 = vunpack.c.l.b16 %v102
  %v746 = vunpack.c.l.b16 %v103
  %v747 = vunpack.c.l.b16 %v104
  %v748 = vunpack.c.l.b16 %v105
  %v749 = vunpack.c.l.b16 %v106
  %v750 = vunpack.c.l.b16 %v107
  %v751 = vunpack.c.l.b16 %v108
  %v752 = vunpack.c.l.b16 %v109
  %v753 = vunpack.c.l.b16 %v110
  %v754 = vunpack.c.l.b16 %v111
  %v755 = vunpack.c.l.b16 %v112
  %v756 = vunpack.c.l.b16 %v113
  %v757 = vunpack.c.l.b16 %v114
  %v758 = vunpack.c.l.b16 %v115
  %v759 = vunpack.c.l.b16 %v116
  %v760 = vunpack.c.l.b16 %v117
  %v761 = vunpack.c.l.b16 %v118
  %v762 = vunpack.c.l.b16 %v119
  %v763 = vunpack.c.l.b16 %v120
  %v764 = vunpack.c.l.b16 %v121
  %v765 = vunpack.c.l.b16 %v122
  %v766 = vunpack.c.l.b16 %v123
  %v767 = vunpack.c.l.b16 %v124
  %v768 = vunpack.c.l.b16 %v125
  %v769 = vunpack.c.l.b16 %v126
  %v770 = vunpack.c.l.b16 %v127
  %v771 = vunpack.c.l.b16 %v128
  %v772 = vunpack.c.l.b16 %v129
  %v773 = vunpack.c.l.b16 %v130
  %v774 = vunpack.c.l.b16 %v131
  %v775 = vunpack.c.l.b16 %v132
  %v776 = vunpack.c.l.b16 %v133
  %v777 = vunpack.c.l.b16 %v134
  %v778 = vunpack.c.l.b16 %v135
  %v779 = vunpack.c.l.b16 %v136
  %v780 = vunpack.c.l.b16 %v137
  %v781 = vunpack.c.l.b16 %v138
  %v782 = vunpack.c.l.b16 %v139
  %v783 = vunpack.c.l.b16 %v140
  %v784 = vunpack.c.l.b16 %v141
  %v785 = vunpack.c.l.b16 %v142
  %v786 = vunpack.c.l.b16 %v143
  %v787 = vunpack.c.l.b16 %v144
  %v788 = vunpack.c.l.b16 %v145
  %v789 = vunpack.c.l.b16 %v146
  %v790 = vunpack.c.l.b16 %v147
  %v791 = vunpack.c.l.b16 %v148
  %v792 = vunpack.c.l.b16 %v149
  %v793 = vunpack.c.l.b16 %v150
  %v794 = vunpack.c.l.b16 %v151
  %v795 = vunpack.c.l.b16 %v152
  %v796 = vunpack.c.l.b16 %v153
  %v797 = vunpack.c.l.b16 %v154
  %v798 = vunpack.c.l.b16 %v155
  %v799 = vunpack.c.l.b16 %v156
  %v800 = vunpack.c.l.b16 %v157
  %v801 = vunpack.c.l.b16 %v158
  %v802 = vunpack.c.l.b16 %v159
  %v803 = vunpack.c.l.b16 %v160
  %v804 = vunpack.c.l.b16 %v161
  %v805 = vunpack.c.l.b16 %v162
  %v806 = vunpack.c.l.b16 %v163
  %v807 = vunpack.c.l.b16 %v164
  %v808 = vunpack.c.l.b16 %v165
  %v809 = vunpack.c.l.b16 %v166
  %v810 = vunpack.c.l.b16 %v167
  %v811 = vunpack.c.l.b16 %v168
  %v812 = vunpack.c.l.b16 %v169
  %v813 = vunpack.c.l.b16 %v170
  %v814 = vunpack.c.l.b16 %v171
  %v815 = vunpack.c.l.b16 %v172
  %v816 = vunpack.c.l.b16 %v173
  %v817 = vunpack.c.l.b16 %v174
  %v818 = vunpack.c.l.b16 %v175
  %v819 = vunpack.c.l.b16 %v176
  %v820 = vunpack.c.l.b16 %v177
  %v821 = vunpack.c.l.b16 %v178
  %v822 = vunpack.c.l.b16 %v179
  %v823 = vunpack.c.l.b16 %v180
  %v824 = vunpack.c.l.b16 %v181
  %v825 = vunpack.c.l.b16 %v182
  %v826 = vunpack.c.l.b16 %v183
  %v827 = vunpack.c.l.b16 %v184
  %v828 = vunpack.c.l.b16 %v185
  %v829 = vunpack.c.l.b16 %v186
  %v830 = vunpack.c.l.b16 %v187
  %v831 = vunpack.c.l.b16 %v188
  %v832 = vunpack.c.l.b16 %v189
  %v833 = vunpack.c.l.b16 %v190
  %v834 = vunpack.c.l.b16 %v191
  %v835 = vunpack.c.l.b16 %v192
  %v836 = vunpack.c.l.b16 %v193
  %v837 = vunpack.c.l.b16 %v194
  %v838 = vunpack.c.l.b16 %v195
  %v839 = vunpack.c.l.b16 %v196
  %v840 = vunpack.c.l.b16 %v197
  %v841 = vunpack.c.l.b16 %v198
  %v842 = vunpack.c.l.b16 %v199
  %v843 = vunpack.c.l.b16 %v200
  %v844 = vunpack.c.l.b16 %v201
  %v845 = vunpack.c.l.b16 %v202
  %v846 = vunpack.c.l.b16 %v203
  %v847 = vunpack.c.l.b16 %v204
  %v848 = vunpack.c.l.b16 %v205
  %v849 = vunpack.c.l.b16 %v206
  %v850 = vunpack.c.l.b16 %v207
  %v851 = vunpack.c.l.b16 %v208
  %v852 = vunpack.c.l.b16 %v209
  %v853 = vunpack.c.l.b16 %v210
  %v854 = vunpack.c.l.b16 %v211
  %v855 = vunpack.c.l.b16 %v212
  %v856 = vunpack.c.l.b16 %v213
  %v857 = vunpack.c.l.b16 %v214
  %v858 = vunpack.c.l.b16 %v215
  %v859 = vunpack.c.l.b16 %v216
  %v860 = vunpack.c.l.b16 %v217
  %v861 = vunpack.c.l.b16 %v218
  %v862 = vunpack.c.l.b16 %v219
  %v863 = vunpack.c.l.b16 %v220
  %v864 = vunpack.c.l.b16 %v221
  %v865 = vunpack.c.l.b16 %v222
  %v866 = vunpack.c.l.b16 %v223
  %v867 = vunpack.c.l.b16 %v224
  %v868 = vunpack.c.l.b16 %v225
  %v869 = vunpack.c.l.b16 %v226
  %v870 = vunpack.c.l.b16 %v227
  %v871 = vunpack.c.l.b16 %v228
  %v872 = vunpack.c.l.b16 %v229
  %v873 = vunpack.c.l.b16 %v230
  %v874 = vunpack.c.l.b16 %v231
  %v875 = vunpack.c.l.b16 %v232
  %v876 = vunpack.c.l.b16 %v233
  %v877 = vunpack.c.l.b16 %v234
  %v878 = vunpack.c.l.b16 %v235
  %v879 = vunpack.c.l.b16 %v236
  %v880 = vunpack.c.l.b16 %v237
  %v881 = vunpack.c.l.b16 %v238
  %v882 = vunpack.c.l.b16 %v239
  %v883 = vunpack.c.l.b16 %v240
  %v884 = vunpack.c.l.b16 %v241
  %v885 = vunpack.c.l.b16 %v242
  %v886 = vunpack.c.l.b16 %v243
  %v887 = vunpack.c.l.b16 %v244
  %v888 = vunpack.c.l.b16 %v245
  %v889 = vunpack.c.l.b16 %v246
  %v890 = vunpack.c.l.b16 %v247
  %v891 = vunpack.c.l.b16 %v248
  %v892 = vunpack.c.l.b16 %v249
  %v893 = vunpack.c.l.b16 %v250
  %v894 = vunpack.c.l.b16 %v251
  %v895 = vunpack.c.l.b16 %v252
  %v896 = vunpack.c.l.b16 %v253
  %v897 = vunpack.c.l.b16 %v254
  %v898 = vunpack.c.l.b16 %v255
  %v899 = vunpack.c.l.b16 %v256
  %v900 = vunpack.c.l.b16 %v257
  %v901 = vunpack.c.l.b16 %v258
  %v902 = vunpack.c.l.b16 %v259
  %v903 = vunpack.c.l.b16 %v260
  %v904 = vunpack.c.l.b16 %v261
  %v905 = vunpack.c.l.b16 %v262
  %v906 = vunpack.c.l.b16 %v263
  %v907 = vunpack.c.l.b16 %v264
  %v908 = vunpack.c.l.b16 %v265
  %v909 = vunpack.c.l.b16 %v266
  %v910 = vunpack.c.l.b16 %v267
  %v911 = vunpack.c.l.b16 %v268
  %v912 = vunpack.c.l.b16 %v269
  %v913 = vunpack.c.l.b16 %v270
  %v914 = vunpack.c.l.b16 %v271
  %v915 = vunpack.c.l.b16 %v272
  %v916 = vunpack.c.l.b16 %v273
  %v917 = vunpack.c.l.b16 %v274
  %v918 = vunpack.c.l.b16 %v275
  %v919 = vunpack.c.l.b16 %v276
  %v920 = vunpack.c.l.b16 %v277
  %v921 = vunpack.c.l.b16 %v278
  %v922 = vunpack.c.l.b16 %v279
  %v923 = vunpack.c.l.b16 %v280
  %v924 = vunpack.c.l.b16 %v281
  %v925 = vunpack.c.l.b16 %v282
  %v926 = vunpack.c.l.b16 %v283
  %v927 = vunpack.c.l.b16 %v284
  %v928 = vunpack.c.l.b16 %v285
  %v929 = vunpack.c.l.b16 %v286
  %v930 = vunpack.c.l.b16 %v287
  %v931 = vunpack.c.l.b16 %v288
  %v932 = vunpack.c.l.b16 %v289
  %v933 = vunpack.c.l.b16 %v290
  %v934 = vunpack.c.l.b16 %v291
  %v935 = vunpack.c.l.b16 %v292
  %v936 = vunpack.c.l.b16 %v293
  %v937 = vunpack.c.l.b16 %v294
  %v938 = vunpack.c.l.b16 %v295
  %v939 = vunpack.c.l.b16 %v296
  %v940 = vunpack.c.l.b16 %v297
  %v941 = vunpack.c.l.b16 %v298
  %v942 = vunpack.c.l.b16 %v299
  %v943 = vunpack.c.l.b16 %v300
  %v944 = vunpack.c.l.b16 %v301
  %v945 = vunpack.c.l.b16 %v302
  %v946 = vunpack.c.l.b16 %v303
  %v947 = vunpack.c.l.b16 %v304
  %v948 = vunpack.c.l.b16 %v305
  %v949 = vunpack.c.l.b16 %v306
  %v950 = vunpack.c.l.b16 %v307
  %v951 = vunpack.c.l.b16 %v308
  %v952 = vunpack.c.l.b16 %v309
  %v953 = vunpack.c.l.b16 %v310
  %v954 = vpack.c.b16 %v667, %v666
  %v955 = vpack.c.b16 %v669, %v668
  %v956 = vpack.c.b16 %v671, %v670
  %v957 = vpack.c.b16 %v673, %v672
  %v958 = vpack.c.b16 %v675, %v674
  %v959 = vpack.c.b16 %v677, %v676
  %v960 = vpack.c.b16 %v679, %v678
  %v961 = vpack.c.b16 %v681, %v680
  %v962 = vpack.c.b16 %v683, %v682
  %v963 = vpack.c.b16 %v685, %v684
  %v964 = vpack.c.b16 %v687, %v686
  %v965 = vpack.c.b16 %v689, %v688
  %v966 = vpack.c.b16 %v691, %v690
  %v967 = vpack.c.b16 %v693, %v692
  %v968 = vpack.c.b16 %v695, %v694
  %v969 = vpack.c.b16 %v697, %v696
  %v970 = vpack.c.b16 %v699, %v698
  %v971 = vpack.c.b16 %v701, %v700
  %v972 = vpack.c.b16 %v703, %v702
  %v973 = vpack.c.b16 %v705, %v704
  %v974 = vpack.c.b16 %v707, %v706
  %v975 = vpack.c.b16 %v709, %v708
  %v976 = vpack.c.b16 %v711, %v710
  %v977 = vpack.c.b16 %v713, %v712
  %v978 = vpack.c.b16 %v715, %v714
  %v979 = vpack.c.b16 %v717, %v716
  %v980 = vpack.c.b16 %v719, %v718
  %v981 = vpack.c.b16 %v721, %v720
  %v982 = vpack.c.b16 %v723, %v722
  %v983 = vpack.c.b16 %v725, %v724
  %v984 = vpack.c.b16 %v727, %v726
  %v985 = vpack.c.b16 %v729, %v728
  %v986 = vpack.c.b16 %v731, %v730
  %v987 = vpack.c.b16 %v733, %v732
  %v988 = vpack.c.b16 %v735, %v734
  %v989 = vpack.c.b16 %v737, %v736
  %v990 = vpack.c.b16 %v739, %v738
  %v991 = vpack.c.b16 %v741, %v740
  %v992 = vpack.c.b16 %v743, %v742
  %v993 = vpack.c.b16 %v745, %v744
  %v994 = vpack.c.b16 %v747, %v746
  %v995 = vpack.c.b16 %v749, %v748
  %v996 = vpack.c.b16 %v751, %v750
  %v997 = vpack.c.b16 %v753, %v752
  %v998 = vpack.c.b16 %v755, %v754
  %v999 = vpack.c.b16 %v757, %v756
  %v1000 = vpack.c.b16 %v759, %v758
  %v1001 = vpack.c.b16 %v761, %v760
  %v1002 = vpack.c.b16 %v763, %v762
  %v1003 = vpack.c.b16 %v765, %v764
  %v1004 = vpack.c.b16 %v767, %v766
  %v1005 = vpack.c.b16 %v769, %v768
  %v1006 = vpack.c.b16 %v771, %v770
  %v1007 = vpack.c.b16 %v773, %v772
  %v1008 = vpack.c.b16 %v775, %v774
  %v1009 = vpack.c.b16 %v777, %v776
  %v1010 = vpack.c.b16 %v779, %v778
  %v1011 = vpack.c.b16 %v781, %v780
  %v1012 = vpack.c.b16 %v783, %v782
  %v1013 = vpack.c.b16 %v785, %v784
  %v1014 = vpack.c.b16 %v787, %v786
  %v1015 = vpack.c.b16 %v789, %v788
  %v1016 = vpack.c.b16 %v791, %v790
  %v1017 = vpack.c.b16 %v793, %v792
  %v1018 = vpack.c.b16 %v795, %v794
  %v1019 = vpack.c.b16 %v797, %v796
  %v1020 = vpack.c.b16 %v799, %v798
  %v1021 = vpack.c.b16 %v801, %v800
  %v1022 = vpack.c.b16 %v803, %v802
  %v1023 = vpack.c.b16 %v805, %v804
  %v1024 = vpack.c.b16 %v807, %v806
  %v1025 = vpack.c.b16 %v809, %v808
  %v1026 = vpack.c.b16 %v811, %v810
  %v1027 = vpack.c.b16 %v813, %v812
  %v1028 = vpack.c.b16 %v815, %v814
  %v1029 = vpack.c.b16 %v817, %v816
  %v1030 = vpack.c.b16 %v819, %v818
  %v1031 = vpack.c.b16 %v821, %v820
  %v1032 = vpack.c.b16 %v823, %v822
  %v1033 = vpack.c.b16 %v825, %v824
  %v1034 = vpack.c.b16 %v827, %v826
  %v1035 = vpack.c.b16 %v829, %v828
  %v1036 = vpack.c.b16 %v831, %v830
  %v1037 = vpack.c.b16 %v833, %v832
  %v1038 = vpack.c.b16 %v835, %v834
  %v1039 = vpack.c.b16 %v837, %v836
  %v1040 = vpack.c.b16 %v839, %v838
  %v1041 = vpack.c.b16 %v841, %v840
  %v1042 = vpack.c.b16 %v843, %v842
  %v1043 = vpack.c.b16 %v845, %v844
  %v1044 = vpack.c.b16 %v847, %v846
  %v1045 = vpack.c.b16 %v849, %v848
  %v1046 = vpack.c.b16 %v851, %v850
  %v1047 = vpack.c.b16 %v853, %v852
  %v1048 = vpack.c.b16 %v855, %v854
  %v1049 = vpack.c.b16 %v857, %v856
  %v1050 = vpack.c.b16 %v859, %v858
  %v1051 = vpack.c.b16 %v861, %v860
  %v1052 = vpack.c.b16 %v863, %v862
  %v1053 = vpack.c.b16 %v865, %v864
  %v1054 = vpack.c.b16 %v867, %v866
  %v1055 = vpack.c.b16 %v869, %v868
  %v1056 = vpack.c.b16 %v871, %v870
  %v1057 = vpack.c.b16 %v873, %v872
  %v1058 = vpack.c.b16 %v875, %v874
  %v1059 = vpack.c.b16 %v877, %v876
  %v1060 = vpack.c.b16 %v879, %v878
  %v1061 = vpack.c.b16 %v881, %v880
  %v1062 = vpack.c.b16 %v883, %v882
  %v1063 = vpack.c.b16 %v885, %v884
  %v1064 = vpack.c.b16 %v887, %v886
  %v1065 = vpack.c.b16 %v889, %v888
  %v1066 = vpack.c.b16 %v891, %v890
  %v1067 = vpack.c.b16 %v893, %v892
  %v1068 = vpack.c.b16 %v895, %v894
  %v1069 = vpack.c.b16 %v897, %v896
  %v1070 = vpack.c.b16 %v899, %v898
  %v1071 = vpack.c.b16 %v901, %v900
  %v1072 = vpack.c.b16 %v903, %v902
  %v1073 = vpack.c.b16 %v905, %v904
  %v1074 = vpack.c.b16 %v907, %v906
  %v1075 = vpack.c.b16 %v909, %v908
  %v1076 = vpack.c.b16 %v911, %v910
  %v1077 = vpack.c.b16 %v913, %v912
  %v1078 = vpack.c.b16 %v915, %v914
  %v1079 = vpack.c.b16 %v917, %v916
  %v1080 = vpack.c.b16 %v919, %v918
  %v1081 = vpack.c.b16 %v921, %v920
  %v1082 = vpack.c.b16 %v923, %v922
  %v1083 = vpack.c.b16 %v925, %v924
  %v1084 = vpack.c.b16 %v927, %v926
  %v1085 = vpack.c.b16 %v929, %v928
  %v1086 = vpack.c.b16 %v931, %v930
  %v1087 = vpack.c.b16 %v933, %v932
  %v1088 = vpack.c.b16 %v935, %v934
  %v1089 = vpack.c.b16 %v937, %v936
  %v1090 = vpack.c.b16 %v939, %v938
  %v1091 = vpack.c.b16 %v941, %v940
  %v1092 = vpack.c.b16 %v943, %v942
  %v1093 = vpack.c.b16 %v945, %v944
  %v1094 = vpack.c.b16 %v947, %v946
  %v1095 = vpack.c.b16 %v949, %v948
  %v1096 = vpack.c.b16 %v951, %v950
  %v1097 = vpack.c.b16 %v953, %v952
  %1242 = vmatpush.bf16.msra.mxu0 %v961
  %1243 = vmatpush.bf16.msra.mxu0 %v960
  %1244 = vmatpush.bf16.msra.mxu0 %v959
  %1245 = vmatpush.bf16.msra.mxu0 %v958
  %1246 = vmatpush.bf16.msra.mxu0 %v957
  %1247 = vmatpush.bf16.msra.mxu0 %v956
  %1248 = vmatpush.bf16.msra.mxu0 %v955
  %1249 = vmatpush.bf16.msra.mxu0 %v954
  %1250 = vmatmul.bf16.gmra.mxu0 %v342
  %v1251 = vpop.f32.mrf.mxu0
  %v1252 = vadd.f32 %v313, %v1251
  %v1253 = vpop.f32.mrf.mxu0
  %1254 = vdwg.mxu0
  %1255 = vmatpush.bf16.msra.mxu0 %v969
  %1256 = vmatpush.bf16.msra.mxu0 %v968
  %1257 = vmatpush.bf16.msra.mxu0 %v967
  %1258 = vmatpush.bf16.msra.mxu0 %v966
  %1259 = vmatpush.bf16.msra.mxu0 %v965
  %1260 = vmatpush.bf16.msra.mxu0 %v964
  %1261 = vmatpush.bf16.msra.mxu0 %v963
  %1262 = vmatpush.bf16.msra.mxu0 %v962
  %1263 = vmatmul.bf16.gmra.mxu0 %v343
  %v1264 = vpop.f32.mrf.mxu0
  %v1265 = vadd.f32 %v1252, %v1264
  %v1266 = vpop.f32.mrf.mxu0
  %1267 = vdwg.mxu0
  %1268 = vmatpush.bf16.msra.mxu0 %v977
  %1269 = vmatpush.bf16.msra.mxu0 %v976
  %1270 = vmatpush.bf16.msra.mxu0 %v975
  %1271 = vmatpush.bf16.msra.mxu0 %v974
  %1272 = vmatpush.bf16.msra.mxu0 %v973
  %1273 = vmatpush.bf16.msra.mxu0 %v972
  %1274 = vmatpush.bf16.msra.mxu0 %v971
  %1275 = vmatpush.bf16.msra.mxu0 %v970
  %1276 = vmatmul.bf16.gmra.mxu0 %v344
  %v1277 = vpop.f32.mrf.mxu0
  %v1278 = vadd.f32 %v1265, %v1277
  %v1279 = vpop.f32.mrf.mxu0
  %1280 = vdwg.mxu0
  %1281 = vmatpush.bf16.msra.mxu0 %v985
  %1282 = vmatpush.bf16.msra.mxu0 %v984
  %1283 = vmatpush.bf16.msra.mxu0 %v983
  %1284 = vmatpush.bf16.msra.mxu0 %v982
  %1285 = vmatpush.bf16.msra.mxu0 %v981
  %1286 = vmatpush.bf16.msra.mxu0 %v980
  %1287 = vmatpush.bf16.msra.mxu0 %v979
  %1288 = vmatpush.bf16.msra.mxu0 %v978
  %1289 = vmatmul.bf16.gmra.mxu0 %v345
  %v1290 = vpop.f32.mrf.mxu0
  %v1291 = vadd.f32 %v1278, %v1290
  %v1292 = vpop.f32.mrf.mxu0
  %1293 = vdwg.mxu0
  %1294 = vmatpush.bf16.msra.mxu0 %v993
  %1295 = vmatpush.bf16.msra.mxu0 %v992
  %1296 = vmatpush.bf16.msra.mxu0 %v991
  %1297 = vmatpush.bf16.msra.mxu0 %v990
  %1298 = vmatpush.bf16.msra.mxu0 %v989
  %1299 = vmatpush.bf16.msra.mxu0 %v988
  %1300 = vmatpush.bf16.msra.mxu0 %v987
  %1301 = vmatpush.bf16.msra.mxu0 %v986
  %1302 = vmatmul.bf16.gmra.mxu0 %v346
  %v1303 = vpop.f32.mrf.mxu0
  %v1304 = vadd.f32 %v1291, %v1303
  %v1305 = vpop.f32.mrf.mxu0
  %1306 = vdwg.mxu0
  %1307 = vmatpush.bf16.msra.mxu0 %v1001
  %1308 = vmatpush.bf16.msra.mxu0 %v1000
  %1309 = vmatpush.bf16.msra.mxu0 %v999
  %1310 = vmatpush.bf16.msra.mxu0 %v998
  %1311 = vmatpush.bf16.msra.mxu0 %v997
  %1312 = vmatpush.bf16.msra.mxu0 %v996
  %1313 = vmatpush.bf16.msra.mxu0 %v995
  %1314 = vmatpush.bf16.msra.mxu0 %v994
  %1315 = vmatmul.bf16.gmra.mxu0 %v347
  %v1316 = vpop.f32.mrf.mxu0
  %v1317 = vadd.f32 %v1304, %v1316
  %v1318 = vpop.f32.mrf.mxu0
  %1319 = vdwg.mxu0
  %1320 = vmatpush.bf16.msra.mxu0 %v1009
  %1321 = vmatpush.bf16.msra.mxu0 %v1008
  %1322 = vmatpush.bf16.msra.mxu0 %v1007
  %1323 = vmatpush.bf16.msra.mxu0 %v1006
  %1324 = vmatpush.bf16.msra.mxu0 %v1005
  %1325 = vmatpush.bf16.msra.mxu0 %v1004
  %1326 = vmatpush.bf16.msra.mxu0 %v1003
  %1327 = vmatpush.bf16.msra.mxu0 %v1002
  %1328 = vmatmul.bf16.gmra.mxu0 %v348
  %v1329 = vpop.f32.mrf.mxu0
  %v1330 = vadd.f32 %v1317, %v1329
  %v1331 = vpop.f32.mrf.mxu0
  %1332 = vdwg.mxu0
  %1333 = vmatpush.bf16.msra.mxu0 %v1017
  %1334 = vmatpush.bf16.msra.mxu0 %v1016
  %1335 = vmatpush.bf16.msra.mxu0 %v1015
  %1336 = vmatpush.bf16.msra.mxu0 %v1014
  %1337 = vmatpush.bf16.msra.mxu0 %v1013
  %1338 = vmatpush.bf16.msra.mxu0 %v1012
  %1339 = vmatpush.bf16.msra.mxu0 %v1011
  %1340 = vmatpush.bf16.msra.mxu0 %v1010
  %1341 = vmatmul.bf16.gmra.mxu0 %v349
  %v1342 = vpop.f32.mrf.mxu0
  %v1343 = vadd.f32 %v1330, %v1342
  %v1344 = vpop.f32.mrf.mxu0
  %1345 = vdwg.mxu0
  %1346 = vmatpush.bf16.msra.mxu0 %v1025
  %1347 = vmatpush.bf16.msra.mxu0 %v1024
  %1348 = vmatpush.bf16.msra.mxu0 %v1023
  %1349 = vmatpush.bf16.msra.mxu0 %v1022
  %1350 = vmatpush.bf16.msra.mxu0 %v1021
  %1351 = vmatpush.bf16.msra.mxu0 %v1020
  %1352 = vmatpush.bf16.msra.mxu0 %v1019
  %1353 = vmatpush.bf16.msra.mxu0 %v1018
  %1354 = vmatmul.bf16.gmra.mxu0 %v350
  %v1355 = vpop.f32.mrf.mxu0
  %v1356 = vadd.f32 %v1343, %v1355
  %v1357 = vpop.f32.mrf.mxu0
  %1358 = vdwg.mxu0
  %1359 = vmatpush.bf16.msra.mxu0 %v1033
  %1360 = vmatpush.bf16.msra.mxu0 %v1032
  %1361 = vmatpush.bf16.msra.mxu0 %v1031
  %1362 = vmatpush.bf16.msra.mxu0 %v1030
  %1363 = vmatpush.bf16.msra.mxu0 %v1029
  %1364 = vmatpush.bf16.msra.mxu0 %v1028
  %1365 = vmatpush.bf16.msra.mxu0 %v1027
  %1366 = vmatpush.bf16.msra.mxu0 %v1026
  %1367 = vmatmul.bf16.gmra.mxu0 %v351
  %v1368 = vpop.f32.mrf.mxu0
  %v1369 = vadd.f32 %v1356, %v1368
  %v1370 = vpop.f32.mrf.mxu0
  %1371 = vdwg.mxu0
  %1372 = vmatpush.bf16.msra.mxu0 %v1041
  %1373 = vmatpush.bf16.msra.mxu0 %v1040
  %1374 = vmatpush.bf16.msra.mxu0 %v1039
  %1375 = vmatpush.bf16.msra.mxu0 %v1038
  %1376 = vmatpush.bf16.msra.mxu0 %v1037
  %1377 = vmatpush.bf16.msra.mxu0 %v1036
  %1378 = vmatpush.bf16.msra.mxu0 %v1035
  %1379 = vmatpush.bf16.msra.mxu0 %v1034
  %1380 = vmatmul.bf16.gmra.mxu0 %v352
  %v1381 = vpop.f32.mrf.mxu0
  %v1382 = vadd.f32 %v1369, %v1381
  %v1383 = vpop.f32.mrf.mxu0
  %1384 = vdwg.mxu0
  %1385 = vmatpush.bf16.msra.mxu0 %v1049
  %1386 = vmatpush.bf16.msra.mxu0 %v1048
  %1387 = vmatpush.bf16.msra.mxu0 %v1047
  %1388 = vmatpush.bf16.msra.mxu0 %v1046
  %1389 = vmatpush.bf16.msra.mxu0 %v1045
  %1390 = vmatpush.bf16.msra.mxu0 %v1044
  %1391 = vmatpush.bf16.msra.mxu0 %v1043
  %1392 = vmatpush.bf16.msra.mxu0 %v1042
  %1393 = vmatmul.bf16.gmra.mxu0 %v353
  %v1394 = vpop.f32.mrf.mxu0
  %v1395 = vadd.f32 %v1382, %v1394
  %v1396 = vpop.f32.mrf.mxu0
  %1397 = vdwg.mxu0
  %1398 = vmatpush.bf16.msra.mxu0 %v1057
  %1399 = vmatpush.bf16.msra.mxu0 %v1056
  %1400 = vmatpush.bf16.msra.mxu0 %v1055
  %1401 = vmatpush.bf16.msra.mxu0 %v1054
  %1402 = vmatpush.bf16.msra.mxu0 %v1053
  %1403 = vmatpush.bf16.msra.mxu0 %v1052
  %1404 = vmatpush.bf16.msra.mxu0 %v1051
  %1405 = vmatpush.bf16.msra.mxu0 %v1050
  %1406 = vmatmul.bf16.gmra.mxu0 %v354
  %v1407 = vpop.f32.mrf.mxu0
  %v1408 = vadd.f32 %v1395, %v1407
  %v1409 = vpop.f32.mrf.mxu0
  %1410 = vdwg.mxu0
  %1411 = vmatpush.bf16.msra.mxu0 %v1065
  %1412 = vmatpush.bf16.msra.mxu0 %v1064
  %1413 = vmatpush.bf16.msra.mxu0 %v1063
  %1414 = vmatpush.bf16.msra.mxu0 %v1062
  %1415 = vmatpush.bf16.msra.mxu0 %v1061
  %1416 = vmatpush.bf16.msra.mxu0 %v1060
  %1417 = vmatpush.bf16.msra.mxu0 %v1059
  %1418 = vmatpush.bf16.msra.mxu0 %v1058
  %1419 = vmatmul.bf16.gmra.mxu0 %v355
  %v1420 = vpop.f32.mrf.mxu0
  %v1421 = vadd.f32 %v1408, %v1420
  %v1422 = vpop.f32.mrf.mxu0
  %1423 = vdwg.mxu0
  %1424 = vmatpush.bf16.msra.mxu0 %v1073
  %1425 = vmatpush.bf16.msra.mxu0 %v1072
  %1426 = vmatpush.bf16.msra.mxu0 %v1071
  %1427 = vmatpush.bf16.msra.mxu0 %v1070
  %1428 = vmatpush.bf16.msra.mxu0 %v1069
  %1429 = vmatpush.bf16.msra.mxu0 %v1068
  %1430 = vmatpush.bf16.msra.mxu0 %v1067
  %1431 = vmatpush.bf16.msra.mxu0 %v1066
  %1432 = vmatmul.bf16.gmra.mxu0 %v356
  %v1433 = vpop.f32.mrf.mxu0
  %v1434 = vadd.f32 %v1421, %v1433
  %v1435 = vpop.f32.mrf.mxu0
  %1436 = vdwg.mxu0
  %1437 = vmatpush.bf16.msra.mxu0 %v1081
  %1438 = vmatpush.bf16.msra.mxu0 %v1080
  %1439 = vmatpush.bf16.msra.mxu0 %v1079
  %1440 = vmatpush.bf16.msra.mxu0 %v1078
  %1441 = vmatpush.bf16.msra.mxu0 %v1077
  %1442 = vmatpush.bf16.msra.mxu0 %v1076
  %1443 = vmatpush.bf16.msra.mxu0 %v1075
  %1444 = vmatpush.bf16.msra.mxu0 %v1074
  %1445 = vmatmul.bf16.gmra.mxu0 %v357
  %v1446 = vpop.f32.mrf.mxu0
  %v1447 = vadd.f32 %v1434, %v1446
  %v1448 = vpop.f32.mrf.mxu0
  %1449 = vdwg.mxu0
  %1450 = vmatpush.bf16.msra.mxu0 %v1089
  %1451 = vmatpush.bf16.msra.mxu0 %v1088
  %1452 = vmatpush.bf16.msra.mxu0 %v1087
  %1453 = vmatpush.bf16.msra.mxu0 %v1086
  %1454 = vmatpush.bf16.msra.mxu0 %v1085
  %1455 = vmatpush.bf16.msra.mxu0 %v1084
  %1456 = vmatpush.bf16.msra.mxu0 %v1083
  %1457 = vmatpush.bf16.msra.mxu0 %v1082
  %1458 = vmatmul.bf16.gmra.mxu0 %v358
  %v1459 = vpop.f32.mrf.mxu0
  %v1460 = vadd.f32 %v1447, %v1459
  %v1461 = vpop.f32.mrf.mxu0
  %1462 = vdwg.mxu0
  %1463 = vmatpush.bf16.msra.mxu0 %v1097
  %1464 = vmatpush.bf16.msra.mxu0 %v1096
  %1465 = vmatpush.bf16.msra.mxu0 %v1095
  %1466 = vmatpush.bf16.msra.mxu0 %v1094
  %1467 = vmatpush.bf16.msra.mxu0 %v1093
  %1468 = vmatpush.bf16.msra.mxu0 %v1092
  %1469 = vmatpush.bf16.msra.mxu0 %v1091
  %1470 = vmatpush.bf16.msra.mxu0 %v1090
  %1471 = vmatmul.bf16.gmra.mxu0 %v359
  %v1472 = vpop.f32.mrf.mxu0
  %v1473 = vadd.f32 %v1460, %v1472
  %v1474 = vpop.f32.mrf.mxu0
  %1475 = vdwg.mxu0
  %v1476 = vmax.f32 %v1473, 0.0
  %1477 = vst [vmem:[%s3] sm:$0xff] %v1476
  // Predicated region
  $region14: #{compentrans512_forward.24} parent=0 // pred_check
    _
  $region15: #{compentrans512_forward.24} parent=0 // pred_check_branch
    %1479 = sbr.rel (0) target = $region17
  $region16: #{compentrans512_forward.24} parent=0 // pred_region
    _
  $region17: #{compentrans512_forward.24} parent=0 // pred_fallthru
    _
  // Predicated region
  $region18: #{compentrans512_forward.24} parent=0 // pred_check
    _
  $region19: #{compentrans512_forward.24} parent=0 // pred_check_branch
    %1481 = sbr.rel (0) target = $region21
  $region20: #{compentrans512_forward.24} parent=0 // pred_region
    _
  $region21: #{compentrans512_forward.24} parent=0 // pred_fallthru
    _

// kernel: compentrans512_forward.25
$region0: #{compentrans512_forward.25}
  #allocation0 [shape = 'u32[]', space=smem, size = 0x4, offset = 0x4, fixed_abs, tag = 'smem constant byte address 0x4 - core index']
  #allocation1 [shape = 'u32[72,128]{1,0:T(1,128)}', space=vmem, size = 0x9000, scoped, tag = 'internal scratch']
  #allocation2 [shape = 'f32[1,1]{1,0:T(1,128)S(1)}', space=vmem, size = 0x200, scoped, tag = 'scoped memory for compentrans512_forward.25']
  %s0 = inlined_call_operand.vmem [shape: bf16[8,1152], index: 0, kind: input, shape index: {}]
  %s1 = inlined_call_operand.vmem [shape: bf16[1152,1], index: 1, kind: input, shape index: {}]
  %s2 = inlined_call_operand.<no memory space> [shape: f32[1,1], index: 2, kind: input, shape index: {}]
  %s3 = inlined_call_operand.vmem [shape: f32[8,128], index: 3, kind: input, shape index: {}]
  %s4 = inlined_call_operand.vmem [shape: f32[8,128], index: 4, kind: output, shape index: {}]
  %s5 = sld [smem:[#allocation0]]
  $region26: #{compentrans512_forward.25} parent=0
    _
  %s7 = ssub.s32 1, %s5
  %s8 = scalar_select 0, %s7, %s5
  %v9 = vstv %s2
  %10 = vst [vmem:[#allocation2] sm:$0x1] %v9
  // Predicated region
  $region2: #{compentrans512_forward.25} parent=0 // pred_check
    _
  $region3: #{compentrans512_forward.25} parent=0 // pred_check_branch
    %12 = sbr.rel (0) target = $region5
  $region4: #{compentrans512_forward.25} parent=0 // pred_region
    _
  $region5: #{compentrans512_forward.25} parent=0 // pred_fallthru
    _
  // Predicated region
  $region6: #{compentrans512_forward.25} parent=0 // pred_check
    _
  $region7: #{compentrans512_forward.25} parent=0 // pred_check_branch
    %14 = sbr.rel (0) target = $region9
  $region8: #{compentrans512_forward.25} parent=0 // pred_region
    _
  $region9: #{compentrans512_forward.25} parent=0 // pred_fallthru
    _
  // Predicated region
  $region10: #{compentrans512_forward.25} parent=0 // pred_check
    _
  $region11: #{compentrans512_forward.25} parent=0 // pred_check_branch
    %16 = sbr.rel (0) target = $region13
  $region12: #{compentrans512_forward.25} parent=0 // pred_region
    _
  $region13: #{compentrans512_forward.25} parent=0 // pred_fallthru
    _
  // Predicated region
  $region14: #{compentrans512_forward.25} parent=0 // pred_check
    _
  $region15: #{compentrans512_forward.25} parent=0 // pred_check_branch
    %18 = sbr.rel (0) target = $region17
  $region16: #{compentrans512_forward.25} parent=0 // pred_region
    _
  $region17: #{compentrans512_forward.25} parent=0 // pred_fallthru
    _
  %v19 = vld [vmem:[%s0] sm:$0xff]
  %v20 = vld [vmem:[%s0 + $0x8] sm:$0xff]
  %v21 = vld [vmem:[%s0 + $0x10] sm:$0xff]
  %v22 = vld [vmem:[%s0 + $0x18] sm:$0xff]
  %v23 = vld [vmem:[%s0 + $0x20] sm:$0xf]
  %v24 = vld [vmem:[%s1] sm:$0xf]
  %v25 = vld [vmem:[%s1 + $0x4] sm:$0xf]
  %v26 = vld [vmem:[%s1 + $0x8] sm:$0xf]
  %v27 = vld [vmem:[%s1 + $0xc] sm:$0xf]
  %v28 = vld [vmem:[%s1 + $0x10] sm:$0xf]
  %v29 = vld [vmem:[%s1 + $0x14] sm:$0xf]
  %v30 = vld [vmem:[%s1 + $0x18] sm:$0xf]
  %v31 = vld [vmem:[%s1 + $0x1c] sm:$0xf]
  %v32 = vld [vmem:[%s1 + $0x20] sm:$0xf]
  %v33 = vld [vmem:[%s1 + $0x24] sm:$0xf]
  %v34 = vld [vmem:[%s1 + $0x28] sm:$0xf]
  %v35 = vld [vmem:[%s1 + $0x2c] sm:$0xf]
  %v36 = vld [vmem:[%s1 + $0x30] sm:$0xf]
  %v37 = vld [vmem:[%s1 + $0x34] sm:$0xf]
  %v38 = vld [vmem:[%s1 + $0x38] sm:$0xf]
  %v39 = vld [vmem:[%s1 + $0x3c] sm:$0xf]
  %v40 = vld [vmem:[%s1 + $0x40] sm:$0xf]
  %v41 = vld [vmem:[%s1 + $0x44] sm:$0xf]
  %v42 = vld [vmem:[%s1 + $0x48] sm:$0xf]
  %v43 = vld [vmem:[%s1 + $0x4c] sm:$0xf]
  %v44 = vld [vmem:[%s1 + $0x50] sm:$0xf]
  %v45 = vld [vmem:[%s1 + $0x54] sm:$0xf]
  %v46 = vld [vmem:[%s1 + $0x58] sm:$0xf]
  %v47 = vld [vmem:[%s1 + $0x5c] sm:$0xf]
  %v48 = vld [vmem:[%s1 + $0x60] sm:$0xf]
  %v49 = vld [vmem:[%s1 + $0x64] sm:$0xf]
  %v50 = vld [vmem:[%s1 + $0x68] sm:$0xf]
  %v51 = vld [vmem:[%s1 + $0x6c] sm:$0xf]
  %v52 = vld [vmem:[%s1 + $0x70] sm:$0xf]
  %v53 = vld [vmem:[%s1 + $0x74] sm:$0xf]
  %v54 = vld [vmem:[%s1 + $0x78] sm:$0xf]
  %v55 = vld [vmem:[%s1 + $0x7c] sm:$0xf]
  %v56 = vld [vmem:[%s1 + $0x80] sm:$0xf]
  %v57 = vld [vmem:[%s1 + $0x84] sm:$0xf]
  %v58 = vld [vmem:[%s1 + $0x88] sm:$0xf]
  %v59 = vld [vmem:[%s1 + $0x8c] sm:$0xf]
  %v60 = vld [vmem:[%s1 + $0x90] sm:$0xf]
  %v61 = vld [vmem:[%s1 + $0x94] sm:$0xf]
  %v62 = vld [vmem:[%s1 + $0x98] sm:$0xf]
  %v63 = vld [vmem:[%s1 + $0x9c] sm:$0xf]
  %v64 = vld [vmem:[%s1 + $0xa0] sm:$0xf]
  %v65 = vld [vmem:[%s1 + $0xa4] sm:$0xf]
  %v66 = vld [vmem:[%s1 + $0xa8] sm:$0xf]
  %v67 = vld [vmem:[%s1 + $0xac] sm:$0xf]
  %v68 = vld [vmem:[%s1 + $0xb0] sm:$0xf]
  %v69 = vld [vmem:[%s1 + $0xb4] sm:$0xf]
  %v70 = vld [vmem:[%s1 + $0xb8] sm:$0xf]
  %v71 = vld [vmem:[%s1 + $0xbc] sm:$0xf]
  %v72 = vld [vmem:[%s1 + $0xc0] sm:$0xf]
  %v73 = vld [vmem:[%s1 + $0xc4] sm:$0xf]
  %v74 = vld [vmem:[%s1 + $0xc8] sm:$0xf]
  %v75 = vld [vmem:[%s1 + $0xcc] sm:$0xf]
  %v76 = vld [vmem:[%s1 + $0xd0] sm:$0xf]
  %v77 = vld [vmem:[%s1 + $0xd4] sm:$0xf]
  %v78 = vld [vmem:[%s1 + $0xd8] sm:$0xf]
  %v79 = vld [vmem:[%s1 + $0xdc] sm:$0xf]
  %v80 = vld [vmem:[%s1 + $0xe0] sm:$0xf]
  %v81 = vld [vmem:[%s1 + $0xe4] sm:$0xf]
  %v82 = vld [vmem:[%s1 + $0xe8] sm:$0xf]
  %v83 = vld [vmem:[%s1 + $0xec] sm:$0xf]
  %v84 = vld [vmem:[%s1 + $0xf0] sm:$0xf]
  %v85 = vld [vmem:[%s1 + $0xf4] sm:$0xf]
  %v86 = vld [vmem:[%s1 + $0xf8] sm:$0xf]
  %v87 = vld [vmem:[%s1 + $0xfc] sm:$0xf]
  %v88 = vld [vmem:[%s1 + $0x100] sm:$0xf]
  %v89 = vld [vmem:[%s1 + $0x104] sm:$0xf]
  %v90 = vld [vmem:[%s1 + $0x108] sm:$0xf]
  %v91 = vld [vmem:[%s1 + $0x10c] sm:$0xf]
  %v92 = vld [vmem:[%s1 + $0x110] sm:$0xf]
  %v93 = vld [vmem:[%s1 + $0x114] sm:$0xf]
  %v94 = vld [vmem:[%s1 + $0x118] sm:$0xf]
  %v95 = vld [vmem:[%s1 + $0x11c] sm:$0xf]
  %v96 = vld [vmem:[%s1 + $0x120] sm:$0xf]
  %v97 = vld [vmem:[%s1 + $0x124] sm:$0xf]
  %v98 = vld [vmem:[%s1 + $0x128] sm:$0xf]
  %v99 = vld [vmem:[%s1 + $0x12c] sm:$0xf]
  %v100 = vld [vmem:[%s1 + $0x130] sm:$0xf]
  %v101 = vld [vmem:[%s1 + $0x134] sm:$0xf]
  %v102 = vld [vmem:[%s1 + $0x138] sm:$0xf]
  %v103 = vld [vmem:[%s1 + $0x13c] sm:$0xf]
  %v104 = vld [vmem:[%s1 + $0x140] sm:$0xf]
  %v105 = vld [vmem:[%s1 + $0x144] sm:$0xf]
  %v106 = vld [vmem:[%s1 + $0x148] sm:$0xf]
  %v107 = vld [vmem:[%s1 + $0x14c] sm:$0xf]
  %v108 = vld [vmem:[%s1 + $0x150] sm:$0xf]
  %v109 = vld [vmem:[%s1 + $0x154] sm:$0xf]
  %v110 = vld [vmem:[%s1 + $0x158] sm:$0xf]
  %v111 = vld [vmem:[%s1 + $0x15c] sm:$0xf]
  %v112 = vld [vmem:[%s1 + $0x160] sm:$0xf]
  %v113 = vld [vmem:[%s1 + $0x164] sm:$0xf]
  %v114 = vld [vmem:[%s1 + $0x168] sm:$0xf]
  %v115 = vld [vmem:[%s1 + $0x16c] sm:$0xf]
  %v116 = vld [vmem:[%s1 + $0x170] sm:$0xf]
  %v117 = vld [vmem:[%s1 + $0x174] sm:$0xf]
  %v118 = vld [vmem:[%s1 + $0x178] sm:$0xf]
  %v119 = vld [vmem:[%s1 + $0x17c] sm:$0xf]
  %v120 = vld [vmem:[%s1 + $0x180] sm:$0xf]
  %v121 = vld [vmem:[%s1 + $0x184] sm:$0xf]
  %v122 = vld [vmem:[%s1 + $0x188] sm:$0xf]
  %v123 = vld [vmem:[%s1 + $0x18c] sm:$0xf]
  %v124 = vld [vmem:[%s1 + $0x190] sm:$0xf]
  %v125 = vld [vmem:[%s1 + $0x194] sm:$0xf]
  %v126 = vld [vmem:[%s1 + $0x198] sm:$0xf]
  %v127 = vld [vmem:[%s1 + $0x19c] sm:$0xf]
  %v128 = vld [vmem:[%s1 + $0x1a0] sm:$0xf]
  %v129 = vld [vmem:[%s1 + $0x1a4] sm:$0xf]
  %v130 = vld [vmem:[%s1 + $0x1a8] sm:$0xf]
  %v131 = vld [vmem:[%s1 + $0x1ac] sm:$0xf]
  %v132 = vld [vmem:[%s1 + $0x1b0] sm:$0xf]
  %v133 = vld [vmem:[%s1 + $0x1b4] sm:$0xf]
  %v134 = vld [vmem:[%s1 + $0x1b8] sm:$0xf]
  %v135 = vld [vmem:[%s1 + $0x1bc] sm:$0xf]
  %v136 = vld [vmem:[%s1 + $0x1c0] sm:$0xf]
  %v137 = vld [vmem:[%s1 + $0x1c4] sm:$0xf]
  %v138 = vld [vmem:[%s1 + $0x1c8] sm:$0xf]
  %v139 = vld [vmem:[%s1 + $0x1cc] sm:$0xf]
  %v140 = vld [vmem:[%s1 + $0x1d0] sm:$0xf]
  %v141 = vld [vmem:[%s1 + $0x1d4] sm:$0xf]
  %v142 = vld [vmem:[%s1 + $0x1d8] sm:$0xf]
  %v143 = vld [vmem:[%s1 + $0x1dc] sm:$0xf]
  %v144 = vld [vmem:[%s1 + $0x1e0] sm:$0xf]
  %v145 = vld [vmem:[%s1 + $0x1e4] sm:$0xf]
  %v146 = vld [vmem:[%s1 + $0x1e8] sm:$0xf]
  %v147 = vld [vmem:[%s1 + $0x1ec] sm:$0xf]
  %v148 = vld [vmem:[%s1 + $0x1f0] sm:$0xf]
  %v149 = vld [vmem:[%s1 + $0x1f4] sm:$0xf]
  %v150 = vld [vmem:[%s1 + $0x1f8] sm:$0xf]
  %v151 = vld [vmem:[%s1 + $0x1fc] sm:$0xf]
  %v152 = vld [vmem:[%s1 + $0x200] sm:$0xf]
  %v153 = vld [vmem:[%s1 + $0x204] sm:$0xf]
  %v154 = vld [vmem:[%s1 + $0x208] sm:$0xf]
  %v155 = vld [vmem:[%s1 + $0x20c] sm:$0xf]
  %v156 = vld [vmem:[%s1 + $0x210] sm:$0xf]
  %v157 = vld [vmem:[%s1 + $0x214] sm:$0xf]
  %v158 = vld [vmem:[%s1 + $0x218] sm:$0xf]
  %v159 = vld [vmem:[%s1 + $0x21c] sm:$0xf]
  %v160 = vld [vmem:[%s1 + $0x220] sm:$0xf]
  %v161 = vld [vmem:[%s1 + $0x224] sm:$0xf]
  %v162 = vld [vmem:[%s1 + $0x228] sm:$0xf]
  %v163 = vld [vmem:[%s1 + $0x22c] sm:$0xf]
  %v164 = vld [vmem:[%s1 + $0x230] sm:$0xf]
  %v165 = vld [vmem:[%s1 + $0x234] sm:$0xf]
  %v166 = vld [vmem:[%s1 + $0x238] sm:$0xf]
  %v167 = vld [vmem:[%s1 + $0x23c] sm:$0xf]
  %v168 = vld [vmem:[#allocation2] sm:$0x1]
  %v170 = vperm.slane %v168, 0
  %v177 = vunpack.c.l.b16 %v19
  %v178 = vunpack.c.h.b16 %v19
  %v179 = vunpack.c.l.b16 %v20
  %v180 = vunpack.c.h.b16 %v20
  %v181 = vunpack.c.l.b16 %v21
  %v182 = vunpack.c.h.b16 %v21
  %v183 = vunpack.c.l.b16 %v22
  %v184 = vunpack.c.h.b16 %v22
  %v185 = vunpack.c.l.b16 %v23
  %v186 = vpack.c.b16 %v177, %v177
  %v187 = vpack.c.b16 %v178, %v178
  %v188 = vpack.c.b16 %v179, %v179
  %v189 = vpack.c.b16 %v180, %v180
  %v190 = vpack.c.b16 %v181, %v181
  %v191 = vpack.c.b16 %v182, %v182
  %v192 = vpack.c.b16 %v183, %v183
  %v193 = vpack.c.b16 %v184, %v184
  %v194 = vpack.c.b16 %v185, %v185
  %v348 = vunpack.c.l.b16 %v24
  %v349 = vunpack.c.l.b16 %v25
  %v350 = vunpack.c.l.b16 %v26
  %v351 = vunpack.c.l.b16 %v27
  %v352 = vunpack.c.l.b16 %v28
  %v353 = vunpack.c.l.b16 %v29
  %v354 = vunpack.c.l.b16 %v30
  %v355 = vunpack.c.l.b16 %v31
  %v356 = vunpack.c.l.b16 %v32
  %v357 = vunpack.c.l.b16 %v33
  %v358 = vunpack.c.l.b16 %v34
  %v359 = vunpack.c.l.b16 %v35
  %v360 = vunpack.c.l.b16 %v36
  %v361 = vunpack.c.l.b16 %v37
  %v362 = vunpack.c.l.b16 %v38
  %v363 = vunpack.c.l.b16 %v39
  %v364 = vunpack.c.l.b16 %v40
  %v365 = vunpack.c.l.b16 %v41
  %v366 = vunpack.c.l.b16 %v42
  %v367 = vunpack.c.l.b16 %v43
  %v368 = vunpack.c.l.b16 %v44
  %v369 = vunpack.c.l.b16 %v45
  %v370 = vunpack.c.l.b16 %v46
  %v371 = vunpack.c.l.b16 %v47
  %v372 = vunpack.c.l.b16 %v48
  %v373 = vunpack.c.l.b16 %v49
  %v374 = vunpack.c.l.b16 %v50
  %v375 = vunpack.c.l.b16 %v51
  %v376 = vunpack.c.l.b16 %v52
  %v377 = vunpack.c.l.b16 %v53
  %v378 = vunpack.c.l.b16 %v54
  %v379 = vunpack.c.l.b16 %v55
  %v380 = vunpack.c.l.b16 %v56
  %v381 = vunpack.c.l.b16 %v57
  %v382 = vunpack.c.l.b16 %v58
  %v383 = vunpack.c.l.b16 %v59
  %v384 = vunpack.c.l.b16 %v60
  %v385 = vunpack.c.l.b16 %v61
  %v386 = vunpack.c.l.b16 %v62
  %v387 = vunpack.c.l.b16 %v63
  %v388 = vunpack.c.l.b16 %v64
  %v389 = vunpack.c.l.b16 %v65
  %v390 = vunpack.c.l.b16 %v66
  %v391 = vunpack.c.l.b16 %v67
  %v392 = vunpack.c.l.b16 %v68
  %v393 = vunpack.c.l.b16 %v69
  %v394 = vunpack.c.l.b16 %v70
  %v395 = vunpack.c.l.b16 %v71
  %v396 = vunpack.c.l.b16 %v72
  %v397 = vunpack.c.l.b16 %v73
  %v398 = vunpack.c.l.b16 %v74
  %v399 = vunpack.c.l.b16 %v75
  %v400 = vunpack.c.l.b16 %v76
  %v401 = vunpack.c.l.b16 %v77
  %v402 = vunpack.c.l.b16 %v78
  %v403 = vunpack.c.l.b16 %v79
  %v404 = vunpack.c.l.b16 %v80
  %v405 = vunpack.c.l.b16 %v81
  %v406 = vunpack.c.l.b16 %v82
  %v407 = vunpack.c.l.b16 %v83
  %v408 = vunpack.c.l.b16 %v84
  %v409 = vunpack.c.l.b16 %v85
  %v410 = vunpack.c.l.b16 %v86
  %v411 = vunpack.c.l.b16 %v87
  %v412 = vunpack.c.l.b16 %v88
  %v413 = vunpack.c.l.b16 %v89
  %v414 = vunpack.c.l.b16 %v90
  %v415 = vunpack.c.l.b16 %v91
  %v416 = vunpack.c.l.b16 %v92
  %v417 = vunpack.c.l.b16 %v93
  %v418 = vunpack.c.l.b16 %v94
  %v419 = vunpack.c.l.b16 %v95
  %v420 = vunpack.c.l.b16 %v96
  %v421 = vunpack.c.l.b16 %v97
  %v422 = vunpack.c.l.b16 %v98
  %v423 = vunpack.c.l.b16 %v99
  %v424 = vunpack.c.l.b16 %v100
  %v425 = vunpack.c.l.b16 %v101
  %v426 = vunpack.c.l.b16 %v102
  %v427 = vunpack.c.l.b16 %v103
  %v428 = vunpack.c.l.b16 %v104
  %v429 = vunpack.c.l.b16 %v105
  %v430 = vunpack.c.l.b16 %v106
  %v431 = vunpack.c.l.b16 %v107
  %v432 = vunpack.c.l.b16 %v108
  %v433 = vunpack.c.l.b16 %v109
  %v434 = vunpack.c.l.b16 %v110
  %v435 = vunpack.c.l.b16 %v111
  %v436 = vunpack.c.l.b16 %v112
  %v437 = vunpack.c.l.b16 %v113
  %v438 = vunpack.c.l.b16 %v114
  %v439 = vunpack.c.l.b16 %v115
  %v440 = vunpack.c.l.b16 %v116
  %v441 = vunpack.c.l.b16 %v117
  %v442 = vunpack.c.l.b16 %v118
  %v443 = vunpack.c.l.b16 %v119
  %v444 = vunpack.c.l.b16 %v120
  %v445 = vunpack.c.l.b16 %v121
  %v446 = vunpack.c.l.b16 %v122
  %v447 = vunpack.c.l.b16 %v123
  %v448 = vunpack.c.l.b16 %v124
  %v449 = vunpack.c.l.b16 %v125
  %v450 = vunpack.c.l.b16 %v126
  %v451 = vunpack.c.l.b16 %v127
  %v452 = vunpack.c.l.b16 %v128
  %v453 = vunpack.c.l.b16 %v129
  %v454 = vunpack.c.l.b16 %v130
  %v455 = vunpack.c.l.b16 %v131
  %v456 = vunpack.c.l.b16 %v132
  %v457 = vunpack.c.l.b16 %v133
  %v458 = vunpack.c.l.b16 %v134
  %v459 = vunpack.c.l.b16 %v135
  %v460 = vunpack.c.l.b16 %v136
  %v461 = vunpack.c.l.b16 %v137
  %v462 = vunpack.c.l.b16 %v138
  %v463 = vunpack.c.l.b16 %v139
  %v464 = vunpack.c.l.b16 %v140
  %v465 = vunpack.c.l.b16 %v141
  %v466 = vunpack.c.l.b16 %v142
  %v467 = vunpack.c.l.b16 %v143
  %v468 = vunpack.c.l.b16 %v144
  %v469 = vunpack.c.l.b16 %v145
  %v470 = vunpack.c.l.b16 %v146
  %v471 = vunpack.c.l.b16 %v147
  %v472 = vunpack.c.l.b16 %v148
  %v473 = vunpack.c.l.b16 %v149
  %v474 = vunpack.c.l.b16 %v150
  %v475 = vunpack.c.l.b16 %v151
  %v476 = vunpack.c.l.b16 %v152
  %v477 = vunpack.c.l.b16 %v153
  %v478 = vunpack.c.l.b16 %v154
  %v479 = vunpack.c.l.b16 %v155
  %v480 = vunpack.c.l.b16 %v156
  %v481 = vunpack.c.l.b16 %v157
  %v482 = vunpack.c.l.b16 %v158
  %v483 = vunpack.c.l.b16 %v159
  %v484 = vunpack.c.l.b16 %v160
  %v485 = vunpack.c.l.b16 %v161
  %v486 = vunpack.c.l.b16 %v162
  %v487 = vunpack.c.l.b16 %v163
  %v488 = vunpack.c.l.b16 %v164
  %v489 = vunpack.c.l.b16 %v165
  %v490 = vunpack.c.l.b16 %v166
  %v491 = vunpack.c.l.b16 %v167
  %v492 = vpack.c.b16 %v349, %v348
  %v493 = vpack.c.b16 %v351, %v350
  %v494 = vpack.c.b16 %v353, %v352
  %v495 = vpack.c.b16 %v355, %v354
  %v496 = vpack.c.b16 %v357, %v356
  %v497 = vpack.c.b16 %v359, %v358
  %v498 = vpack.c.b16 %v361, %v360
  %v499 = vpack.c.b16 %v363, %v362
  %v500 = vpack.c.b16 %v365, %v364
  %v501 = vpack.c.b16 %v367, %v366
  %v502 = vpack.c.b16 %v369, %v368
  %v503 = vpack.c.b16 %v371, %v370
  %v504 = vpack.c.b16 %v373, %v372
  %v505 = vpack.c.b16 %v375, %v374
  %v506 = vpack.c.b16 %v377, %v376
  %v507 = vpack.c.b16 %v379, %v378
  %v508 = vpack.c.b16 %v381, %v380
  %v509 = vpack.c.b16 %v383, %v382
  %v510 = vpack.c.b16 %v385, %v384
  %v511 = vpack.c.b16 %v387, %v386
  %v512 = vpack.c.b16 %v389, %v388
  %v513 = vpack.c.b16 %v391, %v390
  %v514 = vpack.c.b16 %v393, %v392
  %v515 = vpack.c.b16 %v395, %v394
  %v516 = vpack.c.b16 %v397, %v396
  %v517 = vpack.c.b16 %v399, %v398
  %v518 = vpack.c.b16 %v401, %v400
  %v519 = vpack.c.b16 %v403, %v402
  %v520 = vpack.c.b16 %v405, %v404
  %v521 = vpack.c.b16 %v407, %v406
  %v522 = vpack.c.b16 %v409, %v408
  %v523 = vpack.c.b16 %v411, %v410
  %v524 = vpack.c.b16 %v413, %v412
  %v525 = vpack.c.b16 %v415, %v414
  %v526 = vpack.c.b16 %v417, %v416
  %v527 = vpack.c.b16 %v419, %v418
  %v528 = vpack.c.b16 %v421, %v420
  %v529 = vpack.c.b16 %v423, %v422
  %v530 = vpack.c.b16 %v425, %v424
  %v531 = vpack.c.b16 %v427, %v426
  %v532 = vpack.c.b16 %v429, %v428
  %v533 = vpack.c.b16 %v431, %v430
  %v534 = vpack.c.b16 %v433, %v432
  %v535 = vpack.c.b16 %v435, %v434
  %v536 = vpack.c.b16 %v437, %v436
  %v537 = vpack.c.b16 %v439, %v438
  %v538 = vpack.c.b16 %v441, %v440
  %v539 = vpack.c.b16 %v443, %v442
  %v540 = vpack.c.b16 %v445, %v444
  %v541 = vpack.c.b16 %v447, %v446
  %v542 = vpack.c.b16 %v449, %v448
  %v543 = vpack.c.b16 %v451, %v450
  %v544 = vpack.c.b16 %v453, %v452
  %v545 = vpack.c.b16 %v455, %v454
  %v546 = vpack.c.b16 %v457, %v456
  %v547 = vpack.c.b16 %v459, %v458
  %v548 = vpack.c.b16 %v461, %v460
  %v549 = vpack.c.b16 %v463, %v462
  %v550 = vpack.c.b16 %v465, %v464
  %v551 = vpack.c.b16 %v467, %v466
  %v552 = vpack.c.b16 %v469, %v468
  %v553 = vpack.c.b16 %v471, %v470
  %v554 = vpack.c.b16 %v473, %v472
  %v555 = vpack.c.b16 %v475, %v474
  %v556 = vpack.c.b16 %v477, %v476
  %v557 = vpack.c.b16 %v479, %v478
  %v558 = vpack.c.b16 %v481, %v480
  %v559 = vpack.c.b16 %v483, %v482
  %v560 = vpack.c.b16 %v485, %v484
  %v561 = vpack.c.b16 %v487, %v486
  %v562 = vpack.c.b16 %v489, %v488
  %v563 = vpack.c.b16 %v491, %v490
  %636 = vmatpush.bf16.msra.mxu0 %v499
  %637 = vmatpush.bf16.msra.mxu0 %v498
  %638 = vmatpush.bf16.msra.mxu0 %v497
  %639 = vmatpush.bf16.msra.mxu0 %v496
  %640 = vmatpush.bf16.msra.mxu0 %v495
  %641 = vmatpush.bf16.msra.mxu0 %v494
  %642 = vmatpush.bf16.msra.mxu0 %v493
  %643 = vmatpush.bf16.msra.mxu0 %v492
  %644 = vmatmul.bf16.gmra.mxu0 %v186
  %v645 = vpop.f32.mrf.mxu0
  %v646 = vadd.f32 %v170, %v645
  %v647 = vpop.f32.mrf.mxu0
  %648 = vdwg.mxu0
  %649 = vmatpush.bf16.msra.mxu0 %v507
  %650 = vmatpush.bf16.msra.mxu0 %v506
  %651 = vmatpush.bf16.msra.mxu0 %v505
  %652 = vmatpush.bf16.msra.mxu0 %v504
  %653 = vmatpush.bf16.msra.mxu0 %v503
  %654 = vmatpush.bf16.msra.mxu0 %v502
  %655 = vmatpush.bf16.msra.mxu0 %v501
  %656 = vmatpush.bf16.msra.mxu0 %v500
  %657 = vmatmul.bf16.gmra.mxu0 %v187
  %v658 = vpop.f32.mrf.mxu0
  %v659 = vadd.f32 %v646, %v658
  %v660 = vpop.f32.mrf.mxu0
  %661 = vdwg.mxu0
  %662 = vmatpush.bf16.msra.mxu0 %v515
  %663 = vmatpush.bf16.msra.mxu0 %v514
  %664 = vmatpush.bf16.msra.mxu0 %v513
  %665 = vmatpush.bf16.msra.mxu0 %v512
  %666 = vmatpush.bf16.msra.mxu0 %v511
  %667 = vmatpush.bf16.msra.mxu0 %v510
  %668 = vmatpush.bf16.msra.mxu0 %v509
  %669 = vmatpush.bf16.msra.mxu0 %v508
  %670 = vmatmul.bf16.gmra.mxu0 %v188
  %v671 = vpop.f32.mrf.mxu0
  %v672 = vadd.f32 %v659, %v671
  %v673 = vpop.f32.mrf.mxu0
  %674 = vdwg.mxu0
  %675 = vmatpush.bf16.msra.mxu0 %v523
  %676 = vmatpush.bf16.msra.mxu0 %v522
  %677 = vmatpush.bf16.msra.mxu0 %v521
  %678 = vmatpush.bf16.msra.mxu0 %v520
  %679 = vmatpush.bf16.msra.mxu0 %v519
  %680 = vmatpush.bf16.msra.mxu0 %v518
  %681 = vmatpush.bf16.msra.mxu0 %v517
  %682 = vmatpush.bf16.msra.mxu0 %v516
  %683 = vmatmul.bf16.gmra.mxu0 %v189
  %v684 = vpop.f32.mrf.mxu0
  %v685 = vadd.f32 %v672, %v684
  %v686 = vpop.f32.mrf.mxu0
  %687 = vdwg.mxu0
  %688 = vmatpush.bf16.msra.mxu0 %v531
  %689 = vmatpush.bf16.msra.mxu0 %v530
  %690 = vmatpush.bf16.msra.mxu0 %v529
  %691 = vmatpush.bf16.msra.mxu0 %v528
  %692 = vmatpush.bf16.msra.mxu0 %v527
  %693 = vmatpush.bf16.msra.mxu0 %v526
  %694 = vmatpush.bf16.msra.mxu0 %v525
  %695 = vmatpush.bf16.msra.mxu0 %v524
  %696 = vmatmul.bf16.gmra.mxu0 %v190
  %v697 = vpop.f32.mrf.mxu0
  %v698 = vadd.f32 %v685, %v697
  %v699 = vpop.f32.mrf.mxu0
  %700 = vdwg.mxu0
  %701 = vmatpush.bf16.msra.mxu0 %v539
  %702 = vmatpush.bf16.msra.mxu0 %v538
  %703 = vmatpush.bf16.msra.mxu0 %v537
  %704 = vmatpush.bf16.msra.mxu0 %v536
  %705 = vmatpush.bf16.msra.mxu0 %v535
  %706 = vmatpush.bf16.msra.mxu0 %v534
  %707 = vmatpush.bf16.msra.mxu0 %v533
  %708 = vmatpush.bf16.msra.mxu0 %v532
  %709 = vmatmul.bf16.gmra.mxu0 %v191
  %v710 = vpop.f32.mrf.mxu0
  %v711 = vadd.f32 %v698, %v710
  %v712 = vpop.f32.mrf.mxu0
  %713 = vdwg.mxu0
  %714 = vmatpush.bf16.msra.mxu0 %v547
  %715 = vmatpush.bf16.msra.mxu0 %v546
  %716 = vmatpush.bf16.msra.mxu0 %v545
  %717 = vmatpush.bf16.msra.mxu0 %v544
  %718 = vmatpush.bf16.msra.mxu0 %v543
  %719 = vmatpush.bf16.msra.mxu0 %v542
  %720 = vmatpush.bf16.msra.mxu0 %v541
  %721 = vmatpush.bf16.msra.mxu0 %v540
  %722 = vmatmul.bf16.gmra.mxu0 %v192
  %v723 = vpop.f32.mrf.mxu0
  %v724 = vadd.f32 %v711, %v723
  %v725 = vpop.f32.mrf.mxu0
  %726 = vdwg.mxu0
  %727 = vmatpush.bf16.msra.mxu0 %v555
  %728 = vmatpush.bf16.msra.mxu0 %v554
  %729 = vmatpush.bf16.msra.mxu0 %v553
  %730 = vmatpush.bf16.msra.mxu0 %v552
  %731 = vmatpush.bf16.msra.mxu0 %v551
  %732 = vmatpush.bf16.msra.mxu0 %v550
  %733 = vmatpush.bf16.msra.mxu0 %v549
  %734 = vmatpush.bf16.msra.mxu0 %v548
  %735 = vmatmul.bf16.gmra.mxu0 %v193
  %v736 = vpop.f32.mrf.mxu0
  %v737 = vadd.f32 %v724, %v736
  %v738 = vpop.f32.mrf.mxu0
  %739 = vdwg.mxu0
  %740 = vmatpush.bf16.msra.mxu0 %v563
  %741 = vmatpush.bf16.msra.mxu0 %v562
  %742 = vmatpush.bf16.msra.mxu0 %v561
  %743 = vmatpush.bf16.msra.mxu0 %v560
  %744 = vmatpush.bf16.msra.mxu0 %v559
  %745 = vmatpush.bf16.msra.mxu0 %v558
  %746 = vmatpush.bf16.msra.mxu0 %v557
  %747 = vmatpush.bf16.msra.mxu0 %v556
  %748 = vmatmul.bf16.gmra.mxu0 %v194
  %v749 = vpop.f32.mrf.mxu0
  %v750 = vadd.f32 %v737, %v749
  %v751 = vpop.f32.mrf.mxu0
  %752 = vdwg.mxu0
  %v753 = vsub.f32 0.0, %v750
  %v754 = vmul.f32 %v753, 1.442695
  %v755 = vpow.pop %v754
  %v756 = vadd.f32 %v755, 1.0
  %v757 = vrcp.pop %v756
  %v758 = vmul.f32 %v756, %v757
  %v759 = vsub.f32 1.0, %v758
  %v760 = vmul.f32 %v757, %v759
  %v761 = vadd.f32 %v757, %v760
  %vm762 = vweird.f32 %v756
  %vm763 = vweird.f32 %v757
  %vm764 = vmor %vm762, %vm763
  %v765 = vsel %vm764, %v757, %v761
  %v766 = vand.u32 2147483647, %v756
  %vm767 = vcmp.eq.f32.partialorder %v766, 8.507059e+37
  %v768 = vand.u32 %v756, 2147483648
  %v769 = vor.u32 1.1754944e-38, %v768
  %v770 = vsel %vm767, %v769, %v765
  %v771 = vmul.f32 1.0, %v770
  %v772 = vld [vmem:[%s3] sm:$0xff]
  %v773 = vmul.f32 %v771, 1.442695
  %v774 = vpow.pop %v773
  %776 = vset.pattern.permute.xlu0 0
  %777 = vperm.xlu0 %776, %v774
  %v778 = vpop.permute.xlu0 %777
  %v780 = vmul.f32 %v772, %v778
  %v781 = vadd.f32 %v772, %v780
  %782 = vst [vmem:[%s4] sm:$0xff] %v781
  // Predicated region
  $region18: #{compentrans512_forward.25} parent=0 // pred_check
    _
  $region19: #{compentrans512_forward.25} parent=0 // pred_check_branch
    %784 = sbr.rel (0) target = $region21
  $region20: #{compentrans512_forward.25} parent=0 // pred_region
    _
  $region21: #{compentrans512_forward.25} parent=0 // pred_fallthru
    _
  // Predicated region
  $region22: #{compentrans512_forward.25} parent=0 // pred_check
    _
  $region23: #{compentrans512_forward.25} parent=0 // pred_check_branch
    %786 = sbr.rel (0) target = $region25
  $region24: #{compentrans512_forward.25} parent=0 // pred_region
    _
  $region25: #{compentrans512_forward.25} parent=0 // pred_fallthru
    _

// kernel: tile.23
$region0: #{tile.23}
  #allocation0 [shape = 's32[1]{0}', space=sflag, size = 0x4, scoped, tag = 'scoped memory for tile.23']
  %s0 = inlined_call_operand.vmem [shape: f32[64], index: 0, kind: input, shape index: {}]
  %s1 = inlined_call_operand.vmem [shape: f32[4,64], index: 1, kind: output, shape index: {}]
  // Predicated region
  $region2: #{tile.23} parent=0 // pred_check
    _
  $region3: #{tile.23} parent=0 // pred_check_branch
    %3 = sbr.rel (0) target = $region5
  $region4: #{tile.23} parent=0 // pred_region
    _
  $region5: #{tile.23} parent=0 // pred_fallthru
    _
  %v4 = vld [vmem:[%s0] ss:$0 sm:$0xff]
  %5 = vst [vmem:[%s1] sm:$0xf] %v4

// kernel: tile.24
$region0: #{tile.24}
  %s0 = inlined_call_operand.vmem [shape: f32[4,64], index: 0, kind: input, shape index: {}]
  %s1 = inlined_call_operand.vmem [shape: f32[1,256], index: 1, kind: output, shape index: {}]
  $region1: #{tile.24} parent=0
    #allocation0 [shape = 'u8[8192]{0}', space=vmem, size = 0x2000, scoped, tag = 'scoped mem for output reshape']
    #allocation1 [shape = 'u8[4096]{0}', space=vmem, size = 0x1000, scoped, tag = 'scoped mem for input reshape']
    %s3 = ssub.s32 16, 1
    %v4 = vld [vmem:[%s0] sm:%s3]
    %5 = vst [vmem:[#allocation1] sm:%s3] %v4
    %s6 = smov 3
    %v7 = vld [vmem:[#allocation1] ss:$2 sm:%s6]
    %vm8 = vcmask 523264
    %9 = vst.msk [vmem:[#allocation0] ss:$8 sm:$0x3] %vm8, %v7
    %s10 = scalar_lea.vmem [#allocation1], 1
    %s11 = smov 3
    %v12 = vld [vmem:[%s10] ss:$2 sm:%s11]
    %13 = vrot.lane.b32.xlu0 %v12, 64
    %v14 = vpop.permute.xlu0 %13
    %vm15 = vcmask 1048064
    %16 = vst.msk [vmem:[#allocation0] ss:$8 sm:$0x3] %vm15, %v14
    %s18 = ssub.s32 2, 1
    %v19 = vld [vmem:[#allocation0] sm:%s18]
    %s21 = ssub.s32 2, 1
    %22 = vst [vmem:[%s1] sm:%s21] %v19
    %s23 = scalar_lea.vmem [#allocation0], 8
    %v24 = vld [vmem:[%s23] sm:%s18]
    %s26 = ssub.s32 2, 1
    %s27 = scalar_lea.vmem %s1, 1
    %28 = vst [vmem:[%s27] sm:%s26] %v24

// kernel: compentrans512_forward.26
$region0: #{compentrans512_forward.26}
  #allocation0 [shape = 'u32[]', space=smem, size = 0x4, offset = 0x4, fixed_abs, tag = 'smem constant byte address 0x4 - core index']
  #allocation1 [shape = 'u32[72,128]{1,0:T(1,128)}', space=vmem, size = 0x9000, scoped, tag = 'internal scratch']
  %s0 = inlined_call_operand.vmem [shape: bf16[8,512], index: 0, kind: input, shape index: {}]
  %s1 = inlined_call_operand.vmem [shape: bf16[512,256], index: 1, kind: input, shape index: {}]
  %s2 = inlined_call_operand.vmem [shape: f32[1,256], index: 2, kind: input, shape index: {}]
  %s3 = inlined_call_operand.vmem [shape: f32[8,256], index: 3, kind: input, shape index: {}]
  %s4 = inlined_call_operand.vmem [shape: f32[8,256], index: 4, kind: output, shape index: {}]
  %s5 = sld [smem:[#allocation0]]
  $region26: #{compentrans512_forward.26} parent=0
    _
  %s7 = ssub.s32 1, %s5
  %s8 = scalar_select 0, %s7, %s5
  // Predicated region
  $region2: #{compentrans512_forward.26} parent=0 // pred_check
    _
  $region3: #{compentrans512_forward.26} parent=0 // pred_check_branch
    %10 = sbr.rel (0) target = $region5
  $region4: #{compentrans512_forward.26} parent=0 // pred_region
    _
  $region5: #{compentrans512_forward.26} parent=0 // pred_fallthru
    _
  // Predicated region
  $region6: #{compentrans512_forward.26} parent=0 // pred_check
    _
  $region7: #{compentrans512_forward.26} parent=0 // pred_check_branch
    %12 = sbr.rel (0) target = $region9
  $region8: #{compentrans512_forward.26} parent=0 // pred_region
    _
  $region9: #{compentrans512_forward.26} parent=0 // pred_fallthru
    _
  // Predicated region
  $region10: #{compentrans512_forward.26} parent=0 // pred_check
    _
  $region11: #{compentrans512_forward.26} parent=0 // pred_check_branch
    %14 = sbr.rel (0) target = $region13
  $region12: #{compentrans512_forward.26} parent=0 // pred_region
    _
  $region13: #{compentrans512_forward.26} parent=0 // pred_fallthru
    _
  // Predicated region
  $region14: #{compentrans512_forward.26} parent=0 // pred_check
    _
  $region15: #{compentrans512_forward.26} parent=0 // pred_check_branch
    %16 = sbr.rel (0) target = $region17
  $region16: #{compentrans512_forward.26} parent=0 // pred_region
    _
  $region17: #{compentrans512_forward.26} parent=0 // pred_fallthru
    _
  %v17 = vld [vmem:[%s0] sm:$0xff]
  %v18 = vld [vmem:[%s0 + $0x8] sm:$0xff]
  %v19 = vld [vmem:[%s1] sm:$0xff]
  %v20 = vld [vmem:[%s1 + $0x8] sm:$0xff]
  %v21 = vld [vmem:[%s1 + $0x10] sm:$0xff]
  %v22 = vld [vmem:[%s1 + $0x18] sm:$0xff]
  %v23 = vld [vmem:[%s1 + $0x20] sm:$0xff]
  %v24 = vld [vmem:[%s1 + $0x28] sm:$0xff]
  %v25 = vld [vmem:[%s1 + $0x30] sm:$0xff]
  %v26 = vld [vmem:[%s1 + $0x38] sm:$0xff]
  %v27 = vld [vmem:[%s1 + $0x40] sm:$0xff]
  %v28 = vld [vmem:[%s1 + $0x48] sm:$0xff]
  %v29 = vld [vmem:[%s1 + $0x50] sm:$0xff]
  %v30 = vld [vmem:[%s1 + $0x58] sm:$0xff]
  %v31 = vld [vmem:[%s1 + $0x60] sm:$0xff]
  %v32 = vld [vmem:[%s1 + $0x68] sm:$0xff]
  %v33 = vld [vmem:[%s1 + $0x70] sm:$0xff]
  %v34 = vld [vmem:[%s1 + $0x78] sm:$0xff]
  %v35 = vld [vmem:[%s1 + $0x80] sm:$0xff]
  %v36 = vld [vmem:[%s1 + $0x88] sm:$0xff]
  %v37 = vld [vmem:[%s1 + $0x90] sm:$0xff]
  %v38 = vld [vmem:[%s1 + $0x98] sm:$0xff]
  %v39 = vld [vmem:[%s1 + $0xa0] sm:$0xff]
  %v40 = vld [vmem:[%s1 + $0xa8] sm:$0xff]
  %v41 = vld [vmem:[%s1 + $0xb0] sm:$0xff]
  %v42 = vld [vmem:[%s1 + $0xb8] sm:$0xff]
  %v43 = vld [vmem:[%s1 + $0xc0] sm:$0xff]
  %v44 = vld [vmem:[%s1 + $0xc8] sm:$0xff]
  %v45 = vld [vmem:[%s1 + $0xd0] sm:$0xff]
  %v46 = vld [vmem:[%s1 + $0xd8] sm:$0xff]
  %v47 = vld [vmem:[%s1 + $0xe0] sm:$0xff]
  %v48 = vld [vmem:[%s1 + $0xe8] sm:$0xff]
  %v49 = vld [vmem:[%s1 + $0xf0] sm:$0xff]
  %v50 = vld [vmem:[%s1 + $0xf8] sm:$0xff]
  %v51 = vld [vmem:[%s1 + $0x100] sm:$0xff]
  %v52 = vld [vmem:[%s1 + $0x108] sm:$0xff]
  %v53 = vld [vmem:[%s1 + $0x110] sm:$0xff]
  %v54 = vld [vmem:[%s1 + $0x118] sm:$0xff]
  %v55 = vld [vmem:[%s1 + $0x120] sm:$0xff]
  %v56 = vld [vmem:[%s1 + $0x128] sm:$0xff]
  %v57 = vld [vmem:[%s1 + $0x130] sm:$0xff]
  %v58 = vld [vmem:[%s1 + $0x138] sm:$0xff]
  %v59 = vld [vmem:[%s1 + $0x140] sm:$0xff]
  %v60 = vld [vmem:[%s1 + $0x148] sm:$0xff]
  %v61 = vld [vmem:[%s1 + $0x150] sm:$0xff]
  %v62 = vld [vmem:[%s1 + $0x158] sm:$0xff]
  %v63 = vld [vmem:[%s1 + $0x160] sm:$0xff]
  %v64 = vld [vmem:[%s1 + $0x168] sm:$0xff]
  %v65 = vld [vmem:[%s1 + $0x170] sm:$0xff]
  %v66 = vld [vmem:[%s1 + $0x178] sm:$0xff]
  %v67 = vld [vmem:[%s1 + $0x180] sm:$0xff]
  %v68 = vld [vmem:[%s1 + $0x188] sm:$0xff]
  %v69 = vld [vmem:[%s1 + $0x190] sm:$0xff]
  %v70 = vld [vmem:[%s1 + $0x198] sm:$0xff]
  %v71 = vld [vmem:[%s1 + $0x1a0] sm:$0xff]
  %v72 = vld [vmem:[%s1 + $0x1a8] sm:$0xff]
  %v73 = vld [vmem:[%s1 + $0x1b0] sm:$0xff]
  %v74 = vld [vmem:[%s1 + $0x1b8] sm:$0xff]
  %v75 = vld [vmem:[%s1 + $0x1c0] sm:$0xff]
  %v76 = vld [vmem:[%s1 + $0x1c8] sm:$0xff]
  %v77 = vld [vmem:[%s1 + $0x1d0] sm:$0xff]
  %v78 = vld [vmem:[%s1 + $0x1d8] sm:$0xff]
  %v79 = vld [vmem:[%s1 + $0x1e0] sm:$0xff]
  %v80 = vld [vmem:[%s1 + $0x1e8] sm:$0xff]
  %v81 = vld [vmem:[%s1 + $0x1f0] sm:$0xff]
  %v82 = vld [vmem:[%s1 + $0x1f8] sm:$0xff]
  %v83 = vld [vmem:[%s2] sm:$0x3]
  %v85 = vperm.slane %v83, 0
  %v86 = vperm.slane %v83, 1
  %v91 = vunpack.c.l.b16 %v17
  %v92 = vunpack.c.h.b16 %v17
  %v93 = vunpack.c.l.b16 %v18
  %v94 = vunpack.c.h.b16 %v18
  %v95 = vpack.c.b16 %v91, %v91
  %v96 = vpack.c.b16 %v92, %v92
  %v97 = vpack.c.b16 %v93, %v93
  %v98 = vpack.c.b16 %v94, %v94
  %v167 = vunpack.c.l.b16 %v19
  %v168 = vunpack.c.h.b16 %v19
  %v169 = vunpack.c.l.b16 %v20
  %v170 = vunpack.c.h.b16 %v20
  %v171 = vunpack.c.l.b16 %v21
  %v172 = vunpack.c.h.b16 %v21
  %v173 = vunpack.c.l.b16 %v22
  %v174 = vunpack.c.h.b16 %v22
  %v175 = vunpack.c.l.b16 %v23
  %v176 = vunpack.c.h.b16 %v23
  %v177 = vunpack.c.l.b16 %v24
  %v178 = vunpack.c.h.b16 %v24
  %v179 = vunpack.c.l.b16 %v25
  %v180 = vunpack.c.h.b16 %v25
  %v181 = vunpack.c.l.b16 %v26
  %v182 = vunpack.c.h.b16 %v26
  %v183 = vunpack.c.l.b16 %v27
  %v184 = vunpack.c.h.b16 %v27
  %v185 = vunpack.c.l.b16 %v28
  %v186 = vunpack.c.h.b16 %v28
  %v187 = vunpack.c.l.b16 %v29
  %v188 = vunpack.c.h.b16 %v29
  %v189 = vunpack.c.l.b16 %v30
  %v190 = vunpack.c.h.b16 %v30
  %v191 = vunpack.c.l.b16 %v31
  %v192 = vunpack.c.h.b16 %v31
  %v193 = vunpack.c.l.b16 %v32
  %v194 = vunpack.c.h.b16 %v32
  %v195 = vunpack.c.l.b16 %v33
  %v196 = vunpack.c.h.b16 %v33
  %v197 = vunpack.c.l.b16 %v34
  %v198 = vunpack.c.h.b16 %v34
  %v199 = vunpack.c.l.b16 %v35
  %v200 = vunpack.c.h.b16 %v35
  %v201 = vunpack.c.l.b16 %v36
  %v202 = vunpack.c.h.b16 %v36
  %v203 = vunpack.c.l.b16 %v37
  %v204 = vunpack.c.h.b16 %v37
  %v205 = vunpack.c.l.b16 %v38
  %v206 = vunpack.c.h.b16 %v38
  %v207 = vunpack.c.l.b16 %v39
  %v208 = vunpack.c.h.b16 %v39
  %v209 = vunpack.c.l.b16 %v40
  %v210 = vunpack.c.h.b16 %v40
  %v211 = vunpack.c.l.b16 %v41
  %v212 = vunpack.c.h.b16 %v41
  %v213 = vunpack.c.l.b16 %v42
  %v214 = vunpack.c.h.b16 %v42
  %v215 = vunpack.c.l.b16 %v43
  %v216 = vunpack.c.h.b16 %v43
  %v217 = vunpack.c.l.b16 %v44
  %v218 = vunpack.c.h.b16 %v44
  %v219 = vunpack.c.l.b16 %v45
  %v220 = vunpack.c.h.b16 %v45
  %v221 = vunpack.c.l.b16 %v46
  %v222 = vunpack.c.h.b16 %v46
  %v223 = vunpack.c.l.b16 %v47
  %v224 = vunpack.c.h.b16 %v47
  %v225 = vunpack.c.l.b16 %v48
  %v226 = vunpack.c.h.b16 %v48
  %v227 = vunpack.c.l.b16 %v49
  %v228 = vunpack.c.h.b16 %v49
  %v229 = vunpack.c.l.b16 %v50
  %v230 = vunpack.c.h.b16 %v50
  %v231 = vunpack.c.l.b16 %v51
  %v232 = vunpack.c.h.b16 %v51
  %v233 = vunpack.c.l.b16 %v52
  %v234 = vunpack.c.h.b16 %v52
  %v235 = vunpack.c.l.b16 %v53
  %v236 = vunpack.c.h.b16 %v53
  %v237 = vunpack.c.l.b16 %v54
  %v238 = vunpack.c.h.b16 %v54
  %v239 = vunpack.c.l.b16 %v55
  %v240 = vunpack.c.h.b16 %v55
  %v241 = vunpack.c.l.b16 %v56
  %v242 = vunpack.c.h.b16 %v56
  %v243 = vunpack.c.l.b16 %v57
  %v244 = vunpack.c.h.b16 %v57
  %v245 = vunpack.c.l.b16 %v58
  %v246 = vunpack.c.h.b16 %v58
  %v247 = vunpack.c.l.b16 %v59
  %v248 = vunpack.c.h.b16 %v59
  %v249 = vunpack.c.l.b16 %v60
  %v250 = vunpack.c.h.b16 %v60
  %v251 = vunpack.c.l.b16 %v61
  %v252 = vunpack.c.h.b16 %v61
  %v253 = vunpack.c.l.b16 %v62
  %v254 = vunpack.c.h.b16 %v62
  %v255 = vunpack.c.l.b16 %v63
  %v256 = vunpack.c.h.b16 %v63
  %v257 = vunpack.c.l.b16 %v64
  %v258 = vunpack.c.h.b16 %v64
  %v259 = vunpack.c.l.b16 %v65
  %v260 = vunpack.c.h.b16 %v65
  %v261 = vunpack.c.l.b16 %v66
  %v262 = vunpack.c.h.b16 %v66
  %v263 = vunpack.c.l.b16 %v67
  %v264 = vunpack.c.h.b16 %v67
  %v265 = vunpack.c.l.b16 %v68
  %v266 = vunpack.c.h.b16 %v68
  %v267 = vunpack.c.l.b16 %v69
  %v268 = vunpack.c.h.b16 %v69
  %v269 = vunpack.c.l.b16 %v70
  %v270 = vunpack.c.h.b16 %v70
  %v271 = vunpack.c.l.b16 %v71
  %v272 = vunpack.c.h.b16 %v71
  %v273 = vunpack.c.l.b16 %v72
  %v274 = vunpack.c.h.b16 %v72
  %v275 = vunpack.c.l.b16 %v73
  %v276 = vunpack.c.h.b16 %v73
  %v277 = vunpack.c.l.b16 %v74
  %v278 = vunpack.c.h.b16 %v74
  %v279 = vunpack.c.l.b16 %v75
  %v280 = vunpack.c.h.b16 %v75
  %v281 = vunpack.c.l.b16 %v76
  %v282 = vunpack.c.h.b16 %v76
  %v283 = vunpack.c.l.b16 %v77
  %v284 = vunpack.c.h.b16 %v77
  %v285 = vunpack.c.l.b16 %v78
  %v286 = vunpack.c.h.b16 %v78
  %v287 = vunpack.c.l.b16 %v79
  %v288 = vunpack.c.h.b16 %v79
  %v289 = vunpack.c.l.b16 %v80
  %v290 = vunpack.c.h.b16 %v80
  %v291 = vunpack.c.l.b16 %v81
  %v292 = vunpack.c.h.b16 %v81
  %v293 = vunpack.c.l.b16 %v82
  %v294 = vunpack.c.h.b16 %v82
  %v295 = vpack.c.b16 %v169, %v167
  %v296 = vpack.c.b16 %v170, %v168
  %v297 = vpack.c.b16 %v173, %v171
  %v298 = vpack.c.b16 %v174, %v172
  %v299 = vpack.c.b16 %v177, %v175
  %v300 = vpack.c.b16 %v178, %v176
  %v301 = vpack.c.b16 %v181, %v179
  %v302 = vpack.c.b16 %v182, %v180
  %v303 = vpack.c.b16 %v185, %v183
  %v304 = vpack.c.b16 %v186, %v184
  %v305 = vpack.c.b16 %v189, %v187
  %v306 = vpack.c.b16 %v190, %v188
  %v307 = vpack.c.b16 %v193, %v191
  %v308 = vpack.c.b16 %v194, %v192
  %v309 = vpack.c.b16 %v197, %v195
  %v310 = vpack.c.b16 %v198, %v196
  %v311 = vpack.c.b16 %v201, %v199
  %v312 = vpack.c.b16 %v202, %v200
  %v313 = vpack.c.b16 %v205, %v203
  %v314 = vpack.c.b16 %v206, %v204
  %v315 = vpack.c.b16 %v209, %v207
  %v316 = vpack.c.b16 %v210, %v208
  %v317 = vpack.c.b16 %v213, %v211
  %v318 = vpack.c.b16 %v214, %v212
  %v319 = vpack.c.b16 %v217, %v215
  %v320 = vpack.c.b16 %v218, %v216
  %v321 = vpack.c.b16 %v221, %v219
  %v322 = vpack.c.b16 %v222, %v220
  %v323 = vpack.c.b16 %v225, %v223
  %v324 = vpack.c.b16 %v226, %v224
  %v325 = vpack.c.b16 %v229, %v227
  %v326 = vpack.c.b16 %v230, %v228
  %v327 = vpack.c.b16 %v233, %v231
  %v328 = vpack.c.b16 %v234, %v232
  %v329 = vpack.c.b16 %v237, %v235
  %v330 = vpack.c.b16 %v238, %v236
  %v331 = vpack.c.b16 %v241, %v239
  %v332 = vpack.c.b16 %v242, %v240
  %v333 = vpack.c.b16 %v245, %v243
  %v334 = vpack.c.b16 %v246, %v244
  %v335 = vpack.c.b16 %v249, %v247
  %v336 = vpack.c.b16 %v250, %v248
  %v337 = vpack.c.b16 %v253, %v251
  %v338 = vpack.c.b16 %v254, %v252
  %v339 = vpack.c.b16 %v257, %v255
  %v340 = vpack.c.b16 %v258, %v256
  %v341 = vpack.c.b16 %v261, %v259
  %v342 = vpack.c.b16 %v262, %v260
  %v343 = vpack.c.b16 %v265, %v263
  %v344 = vpack.c.b16 %v266, %v264
  %v345 = vpack.c.b16 %v269, %v267
  %v346 = vpack.c.b16 %v270, %v268
  %v347 = vpack.c.b16 %v273, %v271
  %v348 = vpack.c.b16 %v274, %v272
  %v349 = vpack.c.b16 %v277, %v275
  %v350 = vpack.c.b16 %v278, %v276
  %v351 = vpack.c.b16 %v281, %v279
  %v352 = vpack.c.b16 %v282, %v280
  %v353 = vpack.c.b16 %v285, %v283
  %v354 = vpack.c.b16 %v286, %v284
  %v355 = vpack.c.b16 %v289, %v287
  %v356 = vpack.c.b16 %v290, %v288
  %v357 = vpack.c.b16 %v293, %v291
  %v358 = vpack.c.b16 %v294, %v292
  %423 = vmatpush.bf16.msra.mxu0 %v309
  %424 = vmatpush.bf16.msra.mxu0 %v307
  %425 = vmatpush.bf16.msra.mxu0 %v305
  %426 = vmatpush.bf16.msra.mxu0 %v303
  %427 = vmatpush.bf16.msra.mxu0 %v301
  %428 = vmatpush.bf16.msra.mxu0 %v299
  %429 = vmatpush.bf16.msra.mxu0 %v297
  %430 = vmatpush.bf16.msra.mxu0 %v295
  %431 = vmatmul.bf16.gmra.mxu0 %v95
  %v432 = vpop.f32.mrf.mxu0
  %v433 = vadd.f32 %v85, %v432
  %v434 = vpop.f32.mrf.mxu0
  %435 = vdwg.mxu0
  %436 = vmatpush.bf16.msra.mxu0 %v325
  %437 = vmatpush.bf16.msra.mxu0 %v323
  %438 = vmatpush.bf16.msra.mxu0 %v321
  %439 = vmatpush.bf16.msra.mxu0 %v319
  %440 = vmatpush.bf16.msra.mxu0 %v317
  %441 = vmatpush.bf16.msra.mxu0 %v315
  %442 = vmatpush.bf16.msra.mxu0 %v313
  %443 = vmatpush.bf16.msra.mxu0 %v311
  %444 = vmatmul.bf16.gmra.mxu0 %v96
  %v445 = vpop.f32.mrf.mxu0
  %v446 = vadd.f32 %v433, %v445
  %v447 = vpop.f32.mrf.mxu0
  %448 = vdwg.mxu0
  %449 = vmatpush.bf16.msra.mxu0 %v341
  %450 = vmatpush.bf16.msra.mxu0 %v339
  %451 = vmatpush.bf16.msra.mxu0 %v337
  %452 = vmatpush.bf16.msra.mxu0 %v335
  %453 = vmatpush.bf16.msra.mxu0 %v333
  %454 = vmatpush.bf16.msra.mxu0 %v331
  %455 = vmatpush.bf16.msra.mxu0 %v329
  %456 = vmatpush.bf16.msra.mxu0 %v327
  %457 = vmatmul.bf16.gmra.mxu0 %v97
  %v458 = vpop.f32.mrf.mxu0
  %v459 = vadd.f32 %v446, %v458
  %v460 = vpop.f32.mrf.mxu0
  %461 = vdwg.mxu0
  %462 = vmatpush.bf16.msra.mxu0 %v357
  %463 = vmatpush.bf16.msra.mxu0 %v355
  %464 = vmatpush.bf16.msra.mxu0 %v353
  %465 = vmatpush.bf16.msra.mxu0 %v351
  %466 = vmatpush.bf16.msra.mxu0 %v349
  %467 = vmatpush.bf16.msra.mxu0 %v347
  %468 = vmatpush.bf16.msra.mxu0 %v345
  %469 = vmatpush.bf16.msra.mxu0 %v343
  %470 = vmatmul.bf16.gmra.mxu0 %v98
  %v471 = vpop.f32.mrf.mxu0
  %v472 = vadd.f32 %v459, %v471
  %v473 = vpop.f32.mrf.mxu0
  %474 = vdwg.mxu0
  %475 = vmatpush.bf16.msra.mxu0 %v310
  %476 = vmatpush.bf16.msra.mxu0 %v308
  %477 = vmatpush.bf16.msra.mxu0 %v306
  %478 = vmatpush.bf16.msra.mxu0 %v304
  %479 = vmatpush.bf16.msra.mxu0 %v302
  %480 = vmatpush.bf16.msra.mxu0 %v300
  %481 = vmatpush.bf16.msra.mxu0 %v298
  %482 = vmatpush.bf16.msra.mxu0 %v296
  %483 = vmatmul.bf16.gmra.mxu0 %v95
  %v484 = vpop.f32.mrf.mxu0
  %v485 = vadd.f32 %v86, %v484
  %v486 = vpop.f32.mrf.mxu0
  %487 = vdwg.mxu0
  %488 = vmatpush.bf16.msra.mxu0 %v326
  %489 = vmatpush.bf16.msra.mxu0 %v324
  %490 = vmatpush.bf16.msra.mxu0 %v322
  %491 = vmatpush.bf16.msra.mxu0 %v320
  %492 = vmatpush.bf16.msra.mxu0 %v318
  %493 = vmatpush.bf16.msra.mxu0 %v316
  %494 = vmatpush.bf16.msra.mxu0 %v314
  %495 = vmatpush.bf16.msra.mxu0 %v312
  %496 = vmatmul.bf16.gmra.mxu0 %v96
  %v497 = vpop.f32.mrf.mxu0
  %v498 = vadd.f32 %v485, %v497
  %v499 = vpop.f32.mrf.mxu0
  %500 = vdwg.mxu0
  %501 = vmatpush.bf16.msra.mxu0 %v342
  %502 = vmatpush.bf16.msra.mxu0 %v340
  %503 = vmatpush.bf16.msra.mxu0 %v338
  %504 = vmatpush.bf16.msra.mxu0 %v336
  %505 = vmatpush.bf16.msra.mxu0 %v334
  %506 = vmatpush.bf16.msra.mxu0 %v332
  %507 = vmatpush.bf16.msra.mxu0 %v330
  %508 = vmatpush.bf16.msra.mxu0 %v328
  %509 = vmatmul.bf16.gmra.mxu0 %v97
  %v510 = vpop.f32.mrf.mxu0
  %v511 = vadd.f32 %v498, %v510
  %v512 = vpop.f32.mrf.mxu0
  %513 = vdwg.mxu0
  %514 = vmatpush.bf16.msra.mxu0 %v358
  %515 = vmatpush.bf16.msra.mxu0 %v356
  %516 = vmatpush.bf16.msra.mxu0 %v354
  %517 = vmatpush.bf16.msra.mxu0 %v352
  %518 = vmatpush.bf16.msra.mxu0 %v350
  %519 = vmatpush.bf16.msra.mxu0 %v348
  %520 = vmatpush.bf16.msra.mxu0 %v346
  %521 = vmatpush.bf16.msra.mxu0 %v344
  %522 = vmatmul.bf16.gmra.mxu0 %v98
  %v523 = vpop.f32.mrf.mxu0
  %v524 = vadd.f32 %v511, %v523
  %v525 = vpop.f32.mrf.mxu0
  %526 = vdwg.mxu0
  %v527 = vld [vmem:[%s3] sm:$0xff]
  %v528 = vld [vmem:[%s3 + $0x8] sm:$0xff]
  %v529 = vadd.f32 %v472, %v527
  %v530 = vadd.f32 %v524, %v528
  %v531 = vmax.f32 %v529, 0.0
  %v532 = vmax.f32 %v530, 0.0
  %533 = vst [vmem:[%s4] sm:$0xff] %v531
  %534 = vst [vmem:[%s4 + $0x8] sm:$0xff] %v532
  // Predicated region
  $region18: #{compentrans512_forward.26} parent=0 // pred_check
    _
  $region19: #{compentrans512_forward.26} parent=0 // pred_check_branch
    %536 = sbr.rel (0) target = $region21
  $region20: #{compentrans512_forward.26} parent=0 // pred_region
    _
  $region21: #{compentrans512_forward.26} parent=0 // pred_fallthru
    _
  // Predicated region
  $region22: #{compentrans512_forward.26} parent=0 // pred_check
    _
  $region23: #{compentrans512_forward.26} parent=0 // pred_check_branch
    %538 = sbr.rel (0) target = $region25
  $region24: #{compentrans512_forward.26} parent=0 // pred_region
    _
  $region25: #{compentrans512_forward.26} parent=0 // pred_fallthru
    _

// kernel: compentrans512_forward.27
$region0: #{compentrans512_forward.27}
  #allocation0 [shape = 'u32[]', space=smem, size = 0x4, offset = 0x4, fixed_abs, tag = 'smem constant byte address 0x4 - core index']
  #allocation1 [shape = 'u32[72,128]{1,0:T(1,128)}', space=vmem, size = 0x9000, scoped, tag = 'internal scratch']
  %s0 = inlined_call_operand.vmem [shape: bf16[32,64], index: 0, kind: input, shape index: {}]
  %s1 = inlined_call_operand.vmem [shape: bf16[64,256], index: 1, kind: input, shape index: {}]
  %s2 = inlined_call_operand.vmem [shape: f32[1,256], index: 2, kind: input, shape index: {}]
  %s3 = inlined_call_operand.vmem [shape: f32[32,256], index: 3, kind: input, shape index: {}]
  %s4 = inlined_call_operand.vmem [shape: f32[32,256], index: 4, kind: output, shape index: {}]
  %s5 = sld [smem:[#allocation0]]
  $region26: #{compentrans512_forward.27} parent=0
    _
  %s7 = ssub.s32 1, %s5
  %s8 = scalar_select 0, %s7, %s5
  // Predicated region
  $region2: #{compentrans512_forward.27} parent=0 // pred_check
    _
  $region3: #{compentrans512_forward.27} parent=0 // pred_check_branch
    %10 = sbr.rel (0) target = $region5
  $region4: #{compentrans512_forward.27} parent=0 // pred_region
    _
  $region5: #{compentrans512_forward.27} parent=0 // pred_fallthru
    _
  // Predicated region
  $region6: #{compentrans512_forward.27} parent=0 // pred_check
    _
  $region7: #{compentrans512_forward.27} parent=0 // pred_check_branch
    %12 = sbr.rel (0) target = $region9
  $region8: #{compentrans512_forward.27} parent=0 // pred_region
    _
  $region9: #{compentrans512_forward.27} parent=0 // pred_fallthru
    _
  // Predicated region
  $region10: #{compentrans512_forward.27} parent=0 // pred_check
    _
  $region11: #{compentrans512_forward.27} parent=0 // pred_check_branch
    %14 = sbr.rel (0) target = $region13
  $region12: #{compentrans512_forward.27} parent=0 // pred_region
    _
  $region13: #{compentrans512_forward.27} parent=0 // pred_fallthru
    _
  // Predicated region
  $region14: #{compentrans512_forward.27} parent=0 // pred_check
    _
  $region15: #{compentrans512_forward.27} parent=0 // pred_check_branch
    %16 = sbr.rel (0) target = $region17
  $region16: #{compentrans512_forward.27} parent=0 // pred_region
    _
  $region17: #{compentrans512_forward.27} parent=0 // pred_fallthru
    _
  %v18 = vld [vmem:[%s0] sm:$0xf]
  %v19 = vld [vmem:[%s0 + $0x4] sm:$0xf]
  %v20 = vld [vmem:[%s0 + $0x8] sm:$0xf]
  %v21 = vld [vmem:[%s0 + $0xc] sm:$0xf]
  %v22 = vld [vmem:[%s1] sm:$0xff]
  %v23 = vld [vmem:[%s1 + $0x8] sm:$0xff]
  %v24 = vld [vmem:[%s1 + $0x10] sm:$0xff]
  %v25 = vld [vmem:[%s1 + $0x18] sm:$0xff]
  %v26 = vld [vmem:[%s1 + $0x20] sm:$0xff]
  %v27 = vld [vmem:[%s1 + $0x28] sm:$0xff]
  %v28 = vld [vmem:[%s1 + $0x30] sm:$0xff]
  %v29 = vld [vmem:[%s1 + $0x38] sm:$0xff]
  %v30 = vld [vmem:[%s2] sm:$0x3]
  %v32 = vperm.slane %v30, 0
  %v33 = vperm.slane %v30, 1
  %v40 = vunpack.c.l.b16 %v18
  %v41 = vunpack.c.l.b16 %v19
  %v42 = vunpack.c.l.b16 %v20
  %v43 = vunpack.c.l.b16 %v21
  %v44 = vpack.c.b16 %v41, %v40
  %v45 = vpack.c.b16 %v43, %v42
  %v54 = vunpack.c.l.b16 %v22
  %v55 = vunpack.c.h.b16 %v22
  %v56 = vunpack.c.l.b16 %v23
  %v57 = vunpack.c.h.b16 %v23
  %v58 = vunpack.c.l.b16 %v24
  %v59 = vunpack.c.h.b16 %v24
  %v60 = vunpack.c.l.b16 %v25
  %v61 = vunpack.c.h.b16 %v25
  %v62 = vunpack.c.l.b16 %v26
  %v63 = vunpack.c.h.b16 %v26
  %v64 = vunpack.c.l.b16 %v27
  %v65 = vunpack.c.h.b16 %v27
  %v66 = vunpack.c.l.b16 %v28
  %v67 = vunpack.c.h.b16 %v28
  %v68 = vunpack.c.l.b16 %v29
  %v69 = vunpack.c.h.b16 %v29
  %v70 = vpack.c.b16 %v56, %v54
  %v71 = vpack.c.b16 %v57, %v55
  %v72 = vpack.c.b16 %v60, %v58
  %v73 = vpack.c.b16 %v61, %v59
  %v74 = vpack.c.b16 %v64, %v62
  %v75 = vpack.c.b16 %v65, %v63
  %v76 = vpack.c.b16 %v68, %v66
  %v77 = vpack.c.b16 %v69, %v67
  %vm86 = vcmask 523264
  %v88 = vsel %vm86, %v44, 0
  %v91 = vsel %vm86, %v45, 0
  %93 = vmatpush.bf16.msra.mxu0 0
  %94 = vmatpush.bf16.msra.mxu0 0
  %95 = vmatpush.bf16.msra.mxu0 0
  %96 = vmatpush.bf16.msra.mxu0 0
  %97 = vmatpush.bf16.msra.mxu0 %v76
  %98 = vmatpush.bf16.msra.mxu0 %v74
  %99 = vmatpush.bf16.msra.mxu0 %v72
  %100 = vmatpush.bf16.msra.mxu0 %v70
  %101 = vmatmul.bf16.gmra.mxu0 %v88
  %v102 = vpop.f32.mrf.mxu0
  %v103 = vadd.f32 %v32, %v102
  %v104 = vpop.f32.mrf.mxu0
  %v105 = vadd.f32 %v32, %v104
  %106 = vmatmul.bf16.gmra.mxu0 %v91
  %v107 = vpop.f32.mrf.mxu0
  %v108 = vadd.f32 %v32, %v107
  %v109 = vpop.f32.mrf.mxu0
  %v110 = vadd.f32 %v32, %v109
  %111 = vdwg.mxu0
  %112 = vmatpush.bf16.msra.mxu0 0
  %113 = vmatpush.bf16.msra.mxu0 0
  %114 = vmatpush.bf16.msra.mxu0 0
  %115 = vmatpush.bf16.msra.mxu0 0
  %116 = vmatpush.bf16.msra.mxu0 %v77
  %117 = vmatpush.bf16.msra.mxu0 %v75
  %118 = vmatpush.bf16.msra.mxu0 %v73
  %119 = vmatpush.bf16.msra.mxu0 %v71
  %120 = vmatmul.bf16.gmra.mxu0 %v88
  %v121 = vpop.f32.mrf.mxu0
  %v122 = vadd.f32 %v33, %v121
  %v123 = vpop.f32.mrf.mxu0
  %v124 = vadd.f32 %v33, %v123
  %125 = vmatmul.bf16.gmra.mxu0 %v91
  %v126 = vpop.f32.mrf.mxu0
  %v127 = vadd.f32 %v33, %v126
  %v128 = vpop.f32.mrf.mxu0
  %v129 = vadd.f32 %v33, %v128
  %130 = vdwg.mxu0
  %v131 = vld [vmem:[%s3] sm:$0xff]
  %v132 = vld [vmem:[%s3 + $0x8] sm:$0xff]
  %v133 = vld [vmem:[%s3 + $0x10] sm:$0xff]
  %v134 = vld [vmem:[%s3 + $0x18] sm:$0xff]
  %v135 = vld [vmem:[%s3 + $0x20] sm:$0xff]
  %v136 = vld [vmem:[%s3 + $0x28] sm:$0xff]
  %v137 = vld [vmem:[%s3 + $0x30] sm:$0xff]
  %v138 = vld [vmem:[%s3 + $0x38] sm:$0xff]
  %v139 = vadd.f32 %v103, %v131
  %v140 = vadd.f32 %v122, %v132
  %v141 = vadd.f32 %v105, %v133
  %v142 = vadd.f32 %v124, %v134
  %v143 = vadd.f32 %v108, %v135
  %v144 = vadd.f32 %v127, %v136
  %v145 = vadd.f32 %v110, %v137
  %v146 = vadd.f32 %v129, %v138
  %v147 = vmax.f32 %v139, 0.0
  %v148 = vmax.f32 %v140, 0.0
  %v149 = vmax.f32 %v141, 0.0
  %v150 = vmax.f32 %v142, 0.0
  %v151 = vmax.f32 %v143, 0.0
  %v152 = vmax.f32 %v144, 0.0
  %v153 = vmax.f32 %v145, 0.0
  %v154 = vmax.f32 %v146, 0.0
  %155 = vst [vmem:[%s4] sm:$0xff] %v147
  %156 = vst [vmem:[%s4 + $0x8] sm:$0xff] %v148
  %157 = vst [vmem:[%s4 + $0x10] sm:$0xff] %v149
  %158 = vst [vmem:[%s4 + $0x18] sm:$0xff] %v150
  %159 = vst [vmem:[%s4 + $0x20] sm:$0xff] %v151
  %160 = vst [vmem:[%s4 + $0x28] sm:$0xff] %v152
  %161 = vst [vmem:[%s4 + $0x30] sm:$0xff] %v153
  %162 = vst [vmem:[%s4 + $0x38] sm:$0xff] %v154
  // Predicated region
  $region18: #{compentrans512_forward.27} parent=0 // pred_check
    _
  $region19: #{compentrans512_forward.27} parent=0 // pred_check_branch
    %164 = sbr.rel (0) target = $region21
  $region20: #{compentrans512_forward.27} parent=0 // pred_region
    _
  $region21: #{compentrans512_forward.27} parent=0 // pred_fallthru
    _
  // Predicated region
  $region22: #{compentrans512_forward.27} parent=0 // pred_check
    _
  $region23: #{compentrans512_forward.27} parent=0 // pred_check_branch
    %166 = sbr.rel (0) target = $region25
  $region24: #{compentrans512_forward.27} parent=0 // pred_region
    _
  $region25: #{compentrans512_forward.27} parent=0 // pred_fallthru
    _

// kernel: tile.33
$region0: #{tile.33}
  #allocation0 [shape = 's32[1]{0}', space=sflag, size = 0x4, scoped, tag = 'scoped memory for tile.33']
  %s0 = inlined_call_operand.vmem [shape: f32[32], index: 0, kind: input, shape index: {}]
  %s1 = inlined_call_operand.vmem [shape: f32[4,32], index: 1, kind: output, shape index: {}]
  // Predicated region
  $region2: #{tile.33} parent=0 // pred_check
    _
  $region3: #{tile.33} parent=0 // pred_check_branch
    %3 = sbr.rel (0) target = $region5
  $region4: #{tile.33} parent=0 // pred_region
    _
  $region5: #{tile.33} parent=0 // pred_fallthru
    _
  %v4 = vld [vmem:[%s0] ss:$0 sm:$0xff]
  %5 = vst [vmem:[%s1] sm:$0xf] %v4

// kernel: tile.34
$region0: #{tile.34}
  %s0 = inlined_call_operand.vmem [shape: f32[4,32], index: 0, kind: input, shape index: {}]
  %s1 = inlined_call_operand.vmem [shape: f32[1,128], index: 1, kind: output, shape index: {}]
  $region1: #{tile.34} parent=0
    #allocation0 [shape = 'u8[4096]{0}', space=vmem, size = 0x1000, scoped, tag = 'scoped mem for output reshape']
    #allocation1 [shape = 'u8[4096]{0}', space=vmem, size = 0x1000, scoped, tag = 'scoped mem for input reshape']
    %s3 = ssub.s32 16, 1
    %v4 = vld [vmem:[%s0] sm:%s3]
    %5 = vst [vmem:[#allocation1] sm:%s3] %v4
    %v6 = vld [vmem:[#allocation1] sm:$0x1]
    %vm7 = vcmask 261120
    %8 = vst.msk [vmem:[#allocation0] sm:$0x1] %vm7, %v6
    %s9 = scalar_lea.vmem [#allocation1], 3
    %v10 = vld [vmem:[%s9] sm:$0x1]
    %11 = vrot.lane.b32.xlu0 %v10, 96
    %v12 = vpop.permute.xlu0 %11
    %vm13 = vcmask 1048320
    %14 = vst.msk [vmem:[#allocation0] sm:$0x1] %vm13, %v12
    %s15 = scalar_lea.vmem [#allocation1], 2
    %v16 = vld [vmem:[%s15] sm:$0x1]
    %17 = vrot.lane.b32.xlu0 %v16, 64
    %v18 = vpop.permute.xlu0 %17
    %vm19 = vcmask 785920
    %20 = vst.msk [vmem:[#allocation0] sm:$0x1] %vm19, %v18
    %s21 = scalar_lea.vmem [#allocation1], 1
    %v22 = vld [vmem:[%s21] sm:$0x1]
    %23 = vrot.lane.b32.xlu0 %v22, 32
    %v24 = vpop.permute.xlu0 %23
    %vm25 = vcmask 523520
    %26 = vst.msk [vmem:[#allocation0] sm:$0x1] %vm25, %v24
    %s28 = ssub.s32 2, 1
    %v29 = vld [vmem:[#allocation0] sm:%s28]
    %s31 = ssub.s32 2, 1
    %32 = vst [vmem:[%s1] sm:%s31] %v29

// kernel: compentrans512_forward.28
$region0: #{compentrans512_forward.28}
  #allocation0 [shape = 'u32[]', space=smem, size = 0x4, offset = 0x4, fixed_abs, tag = 'smem constant byte address 0x4 - core index']
  #allocation1 [shape = 'u32[72,128]{1,0:T(1,128)}', space=vmem, size = 0x9000, scoped, tag = 'internal scratch']
  %s0 = inlined_call_operand.vmem [shape: bf16[128,64], index: 0, kind: input, shape index: {}]
  %s1 = inlined_call_operand.vmem [shape: bf16[64,128], index: 1, kind: input, shape index: {}]
  %s2 = inlined_call_operand.vmem [shape: f32[1,128], index: 2, kind: input, shape index: {}]
  %s3 = inlined_call_operand.vmem [shape: f32[128,128], index: 3, kind: input, shape index: {}]
  %s4 = inlined_call_operand.vmem [shape: f32[128,128], index: 4, kind: output, shape index: {}]
  %s5 = sld [smem:[#allocation0]]
  $region26: #{compentrans512_forward.28} parent=0
    _
  %s7 = ssub.s32 1, %s5
  %s8 = scalar_select 0, %s7, %s5
  // Predicated region
  $region2: #{compentrans512_forward.28} parent=0 // pred_check
    _
  $region3: #{compentrans512_forward.28} parent=0 // pred_check_branch
    %10 = sbr.rel (0) target = $region5
  $region4: #{compentrans512_forward.28} parent=0 // pred_region
    _
  $region5: #{compentrans512_forward.28} parent=0 // pred_fallthru
    _
  // Predicated region
  $region6: #{compentrans512_forward.28} parent=0 // pred_check
    _
  $region7: #{compentrans512_forward.28} parent=0 // pred_check_branch
    %12 = sbr.rel (0) target = $region9
  $region8: #{compentrans512_forward.28} parent=0 // pred_region
    _
  $region9: #{compentrans512_forward.28} parent=0 // pred_fallthru
    _
  // Predicated region
  $region10: #{compentrans512_forward.28} parent=0 // pred_check
    _
  $region11: #{compentrans512_forward.28} parent=0 // pred_check_branch
    %14 = sbr.rel (0) target = $region13
  $region12: #{compentrans512_forward.28} parent=0 // pred_region
    _
  $region13: #{compentrans512_forward.28} parent=0 // pred_fallthru
    _
  // Predicated region
  $region14: #{compentrans512_forward.28} parent=0 // pred_check
    _
  $region15: #{compentrans512_forward.28} parent=0 // pred_check_branch
    %16 = sbr.rel (0) target = $region17
  $region16: #{compentrans512_forward.28} parent=0 // pred_region
    _
  $region17: #{compentrans512_forward.28} parent=0 // pred_fallthru
    _
  %v18 = vld [vmem:[%s0] sm:$0xf]
  %v19 = vld [vmem:[%s0 + $0x4] sm:$0xf]
  %v20 = vld [vmem:[%s0 + $0x8] sm:$0xf]
  %v21 = vld [vmem:[%s0 + $0xc] sm:$0xf]
  %v22 = vld [vmem:[%s0 + $0x10] sm:$0xf]
  %v23 = vld [vmem:[%s0 + $0x14] sm:$0xf]
  %v24 = vld [vmem:[%s0 + $0x18] sm:$0xf]
  %v25 = vld [vmem:[%s0 + $0x1c] sm:$0xf]
  %v26 = vld [vmem:[%s0 + $0x20] sm:$0xf]
  %v27 = vld [vmem:[%s0 + $0x24] sm:$0xf]
  %v28 = vld [vmem:[%s0 + $0x28] sm:$0xf]
  %v29 = vld [vmem:[%s0 + $0x2c] sm:$0xf]
  %v30 = vld [vmem:[%s0 + $0x30] sm:$0xf]
  %v31 = vld [vmem:[%s0 + $0x34] sm:$0xf]
  %v32 = vld [vmem:[%s0 + $0x38] sm:$0xf]
  %v33 = vld [vmem:[%s0 + $0x3c] sm:$0xf]
  %v34 = vld [vmem:[%s1] sm:$0xf]
  %v35 = vld [vmem:[%s1 + $0x4] sm:$0xf]
  %v36 = vld [vmem:[%s1 + $0x8] sm:$0xf]
  %v37 = vld [vmem:[%s1 + $0xc] sm:$0xf]
  %v38 = vld [vmem:[%s1 + $0x10] sm:$0xf]
  %v39 = vld [vmem:[%s1 + $0x14] sm:$0xf]
  %v40 = vld [vmem:[%s1 + $0x18] sm:$0xf]
  %v41 = vld [vmem:[%s1 + $0x1c] sm:$0xf]
  %v42 = vld [vmem:[%s2] sm:$0x1]
  %v44 = vperm.slane %v42, 0
  %v62 = vunpack.c.l.b16 %v18
  %v63 = vunpack.c.l.b16 %v19
  %v64 = vunpack.c.l.b16 %v20
  %v65 = vunpack.c.l.b16 %v21
  %v66 = vunpack.c.l.b16 %v22
  %v67 = vunpack.c.l.b16 %v23
  %v68 = vunpack.c.l.b16 %v24
  %v69 = vunpack.c.l.b16 %v25
  %v70 = vunpack.c.l.b16 %v26
  %v71 = vunpack.c.l.b16 %v27
  %v72 = vunpack.c.l.b16 %v28
  %v73 = vunpack.c.l.b16 %v29
  %v74 = vunpack.c.l.b16 %v30
  %v75 = vunpack.c.l.b16 %v31
  %v76 = vunpack.c.l.b16 %v32
  %v77 = vunpack.c.l.b16 %v33
  %v78 = vpack.c.b16 %v63, %v62
  %v79 = vpack.c.b16 %v65, %v64
  %v80 = vpack.c.b16 %v67, %v66
  %v81 = vpack.c.b16 %v69, %v68
  %v82 = vpack.c.b16 %v71, %v70
  %v83 = vpack.c.b16 %v73, %v72
  %v84 = vpack.c.b16 %v75, %v74
  %v85 = vpack.c.b16 %v77, %v76
  %v94 = vunpack.c.l.b16 %v34
  %v95 = vunpack.c.l.b16 %v35
  %v96 = vunpack.c.l.b16 %v36
  %v97 = vunpack.c.l.b16 %v37
  %v98 = vunpack.c.l.b16 %v38
  %v99 = vunpack.c.l.b16 %v39
  %v100 = vunpack.c.l.b16 %v40
  %v101 = vunpack.c.l.b16 %v41
  %v102 = vpack.c.b16 %v95, %v94
  %v103 = vpack.c.b16 %v97, %v96
  %v104 = vpack.c.b16 %v99, %v98
  %v105 = vpack.c.b16 %v101, %v100
  %vm110 = vcmask 523264
  %v112 = vsel %vm110, %v78, 0
  %v115 = vsel %vm110, %v79, 0
  %v118 = vsel %vm110, %v80, 0
  %v121 = vsel %vm110, %v81, 0
  %v124 = vsel %vm110, %v82, 0
  %v127 = vsel %vm110, %v83, 0
  %v130 = vsel %vm110, %v84, 0
  %v133 = vsel %vm110, %v85, 0
  %135 = vmatpush.bf16.msra.mxu0 0
  %136 = vmatpush.bf16.msra.mxu0 0
  %137 = vmatpush.bf16.msra.mxu0 0
  %138 = vmatpush.bf16.msra.mxu0 0
  %139 = vmatpush.bf16.msra.mxu0 %v105
  %140 = vmatpush.bf16.msra.mxu0 %v104
  %141 = vmatpush.bf16.msra.mxu0 %v103
  %142 = vmatpush.bf16.msra.mxu0 %v102
  %143 = vmatmul.bf16.gmra.mxu0 %v112
  %v144 = vpop.f32.mrf.mxu0
  %v145 = vadd.f32 %v44, %v144
  %v146 = vpop.f32.mrf.mxu0
  %v147 = vadd.f32 %v44, %v146
  %148 = vmatmul.bf16.gmra.mxu0 %v115
  %v149 = vpop.f32.mrf.mxu0
  %v150 = vadd.f32 %v44, %v149
  %v151 = vpop.f32.mrf.mxu0
  %v152 = vadd.f32 %v44, %v151
  %153 = vmatmul.bf16.gmra.mxu0 %v118
  %v154 = vpop.f32.mrf.mxu0
  %v155 = vadd.f32 %v44, %v154
  %v156 = vpop.f32.mrf.mxu0
  %v157 = vadd.f32 %v44, %v156
  %158 = vmatmul.bf16.gmra.mxu0 %v121
  %v159 = vpop.f32.mrf.mxu0
  %v160 = vadd.f32 %v44, %v159
  %v161 = vpop.f32.mrf.mxu0
  %v162 = vadd.f32 %v44, %v161
  %163 = vmatmul.bf16.gmra.mxu0 %v124
  %v164 = vpop.f32.mrf.mxu0
  %v165 = vadd.f32 %v44, %v164
  %v166 = vpop.f32.mrf.mxu0
  %v167 = vadd.f32 %v44, %v166
  %168 = vmatmul.bf16.gmra.mxu0 %v127
  %v169 = vpop.f32.mrf.mxu0
  %v170 = vadd.f32 %v44, %v169
  %v171 = vpop.f32.mrf.mxu0
  %v172 = vadd.f32 %v44, %v171
  %173 = vmatmul.bf16.gmra.mxu0 %v130
  %v174 = vpop.f32.mrf.mxu0
  %v175 = vadd.f32 %v44, %v174
  %v176 = vpop.f32.mrf.mxu0
  %v177 = vadd.f32 %v44, %v176
  %178 = vmatmul.bf16.gmra.mxu0 %v133
  %v179 = vpop.f32.mrf.mxu0
  %v180 = vadd.f32 %v44, %v179
  %v181 = vpop.f32.mrf.mxu0
  %v182 = vadd.f32 %v44, %v181
  %183 = vdwg.mxu0
  %v184 = vld [vmem:[%s3] sm:$0xff]
  %v185 = vld [vmem:[%s3 + $0x8] sm:$0xff]
  %v186 = vld [vmem:[%s3 + $0x10] sm:$0xff]
  %v187 = vld [vmem:[%s3 + $0x18] sm:$0xff]
  %v188 = vld [vmem:[%s3 + $0x20] sm:$0xff]
  %v189 = vld [vmem:[%s3 + $0x28] sm:$0xff]
  %v190 = vld [vmem:[%s3 + $0x30] sm:$0xff]
  %v191 = vld [vmem:[%s3 + $0x38] sm:$0xff]
  %v192 = vld [vmem:[%s3 + $0x40] sm:$0xff]
  %v193 = vld [vmem:[%s3 + $0x48] sm:$0xff]
  %v194 = vld [vmem:[%s3 + $0x50] sm:$0xff]
  %v195 = vld [vmem:[%s3 + $0x58] sm:$0xff]
  %v196 = vld [vmem:[%s3 + $0x60] sm:$0xff]
  %v197 = vld [vmem:[%s3 + $0x68] sm:$0xff]
  %v198 = vld [vmem:[%s3 + $0x70] sm:$0xff]
  %v199 = vld [vmem:[%s3 + $0x78] sm:$0xff]
  %v200 = vadd.f32 %v145, %v184
  %v201 = vadd.f32 %v147, %v185
  %v202 = vadd.f32 %v150, %v186
  %v203 = vadd.f32 %v152, %v187
  %v204 = vadd.f32 %v155, %v188
  %v205 = vadd.f32 %v157, %v189
  %v206 = vadd.f32 %v160, %v190
  %v207 = vadd.f32 %v162, %v191
  %v208 = vadd.f32 %v165, %v192
  %v209 = vadd.f32 %v167, %v193
  %v210 = vadd.f32 %v170, %v194
  %v211 = vadd.f32 %v172, %v195
  %v212 = vadd.f32 %v175, %v196
  %v213 = vadd.f32 %v177, %v197
  %v214 = vadd.f32 %v180, %v198
  %v215 = vadd.f32 %v182, %v199
  %v216 = vmax.f32 %v200, 0.0
  %v217 = vmax.f32 %v201, 0.0
  %v218 = vmax.f32 %v202, 0.0
  %v219 = vmax.f32 %v203, 0.0
  %v220 = vmax.f32 %v204, 0.0
  %v221 = vmax.f32 %v205, 0.0
  %v222 = vmax.f32 %v206, 0.0
  %v223 = vmax.f32 %v207, 0.0
  %v224 = vmax.f32 %v208, 0.0
  %v225 = vmax.f32 %v209, 0.0
  %v226 = vmax.f32 %v210, 0.0
  %v227 = vmax.f32 %v211, 0.0
  %v228 = vmax.f32 %v212, 0.0
  %v229 = vmax.f32 %v213, 0.0
  %v230 = vmax.f32 %v214, 0.0
  %v231 = vmax.f32 %v215, 0.0
  %232 = vst [vmem:[%s4] sm:$0xff] %v216
  %233 = vst [vmem:[%s4 + $0x8] sm:$0xff] %v217
  %234 = vst [vmem:[%s4 + $0x10] sm:$0xff] %v218
  %235 = vst [vmem:[%s4 + $0x18] sm:$0xff] %v219
  %236 = vst [vmem:[%s4 + $0x20] sm:$0xff] %v220
  %237 = vst [vmem:[%s4 + $0x28] sm:$0xff] %v221
  %238 = vst [vmem:[%s4 + $0x30] sm:$0xff] %v222
  %239 = vst [vmem:[%s4 + $0x38] sm:$0xff] %v223
  %240 = vst [vmem:[%s4 + $0x40] sm:$0xff] %v224
  %241 = vst [vmem:[%s4 + $0x48] sm:$0xff] %v225
  %242 = vst [vmem:[%s4 + $0x50] sm:$0xff] %v226
  %243 = vst [vmem:[%s4 + $0x58] sm:$0xff] %v227
  %244 = vst [vmem:[%s4 + $0x60] sm:$0xff] %v228
  %245 = vst [vmem:[%s4 + $0x68] sm:$0xff] %v229
  %246 = vst [vmem:[%s4 + $0x70] sm:$0xff] %v230
  %247 = vst [vmem:[%s4 + $0x78] sm:$0xff] %v231
  // Predicated region
  $region18: #{compentrans512_forward.28} parent=0 // pred_check
    _
  $region19: #{compentrans512_forward.28} parent=0 // pred_check_branch
    %249 = sbr.rel (0) target = $region21
  $region20: #{compentrans512_forward.28} parent=0 // pred_region
    _
  $region21: #{compentrans512_forward.28} parent=0 // pred_fallthru
    _
  // Predicated region
  $region22: #{compentrans512_forward.28} parent=0 // pred_check
    _
  $region23: #{compentrans512_forward.28} parent=0 // pred_check_branch
    %251 = sbr.rel (0) target = $region25
  $region24: #{compentrans512_forward.28} parent=0 // pred_region
    _
  $region25: #{compentrans512_forward.28} parent=0 // pred_fallthru
    _

// kernel: tile.38
$region0: #{tile.38}
  #allocation0 [shape = 's32[1]{0}', space=sflag, size = 0x4, scoped, tag = 'scoped memory for tile.38']
  %s0 = inlined_call_operand.vmem [shape: f32[3], index: 0, kind: input, shape index: {}]
  %s1 = inlined_call_operand.vmem [shape: f32[4,3], index: 1, kind: output, shape index: {}]
  // Predicated region
  $region2: #{tile.38} parent=0 // pred_check
    _
  $region3: #{tile.38} parent=0 // pred_check_branch
    %3 = sbr.rel (0) target = $region5
  $region4: #{tile.38} parent=0 // pred_region
    _
  $region5: #{tile.38} parent=0 // pred_fallthru
    _
  %v4 = vld [vmem:[%s0] ss:$0 sm:$0xff]
  %5 = vst [vmem:[%s1] sm:$0xf] %v4

// kernel: tile.39
$region0: #{tile.39}
  %s0 = inlined_call_operand.vmem [shape: f32[4,3], index: 0, kind: input, shape index: {}]
  %s1 = inlined_call_operand.vmem [shape: f32[1,12], index: 1, kind: output, shape index: {}]
  $region1: #{tile.39} parent=0
    #allocation0 [shape = 'u8[4096]{0}', space=vmem, size = 0x1000, scoped, tag = 'scoped mem for output reshape']
    #allocation1 [shape = 'u8[4096]{0}', space=vmem, size = 0x1000, scoped, tag = 'scoped mem for input reshape']
    %s3 = ssub.s32 16, 1
    %v4 = vld [vmem:[%s0] sm:%s3]
    %5 = vst [vmem:[#allocation1] sm:%s3] %v4
    %v6 = vld [vmem:[#allocation1] sm:$0x1]
    %vm7 = vcmask 23552
    %8 = vst.msk [vmem:[#allocation0] sm:$0x1] %vm7, %v6
    %s9 = scalar_lea.vmem [#allocation1], 3
    %v10 = vld [vmem:[%s9] sm:$0x1]
    %11 = vrot.lane.b32.xlu0 %v10, 9
    %v12 = vpop.permute.xlu0 %11
    %vm13 = vcmask 97352
    %14 = vst.msk [vmem:[#allocation0] sm:$0x1] %vm13, %v12
    %s15 = scalar_lea.vmem [#allocation1], 2
    %v16 = vld [vmem:[%s15] sm:$0x1]
    %17 = vrot.lane.b32.xlu0 %v16, 6
    %v18 = vpop.permute.xlu0 %17
    %vm19 = vcmask 72752
    %20 = vst.msk [vmem:[#allocation0] sm:$0x1] %vm19, %v18
    %s21 = scalar_lea.vmem [#allocation1], 1
    %v22 = vld [vmem:[%s21] sm:$0x1]
    %23 = vrot.lane.b32.xlu0 %v22, 3
    %v24 = vpop.permute.xlu0 %23
    %vm25 = vcmask 48152
    %26 = vst.msk [vmem:[#allocation0] sm:$0x1] %vm25, %v24
    %s28 = ssub.s32 2, 1
    %v29 = vld [vmem:[#allocation0] sm:%s28]
    %s31 = ssub.s32 2, 1
    %32 = vst [vmem:[%s1] sm:%s31] %v29

// kernel: compentrans512_forward.29
$region0: #{compentrans512_forward.29}
  #allocation0 [shape = 'u32[]', space=smem, size = 0x4, offset = 0x4, fixed_abs, tag = 'smem constant byte address 0x4 - core index']
  #allocation1 [shape = 'u32[72,128]{1,0:T(1,128)}', space=vmem, size = 0x9000, scoped, tag = 'internal scratch']
  %s0 = inlined_call_operand.vmem [shape: bf16[512,32], index: 0, kind: input, shape index: {}]
  %s1 = inlined_call_operand.vmem [shape: bf16[32,12], index: 1, kind: input, shape index: {}]
  %s2 = inlined_call_operand.vmem [shape: f32[1,12], index: 2, kind: input, shape index: {}]
  %s3 = inlined_call_operand.vmem [shape: f32[512,12], index: 3, kind: output, shape index: {}]
  %s4 = sld [smem:[#allocation0]]
  $region22: #{compentrans512_forward.29} parent=0
    _
  %s6 = ssub.s32 1, %s4
  %s7 = scalar_select 0, %s6, %s4
  // Predicated region
  $region2: #{compentrans512_forward.29} parent=0 // pred_check
    _
  $region3: #{compentrans512_forward.29} parent=0 // pred_check_branch
    %9 = sbr.rel (0) target = $region5
  $region4: #{compentrans512_forward.29} parent=0 // pred_region
    _
  $region5: #{compentrans512_forward.29} parent=0 // pred_fallthru
    _
  // Predicated region
  $region6: #{compentrans512_forward.29} parent=0 // pred_check
    _
  $region7: #{compentrans512_forward.29} parent=0 // pred_check_branch
    %11 = sbr.rel (0) target = $region9
  $region8: #{compentrans512_forward.29} parent=0 // pred_region
    _
  $region9: #{compentrans512_forward.29} parent=0 // pred_fallthru
    _
  // Predicated region
  $region10: #{compentrans512_forward.29} parent=0 // pred_check
    _
  $region11: #{compentrans512_forward.29} parent=0 // pred_check_branch
    %13 = sbr.rel (0) target = $region13
  $region12: #{compentrans512_forward.29} parent=0 // pred_region
    _
  $region13: #{compentrans512_forward.29} parent=0 // pred_fallthru
    _
  %v15 = vld [vmem:[%s0] sm:$0xf]
  %v16 = vld [vmem:[%s0 + $0x4] sm:$0xf]
  %v17 = vld [vmem:[%s0 + $0x8] sm:$0xf]
  %v18 = vld [vmem:[%s0 + $0xc] sm:$0xf]
  %v19 = vld [vmem:[%s0 + $0x10] sm:$0xf]
  %v20 = vld [vmem:[%s0 + $0x14] sm:$0xf]
  %v21 = vld [vmem:[%s0 + $0x18] sm:$0xf]
  %v22 = vld [vmem:[%s0 + $0x1c] sm:$0xf]
  %v23 = vld [vmem:[%s0 + $0x20] sm:$0xf]
  %v24 = vld [vmem:[%s0 + $0x24] sm:$0xf]
  %v25 = vld [vmem:[%s0 + $0x28] sm:$0xf]
  %v26 = vld [vmem:[%s0 + $0x2c] sm:$0xf]
  %v27 = vld [vmem:[%s0 + $0x30] sm:$0xf]
  %v28 = vld [vmem:[%s0 + $0x34] sm:$0xf]
  %v29 = vld [vmem:[%s0 + $0x38] sm:$0xf]
  %v30 = vld [vmem:[%s0 + $0x3c] sm:$0xf]
  %v31 = vld [vmem:[%s0 + $0x40] sm:$0xf]
  %v32 = vld [vmem:[%s0 + $0x44] sm:$0xf]
  %v33 = vld [vmem:[%s0 + $0x48] sm:$0xf]
  %v34 = vld [vmem:[%s0 + $0x4c] sm:$0xf]
  %v35 = vld [vmem:[%s0 + $0x50] sm:$0xf]
  %v36 = vld [vmem:[%s0 + $0x54] sm:$0xf]
  %v37 = vld [vmem:[%s0 + $0x58] sm:$0xf]
  %v38 = vld [vmem:[%s0 + $0x5c] sm:$0xf]
  %v39 = vld [vmem:[%s0 + $0x60] sm:$0xf]
  %v40 = vld [vmem:[%s0 + $0x64] sm:$0xf]
  %v41 = vld [vmem:[%s0 + $0x68] sm:$0xf]
  %v42 = vld [vmem:[%s0 + $0x6c] sm:$0xf]
  %v43 = vld [vmem:[%s0 + $0x70] sm:$0xf]
  %v44 = vld [vmem:[%s0 + $0x74] sm:$0xf]
  %v45 = vld [vmem:[%s0 + $0x78] sm:$0xf]
  %v46 = vld [vmem:[%s0 + $0x7c] sm:$0xf]
  %v47 = vld [vmem:[%s0 + $0x80] sm:$0xf]
  %v48 = vld [vmem:[%s0 + $0x84] sm:$0xf]
  %v49 = vld [vmem:[%s0 + $0x88] sm:$0xf]
  %v50 = vld [vmem:[%s0 + $0x8c] sm:$0xf]
  %v51 = vld [vmem:[%s0 + $0x90] sm:$0xf]
  %v52 = vld [vmem:[%s0 + $0x94] sm:$0xf]
  %v53 = vld [vmem:[%s0 + $0x98] sm:$0xf]
  %v54 = vld [vmem:[%s0 + $0x9c] sm:$0xf]
  %v55 = vld [vmem:[%s0 + $0xa0] sm:$0xf]
  %v56 = vld [vmem:[%s0 + $0xa4] sm:$0xf]
  %v57 = vld [vmem:[%s0 + $0xa8] sm:$0xf]
  %v58 = vld [vmem:[%s0 + $0xac] sm:$0xf]
  %v59 = vld [vmem:[%s0 + $0xb0] sm:$0xf]
  %v60 = vld [vmem:[%s0 + $0xb4] sm:$0xf]
  %v61 = vld [vmem:[%s0 + $0xb8] sm:$0xf]
  %v62 = vld [vmem:[%s0 + $0xbc] sm:$0xf]
  %v63 = vld [vmem:[%s0 + $0xc0] sm:$0xf]
  %v64 = vld [vmem:[%s0 + $0xc4] sm:$0xf]
  %v65 = vld [vmem:[%s0 + $0xc8] sm:$0xf]
  %v66 = vld [vmem:[%s0 + $0xcc] sm:$0xf]
  %v67 = vld [vmem:[%s0 + $0xd0] sm:$0xf]
  %v68 = vld [vmem:[%s0 + $0xd4] sm:$0xf]
  %v69 = vld [vmem:[%s0 + $0xd8] sm:$0xf]
  %v70 = vld [vmem:[%s0 + $0xdc] sm:$0xf]
  %v71 = vld [vmem:[%s0 + $0xe0] sm:$0xf]
  %v72 = vld [vmem:[%s0 + $0xe4] sm:$0xf]
  %v73 = vld [vmem:[%s0 + $0xe8] sm:$0xf]
  %v74 = vld [vmem:[%s0 + $0xec] sm:$0xf]
  %v75 = vld [vmem:[%s0 + $0xf0] sm:$0xf]
  %v76 = vld [vmem:[%s0 + $0xf4] sm:$0xf]
  %v77 = vld [vmem:[%s0 + $0xf8] sm:$0xf]
  %v78 = vld [vmem:[%s0 + $0xfc] sm:$0xf]
  %v79 = vld [vmem:[%s1] sm:$0xf]
  %v80 = vld [vmem:[%s1 + $0x4] sm:$0xf]
  %v81 = vld [vmem:[%s1 + $0x8] sm:$0xf]
  %v82 = vld [vmem:[%s1 + $0xc] sm:$0xf]
  %v83 = vld [vmem:[%s2] sm:$0x1]
  %v85 = vperm.slane %v83, 0
  %v151 = vunpack.c.l.b16 %v15
  %v152 = vunpack.c.l.b16 %v16
  %v153 = vunpack.c.l.b16 %v17
  %v154 = vunpack.c.l.b16 %v18
  %v155 = vunpack.c.l.b16 %v19
  %v156 = vunpack.c.l.b16 %v20
  %v157 = vunpack.c.l.b16 %v21
  %v158 = vunpack.c.l.b16 %v22
  %v159 = vunpack.c.l.b16 %v23
  %v160 = vunpack.c.l.b16 %v24
  %v161 = vunpack.c.l.b16 %v25
  %v162 = vunpack.c.l.b16 %v26
  %v163 = vunpack.c.l.b16 %v27
  %v164 = vunpack.c.l.b16 %v28
  %v165 = vunpack.c.l.b16 %v29
  %v166 = vunpack.c.l.b16 %v30
  %v167 = vunpack.c.l.b16 %v31
  %v168 = vunpack.c.l.b16 %v32
  %v169 = vunpack.c.l.b16 %v33
  %v170 = vunpack.c.l.b16 %v34
  %v171 = vunpack.c.l.b16 %v35
  %v172 = vunpack.c.l.b16 %v36
  %v173 = vunpack.c.l.b16 %v37
  %v174 = vunpack.c.l.b16 %v38
  %v175 = vunpack.c.l.b16 %v39
  %v176 = vunpack.c.l.b16 %v40
  %v177 = vunpack.c.l.b16 %v41
  %v178 = vunpack.c.l.b16 %v42
  %v179 = vunpack.c.l.b16 %v43
  %v180 = vunpack.c.l.b16 %v44
  %v181 = vunpack.c.l.b16 %v45
  %v182 = vunpack.c.l.b16 %v46
  %v183 = vunpack.c.l.b16 %v47
  %v184 = vunpack.c.l.b16 %v48
  %v185 = vunpack.c.l.b16 %v49
  %v186 = vunpack.c.l.b16 %v50
  %v187 = vunpack.c.l.b16 %v51
  %v188 = vunpack.c.l.b16 %v52
  %v189 = vunpack.c.l.b16 %v53
  %v190 = vunpack.c.l.b16 %v54
  %v191 = vunpack.c.l.b16 %v55
  %v192 = vunpack.c.l.b16 %v56
  %v193 = vunpack.c.l.b16 %v57
  %v194 = vunpack.c.l.b16 %v58
  %v195 = vunpack.c.l.b16 %v59
  %v196 = vunpack.c.l.b16 %v60
  %v197 = vunpack.c.l.b16 %v61
  %v198 = vunpack.c.l.b16 %v62
  %v199 = vunpack.c.l.b16 %v63
  %v200 = vunpack.c.l.b16 %v64
  %v201 = vunpack.c.l.b16 %v65
  %v202 = vunpack.c.l.b16 %v66
  %v203 = vunpack.c.l.b16 %v67
  %v204 = vunpack.c.l.b16 %v68
  %v205 = vunpack.c.l.b16 %v69
  %v206 = vunpack.c.l.b16 %v70
  %v207 = vunpack.c.l.b16 %v71
  %v208 = vunpack.c.l.b16 %v72
  %v209 = vunpack.c.l.b16 %v73
  %v210 = vunpack.c.l.b16 %v74
  %v211 = vunpack.c.l.b16 %v75
  %v212 = vunpack.c.l.b16 %v76
  %v213 = vunpack.c.l.b16 %v77
  %v214 = vunpack.c.l.b16 %v78
  %v215 = vpack.c.b16 %v152, %v151
  %v216 = vpack.c.b16 %v154, %v153
  %v217 = vpack.c.b16 %v156, %v155
  %v218 = vpack.c.b16 %v158, %v157
  %v219 = vpack.c.b16 %v160, %v159
  %v220 = vpack.c.b16 %v162, %v161
  %v221 = vpack.c.b16 %v164, %v163
  %v222 = vpack.c.b16 %v166, %v165
  %v223 = vpack.c.b16 %v168, %v167
  %v224 = vpack.c.b16 %v170, %v169
  %v225 = vpack.c.b16 %v172, %v171
  %v226 = vpack.c.b16 %v174, %v173
  %v227 = vpack.c.b16 %v176, %v175
  %v228 = vpack.c.b16 %v178, %v177
  %v229 = vpack.c.b16 %v180, %v179
  %v230 = vpack.c.b16 %v182, %v181
  %v231 = vpack.c.b16 %v184, %v183
  %v232 = vpack.c.b16 %v186, %v185
  %v233 = vpack.c.b16 %v188, %v187
  %v234 = vpack.c.b16 %v190, %v189
  %v235 = vpack.c.b16 %v192, %v191
  %v236 = vpack.c.b16 %v194, %v193
  %v237 = vpack.c.b16 %v196, %v195
  %v238 = vpack.c.b16 %v198, %v197
  %v239 = vpack.c.b16 %v200, %v199
  %v240 = vpack.c.b16 %v202, %v201
  %v241 = vpack.c.b16 %v204, %v203
  %v242 = vpack.c.b16 %v206, %v205
  %v243 = vpack.c.b16 %v208, %v207
  %v244 = vpack.c.b16 %v210, %v209
  %v245 = vpack.c.b16 %v212, %v211
  %v246 = vpack.c.b16 %v214, %v213
  %v251 = vunpack.c.l.b16 %v79
  %v252 = vunpack.c.l.b16 %v80
  %v253 = vunpack.c.l.b16 %v81
  %v254 = vunpack.c.l.b16 %v82
  %v255 = vpack.c.b16 %v252, %v251
  %v256 = vpack.c.b16 %v254, %v253
  %vm259 = vcmask 261120
  %v261 = vsel %vm259, %v215, 0
  %v264 = vsel %vm259, %v216, 0
  %v267 = vsel %vm259, %v217, 0
  %v270 = vsel %vm259, %v218, 0
  %v273 = vsel %vm259, %v219, 0
  %v276 = vsel %vm259, %v220, 0
  %v279 = vsel %vm259, %v221, 0
  %v282 = vsel %vm259, %v222, 0
  %v285 = vsel %vm259, %v223, 0
  %v288 = vsel %vm259, %v224, 0
  %v291 = vsel %vm259, %v225, 0
  %v294 = vsel %vm259, %v226, 0
  %v297 = vsel %vm259, %v227, 0
  %v300 = vsel %vm259, %v228, 0
  %v303 = vsel %vm259, %v229, 0
  %v306 = vsel %vm259, %v230, 0
  %v309 = vsel %vm259, %v231, 0
  %v312 = vsel %vm259, %v232, 0
  %v315 = vsel %vm259, %v233, 0
  %v318 = vsel %vm259, %v234, 0
  %v321 = vsel %vm259, %v235, 0
  %v324 = vsel %vm259, %v236, 0
  %v327 = vsel %vm259, %v237, 0
  %v330 = vsel %vm259, %v238, 0
  %v333 = vsel %vm259, %v239, 0
  %v336 = vsel %vm259, %v240, 0
  %v339 = vsel %vm259, %v241, 0
  %v342 = vsel %vm259, %v242, 0
  %v345 = vsel %vm259, %v243, 0
  %v348 = vsel %vm259, %v244, 0
  %v351 = vsel %vm259, %v245, 0
  %v354 = vsel %vm259, %v246, 0
  %356 = vmatpush.bf16.msra.mxu0 0
  %357 = vmatpush.bf16.msra.mxu0 0
  %358 = vmatpush.bf16.msra.mxu0 0
  %359 = vmatpush.bf16.msra.mxu0 0
  %360 = vmatpush.bf16.msra.mxu0 0
  %361 = vmatpush.bf16.msra.mxu0 0
  %362 = vmatpush.bf16.msra.mxu0 %v256
  %363 = vmatpush.bf16.msra.mxu0 %v255
  %364 = vmatmul.bf16.gmra.mxu0 %v261
  %v365 = vpop.f32.mrf.mxu0
  %v366 = vadd.f32 %v85, %v365
  %v367 = vpop.f32.mrf.mxu0
  %v368 = vadd.f32 %v85, %v367
  %369 = vmatmul.bf16.gmra.mxu0 %v264
  %v370 = vpop.f32.mrf.mxu0
  %v371 = vadd.f32 %v85, %v370
  %v372 = vpop.f32.mrf.mxu0
  %v373 = vadd.f32 %v85, %v372
  %374 = vmatmul.bf16.gmra.mxu0 %v267
  %v375 = vpop.f32.mrf.mxu0
  %v376 = vadd.f32 %v85, %v375
  %v377 = vpop.f32.mrf.mxu0
  %v378 = vadd.f32 %v85, %v377
  %379 = vmatmul.bf16.gmra.mxu0 %v270
  %v380 = vpop.f32.mrf.mxu0
  %v381 = vadd.f32 %v85, %v380
  %v382 = vpop.f32.mrf.mxu0
  %v383 = vadd.f32 %v85, %v382
  %384 = vmatmul.bf16.gmra.mxu0 %v273
  %v385 = vpop.f32.mrf.mxu0
  %v386 = vadd.f32 %v85, %v385
  %v387 = vpop.f32.mrf.mxu0
  %v388 = vadd.f32 %v85, %v387
  %389 = vmatmul.bf16.gmra.mxu0 %v276
  %v390 = vpop.f32.mrf.mxu0
  %v391 = vadd.f32 %v85, %v390
  %v392 = vpop.f32.mrf.mxu0
  %v393 = vadd.f32 %v85, %v392
  %394 = vmatmul.bf16.gmra.mxu0 %v279
  %v395 = vpop.f32.mrf.mxu0
  %v396 = vadd.f32 %v85, %v395
  %v397 = vpop.f32.mrf.mxu0
  %v398 = vadd.f32 %v85, %v397
  %399 = vmatmul.bf16.gmra.mxu0 %v282
  %v400 = vpop.f32.mrf.mxu0
  %v401 = vadd.f32 %v85, %v400
  %v402 = vpop.f32.mrf.mxu0
  %v403 = vadd.f32 %v85, %v402
  %404 = vmatmul.bf16.gmra.mxu0 %v285
  %v405 = vpop.f32.mrf.mxu0
  %v406 = vadd.f32 %v85, %v405
  %v407 = vpop.f32.mrf.mxu0
  %v408 = vadd.f32 %v85, %v407
  %409 = vmatmul.bf16.gmra.mxu0 %v288
  %v410 = vpop.f32.mrf.mxu0
  %v411 = vadd.f32 %v85, %v410
  %v412 = vpop.f32.mrf.mxu0
  %v413 = vadd.f32 %v85, %v412
  %414 = vmatmul.bf16.gmra.mxu0 %v291
  %v415 = vpop.f32.mrf.mxu0
  %v416 = vadd.f32 %v85, %v415
  %v417 = vpop.f32.mrf.mxu0
  %v418 = vadd.f32 %v85, %v417
  %419 = vmatmul.bf16.gmra.mxu0 %v294
  %v420 = vpop.f32.mrf.mxu0
  %v421 = vadd.f32 %v85, %v420
  %v422 = vpop.f32.mrf.mxu0
  %v423 = vadd.f32 %v85, %v422
  %424 = vmatmul.bf16.gmra.mxu0 %v297
  %v425 = vpop.f32.mrf.mxu0
  %v426 = vadd.f32 %v85, %v425
  %v427 = vpop.f32.mrf.mxu0
  %v428 = vadd.f32 %v85, %v427
  %429 = vmatmul.bf16.gmra.mxu0 %v300
  %v430 = vpop.f32.mrf.mxu0
  %v431 = vadd.f32 %v85, %v430
  %v432 = vpop.f32.mrf.mxu0
  %v433 = vadd.f32 %v85, %v432
  %434 = vmatmul.bf16.gmra.mxu0 %v303
  %v435 = vpop.f32.mrf.mxu0
  %v436 = vadd.f32 %v85, %v435
  %v437 = vpop.f32.mrf.mxu0
  %v438 = vadd.f32 %v85, %v437
  %439 = vmatmul.bf16.gmra.mxu0 %v306
  %v440 = vpop.f32.mrf.mxu0
  %v441 = vadd.f32 %v85, %v440
  %v442 = vpop.f32.mrf.mxu0
  %v443 = vadd.f32 %v85, %v442
  %444 = vmatmul.bf16.gmra.mxu0 %v309
  %v445 = vpop.f32.mrf.mxu0
  %v446 = vadd.f32 %v85, %v445
  %v447 = vpop.f32.mrf.mxu0
  %v448 = vadd.f32 %v85, %v447
  %449 = vmatmul.bf16.gmra.mxu0 %v312
  %v450 = vpop.f32.mrf.mxu0
  %v451 = vadd.f32 %v85, %v450
  %v452 = vpop.f32.mrf.mxu0
  %v453 = vadd.f32 %v85, %v452
  %454 = vmatmul.bf16.gmra.mxu0 %v315
  %v455 = vpop.f32.mrf.mxu0
  %v456 = vadd.f32 %v85, %v455
  %v457 = vpop.f32.mrf.mxu0
  %v458 = vadd.f32 %v85, %v457
  %459 = vmatmul.bf16.gmra.mxu0 %v318
  %v460 = vpop.f32.mrf.mxu0
  %v461 = vadd.f32 %v85, %v460
  %v462 = vpop.f32.mrf.mxu0
  %v463 = vadd.f32 %v85, %v462
  %464 = vmatmul.bf16.gmra.mxu0 %v321
  %v465 = vpop.f32.mrf.mxu0
  %v466 = vadd.f32 %v85, %v465
  %v467 = vpop.f32.mrf.mxu0
  %v468 = vadd.f32 %v85, %v467
  %469 = vmatmul.bf16.gmra.mxu0 %v324
  %v470 = vpop.f32.mrf.mxu0
  %v471 = vadd.f32 %v85, %v470
  %v472 = vpop.f32.mrf.mxu0
  %v473 = vadd.f32 %v85, %v472
  %474 = vmatmul.bf16.gmra.mxu0 %v327
  %v475 = vpop.f32.mrf.mxu0
  %v476 = vadd.f32 %v85, %v475
  %v477 = vpop.f32.mrf.mxu0
  %v478 = vadd.f32 %v85, %v477
  %479 = vmatmul.bf16.gmra.mxu0 %v330
  %v480 = vpop.f32.mrf.mxu0
  %v481 = vadd.f32 %v85, %v480
  %v482 = vpop.f32.mrf.mxu0
  %v483 = vadd.f32 %v85, %v482
  %484 = vmatmul.bf16.gmra.mxu0 %v333
  %v485 = vpop.f32.mrf.mxu0
  %v486 = vadd.f32 %v85, %v485
  %v487 = vpop.f32.mrf.mxu0
  %v488 = vadd.f32 %v85, %v487
  %489 = vmatmul.bf16.gmra.mxu0 %v336
  %v490 = vpop.f32.mrf.mxu0
  %v491 = vadd.f32 %v85, %v490
  %v492 = vpop.f32.mrf.mxu0
  %v493 = vadd.f32 %v85, %v492
  %494 = vmatmul.bf16.gmra.mxu0 %v339
  %v495 = vpop.f32.mrf.mxu0
  %v496 = vadd.f32 %v85, %v495
  %v497 = vpop.f32.mrf.mxu0
  %v498 = vadd.f32 %v85, %v497
  %499 = vmatmul.bf16.gmra.mxu0 %v342
  %v500 = vpop.f32.mrf.mxu0
  %v501 = vadd.f32 %v85, %v500
  %v502 = vpop.f32.mrf.mxu0
  %v503 = vadd.f32 %v85, %v502
  %504 = vmatmul.bf16.gmra.mxu0 %v345
  %v505 = vpop.f32.mrf.mxu0
  %v506 = vadd.f32 %v85, %v505
  %v507 = vpop.f32.mrf.mxu0
  %v508 = vadd.f32 %v85, %v507
  %509 = vmatmul.bf16.gmra.mxu0 %v348
  %v510 = vpop.f32.mrf.mxu0
  %v511 = vadd.f32 %v85, %v510
  %v512 = vpop.f32.mrf.mxu0
  %v513 = vadd.f32 %v85, %v512
  %514 = vmatmul.bf16.gmra.mxu0 %v351
  %v515 = vpop.f32.mrf.mxu0
  %v516 = vadd.f32 %v85, %v515
  %v517 = vpop.f32.mrf.mxu0
  %v518 = vadd.f32 %v85, %v517
  %519 = vmatmul.bf16.gmra.mxu0 %v354
  %v520 = vpop.f32.mrf.mxu0
  %v521 = vadd.f32 %v85, %v520
  %v522 = vpop.f32.mrf.mxu0
  %v523 = vadd.f32 %v85, %v522
  %524 = vdwg.mxu0
  %v525 = vmax.f32 %v366, 0.0
  %v526 = vmax.f32 %v368, 0.0
  %v527 = vmax.f32 %v371, 0.0
  %v528 = vmax.f32 %v373, 0.0
  %v529 = vmax.f32 %v376, 0.0
  %v530 = vmax.f32 %v378, 0.0
  %v531 = vmax.f32 %v381, 0.0
  %v532 = vmax.f32 %v383, 0.0
  %v533 = vmax.f32 %v386, 0.0
  %v534 = vmax.f32 %v388, 0.0
  %v535 = vmax.f32 %v391, 0.0
  %v536 = vmax.f32 %v393, 0.0
  %v537 = vmax.f32 %v396, 0.0
  %v538 = vmax.f32 %v398, 0.0
  %v539 = vmax.f32 %v401, 0.0
  %v540 = vmax.f32 %v403, 0.0
  %v541 = vmax.f32 %v406, 0.0
  %v542 = vmax.f32 %v408, 0.0
  %v543 = vmax.f32 %v411, 0.0
  %v544 = vmax.f32 %v413, 0.0
  %v545 = vmax.f32 %v416, 0.0
  %v546 = vmax.f32 %v418, 0.0
  %v547 = vmax.f32 %v421, 0.0
  %v548 = vmax.f32 %v423, 0.0
  %v549 = vmax.f32 %v426, 0.0
  %v550 = vmax.f32 %v428, 0.0
  %v551 = vmax.f32 %v431, 0.0
  %v552 = vmax.f32 %v433, 0.0
  %v553 = vmax.f32 %v436, 0.0
  %v554 = vmax.f32 %v438, 0.0
  %v555 = vmax.f32 %v441, 0.0
  %v556 = vmax.f32 %v443, 0.0
  %v557 = vmax.f32 %v446, 0.0
  %v558 = vmax.f32 %v448, 0.0
  %v559 = vmax.f32 %v451, 0.0
  %v560 = vmax.f32 %v453, 0.0
  %v561 = vmax.f32 %v456, 0.0
  %v562 = vmax.f32 %v458, 0.0
  %v563 = vmax.f32 %v461, 0.0
  %v564 = vmax.f32 %v463, 0.0
  %v565 = vmax.f32 %v466, 0.0
  %v566 = vmax.f32 %v468, 0.0
  %v567 = vmax.f32 %v471, 0.0
  %v568 = vmax.f32 %v473, 0.0
  %v569 = vmax.f32 %v476, 0.0
  %v570 = vmax.f32 %v478, 0.0
  %v571 = vmax.f32 %v481, 0.0
  %v572 = vmax.f32 %v483, 0.0
  %v573 = vmax.f32 %v486, 0.0
  %v574 = vmax.f32 %v488, 0.0
  %v575 = vmax.f32 %v491, 0.0
  %v576 = vmax.f32 %v493, 0.0
  %v577 = vmax.f32 %v496, 0.0
  %v578 = vmax.f32 %v498, 0.0
  %v579 = vmax.f32 %v501, 0.0
  %v580 = vmax.f32 %v503, 0.0
  %v581 = vmax.f32 %v506, 0.0
  %v582 = vmax.f32 %v508, 0.0
  %v583 = vmax.f32 %v511, 0.0
  %v584 = vmax.f32 %v513, 0.0
  %v585 = vmax.f32 %v516, 0.0
  %v586 = vmax.f32 %v518, 0.0
  %v587 = vmax.f32 %v521, 0.0
  %v588 = vmax.f32 %v523, 0.0
  %v589 = vmin.f32 %v525, 1.0
  %v590 = vmin.f32 %v526, 1.0
  %v591 = vmin.f32 %v527, 1.0
  %v592 = vmin.f32 %v528, 1.0
  %v593 = vmin.f32 %v529, 1.0
  %v594 = vmin.f32 %v530, 1.0
  %v595 = vmin.f32 %v531, 1.0
  %v596 = vmin.f32 %v532, 1.0
  %v597 = vmin.f32 %v533, 1.0
  %v598 = vmin.f32 %v534, 1.0
  %v599 = vmin.f32 %v535, 1.0
  %v600 = vmin.f32 %v536, 1.0
  %v601 = vmin.f32 %v537, 1.0
  %v602 = vmin.f32 %v538, 1.0
  %v603 = vmin.f32 %v539, 1.0
  %v604 = vmin.f32 %v540, 1.0
  %v605 = vmin.f32 %v541, 1.0
  %v606 = vmin.f32 %v542, 1.0
  %v607 = vmin.f32 %v543, 1.0
  %v608 = vmin.f32 %v544, 1.0
  %v609 = vmin.f32 %v545, 1.0
  %v610 = vmin.f32 %v546, 1.0
  %v611 = vmin.f32 %v547, 1.0
  %v612 = vmin.f32 %v548, 1.0
  %v613 = vmin.f32 %v549, 1.0
  %v614 = vmin.f32 %v550, 1.0
  %v615 = vmin.f32 %v551, 1.0
  %v616 = vmin.f32 %v552, 1.0
  %v617 = vmin.f32 %v553, 1.0
  %v618 = vmin.f32 %v554, 1.0
  %v619 = vmin.f32 %v555, 1.0
  %v620 = vmin.f32 %v556, 1.0
  %v621 = vmin.f32 %v557, 1.0
  %v622 = vmin.f32 %v558, 1.0
  %v623 = vmin.f32 %v559, 1.0
  %v624 = vmin.f32 %v560, 1.0
  %v625 = vmin.f32 %v561, 1.0
  %v626 = vmin.f32 %v562, 1.0
  %v627 = vmin.f32 %v563, 1.0
  %v628 = vmin.f32 %v564, 1.0
  %v629 = vmin.f32 %v565, 1.0
  %v630 = vmin.f32 %v566, 1.0
  %v631 = vmin.f32 %v567, 1.0
  %v632 = vmin.f32 %v568, 1.0
  %v633 = vmin.f32 %v569, 1.0
  %v634 = vmin.f32 %v570, 1.0
  %v635 = vmin.f32 %v571, 1.0
  %v636 = vmin.f32 %v572, 1.0
  %v637 = vmin.f32 %v573, 1.0
  %v638 = vmin.f32 %v574, 1.0
  %v639 = vmin.f32 %v575, 1.0
  %v640 = vmin.f32 %v576, 1.0
  %v641 = vmin.f32 %v577, 1.0
  %v642 = vmin.f32 %v578, 1.0
  %v643 = vmin.f32 %v579, 1.0
  %v644 = vmin.f32 %v580, 1.0
  %v645 = vmin.f32 %v581, 1.0
  %v646 = vmin.f32 %v582, 1.0
  %v647 = vmin.f32 %v583, 1.0
  %v648 = vmin.f32 %v584, 1.0
  %v649 = vmin.f32 %v585, 1.0
  %v650 = vmin.f32 %v586, 1.0
  %v651 = vmin.f32 %v587, 1.0
  %v652 = vmin.f32 %v588, 1.0
  %vm653 = vcmask 97280
  %654 = vst.msk [vmem:[%s3] sm:$0xff] %vm653, %v589
  %655 = vst.msk [vmem:[%s3 + $0x8] sm:$0xff] %vm653, %v590
  %656 = vst.msk [vmem:[%s3 + $0x10] sm:$0xff] %vm653, %v591
  %657 = vst.msk [vmem:[%s3 + $0x18] sm:$0xff] %vm653, %v592
  %658 = vst.msk [vmem:[%s3 + $0x20] sm:$0xff] %vm653, %v593
  %659 = vst.msk [vmem:[%s3 + $0x28] sm:$0xff] %vm653, %v594
  %660 = vst.msk [vmem:[%s3 + $0x30] sm:$0xff] %vm653, %v595
  %661 = vst.msk [vmem:[%s3 + $0x38] sm:$0xff] %vm653, %v596
  %662 = vst.msk [vmem:[%s3 + $0x40] sm:$0xff] %vm653, %v597
  %663 = vst.msk [vmem:[%s3 + $0x48] sm:$0xff] %vm653, %v598
  %664 = vst.msk [vmem:[%s3 + $0x50] sm:$0xff] %vm653, %v599
  %665 = vst.msk [vmem:[%s3 + $0x58] sm:$0xff] %vm653, %v600
  %666 = vst.msk [vmem:[%s3 + $0x60] sm:$0xff] %vm653, %v601
  %667 = vst.msk [vmem:[%s3 + $0x68] sm:$0xff] %vm653, %v602
  %668 = vst.msk [vmem:[%s3 + $0x70] sm:$0xff] %vm653, %v603
  %669 = vst.msk [vmem:[%s3 + $0x78] sm:$0xff] %vm653, %v604
  %670 = vst.msk [vmem:[%s3 + $0x80] sm:$0xff] %vm653, %v605
  %671 = vst.msk [vmem:[%s3 + $0x88] sm:$0xff] %vm653, %v606
  %672 = vst.msk [vmem:[%s3 + $0x90] sm:$0xff] %vm653, %v607
  %673 = vst.msk [vmem:[%s3 + $0x98] sm:$0xff] %vm653, %v608
  %674 = vst.msk [vmem:[%s3 + $0xa0] sm:$0xff] %vm653, %v609
  %675 = vst.msk [vmem:[%s3 + $0xa8] sm:$0xff] %vm653, %v610
  %676 = vst.msk [vmem:[%s3 + $0xb0] sm:$0xff] %vm653, %v611
  %677 = vst.msk [vmem:[%s3 + $0xb8] sm:$0xff] %vm653, %v612
  %678 = vst.msk [vmem:[%s3 + $0xc0] sm:$0xff] %vm653, %v613
  %679 = vst.msk [vmem:[%s3 + $0xc8] sm:$0xff] %vm653, %v614
  %680 = vst.msk [vmem:[%s3 + $0xd0] sm:$0xff] %vm653, %v615
  %681 = vst.msk [vmem:[%s3 + $0xd8] sm:$0xff] %vm653, %v616
  %682 = vst.msk [vmem:[%s3 + $0xe0] sm:$0xff] %vm653, %v617
  %683 = vst.msk [vmem:[%s3 + $0xe8] sm:$0xff] %vm653, %v618
  %684 = vst.msk [vmem:[%s3 + $0xf0] sm:$0xff] %vm653, %v619
  %685 = vst.msk [vmem:[%s3 + $0xf8] sm:$0xff] %vm653, %v620
  %686 = vst.msk [vmem:[%s3 + $0x100] sm:$0xff] %vm653, %v621
  %687 = vst.msk [vmem:[%s3 + $0x108] sm:$0xff] %vm653, %v622
  %688 = vst.msk [vmem:[%s3 + $0x110] sm:$0xff] %vm653, %v623
  %689 = vst.msk [vmem:[%s3 + $0x118] sm:$0xff] %vm653, %v624
  %690 = vst.msk [vmem:[%s3 + $0x120] sm:$0xff] %vm653, %v625
  %691 = vst.msk [vmem:[%s3 + $0x128] sm:$0xff] %vm653, %v626
  %692 = vst.msk [vmem:[%s3 + $0x130] sm:$0xff] %vm653, %v627
  %693 = vst.msk [vmem:[%s3 + $0x138] sm:$0xff] %vm653, %v628
  %694 = vst.msk [vmem:[%s3 + $0x140] sm:$0xff] %vm653, %v629
  %695 = vst.msk [vmem:[%s3 + $0x148] sm:$0xff] %vm653, %v630
  %696 = vst.msk [vmem:[%s3 + $0x150] sm:$0xff] %vm653, %v631
  %697 = vst.msk [vmem:[%s3 + $0x158] sm:$0xff] %vm653, %v632
  %698 = vst.msk [vmem:[%s3 + $0x160] sm:$0xff] %vm653, %v633
  %699 = vst.msk [vmem:[%s3 + $0x168] sm:$0xff] %vm653, %v634
  %700 = vst.msk [vmem:[%s3 + $0x170] sm:$0xff] %vm653, %v635
  %701 = vst.msk [vmem:[%s3 + $0x178] sm:$0xff] %vm653, %v636
  %702 = vst.msk [vmem:[%s3 + $0x180] sm:$0xff] %vm653, %v637
  %703 = vst.msk [vmem:[%s3 + $0x188] sm:$0xff] %vm653, %v638
  %704 = vst.msk [vmem:[%s3 + $0x190] sm:$0xff] %vm653, %v639
  %705 = vst.msk [vmem:[%s3 + $0x198] sm:$0xff] %vm653, %v640
  %706 = vst.msk [vmem:[%s3 + $0x1a0] sm:$0xff] %vm653, %v641
  %707 = vst.msk [vmem:[%s3 + $0x1a8] sm:$0xff] %vm653, %v642
  %708 = vst.msk [vmem:[%s3 + $0x1b0] sm:$0xff] %vm653, %v643
  %709 = vst.msk [vmem:[%s3 + $0x1b8] sm:$0xff] %vm653, %v644
  %710 = vst.msk [vmem:[%s3 + $0x1c0] sm:$0xff] %vm653, %v645
  %711 = vst.msk [vmem:[%s3 + $0x1c8] sm:$0xff] %vm653, %v646
  %712 = vst.msk [vmem:[%s3 + $0x1d0] sm:$0xff] %vm653, %v647
  %713 = vst.msk [vmem:[%s3 + $0x1d8] sm:$0xff] %vm653, %v648
  %714 = vst.msk [vmem:[%s3 + $0x1e0] sm:$0xff] %vm653, %v649
  %715 = vst.msk [vmem:[%s3 + $0x1e8] sm:$0xff] %vm653, %v650
  %716 = vst.msk [vmem:[%s3 + $0x1f0] sm:$0xff] %vm653, %v651
  %717 = vst.msk [vmem:[%s3 + $0x1f8] sm:$0xff] %vm653, %v652
  // Predicated region
  $region14: #{compentrans512_forward.29} parent=0 // pred_check
    _
  $region15: #{compentrans512_forward.29} parent=0 // pred_check_branch
    %719 = sbr.rel (0) target = $region17
  $region16: #{compentrans512_forward.29} parent=0 // pred_region
    _
  $region17: #{compentrans512_forward.29} parent=0 // pred_fallthru
    _
  // Predicated region
  $region18: #{compentrans512_forward.29} parent=0 // pred_check
    _
  $region19: #{compentrans512_forward.29} parent=0 // pred_check_branch
    %721 = sbr.rel (0) target = $region21
  $region20: #{compentrans512_forward.29} parent=0 // pred_region
    _
  $region21: #{compentrans512_forward.29} parent=0 // pred_fallthru
    _

</llo_original>
